<compile_context>
chip_gen: v7x
topology: tpu7x:2x2x1
jax: 0.10.0
libtpu: 0.0.40
codegen_flags: <defaults>
</compile_context>

<pallas_src>
import functools
import math

import jax
import jax.numpy as jnp
from jax.experimental import pallas as pl

EPS = 1e-5        # nn.BatchNorm2d default
ROW_ALIGN = 16    # pad M (rows) to a multiple of 16 (bf16 sublane tile for the matmul LHS)
LANE = 128        # pad channels to a multiple of 128 lanes


def _ceil_to(x, m):
    return ((x + m - 1) // m) * m


# --------------------------- activation container ---------------------------

class Act:
    """Lane-dense activation: (Mp, Cp) float32 slab with rows padded to ROW_ALIGN (zeros)
    and channels padded to a multiple of 128 (zeros), plus the logical NHWC shape."""
    __slots__ = ("slab", "n", "h", "w", "c")

    def __init__(self, slab, n, h, w, c):
        self.slab, self.n, self.h, self.w, self.c = slab, n, h, w, c

    @property
    def m(self):
        return self.n * self.h * self.w

    def nhwc(self):
        return self.slab[: self.m].reshape(self.n, self.h, self.w, self.slab.shape[1])


# ------------------------------ Pallas kernels ------------------------------

def _bn_norm(y, m_valid, eps, relu):
    """Training-mode BatchNorm (gamma=1, beta=0) over the first m_valid rows of y.
    Padded rows (>= m_valid, exactly zero in y) are masked out of the statistics and are
    zero in the result, so padded slabs can be carried safely between layers."""
    mp = y.shape[0]
    inv_m = 1.0 / m_valid
    mean = jnp.sum(y, axis=0, keepdims=True) * inv_m          # padded rows contribute 0
    row_ok = jax.lax.broadcasted_iota(jnp.int32, (mp, 1), 0) < m_valid
    d = jnp.where(row_ok, y - mean, 0.0)                      # centered -> stable variance
    var = jnp.sum(d * d, axis=0, keepdims=True) * inv_m
    out = d * jax.lax.rsqrt(var + eps)                        # (y - mean) * invstd, rows masked
    if relu:
        out = jnp.maximum(out, 0.0)
    return out


def _conv_bn_kernel(a_ref, b_ref, o_ref, *, m_valid, relu, eps):
    y = jnp.dot(a_ref[...], b_ref[...], preferred_element_type=jnp.float32)
    o_ref[...] = _bn_norm(y, m_valid, eps, relu)


def _conv_bn_res_kernel(a_ref, b_ref, r_ref, o_ref, *, m_valid, relu, eps):
    y = jnp.dot(a_ref[...], b_ref[...], preferred_element_type=jnp.float32)
    out = _bn_norm(y, m_valid, eps, relu=False) + r_ref[...]  # BN -> +residual -> ReLU
    if relu:
        out = jnp.maximum(out, 0.0)
    o_ref[...] = out


def _conv_bn_dual_kernel(a_ref, b_ref, o1_ref, o2_ref, *, m_valid, n1, eps):
    # One matmul feeding two BN heads: columns [:n1] -> o1 (with ReLU, the conv1 branch),
    # columns [n1:] -> o2 (no ReLU, the downsample/residual branch).
    y = jnp.dot(a_ref[...], b_ref[...], preferred_element_type=jnp.float32)
    o1_ref[...] = _bn_norm(y[:, :n1], m_valid, eps, relu=True)
    o2_ref[...] = _bn_norm(y[:, n1:], m_valid, eps, relu=False)


def _max9_kernel(t0, t1, t2, t3, t4, t5, t6, t7, t8, o_ref):
    m01 = jnp.maximum(t0[...], t1[...])
    m23 = jnp.maximum(t2[...], t3[...])
    m45 = jnp.maximum(t4[...], t5[...])
    m67 = jnp.maximum(t6[...], t7[...])
    o_ref[...] = jnp.maximum(
        jnp.maximum(jnp.maximum(m01, m23), jnp.maximum(m45, m67)), t8[...])


# --------------------------- fused-conv call glue ---------------------------

def _pad_rows(x, mp):
    return x if x.shape[0] == mp else jnp.pad(x, ((0, mp - x.shape[0]), (0, 0)))


def _prep_lhs(a_f32, kp):
    k = a_f32.shape[1]
    if k < kp:
        a_f32 = jnp.pad(a_f32, ((0, 0), (0, kp - k)))
    return a_f32.astype(jnp.bfloat16)          # bf16 operands, f32 accumulation on the MXU


def fused_conv_bn(a_f32, b_bf16, m_valid, *, relu, residual=None, eps=EPS):
    """a_f32: (Mp, K) patches (padded rows are zero); b_bf16: (Kp, Np) prepped weights.
    Returns (Mp, Np) float32 = relu?( BN(a @ b) [+ residual] ), padded rows/cols zero."""
    mp = a_f32.shape[0]
    kp, np_ = b_bf16.shape
    a = _prep_lhs(a_f32, kp)
    if residual is None:
        kernel = functools.partial(_conv_bn_kernel, m_valid=m_valid, relu=relu, eps=eps)
        args = (a, b_bf16)
    else:
        kernel = functools.partial(_conv_bn_res_kernel, m_valid=m_valid, relu=relu, eps=eps)
        args = (a, b_bf16, residual)
    return pl.pallas_call(
        kernel, out_shape=jax.ShapeDtypeStruct((mp, np_), jnp.float32))(*args)


def fused_conv_bn_dual(a_f32, b_bf16, m_valid, n1, *, eps=EPS):
    """Fused conv1 + downsample (same 1x1 patches): one matmul, two BN outputs."""
    mp = a_f32.shape[0]
    kp, np_ = b_bf16.shape
    a = _prep_lhs(a_f32, kp)
    kernel = functools.partial(_conv_bn_dual_kernel, m_valid=m_valid, n1=n1, eps=eps)
    return pl.pallas_call(
        kernel,
        out_shape=(jax.ShapeDtypeStruct((mp, n1), jnp.float32),
                   jax.ShapeDtypeStruct((mp, np_ - n1), jnp.float32)))(a, b_bf16)


# ------------------------------- im2col glue --------------------------------

def _im2col(x, kh, kw, stride, padding, dilation):
    """x: (N, H, W, C) -> patches (N*Ho*Wo, kh*kw*C), K-order [kh, kw, cin]."""
    if padding > 0:
        x = jnp.pad(x, ((0, 0), (padding, padding), (padding, padding), (0, 0)))
    n, h, w, c = x.shape
    ekh = (kh - 1) * dilation + 1
    ekw = (kw - 1) * dilation + 1
    ho = (h - ekh) // stride + 1
    wo = (w - ekw) // stride + 1
    cols = []
    for i in range(kh):
        for j in range(kw):
            cols.append(jax.lax.slice(
                x, (0, i * dilation, j * dilation, 0),
                (n, i * dilation + (ho - 1) * stride + 1,
                 j * dilation + (wo - 1) * stride + 1, c),
                (1, stride, stride, 1)))
    patches = jnp.concatenate(cols, axis=-1).reshape(n * ho * wo, kh * kw * c)
    return patches, (n, ho, wo)


def conv1x1(act, cfg, *, relu=True, residual=None):
    """1x1 stride-1 conv: consumes the lane-dense slab directly (no im2col, no re-pad)."""
    out = fused_conv_bn(act.slab, cfg["b"], act.m, relu=relu, residual=residual)
    return Act(out, act.n, act.h, act.w, cfg["cout"])


def convkxk(act_or_nhwc, cfg, *, relu=True, residual=None):
    """General KxK conv via im2col + fused matmul/BN/ReLU kernel."""
    x = act_or_nhwc.nhwc() if isinstance(act_or_nhwc, Act) else act_or_nhwc
    patches, (n, ho, wo) = _im2col(x, cfg["kh"], cfg["kw"], cfg["stride"],
                                   cfg["pad"], cfg["dil"])
    m = n * ho * wo
    mp = _ceil_to(m, ROW_ALIGN)
    out = fused_conv_bn(_pad_rows(patches, mp), cfg["b"], m, relu=relu, residual=residual)
    return Act(out, n, ho, wo, cfg["cout"])


def maxpool_3x3_s2_p1(act):
    """MaxPool2d(3, stride=2, padding=1): 9 strided taps (JAX slices) reduced by ONE
    Pallas max-tree kernel; the (9, M, C) stack is never materialized."""
    x = act.nhwc()
    n, h, w, cp = x.shape
    xp = jnp.pad(x, ((0, 0), (1, 1), (1, 1), (0, 0)), constant_values=-jnp.inf)
    ho = (h + 2 - 3) // 2 + 1
    wo = (w + 2 - 3) // 2 + 1
    m = n * ho * wo
    mp = _ceil_to(m, ROW_ALIGN)
    taps = []
    for i in range(3):
        for j in range(3):
            sl = jax.lax.slice(xp, (0, i, j, 0),
                               (n, i + (ho - 1) * 2 + 1, j + (wo - 1) * 2 + 1, cp),
                               (1, 2, 2, 1))
            taps.append(_pad_rows(sl.reshape(m, cp), mp))   # row padding = 0 in all taps
    out = pl.pallas_call(
        _max9_kernel, out_shape=jax.ShapeDtypeStruct((mp, cp), jnp.float32))(*taps)
    return Act(out, n, ho, wo, act.c)


# ------------------------------ weight prep ---------------------------------

def _init_conv(key, cout, cin, kh, kw):
    # matches: m.weight.data.normal_(0, math.sqrt(2. / n)), n = kh*kw*out_channels
    n = kh * kw * cout
    return jax.random.normal(key, (cout, cin, kh, kw), jnp.float32) * math.sqrt(2.0 / n)


def init_resnet_params(key):
    """Raw torch-layout weights for ResNet(Bottleneck, [1, 1], layer3=False, layer4=False)."""
    ks = iter(jax.random.split(key, 12))
    return {
        "conv1_w": _init_conv(next(ks), 64, 3, 7, 7),
        # layer1: planes=64, stride=1 -> downsample = 1x1 conv (64 -> 256)
        "layer1": [{
            "stride": 1, "dilation": 1,
            "conv1_w": _init_conv(next(ks), 64, 64, 1, 1),
            "conv2_w": _init_conv(next(ks), 64, 64, 3, 3),
            "conv3_w": _init_conv(next(ks), 256, 64, 1, 1),
            "ds_w": _init_conv(next(ks), 256, 64, 1, 1),
            "ds_stride": 1, "ds_padding": 0, "ds_dilation": 1,
        }],
        # layer2: planes=128, stride=2 -> downsample = 3x3 s2 p0 conv (256 -> 512)
        "layer2": [{
            "stride": 2, "dilation": 1,
            "conv1_w": _init_conv(next(ks), 128, 256, 1, 1),
            "conv2_w": _init_conv(next(ks), 128, 128, 3, 3),
            "conv3_w": _init_conv(next(ks), 512, 128, 1, 1),
            "ds_w": _init_conv(next(ks), 512, 256, 3, 3),
            "ds_stride": 2, "ds_padding": 0, "ds_dilation": 1,
        }],
    }


def _prep_conv_weight(w, cin_act, cout_pad):
    """(Cout, Cin, KH, KW) torch layout -> (Kp, Np) bf16 im2col matmul matrix.
    The per-tap input-channel count is padded to cin_act (the channel count of the padded
    activation it multiplies) and Cout is padded to cout_pad lanes (padding columns zero)."""
    cout, cin, kh, kw = w.shape
    wt = jnp.transpose(w, (2, 3, 1, 0))                                   # (KH, KW, Cin, Cout)
    wt = jnp.pad(wt, ((0, 0), (0, 0), (0, cin_act - cin), (0, cout_pad - cout)))
    k = kh * kw * cin_act
    kp = _ceil_to(k, LANE)
    wmat = jnp.pad(wt.reshape(k, cout_pad), ((0, kp - k), (0, 0)))
    return wmat.astype(jnp.bfloat16)


def prepare_model(params):
    """One-time: transpose / channel-pad / bf16-cast every conv weight into the matmul
    matrix sized for the lane-dense padded activation slabs used at runtime."""
    prep = {"stem": {
        "b": _prep_conv_weight(params["conv1_w"], 3, _ceil_to(64, LANE)),
        "kh": 7, "kw": 7, "stride": 2, "pad": 0, "dil": 1, "cout": 64,
    }}

    def prep_block(blk, cin_act):
        stride, dil = blk["stride"], blk["dilation"]
        pad2 = dil if dil > 1 else 2 - stride            # SiamMask Bottleneck conv2 padding
        cout1 = blk["conv1_w"].shape[0]
        cout2 = blk["conv2_w"].shape[0]
        cout3 = blk["conv3_w"].shape[0]
        c1p = _ceil_to(cout1, LANE)
        c2p = _ceil_to(cout2, LANE)
        c3p = _ceil_to(cout3, LANE)
        b1 = _prep_conv_weight(blk["conv1_w"], cin_act, c1p)
        bp = {
            "conv2": {"b": _prep_conv_weight(blk["conv2_w"], c1p, c2p),
                      "kh": 3, "kw": 3, "stride": stride, "pad": pad2, "dil": dil,
                      "cout": cout2},
            "conv3": {"b": _prep_conv_weight(blk["conv3_w"], c2p, c3p), "cout": cout3},
        }
        if "ds_w" in blk:
            cout_ds = blk["ds_w"].shape[0]
            dsp = _ceil_to(cout_ds, LANE)
            kds = blk["ds_w"].shape[2]
            bds = _prep_conv_weight(blk["ds_w"], cin_act, dsp)
            if kds == 1 and blk["ds_stride"] == 1:
                # conv1 and the 1x1 downsample read the same patches -> one wide matmul
                bp["conv1_ds_fused"] = {"b": jnp.concatenate([b1, bds], axis=1),
                                        "n1": c1p, "cout1": cout1, "cout_ds": cout_ds}
            else:
                bp["conv1"] = {"b": b1, "cout": cout1}
                bp["ds"] = {"b": bds, "kh": kds, "kw": kds, "stride": blk["ds_stride"],
                            "pad": blk["ds_padding"], "dil": blk["ds_dilation"],
                            "cout": cout_ds}
        else:
            bp["conv1"] = {"b": b1, "cout": cout1}
        return bp, c3p

    cin = _ceil_to(64, LANE)   # stem output is carried with channels padded to 128 lanes
    for name in ("layer1", "layer2"):
        prep[name] = []
        for blk in params[name]:
            bp, cin = prep_block(blk, cin)
            prep[name].append(bp)
    return prep


# ------------------------------- model forward ------------------------------

def run_bottleneck(act, bp):
    """SiamMask Bottleneck: conv1x1-bn-relu, conv3x3-bn-relu, conv1x1-bn, +residual, relu."""
    if "conv1_ds_fused" in bp:
        f = bp["conv1_ds_fused"]
        o1, o2 = fused_conv_bn_dual(act.slab, f["b"], act.m, f["n1"])
        x1 = Act(o1, act.n, act.h, act.w, f["cout1"])
        residual = o2                                  # BN(downsample(x)), no ReLU
    else:
        x1 = conv1x1(act, bp["conv1"], relu=True)
        if "ds" in bp:
            residual = convkxk(act, bp["ds"], relu=False).slab
        else:
            residual = act.slab                        # identity shortcut
    x2 = convkxk(x1, bp["conv2"], relu=True)
    x3 = conv1x1(x2, bp["conv3"], relu=True, residual=residual)
    return x3


def resnet_forward(prep, x_nchw):
    """Mirrors ResNet.forward: returns (p2, p3, p4) in NCHW."""
    x = jnp.transpose(x_nchw, (0, 2, 3, 1)).astype(jnp.float32)   # NCHW -> NHWC
    act = convkxk(x, prep["stem"], relu=True)                     # conv1 + bn1 + relu
    act = maxpool_3x3_s2_p1(act)

    p1 = act
    for bp in prep["layer1"]:
        p1 = run_bottleneck(p1, bp)
    p2 = p1
    for bp in prep["layer2"]:
        p2 = run_bottleneck(p2, bp)

    # layer3 / layer4 are identity lambdas (layer3=False, layer4=False)
    p3 = p2
    p4 = p3
    # TODO(synk): log_once('p3 ...') is python-side logging; intentionally omitted.

    def to_nchw(a):
        return jnp.transpose(a.nhwc()[..., : a.c], (0, 3, 1, 2))

    return to_nchw(p2), to_nchw(p3), to_nchw(p4)


if __name__ == "__main__":
    key = jax.random.PRNGKey(0)
    pkey, xkey = jax.random.split(key)
    params = init_resnet_params(pkey)
    prep = prepare_model(params)                     # one-time weight transpose/pad/bf16
    x = jax.random.normal(xkey, (2, 3, 31, 31), jnp.float32)   # NCHW input, like PyTorch

    forward = jax.jit(functools.partial(resnet_forward, prep))
    p2, p3, p4 = forward(x)
    jax.block_until_ready((p2, p3, p4))

    assert p2.shape == (2, 512, 3, 3), p2.shape
    assert p3.shape == p2.shape and p4.shape == p2.shape
    assert bool(jnp.all(jnp.isfinite(p2))), "non-finite values in p2"
    print("KERNEL_OK")
</pallas_src>

<mosaic_0001>
module attributes {stable_mosaic.version = 11 : i64} {
  func.func @_conv_bn_kernel(%arg0: memref<352x256xbf16, #tpu.memory_space<vmem>>, %arg1: memref<256x128xbf16, #tpu.memory_space<vmem>>, %arg2: memref<352x128xf32, #tpu.memory_space<vmem>>) attributes {dimension_semantics = [], scalar_prefetch = 0 : i64, scratch_operands = 0 : i64, tpu.core_type = #tpu.core_type<tc>} {
    %c0 = arith.constant 0 : index
    %c0_0 = arith.constant 0 : index
    %0 = vector.load %arg0[%c0, %c0_0] : memref<352x256xbf16, #tpu.memory_space<vmem>>, vector<352x256xbf16>
    %c0_1 = arith.constant 0 : index
    %c0_2 = arith.constant 0 : index
    %1 = vector.load %arg1[%c0_1, %c0_2] : memref<256x128xbf16, #tpu.memory_space<vmem>>, vector<256x128xbf16>
    %cst = arith.constant dense<0.000000e+00> : vector<352x128xf32>
    %2 = tpu.matmul %0, %1, %cst {dimension_numbers = #tpu.dot_dimension_numbers<[1], [0], [0], [1], [0, 0, 1, 1], [], []>} : vector<352x256xbf16>, vector<256x128xbf16>, vector<352x128xf32> -> vector<352x128xf32>
    %cst_3 = arith.constant dense<0.000000e+00> : vector<128xf32>
    %3 = vector.multi_reduction <add>, %2, %cst_3 [0] : vector<352x128xf32> to vector<128xf32>
    %4 = vector.shape_cast %3 : vector<128xf32> to vector<1x128xf32>
    %cst_4 = arith.constant 2.958580e-03 : f32
    %5 = vector.broadcast %cst_4 : f32 to vector<1x128xf32>
    %6 = arith.mulf %4, %5 : vector<1x128xf32>
    %7 = tpu.iota {dimensions = array<i32: 0>} : vector<352x1xi32>
    %c338_i32 = arith.constant 338 : i32
    %8 = vector.broadcast %c338_i32 : i32 to vector<352x1xi32>
    %9 = arith.cmpi slt, %7, %8 : vector<352x1xi32>
    %10 = vector.broadcast %6 : vector<1x128xf32> to vector<352x128xf32>
    %11 = arith.subf %2, %10 : vector<352x128xf32>
    %cst_5 = arith.constant 0.000000e+00 : f32
    %12 = vector.shape_cast %9 : vector<352x1xi1> to vector<352x1xi1>
    %13 = vector.broadcast %12 : vector<352x1xi1> to vector<352x128xi1>
    %14 = vector.broadcast %cst_5 : f32 to vector<352x128xf32>
    %15 = arith.select %13, %11, %14 : vector<352x128xi1>, vector<352x128xf32>
    %16 = arith.mulf %15, %15 : vector<352x128xf32>
    %cst_6 = arith.constant dense<0.000000e+00> : vector<128xf32>
    %17 = vector.multi_reduction <add>, %16, %cst_6 [0] : vector<352x128xf32> to vector<128xf32>
    %18 = vector.shape_cast %17 : vector<128xf32> to vector<1x128xf32>
    %cst_7 = arith.constant 2.958580e-03 : f32
    %19 = vector.broadcast %cst_7 : f32 to vector<1x128xf32>
    %20 = arith.mulf %18, %19 : vector<1x128xf32>
    %cst_8 = arith.constant 9.99999974E-6 : f32
    %21 = vector.broadcast %cst_8 : f32 to vector<1x128xf32>
    %22 = arith.addf %20, %21 : vector<1x128xf32>
    %23 = math.rsqrt %22 : vector<1x128xf32>
    %24 = vector.broadcast %23 : vector<1x128xf32> to vector<352x128xf32>
    %25 = arith.mulf %15, %24 : vector<352x128xf32>
    %cst_9 = arith.constant 0.000000e+00 : f32
    %26 = vector.broadcast %cst_9 : f32 to vector<352x128xf32>
    %27 = arith.maximumf %25, %26 : vector<352x128xf32>
    %c0_10 = arith.constant 0 : index
    %c0_11 = arith.constant 0 : index
    %28 = vector.load %arg2[%c0_10, %c0_11] : memref<352x128xf32, #tpu.memory_space<vmem>>, vector<352x128xf32>
    tpu.vector_store %arg2[%c0_10, %c0_11], %27 {strides = array<i32>} : memref<352x128xf32, #tpu.memory_space<vmem>>, vector<352x128xf32>,
    return
  }
}

module attributes {stable_mosaic.version = 11 : i64} {
  func.func @_max9_kernel(%arg0: memref<112x128xf32, #tpu.memory_space<vmem>>, %arg1: memref<112x128xf32, #tpu.memory_space<vmem>>, %arg2: memref<112x128xf32, #tpu.memory_space<vmem>>, %arg3: memref<112x128xf32, #tpu.memory_space<vmem>>, %arg4: memref<112x128xf32, #tpu.memory_space<vmem>>, %arg5: memref<112x128xf32, #tpu.memory_space<vmem>>, %arg6: memref<112x128xf32, #tpu.memory_space<vmem>>, %arg7: memref<112x128xf32, #tpu.memory_space<vmem>>, %arg8: memref<112x128xf32, #tpu.memory_space<vmem>>, %arg9: memref<112x128xf32, #tpu.memory_space<vmem>>) attributes {dimension_semantics = [], scalar_prefetch = 0 : i64, scratch_operands = 0 : i64, tpu.core_type = #tpu.core_type<tc>} {
    %c0 = arith.constant 0 : index
    %c0_0 = arith.constant 0 : index
    %0 = vector.load %arg0[%c0, %c0_0] : memref<112x128xf32, #tpu.memory_space<vmem>>, vector<112x128xf32>
    %c0_1 = arith.constant 0 : index
    %c0_2 = arith.constant 0 : index
    %1 = vector.load %arg1[%c0_1, %c0_2] : memref<112x128xf32, #tpu.memory_space<vmem>>, vector<112x128xf32>
    %2 = arith.maximumf %0, %1 : vector<112x128xf32>
    %c0_3 = arith.constant 0 : index
    %c0_4 = arith.constant 0 : index
    %3 = vector.load %arg2[%c0_3, %c0_4] : memref<112x128xf32, #tpu.memory_space<vmem>>, vector<112x128xf32>
    %c0_5 = arith.constant 0 : index
    %c0_6 = arith.constant 0 : index
    %4 = vector.load %arg3[%c0_5, %c0_6] : memref<112x128xf32, #tpu.memory_space<vmem>>, vector<112x128xf32>
    %5 = arith.maximumf %3, %4 : vector<112x128xf32>
    %c0_7 = arith.constant 0 : index
    %c0_8 = arith.constant 0 : index
    %6 = vector.load %arg4[%c0_7, %c0_8] : memref<112x128xf32, #tpu.memory_space<vmem>>, vector<112x128xf32>
    %c0_9 = arith.constant 0 : index
    %c0_10 = arith.constant 0 : index
    %7 = vector.load %arg5[%c0_9, %c0_10] : memref<112x128xf32, #tpu.memory_space<vmem>>, vector<112x128xf32>
    %8 = arith.maximumf %6, %7 : vector<112x128xf32>
    %c0_11 = arith.constant 0 : index
    %c0_12 = arith.constant 0 : index
    %9 = vector.load %arg6[%c0_11, %c0_12] : memref<112x128xf32, #tpu.memory_space<vmem>>, vector<112x128xf32>
    %c0_13 = arith.constant 0 : index
    %c0_14 = arith.constant 0 : index
    %10 = vector.load %arg7[%c0_13, %c0_14] : memref<112x128xf32, #tpu.memory_space<vmem>>, vector<112x128xf32>
    %11 = arith.maximumf %9, %10 : vector<112x128xf32>
    %12 = arith.maximumf %2, %5 : vector<112x128xf32>
    %13 = arith.maximumf %8, %11 : vector<112x128xf32>
    %14 = arith.maximumf %12, %13 : vector<112x128xf32>
    %c0_15 = arith.constant 0 : index
    %c0_16 = arith.constant 0 : index
    %15 = vector.load %arg8[%c0_15, %c0_16] : memref<112x128xf32, #tpu.memory_space<vmem>>, vector<112x128xf32>
    %16 = arith.maximumf %14, %15 : vector<112x128xf32>
    %c0_17 = arith.constant 0 : index
    %c0_18 = arith.constant 0 : index
    %17 = vector.load %arg9[%c0_17, %c0_18] : memref<112x128xf32, #tpu.memory_space<vmem>>, vector<112x128xf32>
    tpu.vector_store %arg9[%c0_17, %c0_18], %16 {strides = array<i32>} : memref<112x128xf32, #tpu.memory_space<vmem>>, vector<112x128xf32>,
    return
  }
}

module attributes {stable_mosaic.version = 11 : i64} {
  func.func @_conv_bn_dual_kernel(%arg0: memref<112x128xbf16, #tpu.memory_space<vmem>>, %arg1: memref<128x384xbf16, #tpu.memory_space<vmem>>, %arg2: memref<112x128xf32, #tpu.memory_space<vmem>>, %arg3: memref<112x256xf32, #tpu.memory_space<vmem>>) attributes {dimension_semantics = [], scalar_prefetch = 0 : i64, scratch_operands = 0 : i64, tpu.core_type = #tpu.core_type<tc>} {
    %c0 = arith.constant 0 : index
    %c0_0 = arith.constant 0 : index
    %0 = vector.load %arg0[%c0, %c0_0] : memref<112x128xbf16, #tpu.memory_space<vmem>>, vector<112x128xbf16>
    %c0_1 = arith.constant 0 : index
    %c0_2 = arith.constant 0 : index
    %1 = vector.load %arg1[%c0_1, %c0_2] : memref<128x384xbf16, #tpu.memory_space<vmem>>, vector<128x384xbf16>
    %cst = arith.constant dense<0.000000e+00> : vector<112x384xf32>
    %2 = tpu.matmul %0, %1, %cst {dimension_numbers = #tpu.dot_dimension_numbers<[1], [0], [0], [1], [0, 0, 1, 1], [], []>} : vector<112x128xbf16>, vector<128x384xbf16>, vector<112x384xf32> -> vector<112x384xf32>
    %3 = vector.extract_strided_slice %2 {offsets = [0, 0], sizes = [112, 128], strides = [1, 1]} : vector<112x384xf32> to vector<112x128xf32>
    %cst_3 = arith.constant dense<0.000000e+00> : vector<128xf32>
    %4 = vector.multi_reduction <add>, %3, %cst_3 [0] : vector<112x128xf32> to vector<128xf32>
    %5 = vector.shape_cast %4 : vector<128xf32> to vector<1x128xf32>
    %cst_4 = arith.constant 0.0102040814 : f32
    %6 = vector.broadcast %cst_4 : f32 to vector<1x128xf32>
    %7 = arith.mulf %5, %6 : vector<1x128xf32>
    %8 = tpu.iota {dimensions = array<i32: 0>} : vector<112x1xi32>
    %c98_i32 = arith.constant 98 : i32
    %9 = vector.broadcast %c98_i32 : i32 to vector<112x1xi32>
    %10 = arith.cmpi slt, %8, %9 : vector<112x1xi32>
    %11 = vector.broadcast %7 : vector<1x128xf32> to vector<112x128xf32>
    %12 = arith.subf %3, %11 : vector<112x128xf32>
    %cst_5 = arith.constant 0.000000e+00 : f32
    %13 = vector.shape_cast %10 : vector<112x1xi1> to vector<112x1xi1>
    %14 = vector.broadcast %13 : vector<112x1xi1> to vector<112x128xi1>
    %15 = vector.broadcast %cst_5 : f32 to vector<112x128xf32>
    %16 = arith.select %14, %12, %15 : vector<112x128xi1>, vector<112x128xf32>
    %17 = arith.mulf %16, %16 : vector<112x128xf32>
    %cst_6 = arith.constant dense<0.000000e+00> : vector<128xf32>
    %18 = vector.multi_reduction <add>, %17, %cst_6 [0] : vector<112x128xf32> to vector<128xf32>
    %19 = vector.shape_cast %18 : vector<128xf32> to vector<1x128xf32>
    %cst_7 = arith.constant 0.0102040814 : f32
    %20 = vector.broadcast %cst_7 : f32 to vector<1x128xf32>
    %21 = arith.mulf %19, %20 : vector<1x128xf32>
    %cst_8 = arith.constant 9.99999974E-6 : f32
    %22 = vector.broadcast %cst_8 : f32 to vector<1x128xf32>
    %23 = arith.addf %21, %22 : vector<1x128xf32>
    %24 = math.rsqrt %23 : vector<1x128xf32>
    %25 = vector.broadcast %24 : vector<1x128xf32> to vector<112x128xf32>
    %26 = arith.mulf %16, %25 : vector<112x128xf32>
    %cst_9 = arith.constant 0.000000e+00 : f32
    %27 = vector.broadcast %cst_9 : f32 to vector<112x128xf32>
    %28 = arith.maximumf %26, %27 : vector<112x128xf32>
    %c0_10 = arith.constant 0 : index
    %c0_11 = arith.constant 0 : index
    %29 = vector.load %arg2[%c0_10, %c0_11] : memref<112x128xf32, #tpu.memory_space<vmem>>, vector<112x128xf32>
    tpu.vector_store %arg2[%c0_10, %c0_11], %28 {strides = array<i32>} : memref<112x128xf32, #tpu.memory_space<vmem>>, vector<112x128xf32>,
    %30 = vector.extract_strided_slice %2 {offsets = [0, 128], sizes = [112, 256], strides = [1, 1]} : vector<112x384xf32> to vector<112x256xf32>
    %cst_12 = arith.constant dense<0.000000e+00> : vector<256xf32>
    %31 = vector.multi_reduction <add>, %30, %cst_12 [0] : vector<112x256xf32> to vector<256xf32>
    %32 = vector.shape_cast %31 : vector<256xf32> to vector<1x256xf32>
    %cst_13 = arith.constant 0.0102040814 : f32
    %33 = vector.broadcast %cst_13 : f32 to vector<1x256xf32>
    %34 = arith.mulf %32, %33 : vector<1x256xf32>
    %35 = tpu.iota {dimensions = array<i32: 0>} : vector<112x1xi32>
    %c98_i32_14 = arith.constant 98 : i32
    %36 = vector.broadcast %c98_i32_14 : i32 to vector<112x1xi32>
    %37 = arith.cmpi slt, %35, %36 : vector<112x1xi32>
    %38 = vector.broadcast %34 : vector<1x256xf32> to vector<112x256xf32>
    %39 = arith.subf %30, %38 : vector<112x256xf32>
    %cst_15 = arith.constant 0.000000e+00 : f32
    %40 = vector.shape_cast %37 : vector<112x1xi1> to vector<112x1xi1>
    %41 = vector.broadcast %40 : vector<112x1xi1> to vector<112x256xi1>
    %42 = vector.broadcast %cst_15 : f32 to vector<112x256xf32>
    %43 = arith.select %41, %39, %42 : vector<112x256xi1>, vector<112x256xf32>
    %44 = arith.mulf %43, %43 : vector<112x256xf32>
    %cst_16 = arith.constant dense<0.000000e+00> : vector<256xf32>
    %45 = vector.multi_reduction <add>, %44, %cst_16 [0] : vector<112x256xf32> to vector<256xf32>
    %46 = vector.shape_cast %45 : vector<256xf32> to vector<1x256xf32>
    %cst_17 = arith.constant 0.0102040814 : f32
    %47 = vector.broadcast %cst_17 : f32 to vector<1x256xf32>
    %48 = arith.mulf %46, %47 : vector<1x256xf32>
    %cst_18 = arith.constant 9.99999974E-6 : f32
    %49 = vector.broadcast %cst_18 : f32 to vector<1x256xf32>
    %50 = arith.addf %48, %49 : vector<1x256xf32>
    %51 = math.rsqrt %50 : vector<1x256xf32>
    %52 = vector.broadcast %51 : vector<1x256xf32> to vector<112x256xf32>
    %53 = arith.mulf %43, %52 : vector<112x256xf32>
    %c0_19 = arith.constant 0 : index
    %c0_20 = arith.constant 0 : index
    %54 = vector.load %arg3[%c0_19, %c0_20] : memref<112x256xf32, #tpu.memory_space<vmem>>, vector<112x256xf32>
    tpu.vector_store %arg3[%c0_19, %c0_20], %53 {strides = array<i32>} : memref<112x256xf32, #tpu.memory_space<vmem>>, vector<112x256xf32>,
    return
  }
}

module attributes {stable_mosaic.version = 11 : i64} {
  func.func @_conv_bn_kernel(%arg0: memref<112x1152xbf16, #tpu.memory_space<vmem>>, %arg1: memref<1152x128xbf16, #tpu.memory_space<vmem>>, %arg2: memref<112x128xf32, #tpu.memory_space<vmem>>) attributes {dimension_semantics = [], scalar_prefetch = 0 : i64, scratch_operands = 0 : i64, tpu.core_type = #tpu.core_type<tc>} {
    %c0 = arith.constant 0 : index
    %c0_0 = arith.constant 0 : index
    %0 = vector.load %arg0[%c0, %c0_0] : memref<112x1152xbf16, #tpu.memory_space<vmem>>, vector<112x1152xbf16>
    %c0_1 = arith.constant 0 : index
    %c0_2 = arith.constant 0 : index
    %1 = vector.load %arg1[%c0_1, %c0_2] : memref<1152x128xbf16, #tpu.memory_space<vmem>>, vector<1152x128xbf16>
    %cst = arith.constant dense<0.000000e+00> : vector<112x128xf32>
    %2 = tpu.matmul %0, %1, %cst {dimension_numbers = #tpu.dot_dimension_numbers<[1], [0], [0], [1], [0, 0, 1, 1], [], []>} : vector<112x1152xbf16>, vector<1152x128xbf16>, vector<112x128xf32> -> vector<112x128xf32>
    %cst_3 = arith.constant dense<0.000000e+00> : vector<128xf32>
    %3 = vector.multi_reduction <add>, %2, %cst_3 [0] : vector<112x128xf32> to vector<128xf32>
    %4 = vector.shape_cast %3 : vector<128xf32> to vector<1x128xf32>
    %cst_4 = arith.constant 0.0102040814 : f32
    %5 = vector.broadcast %cst_4 : f32 to vector<1x128xf32>
    %6 = arith.mulf %4, %5 : vector<1x128xf32>
    %7 = tpu.iota {dimensions = array<i32: 0>} : vector<112x1xi32>
    %c98_i32 = arith.constant 98 : i32
    %8 = vector.broadcast %c98_i32 : i32 to vector<112x1xi32>
    %9 = arith.cmpi slt, %7, %8 : vector<112x1xi32>
    %10 = vector.broadcast %6 : vector<1x128xf32> to vector<112x128xf32>
    %11 = arith.subf %2, %10 : vector<112x128xf32>
    %cst_5 = arith.constant 0.000000e+00 : f32
    %12 = vector.shape_cast %9 : vector<112x1xi1> to vector<112x1xi1>
    %13 = vector.broadcast %12 : vector<112x1xi1> to vector<112x128xi1>
    %14 = vector.broadcast %cst_5 : f32 to vector<112x128xf32>
    %15 = arith.select %13, %11, %14 : vector<112x128xi1>, vector<112x128xf32>
    %16 = arith.mulf %15, %15 : vector<112x128xf32>
    %cst_6 = arith.constant dense<0.000000e+00> : vector<128xf32>
    %17 = vector.multi_reduction <add>, %16, %cst_6 [0] : vector<112x128xf32> to vector<128xf32>
    %18 = vector.shape_cast %17 : vector<128xf32> to vector<1x128xf32>
    %cst_7 = arith.constant 0.0102040814 : f32
    %19 = vector.broadcast %cst_7 : f32 to vector<1x128xf32>
    %20 = arith.mulf %18, %19 : vector<1x128xf32>
    %cst_8 = arith.constant 9.99999974E-6 : f32
    %21 = vector.broadcast %cst_8 : f32 to vector<1x128xf32>
    %22 = arith.addf %20, %21 : vector<1x128xf32>
    %23 = math.rsqrt %22 : vector<1x128xf32>
    %24 = vector.broadcast %23 : vector<1x128xf32> to vector<112x128xf32>
    %25 = arith.mulf %15, %24 : vector<112x128xf32>
    %cst_9 = arith.constant 0.000000e+00 : f32
    %26 = vector.broadcast %cst_9 : f32 to vector<112x128xf32>
    %27 = arith.maximumf %25, %26 : vector<112x128xf32>
    %c0_10 = arith.constant 0 : index
    %c0_11 = arith.constant 0 : index
    %28 = vector.load %arg2[%c0_10, %c0_11] : memref<112x128xf32, #tpu.memory_space<vmem>>, vector<112x128xf32>
    tpu.vector_store %arg2[%c0_10, %c0_11], %27 {strides = array<i32>} : memref<112x128xf32, #tpu.memory_space<vmem>>, vector<112x128xf32>,
    return
  }
}

module attributes {stable_mosaic.version = 11 : i64} {
  func.func @_conv_bn_res_kernel(%arg0: memref<112x128xbf16, #tpu.memory_space<vmem>>, %arg1: memref<128x256xbf16, #tpu.memory_space<vmem>>, %arg2: memref<112x256xf32, #tpu.memory_space<vmem>>, %arg3: memref<112x256xf32, #tpu.memory_space<vmem>>) attributes {dimension_semantics = [], scalar_prefetch = 0 : i64, scratch_operands = 0 : i64, tpu.core_type = #tpu.core_type<tc>} {
    %c0 = arith.constant 0 : index
    %c0_0 = arith.constant 0 : index
    %0 = vector.load %arg0[%c0, %c0_0] : memref<112x128xbf16, #tpu.memory_space<vmem>>, vector<112x128xbf16>
    %c0_1 = arith.constant 0 : index
    %c0_2 = arith.constant 0 : index
    %1 = vector.load %arg1[%c0_1, %c0_2] : memref<128x256xbf16, #tpu.memory_space<vmem>>, vector<128x256xbf16>
    %cst = arith.constant dense<0.000000e+00> : vector<112x256xf32>
    %2 = tpu.matmul %0, %1, %cst {dimension_numbers = #tpu.dot_dimension_numbers<[1], [0], [0], [1], [0, 0, 1, 1], [], []>} : vector<112x128xbf16>, vector<128x256xbf16>, vector<112x256xf32> -> vector<112x256xf32>
    %cst_3 = arith.constant dense<0.000000e+00> : vector<256xf32>
    %3 = vector.multi_reduction <add>, %2, %cst_3 [0] : vector<112x256xf32> to vector<256xf32>
    %4 = vector.shape_cast %3 : vector<256xf32> to vector<1x256xf32>
    %cst_4 = arith.constant 0.0102040814 : f32
    %5 = vector.broadcast %cst_4 : f32 to vector<1x256xf32>
    %6 = arith.mulf %4, %5 : vector<1x256xf32>
    %7 = tpu.iota {dimensions = array<i32: 0>} : vector<112x1xi32>
    %c98_i32 = arith.constant 98 : i32
    %8 = vector.broadcast %c98_i32 : i32 to vector<112x1xi32>
    %9 = arith.cmpi slt, %7, %8 : vector<112x1xi32>
    %10 = vector.broadcast %6 : vector<1x256xf32> to vector<112x256xf32>
    %11 = arith.subf %2, %10 : vector<112x256xf32>
    %cst_5 = arith.constant 0.000000e+00 : f32
    %12 = vector.shape_cast %9 : vector<112x1xi1> to vector<112x1xi1>
    %13 = vector.broadcast %12 : vector<112x1xi1> to vector<112x256xi1>
    %14 = vector.broadcast %cst_5 : f32 to vector<112x256xf32>
    %15 = arith.select %13, %11, %14 : vector<112x256xi1>, vector<112x256xf32>
    %16 = arith.mulf %15, %15 : vector<112x256xf32>
    %cst_6 = arith.constant dense<0.000000e+00> : vector<256xf32>
    %17 = vector.multi_reduction <add>, %16, %cst_6 [0] : vector<112x256xf32> to vector<256xf32>
    %18 = vector.shape_cast %17 : vector<256xf32> to vector<1x256xf32>
    %cst_7 = arith.constant 0.0102040814 : f32
    %19 = vector.broadcast %cst_7 : f32 to vector<1x256xf32>
    %20 = arith.mulf %18, %19 : vector<1x256xf32>
    %cst_8 = arith.constant 9.99999974E-6 : f32
    %21 = vector.broadcast %cst_8 : f32 to vector<1x256xf32>
    %22 = arith.addf %20, %21 : vector<1x256xf32>
    %23 = math.rsqrt %22 : vector<1x256xf32>
    %24 = vector.broadcast %23 : vector<1x256xf32> to vector<112x256xf32>
    %25 = arith.mulf %15, %24 : vector<112x256xf32>
    %c0_9 = arith.constant 0 : index
    %c0_10 = arith.constant 0 : index
    %26 = vector.load %arg2[%c0_9, %c0_10] : memref<112x256xf32, #tpu.memory_space<vmem>>, vector<112x256xf32>
    %27 = arith.addf %25, %26 : vector<112x256xf32>
    %cst_11 = arith.constant 0.000000e+00 : f32
    %28 = vector.broadcast %cst_11 : f32 to vector<112x256xf32>
    %29 = arith.maximumf %27, %28 : vector<112x256xf32>
    %c0_12 = arith.constant 0 : index
    %c0_13 = arith.constant 0 : index
    %30 = vector.load %arg3[%c0_12, %c0_13] : memref<112x256xf32, #tpu.memory_space<vmem>>, vector<112x256xf32>
    tpu.vector_store %arg3[%c0_12, %c0_13], %29 {strides = array<i32>} : memref<112x256xf32, #tpu.memory_space<vmem>>, vector<112x256xf32>,
    return
  }
}

module attributes {stable_mosaic.version = 11 : i64} {
  func.func @_conv_bn_kernel(%arg0: memref<32x2304xbf16, #tpu.memory_space<vmem>>, %arg1: memref<2304x512xbf16, #tpu.memory_space<vmem>>, %arg2: memref<32x512xf32, #tpu.memory_space<vmem>>) attributes {dimension_semantics = [], scalar_prefetch = 0 : i64, scratch_operands = 0 : i64, tpu.core_type = #tpu.core_type<tc>} {
    %c0 = arith.constant 0 : index
    %c0_0 = arith.constant 0 : index
    %0 = vector.load %arg0[%c0, %c0_0] : memref<32x2304xbf16, #tpu.memory_space<vmem>>, vector<32x2304xbf16>
    %c0_1 = arith.constant 0 : index
    %c0_2 = arith.constant 0 : index
    %1 = vector.load %arg1[%c0_1, %c0_2] : memref<2304x512xbf16, #tpu.memory_space<vmem>>, vector<2304x512xbf16>
    %cst = arith.constant dense<0.000000e+00> : vector<32x512xf32>
    %2 = tpu.matmul %0, %1, %cst {dimension_numbers = #tpu.dot_dimension_numbers<[1], [0], [0], [1], [0, 0, 1, 1], [], []>} : vector<32x2304xbf16>, vector<2304x512xbf16>, vector<32x512xf32> -> vector<32x512xf32>
    %cst_3 = arith.constant dense<0.000000e+00> : vector<512xf32>
    %3 = vector.multi_reduction <add>, %2, %cst_3 [0] : vector<32x512xf32> to vector<512xf32>
    %4 = vector.shape_cast %3 : vector<512xf32> to vector<1x512xf32>
    %cst_4 = arith.constant 0.055555556 : f32
    %5 = vector.broadcast %cst_4 : f32 to vector<1x512xf32>
    %6 = arith.mulf %4, %5 : vector<1x512xf32>
    %7 = tpu.iota {dimensions = array<i32: 0>} : vector<32x1xi32>
    %c18_i32 = arith.constant 18 : i32
    %8 = vector.broadcast %c18_i32 : i32 to vector<32x1xi32>
    %9 = arith.cmpi slt, %7, %8 : vector<32x1xi32>
    %10 = vector.broadcast %6 : vector<1x512xf32> to vector<32x512xf32>
    %11 = arith.subf %2, %10 : vector<32x512xf32>
    %cst_5 = arith.constant 0.000000e+00 : f32
    %12 = vector.shape_cast %9 : vector<32x1xi1> to vector<32x1xi1>
    %13 = vector.broadcast %12 : vector<32x1xi1> to vector<32x512xi1>
    %14 = vector.broadcast %cst_5 : f32 to vector<32x512xf32>
    %15 = arith.select %13, %11, %14 : vector<32x512xi1>, vector<32x512xf32>
    %16 = arith.mulf %15, %15 : vector<32x512xf32>
    %cst_6 = arith.constant dense<0.000000e+00> : vector<512xf32>
    %17 = vector.multi_reduction <add>, %16, %cst_6 [0] : vector<32x512xf32> to vector<512xf32>
    %18 = vector.shape_cast %17 : vector<512xf32> to vector<1x512xf32>
    %cst_7 = arith.constant 0.055555556 : f32
    %19 = vector.broadcast %cst_7 : f32 to vector<1x512xf32>
    %20 = arith.mulf %18, %19 : vector<1x512xf32>
    %cst_8 = arith.constant 9.99999974E-6 : f32
    %21 = vector.broadcast %cst_8 : f32 to vector<1x512xf32>
    %22 = arith.addf %20, %21 : vector<1x512xf32>
    %23 = math.rsqrt %22 : vector<1x512xf32>
    %24 = vector.broadcast %23 : vector<1x512xf32> to vector<32x512xf32>
    %25 = arith.mulf %15, %24 : vector<32x512xf32>
    %c0_9 = arith.constant 0 : index
    %c0_10 = arith.constant 0 : index
    %26 = vector.load %arg2[%c0_9, %c0_10] : memref<32x512xf32, #tpu.memory_space<vmem>>, vector<32x512xf32>
    tpu.vector_store %arg2[%c0_9, %c0_10], %25 {strides = array<i32>} : memref<32x512xf32, #tpu.memory_space<vmem>>, vector<32x512xf32>,
    return
  }
}

module attributes {stable_mosaic.version = 11 : i64} {
  func.func @_conv_bn_kernel(%arg0: memref<112x256xbf16, #tpu.memory_space<vmem>>, %arg1: memref<256x128xbf16, #tpu.memory_space<vmem>>, %arg2: memref<112x128xf32, #tpu.memory_space<vmem>>) attributes {dimension_semantics = [], scalar_prefetch = 0 : i64, scratch_operands = 0 : i64, tpu.core_type = #tpu.core_type<tc>} {
    %c0 = arith.constant 0 : index
    %c0_0 = arith.constant 0 : index
    %0 = vector.load %arg0[%c0, %c0_0] : memref<112x256xbf16, #tpu.memory_space<vmem>>, vector<112x256xbf16>
    %c0_1 = arith.constant 0 : index
    %c0_2 = arith.constant 0 : index
    %1 = vector.load %arg1[%c0_1, %c0_2] : memref<256x128xbf16, #tpu.memory_space<vmem>>, vector<256x128xbf16>
    %cst = arith.constant dense<0.000000e+00> : vector<112x128xf32>
    %2 = tpu.matmul %0, %1, %cst {dimension_numbers = #tpu.dot_dimension_numbers<[1], [0], [0], [1], [0, 0, 1, 1], [], []>} : vector<112x256xbf16>, vector<256x128xbf16>, vector<112x128xf32> -> vector<112x128xf32>
    %cst_3 = arith.constant dense<0.000000e+00> : vector<128xf32>
    %3 = vector.multi_reduction <add>, %2, %cst_3 [0] : vector<112x128xf32> to vector<128xf32>
    %4 = vector.shape_cast %3 : vector<128xf32> to vector<1x128xf32>
    %cst_4 = arith.constant 0.0102040814 : f32
    %5 = vector.broadcast %cst_4 : f32 to vector<1x128xf32>
    %6 = arith.mulf %4, %5 : vector<1x128xf32>
    %7 = tpu.iota {dimensions = array<i32: 0>} : vector<112x1xi32>
    %c98_i32 = arith.constant 98 : i32
    %8 = vector.broadcast %c98_i32 : i32 to vector<112x1xi32>
    %9 = arith.cmpi slt, %7, %8 : vector<112x1xi32>
    %10 = vector.broadcast %6 : vector<1x128xf32> to vector<112x128xf32>
    %11 = arith.subf %2, %10 : vector<112x128xf32>
    %cst_5 = arith.constant 0.000000e+00 : f32
    %12 = vector.shape_cast %9 : vector<112x1xi1> to vector<112x1xi1>
    %13 = vector.broadcast %12 : vector<112x1xi1> to vector<112x128xi1>
    %14 = vector.broadcast %cst_5 : f32 to vector<112x128xf32>
    %15 = arith.select %13, %11, %14 : vector<112x128xi1>, vector<112x128xf32>
    %16 = arith.mulf %15, %15 : vector<112x128xf32>
    %cst_6 = arith.constant dense<0.000000e+00> : vector<128xf32>
    %17 = vector.multi_reduction <add>, %16, %cst_6 [0] : vector<112x128xf32> to vector<128xf32>
    %18 = vector.shape_cast %17 : vector<128xf32> to vector<1x128xf32>
    %cst_7 = arith.constant 0.0102040814 : f32
    %19 = vector.broadcast %cst_7 : f32 to vector<1x128xf32>
    %20 = arith.mulf %18, %19 : vector<1x128xf32>
    %cst_8 = arith.constant 9.99999974E-6 : f32
    %21 = vector.broadcast %cst_8 : f32 to vector<1x128xf32>
    %22 = arith.addf %20, %21 : vector<1x128xf32>
    %23 = math.rsqrt %22 : vector<1x128xf32>
    %24 = vector.broadcast %23 : vector<1x128xf32> to vector<112x128xf32>
    %25 = arith.mulf %15, %24 : vector<112x128xf32>
    %cst_9 = arith.constant 0.000000e+00 : f32
    %26 = vector.broadcast %cst_9 : f32 to vector<112x128xf32>
    %27 = arith.maximumf %25, %26 : vector<112x128xf32>
    %c0_10 = arith.constant 0 : index
    %c0_11 = arith.constant 0 : index
    %28 = vector.load %arg2[%c0_10, %c0_11] : memref<112x128xf32, #tpu.memory_space<vmem>>, vector<112x128xf32>
    tpu.vector_store %arg2[%c0_10, %c0_11], %27 {strides = array<i32>} : memref<112x128xf32, #tpu.memory_space<vmem>>, vector<112x128xf32>,
    return
  }
}

module attributes {stable_mosaic.version = 11 : i64} {
  func.func @_conv_bn_kernel(%arg0: memref<32x1152xbf16, #tpu.memory_space<vmem>>, %arg1: memref<1152x128xbf16, #tpu.memory_space<vmem>>, %arg2: memref<32x128xf32, #tpu.memory_space<vmem>>) attributes {dimension_semantics = [], scalar_prefetch = 0 : i64, scratch_operands = 0 : i64, tpu.core_type = #tpu.core_type<tc>} {
    %c0 = arith.constant 0 : index
    %c0_0 = arith.constant 0 : index
    %0 = vector.load %arg0[%c0, %c0_0] : memref<32x1152xbf16, #tpu.memory_space<vmem>>, vector<32x1152xbf16>
    %c0_1 = arith.constant 0 : index
    %c0_2 = arith.constant 0 : index
    %1 = vector.load %arg1[%c0_1, %c0_2] : memref<1152x128xbf16, #tpu.memory_space<vmem>>, vector<1152x128xbf16>
    %cst = arith.constant dense<0.000000e+00> : vector<32x128xf32>
    %2 = tpu.matmul %0, %1, %cst {dimension_numbers = #tpu.dot_dimension_numbers<[1], [0], [0], [1], [0, 0, 1, 1], [], []>} : vector<32x1152xbf16>, vector<1152x128xbf16>, vector<32x128xf32> -> vector<32x128xf32>
    %cst_3 = arith.constant dense<0.000000e+00> : vector<128xf32>
    %3 = vector.multi_reduction <add>, %2, %cst_3 [0] : vector<32x128xf32> to vector<128xf32>
    %4 = vector.shape_cast %3 : vector<128xf32> to vector<1x128xf32>
    %cst_4 = arith.constant 0.055555556 : f32
    %5 = vector.broadcast %cst_4 : f32 to vector<1x128xf32>
    %6 = arith.mulf %4, %5 : vector<1x128xf32>
    %7 = tpu.iota {dimensions = array<i32: 0>} : vector<32x1xi32>
    %c18_i32 = arith.constant 18 : i32
    %8 = vector.broadcast %c18_i32 : i32 to vector<32x1xi32>
    %9 = arith.cmpi slt, %7, %8 : vector<32x1xi32>
    %10 = vector.broadcast %6 : vector<1x128xf32> to vector<32x128xf32>
    %11 = arith.subf %2, %10 : vector<32x128xf32>
    %cst_5 = arith.constant 0.000000e+00 : f32
    %12 = vector.shape_cast %9 : vector<32x1xi1> to vector<32x1xi1>
    %13 = vector.broadcast %12 : vector<32x1xi1> to vector<32x128xi1>
    %14 = vector.broadcast %cst_5 : f32 to vector<32x128xf32>
    %15 = arith.select %13, %11, %14 : vector<32x128xi1>, vector<32x128xf32>
    %16 = arith.mulf %15, %15 : vector<32x128xf32>
    %cst_6 = arith.constant dense<0.000000e+00> : vector<128xf32>
    %17 = vector.multi_reduction <add>, %16, %cst_6 [0] : vector<32x128xf32> to vector<128xf32>
    %18 = vector.shape_cast %17 : vector<128xf32> to vector<1x128xf32>
    %cst_7 = arith.constant 0.055555556 : f32
    %19 = vector.broadcast %cst_7 : f32 to vector<1x128xf32>
    %20 = arith.mulf %18, %19 : vector<1x128xf32>
    %cst_8 = arith.constant 9.99999974E-6 : f32
    %21 = vector.broadcast %cst_8 : f32 to vector<1x128xf32>
    %22 = arith.addf %20, %21 : vector<1x128xf32>
    %23 = math.rsqrt %22 : vector<1x128xf32>
    %24 = vector.broadcast %23 : vector<1x128xf32> to vector<32x128xf32>
    %25 = arith.mulf %15, %24 : vector<32x128xf32>
    %cst_9 = arith.constant 0.000000e+00 : f32
    %26 = vector.broadcast %cst_9 : f32 to vector<32x128xf32>
    %27 = arith.maximumf %25, %26 : vector<32x128xf32>
    %c0_10 = arith.constant 0 : index
    %c0_11 = arith.constant 0 : index
    %28 = vector.load %arg2[%c0_10, %c0_11] : memref<32x128xf32, #tpu.memory_space<vmem>>, vector<32x128xf32>
    tpu.vector_store %arg2[%c0_10, %c0_11], %27 {strides = array<i32>} : memref<32x128xf32, #tpu.memory_space<vmem>>, vector<32x128xf32>,
    return
  }
}

module attributes {stable_mosaic.version = 11 : i64} {
  func.func @_conv_bn_res_kernel(%arg0: memref<32x128xbf16, #tpu.memory_space<vmem>>, %arg1: memref<128x512xbf16, #tpu.memory_space<vmem>>, %arg2: memref<32x512xf32, #tpu.memory_space<vmem>>, %arg3: memref<32x512xf32, #tpu.memory_space<vmem>>) attributes {dimension_semantics = [], scalar_prefetch = 0 : i64, scratch_operands = 0 : i64, tpu.core_type = #tpu.core_type<tc>} {
    %c0 = arith.constant 0 : index
    %c0_0 = arith.constant 0 : index
    %0 = vector.load %arg0[%c0, %c0_0] : memref<32x128xbf16, #tpu.memory_space<vmem>>, vector<32x128xbf16>
    %c0_1 = arith.constant 0 : index
    %c0_2 = arith.constant 0 : index
    %1 = vector.load %arg1[%c0_1, %c0_2] : memref<128x512xbf16, #tpu.memory_space<vmem>>, vector<128x512xbf16>
    %cst = arith.constant dense<0.000000e+00> : vector<32x512xf32>
    %2 = tpu.matmul %0, %1, %cst {dimension_numbers = #tpu.dot_dimension_numbers<[1], [0], [0], [1], [0, 0, 1, 1], [], []>} : vector<32x128xbf16>, vector<128x512xbf16>, vector<32x512xf32> -> vector<32x512xf32>
    %cst_3 = arith.constant dense<0.000000e+00> : vector<512xf32>
    %3 = vector.multi_reduction <add>, %2, %cst_3 [0] : vector<32x512xf32> to vector<512xf32>
    %4 = vector.shape_cast %3 : vector<512xf32> to vector<1x512xf32>
    %cst_4 = arith.constant 0.055555556 : f32
    %5 = vector.broadcast %cst_4 : f32 to vector<1x512xf32>
    %6 = arith.mulf %4, %5 : vector<1x512xf32>
    %7 = tpu.iota {dimensions = array<i32: 0>} : vector<32x1xi32>
    %c18_i32 = arith.constant 18 : i32
    %8 = vector.broadcast %c18_i32 : i32 to vector<32x1xi32>
    %9 = arith.cmpi slt, %7, %8 : vector<32x1xi32>
    %10 = vector.broadcast %6 : vector<1x512xf32> to vector<32x512xf32>
    %11 = arith.subf %2, %10 : vector<32x512xf32>
    %cst_5 = arith.constant 0.000000e+00 : f32
    %12 = vector.shape_cast %9 : vector<32x1xi1> to vector<32x1xi1>
    %13 = vector.broadcast %12 : vector<32x1xi1> to vector<32x512xi1>
    %14 = vector.broadcast %cst_5 : f32 to vector<32x512xf32>
    %15 = arith.select %13, %11, %14 : vector<32x512xi1>, vector<32x512xf32>
    %16 = arith.mulf %15, %15 : vector<32x512xf32>
    %cst_6 = arith.constant dense<0.000000e+00> : vector<512xf32>
    %17 = vector.multi_reduction <add>, %16, %cst_6 [0] : vector<32x512xf32> to vector<512xf32>
    %18 = vector.shape_cast %17 : vector<512xf32> to vector<1x512xf32>
    %cst_7 = arith.constant 0.055555556 : f32
    %19 = vector.broadcast %cst_7 : f32 to vector<1x512xf32>
    %20 = arith.mulf %18, %19 : vector<1x512xf32>
    %cst_8 = arith.constant 9.99999974E-6 : f32
    %21 = vector.broadcast %cst_8 : f32 to vector<1x512xf32>
    %22 = arith.addf %20, %21 : vector<1x512xf32>
    %23 = math.rsqrt %22 : vector<1x512xf32>
    %24 = vector.broadcast %23 : vector<1x512xf32> to vector<32x512xf32>
    %25 = arith.mulf %15, %24 : vector<32x512xf32>
    %c0_9 = arith.constant 0 : index
    %c0_10 = arith.constant 0 : index
    %26 = vector.load %arg2[%c0_9, %c0_10] : memref<32x512xf32, #tpu.memory_space<vmem>>, vector<32x512xf32>
    %27 = arith.addf %25, %26 : vector<32x512xf32>
    %cst_11 = arith.constant 0.000000e+00 : f32
    %28 = vector.broadcast %cst_11 : f32 to vector<32x512xf32>
    %29 = arith.maximumf %27, %28 : vector<32x512xf32>
    %c0_12 = arith.constant 0 : index
    %c0_13 = arith.constant 0 : index
    %30 = vector.load %arg3[%c0_12, %c0_13] : memref<32x512xf32, #tpu.memory_space<vmem>>, vector<32x512xf32>
    tpu.vector_store %arg3[%c0_12, %c0_13], %29 {strides = array<i32>} : memref<32x512xf32, #tpu.memory_space<vmem>>, vector<32x512xf32>,
    return
  }
}

</mosaic_0001>

<llo_original>
// kernel: resnet_forward.9
$region0: #{resnet_forward.9}
  #allocation0 [shape = 'u32[]', space=smem, size = 0x4, offset = 0x4, fixed_abs, tag = 'smem constant byte address 0x4 - core index']
  #allocation1 [shape = 'u32[144,128]{1,0:T(1,128)}', space=vmem, size = 0x12000, scoped, tag = 'internal scratch']
  %s0 = inlined_call_operand.vmem [shape: bf16[352,256], index: 0, kind: input, shape index: {}]
  %s1 = inlined_call_operand.vmem [shape: bf16[256,128], index: 1, kind: input, shape index: {}]
  %s2 = inlined_call_operand.vmem [shape: f32[352,128], index: 2, kind: output, shape index: {}]
  %s3 = sld [smem:[#allocation0]]
  $region18: #{resnet_forward.9} parent=0
    _
  %s5 = ssub.s32 1, %s3
  %s6 = scalar_select 0, %s5, %s3
  // Predicated region
  $region2: #{resnet_forward.9} parent=0 // pred_check
    _
  $region3: #{resnet_forward.9} parent=0 // pred_check_branch
    %8 = sbr.rel (0) target = $region5
  $region4: #{resnet_forward.9} parent=0 // pred_region
    _
  $region5: #{resnet_forward.9} parent=0 // pred_fallthru
    _
  // Predicated region
  $region6: #{resnet_forward.9} parent=0 // pred_check
    _
  $region7: #{resnet_forward.9} parent=0 // pred_check_branch
    %10 = sbr.rel (0) target = $region9
  $region8: #{resnet_forward.9} parent=0 // pred_region
    _
  $region9: #{resnet_forward.9} parent=0 // pred_fallthru
    _
  %v12 = vld [vmem:[%s0] sm:$0xff]
  %v13 = vld [vmem:[%s0 + $0x8] sm:$0xff]
  %v14 = vld [vmem:[%s0 + $0x10] sm:$0xff]
  %v15 = vld [vmem:[%s0 + $0x18] sm:$0xff]
  %v16 = vld [vmem:[%s0 + $0x20] sm:$0xff]
  %v17 = vld [vmem:[%s0 + $0x28] sm:$0xff]
  %v18 = vld [vmem:[%s0 + $0x30] sm:$0xff]
  %v19 = vld [vmem:[%s0 + $0x38] sm:$0xff]
  %v20 = vld [vmem:[%s0 + $0x40] sm:$0xff]
  %v21 = vld [vmem:[%s0 + $0x48] sm:$0xff]
  %v22 = vld [vmem:[%s0 + $0x50] sm:$0xff]
  %v23 = vld [vmem:[%s0 + $0x58] sm:$0xff]
  %v24 = vld [vmem:[%s0 + $0x60] sm:$0xff]
  %v25 = vld [vmem:[%s0 + $0x68] sm:$0xff]
  %v26 = vld [vmem:[%s0 + $0x70] sm:$0xff]
  %v27 = vld [vmem:[%s0 + $0x78] sm:$0xff]
  %v28 = vld [vmem:[%s0 + $0x80] sm:$0xff]
  %v29 = vld [vmem:[%s0 + $0x88] sm:$0xff]
  %v30 = vld [vmem:[%s0 + $0x90] sm:$0xff]
  %v31 = vld [vmem:[%s0 + $0x98] sm:$0xff]
  %v32 = vld [vmem:[%s0 + $0xa0] sm:$0xff]
  %v33 = vld [vmem:[%s0 + $0xa8] sm:$0xff]
  %v34 = vld [vmem:[%s0 + $0xb0] sm:$0xff]
  %v35 = vld [vmem:[%s0 + $0xb8] sm:$0xff]
  %v36 = vld [vmem:[%s0 + $0xc0] sm:$0xff]
  %v37 = vld [vmem:[%s0 + $0xc8] sm:$0xff]
  %v38 = vld [vmem:[%s0 + $0xd0] sm:$0xff]
  %v39 = vld [vmem:[%s0 + $0xd8] sm:$0xff]
  %v40 = vld [vmem:[%s0 + $0xe0] sm:$0xff]
  %v41 = vld [vmem:[%s0 + $0xe8] sm:$0xff]
  %v42 = vld [vmem:[%s0 + $0xf0] sm:$0xff]
  %v43 = vld [vmem:[%s0 + $0xf8] sm:$0xff]
  %v44 = vld [vmem:[%s0 + $0x100] sm:$0xff]
  %v45 = vld [vmem:[%s0 + $0x108] sm:$0xff]
  %v46 = vld [vmem:[%s0 + $0x110] sm:$0xff]
  %v47 = vld [vmem:[%s0 + $0x118] sm:$0xff]
  %v48 = vld [vmem:[%s0 + $0x120] sm:$0xff]
  %v49 = vld [vmem:[%s0 + $0x128] sm:$0xff]
  %v50 = vld [vmem:[%s0 + $0x130] sm:$0xff]
  %v51 = vld [vmem:[%s0 + $0x138] sm:$0xff]
  %v52 = vld [vmem:[%s0 + $0x140] sm:$0xff]
  %v53 = vld [vmem:[%s0 + $0x148] sm:$0xff]
  %v54 = vld [vmem:[%s0 + $0x150] sm:$0xff]
  %v55 = vld [vmem:[%s0 + $0x158] sm:$0xff]
  %v56 = vld [vmem:[%s1] sm:$0xf]
  %v57 = vld [vmem:[%s1 + $0x4] sm:$0xf]
  %v58 = vld [vmem:[%s1 + $0x8] sm:$0xf]
  %v59 = vld [vmem:[%s1 + $0xc] sm:$0xf]
  %v60 = vld [vmem:[%s1 + $0x10] sm:$0xf]
  %v61 = vld [vmem:[%s1 + $0x14] sm:$0xf]
  %v62 = vld [vmem:[%s1 + $0x18] sm:$0xf]
  %v63 = vld [vmem:[%s1 + $0x1c] sm:$0xf]
  %v64 = vld [vmem:[%s1 + $0x20] sm:$0xf]
  %v65 = vld [vmem:[%s1 + $0x24] sm:$0xf]
  %v66 = vld [vmem:[%s1 + $0x28] sm:$0xf]
  %v67 = vld [vmem:[%s1 + $0x2c] sm:$0xf]
  %v68 = vld [vmem:[%s1 + $0x30] sm:$0xf]
  %v69 = vld [vmem:[%s1 + $0x34] sm:$0xf]
  %v70 = vld [vmem:[%s1 + $0x38] sm:$0xf]
  %v71 = vld [vmem:[%s1 + $0x3c] sm:$0xf]
  %v72 = vld [vmem:[%s1 + $0x40] sm:$0xf]
  %v73 = vld [vmem:[%s1 + $0x44] sm:$0xf]
  %v74 = vld [vmem:[%s1 + $0x48] sm:$0xf]
  %v75 = vld [vmem:[%s1 + $0x4c] sm:$0xf]
  %v76 = vld [vmem:[%s1 + $0x50] sm:$0xf]
  %v77 = vld [vmem:[%s1 + $0x54] sm:$0xf]
  %v78 = vld [vmem:[%s1 + $0x58] sm:$0xf]
  %v79 = vld [vmem:[%s1 + $0x5c] sm:$0xf]
  %v80 = vld [vmem:[%s1 + $0x60] sm:$0xf]
  %v81 = vld [vmem:[%s1 + $0x64] sm:$0xf]
  %v82 = vld [vmem:[%s1 + $0x68] sm:$0xf]
  %v83 = vld [vmem:[%s1 + $0x6c] sm:$0xf]
  %v84 = vld [vmem:[%s1 + $0x70] sm:$0xf]
  %v85 = vld [vmem:[%s1 + $0x74] sm:$0xf]
  %v86 = vld [vmem:[%s1 + $0x78] sm:$0xf]
  %v87 = vld [vmem:[%s1 + $0x7c] sm:$0xf]
  %v132 = vunpack.c.l.b16 %v12
  %v133 = vunpack.c.h.b16 %v12
  %v134 = vunpack.c.l.b16 %v13
  %v135 = vunpack.c.h.b16 %v13
  %v136 = vunpack.c.l.b16 %v14
  %v137 = vunpack.c.h.b16 %v14
  %v138 = vunpack.c.l.b16 %v15
  %v139 = vunpack.c.h.b16 %v15
  %v140 = vunpack.c.l.b16 %v16
  %v141 = vunpack.c.h.b16 %v16
  %v142 = vunpack.c.l.b16 %v17
  %v143 = vunpack.c.h.b16 %v17
  %v144 = vunpack.c.l.b16 %v18
  %v145 = vunpack.c.h.b16 %v18
  %v146 = vunpack.c.l.b16 %v19
  %v147 = vunpack.c.h.b16 %v19
  %v148 = vunpack.c.l.b16 %v20
  %v149 = vunpack.c.h.b16 %v20
  %v150 = vunpack.c.l.b16 %v21
  %v151 = vunpack.c.h.b16 %v21
  %v152 = vunpack.c.l.b16 %v22
  %v153 = vunpack.c.h.b16 %v22
  %v154 = vunpack.c.l.b16 %v23
  %v155 = vunpack.c.h.b16 %v23
  %v156 = vunpack.c.l.b16 %v24
  %v157 = vunpack.c.h.b16 %v24
  %v158 = vunpack.c.l.b16 %v25
  %v159 = vunpack.c.h.b16 %v25
  %v160 = vunpack.c.l.b16 %v26
  %v161 = vunpack.c.h.b16 %v26
  %v162 = vunpack.c.l.b16 %v27
  %v163 = vunpack.c.h.b16 %v27
  %v164 = vunpack.c.l.b16 %v28
  %v165 = vunpack.c.h.b16 %v28
  %v166 = vunpack.c.l.b16 %v29
  %v167 = vunpack.c.h.b16 %v29
  %v168 = vunpack.c.l.b16 %v30
  %v169 = vunpack.c.h.b16 %v30
  %v170 = vunpack.c.l.b16 %v31
  %v171 = vunpack.c.h.b16 %v31
  %v172 = vunpack.c.l.b16 %v32
  %v173 = vunpack.c.h.b16 %v32
  %v174 = vunpack.c.l.b16 %v33
  %v175 = vunpack.c.h.b16 %v33
  %v176 = vunpack.c.l.b16 %v34
  %v177 = vunpack.c.h.b16 %v34
  %v178 = vunpack.c.l.b16 %v35
  %v179 = vunpack.c.h.b16 %v35
  %v180 = vunpack.c.l.b16 %v36
  %v181 = vunpack.c.h.b16 %v36
  %v182 = vunpack.c.l.b16 %v37
  %v183 = vunpack.c.h.b16 %v37
  %v184 = vunpack.c.l.b16 %v38
  %v185 = vunpack.c.h.b16 %v38
  %v186 = vunpack.c.l.b16 %v39
  %v187 = vunpack.c.h.b16 %v39
  %v188 = vunpack.c.l.b16 %v40
  %v189 = vunpack.c.h.b16 %v40
  %v190 = vunpack.c.l.b16 %v41
  %v191 = vunpack.c.h.b16 %v41
  %v192 = vunpack.c.l.b16 %v42
  %v193 = vunpack.c.h.b16 %v42
  %v194 = vunpack.c.l.b16 %v43
  %v195 = vunpack.c.h.b16 %v43
  %v196 = vunpack.c.l.b16 %v44
  %v197 = vunpack.c.h.b16 %v44
  %v198 = vunpack.c.l.b16 %v45
  %v199 = vunpack.c.h.b16 %v45
  %v200 = vunpack.c.l.b16 %v46
  %v201 = vunpack.c.h.b16 %v46
  %v202 = vunpack.c.l.b16 %v47
  %v203 = vunpack.c.h.b16 %v47
  %v204 = vunpack.c.l.b16 %v48
  %v205 = vunpack.c.h.b16 %v48
  %v206 = vunpack.c.l.b16 %v49
  %v207 = vunpack.c.h.b16 %v49
  %v208 = vunpack.c.l.b16 %v50
  %v209 = vunpack.c.h.b16 %v50
  %v210 = vunpack.c.l.b16 %v51
  %v211 = vunpack.c.h.b16 %v51
  %v212 = vunpack.c.l.b16 %v52
  %v213 = vunpack.c.h.b16 %v52
  %v214 = vunpack.c.l.b16 %v53
  %v215 = vunpack.c.h.b16 %v53
  %v216 = vunpack.c.l.b16 %v54
  %v217 = vunpack.c.h.b16 %v54
  %v218 = vunpack.c.l.b16 %v55
  %v219 = vunpack.c.h.b16 %v55
  %v220 = vpack.c.b16 %v134, %v132
  %v221 = vpack.c.b16 %v135, %v133
  %v222 = vpack.c.b16 %v138, %v136
  %v223 = vpack.c.b16 %v139, %v137
  %v224 = vpack.c.b16 %v142, %v140
  %v225 = vpack.c.b16 %v143, %v141
  %v226 = vpack.c.b16 %v146, %v144
  %v227 = vpack.c.b16 %v147, %v145
  %v228 = vpack.c.b16 %v150, %v148
  %v229 = vpack.c.b16 %v151, %v149
  %v230 = vpack.c.b16 %v154, %v152
  %v231 = vpack.c.b16 %v155, %v153
  %v232 = vpack.c.b16 %v158, %v156
  %v233 = vpack.c.b16 %v159, %v157
  %v234 = vpack.c.b16 %v162, %v160
  %v235 = vpack.c.b16 %v163, %v161
  %v236 = vpack.c.b16 %v166, %v164
  %v237 = vpack.c.b16 %v167, %v165
  %v238 = vpack.c.b16 %v170, %v168
  %v239 = vpack.c.b16 %v171, %v169
  %v240 = vpack.c.b16 %v174, %v172
  %v241 = vpack.c.b16 %v175, %v173
  %v242 = vpack.c.b16 %v178, %v176
  %v243 = vpack.c.b16 %v179, %v177
  %v244 = vpack.c.b16 %v182, %v180
  %v245 = vpack.c.b16 %v183, %v181
  %v246 = vpack.c.b16 %v186, %v184
  %v247 = vpack.c.b16 %v187, %v185
  %v248 = vpack.c.b16 %v190, %v188
  %v249 = vpack.c.b16 %v191, %v189
  %v250 = vpack.c.b16 %v194, %v192
  %v251 = vpack.c.b16 %v195, %v193
  %v252 = vpack.c.b16 %v198, %v196
  %v253 = vpack.c.b16 %v199, %v197
  %v254 = vpack.c.b16 %v202, %v200
  %v255 = vpack.c.b16 %v203, %v201
  %v256 = vpack.c.b16 %v206, %v204
  %v257 = vpack.c.b16 %v207, %v205
  %v258 = vpack.c.b16 %v210, %v208
  %v259 = vpack.c.b16 %v211, %v209
  %v260 = vpack.c.b16 %v214, %v212
  %v261 = vpack.c.b16 %v215, %v213
  %v262 = vpack.c.b16 %v218, %v216
  %v263 = vpack.c.b16 %v219, %v217
  %v340 = vunpack.c.l.b16 %v56
  %v341 = vunpack.c.l.b16 %v57
  %v342 = vunpack.c.l.b16 %v58
  %v343 = vunpack.c.l.b16 %v59
  %v344 = vunpack.c.l.b16 %v60
  %v345 = vunpack.c.l.b16 %v61
  %v346 = vunpack.c.l.b16 %v62
  %v347 = vunpack.c.l.b16 %v63
  %v348 = vunpack.c.l.b16 %v64
  %v349 = vunpack.c.l.b16 %v65
  %v350 = vunpack.c.l.b16 %v66
  %v351 = vunpack.c.l.b16 %v67
  %v352 = vunpack.c.l.b16 %v68
  %v353 = vunpack.c.l.b16 %v69
  %v354 = vunpack.c.l.b16 %v70
  %v355 = vunpack.c.l.b16 %v71
  %v356 = vunpack.c.l.b16 %v72
  %v357 = vunpack.c.l.b16 %v73
  %v358 = vunpack.c.l.b16 %v74
  %v359 = vunpack.c.l.b16 %v75
  %v360 = vunpack.c.l.b16 %v76
  %v361 = vunpack.c.l.b16 %v77
  %v362 = vunpack.c.l.b16 %v78
  %v363 = vunpack.c.l.b16 %v79
  %v364 = vunpack.c.l.b16 %v80
  %v365 = vunpack.c.l.b16 %v81
  %v366 = vunpack.c.l.b16 %v82
  %v367 = vunpack.c.l.b16 %v83
  %v368 = vunpack.c.l.b16 %v84
  %v369 = vunpack.c.l.b16 %v85
  %v370 = vunpack.c.l.b16 %v86
  %v371 = vunpack.c.l.b16 %v87
  %v372 = vpack.c.b16 %v341, %v340
  %v373 = vpack.c.b16 %v343, %v342
  %v374 = vpack.c.b16 %v345, %v344
  %v375 = vpack.c.b16 %v347, %v346
  %v376 = vpack.c.b16 %v349, %v348
  %v377 = vpack.c.b16 %v351, %v350
  %v378 = vpack.c.b16 %v353, %v352
  %v379 = vpack.c.b16 %v355, %v354
  %v380 = vpack.c.b16 %v357, %v356
  %v381 = vpack.c.b16 %v359, %v358
  %v382 = vpack.c.b16 %v361, %v360
  %v383 = vpack.c.b16 %v363, %v362
  %v384 = vpack.c.b16 %v365, %v364
  %v385 = vpack.c.b16 %v367, %v366
  %v386 = vpack.c.b16 %v369, %v368
  %v387 = vpack.c.b16 %v371, %v370
  %404 = vmatprep.subr.bf16.mxu0 0
  %405 = vmatpush1.bf16.msra.mxu0 %v372
  %406 = vmatprep.subr.bf16.mxu0 0
  %407 = vmatpush1.bf16.msra.mxu0 %v373
  %408 = vmatprep.subr.bf16.mxu0 0
  %409 = vmatpush1.bf16.msra.mxu0 %v374
  %410 = vmatprep.subr.bf16.mxu0 0
  %411 = vmatpush1.bf16.msra.mxu0 %v375
  %412 = vmatprep.subr.bf16.mxu0 0
  %413 = vmatpush1.bf16.msra.mxu0 %v376
  %414 = vmatprep.subr.bf16.mxu0 0
  %415 = vmatpush1.bf16.msra.mxu0 %v377
  %416 = vmatprep.subr.bf16.mxu0 0
  %417 = vmatpush1.bf16.msra.mxu0 %v378
  %418 = vmatprep.subr.bf16.mxu0 0
  %419 = vmatpush1.bf16.msra.mxu0 %v379
  %420 = vmatprep.subr.bf16.mxu0 0
  %421 = vmatpush1.bf16.msra.mxu0 %v380
  %422 = vmatprep.subr.bf16.mxu0 0
  %423 = vmatpush1.bf16.msra.mxu0 %v381
  %424 = vmatprep.subr.bf16.mxu0 0
  %425 = vmatpush1.bf16.msra.mxu0 %v382
  %426 = vmatprep.subr.bf16.mxu0 0
  %427 = vmatpush1.bf16.msra.mxu0 %v383
  %428 = vmatprep.subr.bf16.mxu0 0
  %429 = vmatpush1.bf16.msra.mxu0 %v384
  %430 = vmatprep.subr.bf16.mxu0 0
  %431 = vmatpush1.bf16.msra.mxu0 %v385
  %432 = vmatprep.subr.bf16.mxu0 0
  %433 = vmatpush1.bf16.msra.mxu0 %v386
  %434 = vmatprep.subr.bf16.mxu0 0
  %435 = vmatpush1.bf16.msra.mxu0 %v387
  %436 = vmatprep.mubr.bf16.mxu0 %v221
  %437 = vmatmul.mubr.bf16.gmra.mrb[0].mxu0 %v220
  %v438 = vpop.f32.mrb[0].mxu0
  %v439 = vadd.f32 0.0, %v438
  %v440 = vpop.f32.mrb[0].mxu0
  %v441 = vpop.f32.mrb[0].mxu0
  %v442 = vadd.f32 0.0, %v441
  %v443 = vpop.f32.mrb[0].mxu0
  %444 = vmatprep.mubr.bf16.mxu0 %v223
  %445 = vmatmul.mubr.bf16.gmra.mrb[0].mxu0 %v222
  %v446 = vpop.f32.mrb[0].mxu0
  %v447 = vadd.f32 0.0, %v446
  %v448 = vpop.f32.mrb[0].mxu0
  %v449 = vpop.f32.mrb[0].mxu0
  %v450 = vadd.f32 0.0, %v449
  %v451 = vpop.f32.mrb[0].mxu0
  %452 = vmatprep.mubr.bf16.mxu0 %v225
  %453 = vmatmul.mubr.bf16.gmra.mrb[0].mxu0 %v224
  %v454 = vpop.f32.mrb[0].mxu0
  %v455 = vadd.f32 0.0, %v454
  %v456 = vpop.f32.mrb[0].mxu0
  %v457 = vpop.f32.mrb[0].mxu0
  %v458 = vadd.f32 0.0, %v457
  %v459 = vpop.f32.mrb[0].mxu0
  %460 = vmatprep.mubr.bf16.mxu0 %v227
  %461 = vmatmul.mubr.bf16.gmra.mrb[0].mxu0 %v226
  %v462 = vpop.f32.mrb[0].mxu0
  %v463 = vadd.f32 0.0, %v462
  %v464 = vpop.f32.mrb[0].mxu0
  %v465 = vpop.f32.mrb[0].mxu0
  %v466 = vadd.f32 0.0, %v465
  %v467 = vpop.f32.mrb[0].mxu0
  %468 = vmatprep.mubr.bf16.mxu0 %v229
  %469 = vmatmul.mubr.bf16.gmra.mrb[0].mxu0 %v228
  %v470 = vpop.f32.mrb[0].mxu0
  %v471 = vadd.f32 0.0, %v470
  %v472 = vpop.f32.mrb[0].mxu0
  %v473 = vpop.f32.mrb[0].mxu0
  %v474 = vadd.f32 0.0, %v473
  %v475 = vpop.f32.mrb[0].mxu0
  %476 = vmatprep.mubr.bf16.mxu0 %v231
  %477 = vmatmul.mubr.bf16.gmra.mrb[0].mxu0 %v230
  %v478 = vpop.f32.mrb[0].mxu0
  %v479 = vadd.f32 0.0, %v478
  %v480 = vpop.f32.mrb[0].mxu0
  %v481 = vpop.f32.mrb[0].mxu0
  %v482 = vadd.f32 0.0, %v481
  %v483 = vpop.f32.mrb[0].mxu0
  %484 = vmatprep.mubr.bf16.mxu0 %v233
  %485 = vmatmul.mubr.bf16.gmra.mrb[0].mxu0 %v232
  %v486 = vpop.f32.mrb[0].mxu0
  %v487 = vadd.f32 0.0, %v486
  %v488 = vpop.f32.mrb[0].mxu0
  %v489 = vpop.f32.mrb[0].mxu0
  %v490 = vadd.f32 0.0, %v489
  %v491 = vpop.f32.mrb[0].mxu0
  %492 = vmatprep.mubr.bf16.mxu0 %v235
  %493 = vmatmul.mubr.bf16.gmra.mrb[0].mxu0 %v234
  %v494 = vpop.f32.mrb[0].mxu0
  %v495 = vadd.f32 0.0, %v494
  %v496 = vpop.f32.mrb[0].mxu0
  %v497 = vpop.f32.mrb[0].mxu0
  %v498 = vadd.f32 0.0, %v497
  %v499 = vpop.f32.mrb[0].mxu0
  %500 = vmatprep.mubr.bf16.mxu0 %v237
  %501 = vmatmul.mubr.bf16.gmra.mrb[0].mxu0 %v236
  %v502 = vpop.f32.mrb[0].mxu0
  %v503 = vadd.f32 0.0, %v502
  %v504 = vpop.f32.mrb[0].mxu0
  %v505 = vpop.f32.mrb[0].mxu0
  %v506 = vadd.f32 0.0, %v505
  %v507 = vpop.f32.mrb[0].mxu0
  %508 = vmatprep.mubr.bf16.mxu0 %v239
  %509 = vmatmul.mubr.bf16.gmra.mrb[0].mxu0 %v238
  %v510 = vpop.f32.mrb[0].mxu0
  %v511 = vadd.f32 0.0, %v510
  %v512 = vpop.f32.mrb[0].mxu0
  %v513 = vpop.f32.mrb[0].mxu0
  %v514 = vadd.f32 0.0, %v513
  %v515 = vpop.f32.mrb[0].mxu0
  %516 = vmatprep.mubr.bf16.mxu0 %v241
  %517 = vmatmul.mubr.bf16.gmra.mrb[0].mxu0 %v240
  %v518 = vpop.f32.mrb[0].mxu0
  %v519 = vadd.f32 0.0, %v518
  %v520 = vpop.f32.mrb[0].mxu0
  %v521 = vpop.f32.mrb[0].mxu0
  %v522 = vadd.f32 0.0, %v521
  %v523 = vpop.f32.mrb[0].mxu0
  %524 = vmatprep.mubr.bf16.mxu0 %v243
  %525 = vmatmul.mubr.bf16.gmra.mrb[0].mxu0 %v242
  %v526 = vpop.f32.mrb[0].mxu0
  %v527 = vadd.f32 0.0, %v526
  %v528 = vpop.f32.mrb[0].mxu0
  %v529 = vpop.f32.mrb[0].mxu0
  %v530 = vadd.f32 0.0, %v529
  %v531 = vpop.f32.mrb[0].mxu0
  %532 = vmatprep.mubr.bf16.mxu0 %v245
  %533 = vmatmul.mubr.bf16.gmra.mrb[0].mxu0 %v244
  %v534 = vpop.f32.mrb[0].mxu0
  %v535 = vadd.f32 0.0, %v534
  %v536 = vpop.f32.mrb[0].mxu0
  %v537 = vpop.f32.mrb[0].mxu0
  %v538 = vadd.f32 0.0, %v537
  %v539 = vpop.f32.mrb[0].mxu0
  %540 = vmatprep.mubr.bf16.mxu0 %v247
  %541 = vmatmul.mubr.bf16.gmra.mrb[0].mxu0 %v246
  %v542 = vpop.f32.mrb[0].mxu0
  %v543 = vadd.f32 0.0, %v542
  %v544 = vpop.f32.mrb[0].mxu0
  %v545 = vpop.f32.mrb[0].mxu0
  %v546 = vadd.f32 0.0, %v545
  %v547 = vpop.f32.mrb[0].mxu0
  %548 = vmatprep.mubr.bf16.mxu0 %v249
  %549 = vmatmul.mubr.bf16.gmra.mrb[0].mxu0 %v248
  %v550 = vpop.f32.mrb[0].mxu0
  %v551 = vadd.f32 0.0, %v550
  %v552 = vpop.f32.mrb[0].mxu0
  %v553 = vpop.f32.mrb[0].mxu0
  %v554 = vadd.f32 0.0, %v553
  %v555 = vpop.f32.mrb[0].mxu0
  %556 = vmatprep.mubr.bf16.mxu0 %v251
  %557 = vmatmul.mubr.bf16.gmra.mrb[0].mxu0 %v250
  %v558 = vpop.f32.mrb[0].mxu0
  %v559 = vadd.f32 0.0, %v558
  %v560 = vpop.f32.mrb[0].mxu0
  %v561 = vpop.f32.mrb[0].mxu0
  %v562 = vadd.f32 0.0, %v561
  %v563 = vpop.f32.mrb[0].mxu0
  %564 = vmatprep.mubr.bf16.mxu0 %v253
  %565 = vmatmul.mubr.bf16.gmra.mrb[0].mxu0 %v252
  %v566 = vpop.f32.mrb[0].mxu0
  %v567 = vadd.f32 0.0, %v566
  %v568 = vpop.f32.mrb[0].mxu0
  %v569 = vpop.f32.mrb[0].mxu0
  %v570 = vadd.f32 0.0, %v569
  %v571 = vpop.f32.mrb[0].mxu0
  %572 = vmatprep.mubr.bf16.mxu0 %v255
  %573 = vmatmul.mubr.bf16.gmra.mrb[0].mxu0 %v254
  %v574 = vpop.f32.mrb[0].mxu0
  %v575 = vadd.f32 0.0, %v574
  %v576 = vpop.f32.mrb[0].mxu0
  %v577 = vpop.f32.mrb[0].mxu0
  %v578 = vadd.f32 0.0, %v577
  %v579 = vpop.f32.mrb[0].mxu0
  %580 = vmatprep.mubr.bf16.mxu0 %v257
  %581 = vmatmul.mubr.bf16.gmra.mrb[0].mxu0 %v256
  %v582 = vpop.f32.mrb[0].mxu0
  %v583 = vadd.f32 0.0, %v582
  %v584 = vpop.f32.mrb[0].mxu0
  %v585 = vpop.f32.mrb[0].mxu0
  %v586 = vadd.f32 0.0, %v585
  %v587 = vpop.f32.mrb[0].mxu0
  %588 = vmatprep.mubr.bf16.mxu0 %v259
  %589 = vmatmul.mubr.bf16.gmra.mrb[0].mxu0 %v258
  %v590 = vpop.f32.mrb[0].mxu0
  %v591 = vadd.f32 0.0, %v590
  %v592 = vpop.f32.mrb[0].mxu0
  %v593 = vpop.f32.mrb[0].mxu0
  %v594 = vadd.f32 0.0, %v593
  %v595 = vpop.f32.mrb[0].mxu0
  %596 = vmatprep.mubr.bf16.mxu0 %v261
  %597 = vmatmul.mubr.bf16.gmra.mrb[0].mxu0 %v260
  %v598 = vpop.f32.mrb[0].mxu0
  %v599 = vadd.f32 0.0, %v598
  %v600 = vpop.f32.mrb[0].mxu0
  %v601 = vpop.f32.mrb[0].mxu0
  %v602 = vadd.f32 0.0, %v601
  %v603 = vpop.f32.mrb[0].mxu0
  %604 = vmatprep.mubr.bf16.mxu0 %v263
  %605 = vmatmul.mubr.bf16.gmra.mrb[0].mxu0 %v262
  %v606 = vpop.f32.mrb[0].mxu0
  %v607 = vadd.f32 0.0, %v606
  %v608 = vpop.f32.mrb[0].mxu0
  %v609 = vpop.f32.mrb[0].mxu0
  %v610 = vadd.f32 0.0, %v609
  %v611 = vpop.f32.mrb[0].mxu0
  %612 = vdwg.mxu0
  %v613 = vadd.f32 %v439, %v442
  %v614 = vadd.f32 %v613, %v447
  %v615 = vadd.f32 %v614, %v450
  %v616 = vadd.f32 %v615, %v455
  %v617 = vadd.f32 %v616, %v458
  %v618 = vadd.f32 %v617, %v463
  %v619 = vadd.f32 %v618, %v466
  %v620 = vadd.f32 %v619, %v471
  %v621 = vadd.f32 %v620, %v474
  %v622 = vadd.f32 %v621, %v479
  %v623 = vadd.f32 %v622, %v482
  %v624 = vadd.f32 %v623, %v487
  %v625 = vadd.f32 %v624, %v490
  %v626 = vadd.f32 %v625, %v495
  %v627 = vadd.f32 %v626, %v498
  %v628 = vadd.f32 %v627, %v503
  %v629 = vadd.f32 %v628, %v506
  %v630 = vadd.f32 %v629, %v511
  %v631 = vadd.f32 %v630, %v514
  %v632 = vadd.f32 %v631, %v519
  %v633 = vadd.f32 %v632, %v522
  %v634 = vadd.f32 %v633, %v527
  %v635 = vadd.f32 %v634, %v530
  %v636 = vadd.f32 %v635, %v535
  %v637 = vadd.f32 %v636, %v538
  %v638 = vadd.f32 %v637, %v543
  %v639 = vadd.f32 %v638, %v546
  %v640 = vadd.f32 %v639, %v551
  %v641 = vadd.f32 %v640, %v554
  %v642 = vadd.f32 %v641, %v559
  %v643 = vadd.f32 %v642, %v562
  %v644 = vadd.f32 %v643, %v567
  %v645 = vadd.f32 %v644, %v570
  %v646 = vadd.f32 %v645, %v575
  %v647 = vadd.f32 %v646, %v578
  %v648 = vadd.f32 %v647, %v583
  %v649 = vadd.f32 %v648, %v586
  %v650 = vadd.f32 %v649, %v591
  %v651 = vadd.f32 %v650, %v594
  %v652 = vadd.f32 %v651, %v599
  %v653 = vadd.f32 %v652, %v602
  %v654 = vadd.f32 %v653, %v607
  %v655 = vadd.f32 %v654, %v610
  %v656 = vrot.slane %v655, 4
  %v657 = vadd.f32 %v655, %v656
  %v658 = vrot.slane %v657, 2
  %v659 = vadd.f32 %v657, %v658
  %v660 = vrot.slane %v659, 1
  %v661 = vadd.f32 %v659, %v660
  %v662 = vmul.f32 %v661, 0.00295858
  %v663 = vlaneseq
  %v664 = vshrl.u32 %v663, 7
  %v665 = vadd.s32 %v664, 8
  %v666 = vadd.s32 %v664, 16
  %v667 = vadd.s32 %v664, 24
  %v668 = vadd.s32 %v664, 32
  %v669 = vadd.s32 %v664, 40
  %v670 = vadd.s32 %v664, 48
  %v671 = vadd.s32 %v664, 56
  %v672 = vadd.s32 %v664, 64
  %v673 = vadd.s32 %v664, 72
  %v674 = vadd.s32 %v664, 80
  %v675 = vadd.s32 %v664, 88
  %v676 = vadd.s32 %v664, 96
  %v677 = vadd.s32 %v664, 104
  %v678 = vadd.s32 %v664, 112
  %v679 = vadd.s32 %v664, 120
  %v680 = vadd.s32 %v664, 128
  %v681 = vadd.s32 %v664, 136
  %v682 = vadd.s32 %v664, 144
  %v683 = vadd.s32 %v664, 152
  %v684 = vadd.s32 %v664, 160
  %v685 = vadd.s32 %v664, 168
  %v686 = vadd.s32 %v664, 176
  %v687 = vadd.s32 %v664, 184
  %v688 = vadd.s32 %v664, 192
  %v689 = vadd.s32 %v664, 200
  %v690 = vadd.s32 %v664, 208
  %v691 = vadd.s32 %v664, 216
  %v692 = vadd.s32 %v664, 224
  %v693 = vadd.s32 %v664, 232
  %v694 = vadd.s32 %v664, 240
  %v695 = vadd.s32 %v664, 248
  %v696 = vadd.s32 %v664, 256
  %v697 = vadd.s32 %v664, 264
  %v698 = vadd.s32 %v664, 272
  %v699 = vadd.s32 %v664, 280
  %v700 = vadd.s32 %v664, 288
  %v701 = vadd.s32 %v664, 296
  %v702 = vadd.s32 %v664, 304
  %v703 = vadd.s32 %v664, 312
  %v704 = vadd.s32 %v664, 320
  %v705 = vadd.s32 %v664, 328
  %v706 = vadd.s32 %v664, 336
  %v707 = vadd.s32 %v664, 344
  %vm708 = vcmp.lt.s32.totalorder %v664, 338
  %vm709 = vcmp.lt.s32.totalorder %v665, 338
  %vm710 = vcmp.lt.s32.totalorder %v666, 338
  %vm711 = vcmp.lt.s32.totalorder %v667, 338
  %vm712 = vcmp.lt.s32.totalorder %v668, 338
  %vm713 = vcmp.lt.s32.totalorder %v669, 338
  %vm714 = vcmp.lt.s32.totalorder %v670, 338
  %vm715 = vcmp.lt.s32.totalorder %v671, 338
  %vm716 = vcmp.lt.s32.totalorder %v672, 338
  %vm717 = vcmp.lt.s32.totalorder %v673, 338
  %vm718 = vcmp.lt.s32.totalorder %v674, 338
  %vm719 = vcmp.lt.s32.totalorder %v675, 338
  %vm720 = vcmp.lt.s32.totalorder %v676, 338
  %vm721 = vcmp.lt.s32.totalorder %v677, 338
  %vm722 = vcmp.lt.s32.totalorder %v678, 338
  %vm723 = vcmp.lt.s32.totalorder %v679, 338
  %vm724 = vcmp.lt.s32.totalorder %v680, 338
  %vm725 = vcmp.lt.s32.totalorder %v681, 338
  %vm726 = vcmp.lt.s32.totalorder %v682, 338
  %vm727 = vcmp.lt.s32.totalorder %v683, 338
  %vm728 = vcmp.lt.s32.totalorder %v684, 338
  %vm729 = vcmp.lt.s32.totalorder %v685, 338
  %vm730 = vcmp.lt.s32.totalorder %v686, 338
  %vm731 = vcmp.lt.s32.totalorder %v687, 338
  %vm732 = vcmp.lt.s32.totalorder %v688, 338
  %vm733 = vcmp.lt.s32.totalorder %v689, 338
  %vm734 = vcmp.lt.s32.totalorder %v690, 338
  %vm735 = vcmp.lt.s32.totalorder %v691, 338
  %vm736 = vcmp.lt.s32.totalorder %v692, 338
  %vm737 = vcmp.lt.s32.totalorder %v693, 338
  %vm738 = vcmp.lt.s32.totalorder %v694, 338
  %vm739 = vcmp.lt.s32.totalorder %v695, 338
  %vm740 = vcmp.lt.s32.totalorder %v696, 338
  %vm741 = vcmp.lt.s32.totalorder %v697, 338
  %vm742 = vcmp.lt.s32.totalorder %v698, 338
  %vm743 = vcmp.lt.s32.totalorder %v699, 338
  %vm744 = vcmp.lt.s32.totalorder %v700, 338
  %vm745 = vcmp.lt.s32.totalorder %v701, 338
  %vm746 = vcmp.lt.s32.totalorder %v702, 338
  %vm747 = vcmp.lt.s32.totalorder %v703, 338
  %vm748 = vcmp.lt.s32.totalorder %v704, 338
  %vm749 = vcmp.lt.s32.totalorder %v705, 338
  %vm750 = vcmp.lt.s32.totalorder %v706, 338
  %vm751 = vcmp.lt.s32.totalorder %v707, 338
  %v752 = vsub.f32 %v439, %v662
  %v753 = vsub.f32 %v442, %v662
  %v754 = vsub.f32 %v447, %v662
  %v755 = vsub.f32 %v450, %v662
  %v756 = vsub.f32 %v455, %v662
  %v757 = vsub.f32 %v458, %v662
  %v758 = vsub.f32 %v463, %v662
  %v759 = vsub.f32 %v466, %v662
  %v760 = vsub.f32 %v471, %v662
  %v761 = vsub.f32 %v474, %v662
  %v762 = vsub.f32 %v479, %v662
  %v763 = vsub.f32 %v482, %v662
  %v764 = vsub.f32 %v487, %v662
  %v765 = vsub.f32 %v490, %v662
  %v766 = vsub.f32 %v495, %v662
  %v767 = vsub.f32 %v498, %v662
  %v768 = vsub.f32 %v503, %v662
  %v769 = vsub.f32 %v506, %v662
  %v770 = vsub.f32 %v511, %v662
  %v771 = vsub.f32 %v514, %v662
  %v772 = vsub.f32 %v519, %v662
  %v773 = vsub.f32 %v522, %v662
  %v774 = vsub.f32 %v527, %v662
  %v775 = vsub.f32 %v530, %v662
  %v776 = vsub.f32 %v535, %v662
  %v777 = vsub.f32 %v538, %v662
  %v778 = vsub.f32 %v543, %v662
  %v779 = vsub.f32 %v546, %v662
  %v780 = vsub.f32 %v551, %v662
  %v781 = vsub.f32 %v554, %v662
  %v782 = vsub.f32 %v559, %v662
  %v783 = vsub.f32 %v562, %v662
  %v784 = vsub.f32 %v567, %v662
  %v785 = vsub.f32 %v570, %v662
  %v786 = vsub.f32 %v575, %v662
  %v787 = vsub.f32 %v578, %v662
  %v788 = vsub.f32 %v583, %v662
  %v789 = vsub.f32 %v586, %v662
  %v790 = vsub.f32 %v591, %v662
  %v791 = vsub.f32 %v594, %v662
  %v792 = vsub.f32 %v599, %v662
  %v793 = vsub.f32 %v602, %v662
  %v794 = vsub.f32 %v607, %v662
  %v795 = vsub.f32 %v610, %v662
  %v796 = vsel %vm708, 1, 0
  %v797 = vsel %vm709, 1, 0
  %v798 = vsel %vm710, 1, 0
  %v799 = vsel %vm711, 1, 0
  %v800 = vsel %vm712, 1, 0
  %v801 = vsel %vm713, 1, 0
  %v802 = vsel %vm714, 1, 0
  %v803 = vsel %vm715, 1, 0
  %v804 = vsel %vm716, 1, 0
  %v805 = vsel %vm717, 1, 0
  %v806 = vsel %vm718, 1, 0
  %v807 = vsel %vm719, 1, 0
  %v808 = vsel %vm720, 1, 0
  %v809 = vsel %vm721, 1, 0
  %v810 = vsel %vm722, 1, 0
  %v811 = vsel %vm723, 1, 0
  %v812 = vsel %vm724, 1, 0
  %v813 = vsel %vm725, 1, 0
  %v814 = vsel %vm726, 1, 0
  %v815 = vsel %vm727, 1, 0
  %v816 = vsel %vm728, 1, 0
  %v817 = vsel %vm729, 1, 0
  %v818 = vsel %vm730, 1, 0
  %v819 = vsel %vm731, 1, 0
  %v820 = vsel %vm732, 1, 0
  %v821 = vsel %vm733, 1, 0
  %v822 = vsel %vm734, 1, 0
  %v823 = vsel %vm735, 1, 0
  %v824 = vsel %vm736, 1, 0
  %v825 = vsel %vm737, 1, 0
  %v826 = vsel %vm738, 1, 0
  %v827 = vsel %vm739, 1, 0
  %v828 = vsel %vm740, 1, 0
  %v829 = vsel %vm741, 1, 0
  %v830 = vsel %vm742, 1, 0
  %v831 = vsel %vm743, 1, 0
  %v832 = vsel %vm744, 1, 0
  %v833 = vsel %vm745, 1, 0
  %v834 = vsel %vm746, 1, 0
  %v835 = vsel %vm747, 1, 0
  %v836 = vsel %vm748, 1, 0
  %v837 = vsel %vm749, 1, 0
  %v838 = vsel %vm750, 1, 0
  %v839 = vsel %vm751, 1, 0
  %vm840 = vcmp.eq.s32.totalorder %v796, 1
  %vm841 = vcmp.eq.s32.totalorder %v797, 1
  %vm842 = vcmp.eq.s32.totalorder %v798, 1
  %vm843 = vcmp.eq.s32.totalorder %v799, 1
  %vm844 = vcmp.eq.s32.totalorder %v800, 1
  %vm845 = vcmp.eq.s32.totalorder %v801, 1
  %vm846 = vcmp.eq.s32.totalorder %v802, 1
  %vm847 = vcmp.eq.s32.totalorder %v803, 1
  %vm848 = vcmp.eq.s32.totalorder %v804, 1
  %vm849 = vcmp.eq.s32.totalorder %v805, 1
  %vm850 = vcmp.eq.s32.totalorder %v806, 1
  %vm851 = vcmp.eq.s32.totalorder %v807, 1
  %vm852 = vcmp.eq.s32.totalorder %v808, 1
  %vm853 = vcmp.eq.s32.totalorder %v809, 1
  %vm854 = vcmp.eq.s32.totalorder %v810, 1
  %vm855 = vcmp.eq.s32.totalorder %v811, 1
  %vm856 = vcmp.eq.s32.totalorder %v812, 1
  %vm857 = vcmp.eq.s32.totalorder %v813, 1
  %vm858 = vcmp.eq.s32.totalorder %v814, 1
  %vm859 = vcmp.eq.s32.totalorder %v815, 1
  %vm860 = vcmp.eq.s32.totalorder %v816, 1
  %vm861 = vcmp.eq.s32.totalorder %v817, 1
  %vm862 = vcmp.eq.s32.totalorder %v818, 1
  %vm863 = vcmp.eq.s32.totalorder %v819, 1
  %vm864 = vcmp.eq.s32.totalorder %v820, 1
  %vm865 = vcmp.eq.s32.totalorder %v821, 1
  %vm866 = vcmp.eq.s32.totalorder %v822, 1
  %vm867 = vcmp.eq.s32.totalorder %v823, 1
  %vm868 = vcmp.eq.s32.totalorder %v824, 1
  %vm869 = vcmp.eq.s32.totalorder %v825, 1
  %vm870 = vcmp.eq.s32.totalorder %v826, 1
  %vm871 = vcmp.eq.s32.totalorder %v827, 1
  %vm872 = vcmp.eq.s32.totalorder %v828, 1
  %vm873 = vcmp.eq.s32.totalorder %v829, 1
  %vm874 = vcmp.eq.s32.totalorder %v830, 1
  %vm875 = vcmp.eq.s32.totalorder %v831, 1
  %vm876 = vcmp.eq.s32.totalorder %v832, 1
  %vm877 = vcmp.eq.s32.totalorder %v833, 1
  %vm878 = vcmp.eq.s32.totalorder %v834, 1
  %vm879 = vcmp.eq.s32.totalorder %v835, 1
  %vm880 = vcmp.eq.s32.totalorder %v836, 1
  %vm881 = vcmp.eq.s32.totalorder %v837, 1
  %vm882 = vcmp.eq.s32.totalorder %v838, 1
  %vm883 = vcmp.eq.s32.totalorder %v839, 1
  %v884 = vsel %vm840, %v752, 0.0
  %v885 = vsel %vm841, %v753, 0.0
  %v886 = vsel %vm842, %v754, 0.0
  %v887 = vsel %vm843, %v755, 0.0
  %v888 = vsel %vm844, %v756, 0.0
  %v889 = vsel %vm845, %v757, 0.0
  %v890 = vsel %vm846, %v758, 0.0
  %v891 = vsel %vm847, %v759, 0.0
  %v892 = vsel %vm848, %v760, 0.0
  %v893 = vsel %vm849, %v761, 0.0
  %v894 = vsel %vm850, %v762, 0.0
  %v895 = vsel %vm851, %v763, 0.0
  %v896 = vsel %vm852, %v764, 0.0
  %v897 = vsel %vm853, %v765, 0.0
  %v898 = vsel %vm854, %v766, 0.0
  %v899 = vsel %vm855, %v767, 0.0
  %v900 = vsel %vm856, %v768, 0.0
  %v901 = vsel %vm857, %v769, 0.0
  %v902 = vsel %vm858, %v770, 0.0
  %v903 = vsel %vm859, %v771, 0.0
  %v904 = vsel %vm860, %v772, 0.0
  %v905 = vsel %vm861, %v773, 0.0
  %v906 = vsel %vm862, %v774, 0.0
  %v907 = vsel %vm863, %v775, 0.0
  %v908 = vsel %vm864, %v776, 0.0
  %v909 = vsel %vm865, %v777, 0.0
  %v910 = vsel %vm866, %v778, 0.0
  %v911 = vsel %vm867, %v779, 0.0
  %v912 = vsel %vm868, %v780, 0.0
  %v913 = vsel %vm869, %v781, 0.0
  %v914 = vsel %vm870, %v782, 0.0
  %v915 = vsel %vm871, %v783, 0.0
  %v916 = vsel %vm872, %v784, 0.0
  %v917 = vsel %vm873, %v785, 0.0
  %v918 = vsel %vm874, %v786, 0.0
  %v919 = vsel %vm875, %v787, 0.0
  %v920 = vsel %vm876, %v788, 0.0
  %v921 = vsel %vm877, %v789, 0.0
  %v922 = vsel %vm878, %v790, 0.0
  %v923 = vsel %vm879, %v791, 0.0
  %v924 = vsel %vm880, %v792, 0.0
  %v925 = vsel %vm881, %v793, 0.0
  %v926 = vsel %vm882, %v794, 0.0
  %v927 = vsel %vm883, %v795, 0.0
  %v928 = vmul.f32 %v884, %v884
  %v929 = vmul.f32 %v885, %v885
  %v930 = vmul.f32 %v886, %v886
  %v931 = vmul.f32 %v887, %v887
  %v932 = vmul.f32 %v888, %v888
  %v933 = vmul.f32 %v889, %v889
  %v934 = vmul.f32 %v890, %v890
  %v935 = vmul.f32 %v891, %v891
  %v936 = vmul.f32 %v892, %v892
  %v937 = vmul.f32 %v893, %v893
  %v938 = vmul.f32 %v894, %v894
  %v939 = vmul.f32 %v895, %v895
  %v940 = vmul.f32 %v896, %v896
  %v941 = vmul.f32 %v897, %v897
  %v942 = vmul.f32 %v898, %v898
  %v943 = vmul.f32 %v899, %v899
  %v944 = vmul.f32 %v900, %v900
  %v945 = vmul.f32 %v901, %v901
  %v946 = vmul.f32 %v902, %v902
  %v947 = vmul.f32 %v903, %v903
  %v948 = vmul.f32 %v904, %v904
  %v949 = vmul.f32 %v905, %v905
  %v950 = vmul.f32 %v906, %v906
  %v951 = vmul.f32 %v907, %v907
  %v952 = vmul.f32 %v908, %v908
  %v953 = vmul.f32 %v909, %v909
  %v954 = vmul.f32 %v910, %v910
  %v955 = vmul.f32 %v911, %v911
  %v956 = vmul.f32 %v912, %v912
  %v957 = vmul.f32 %v913, %v913
  %v958 = vmul.f32 %v914, %v914
  %v959 = vmul.f32 %v915, %v915
  %v960 = vmul.f32 %v916, %v916
  %v961 = vmul.f32 %v917, %v917
  %v962 = vmul.f32 %v918, %v918
  %v963 = vmul.f32 %v919, %v919
  %v964 = vmul.f32 %v920, %v920
  %v965 = vmul.f32 %v921, %v921
  %v966 = vmul.f32 %v922, %v922
  %v967 = vmul.f32 %v923, %v923
  %v968 = vmul.f32 %v924, %v924
  %v969 = vmul.f32 %v925, %v925
  %v970 = vmul.f32 %v926, %v926
  %v971 = vmul.f32 %v927, %v927
  %v972 = vadd.f32 %v928, %v929
  %v973 = vadd.f32 %v972, %v930
  %v974 = vadd.f32 %v973, %v931
  %v975 = vadd.f32 %v974, %v932
  %v976 = vadd.f32 %v975, %v933
  %v977 = vadd.f32 %v976, %v934
  %v978 = vadd.f32 %v977, %v935
  %v979 = vadd.f32 %v978, %v936
  %v980 = vadd.f32 %v979, %v937
  %v981 = vadd.f32 %v980, %v938
  %v982 = vadd.f32 %v981, %v939
  %v983 = vadd.f32 %v982, %v940
  %v984 = vadd.f32 %v983, %v941
  %v985 = vadd.f32 %v984, %v942
  %v986 = vadd.f32 %v985, %v943
  %v987 = vadd.f32 %v986, %v944
  %v988 = vadd.f32 %v987, %v945
  %v989 = vadd.f32 %v988, %v946
  %v990 = vadd.f32 %v989, %v947
  %v991 = vadd.f32 %v990, %v948
  %v992 = vadd.f32 %v991, %v949
  %v993 = vadd.f32 %v992, %v950
  %v994 = vadd.f32 %v993, %v951
  %v995 = vadd.f32 %v994, %v952
  %v996 = vadd.f32 %v995, %v953
  %v997 = vadd.f32 %v996, %v954
  %v998 = vadd.f32 %v997, %v955
  %v999 = vadd.f32 %v998, %v956
  %v1000 = vadd.f32 %v999, %v957
  %v1001 = vadd.f32 %v1000, %v958
  %v1002 = vadd.f32 %v1001, %v959
  %v1003 = vadd.f32 %v1002, %v960
  %v1004 = vadd.f32 %v1003, %v961
  %v1005 = vadd.f32 %v1004, %v962
  %v1006 = vadd.f32 %v1005, %v963
  %v1007 = vadd.f32 %v1006, %v964
  %v1008 = vadd.f32 %v1007, %v965
  %v1009 = vadd.f32 %v1008, %v966
  %v1010 = vadd.f32 %v1009, %v967
  %v1011 = vadd.f32 %v1010, %v968
  %v1012 = vadd.f32 %v1011, %v969
  %v1013 = vadd.f32 %v1012, %v970
  %v1014 = vadd.f32 %v1013, %v971
  %v1015 = vrot.slane %v1014, 4
  %v1016 = vadd.f32 %v1014, %v1015
  %v1017 = vrot.slane %v1016, 2
  %v1018 = vadd.f32 %v1016, %v1017
  %v1019 = vrot.slane %v1018, 1
  %v1020 = vadd.f32 %v1018, %v1019
  %v1021 = vmul.f32 %v1020, 0.00295858
  %v1022 = vadd.f32 %v1021, 1e-05
  %v1023 = vrsqrt.pop %v1022
  %v1024 = vmul.f32 %v884, %v1023
  %v1025 = vmul.f32 %v885, %v1023
  %v1026 = vmul.f32 %v886, %v1023
  %v1027 = vmul.f32 %v887, %v1023
  %v1028 = vmul.f32 %v888, %v1023
  %v1029 = vmul.f32 %v889, %v1023
  %v1030 = vmul.f32 %v890, %v1023
  %v1031 = vmul.f32 %v891, %v1023
  %v1032 = vmul.f32 %v892, %v1023
  %v1033 = vmul.f32 %v893, %v1023
  %v1034 = vmul.f32 %v894, %v1023
  %v1035 = vmul.f32 %v895, %v1023
  %v1036 = vmul.f32 %v896, %v1023
  %v1037 = vmul.f32 %v897, %v1023
  %v1038 = vmul.f32 %v898, %v1023
  %v1039 = vmul.f32 %v899, %v1023
  %v1040 = vmul.f32 %v900, %v1023
  %v1041 = vmul.f32 %v901, %v1023
  %v1042 = vmul.f32 %v902, %v1023
  %v1043 = vmul.f32 %v903, %v1023
  %v1044 = vmul.f32 %v904, %v1023
  %v1045 = vmul.f32 %v905, %v1023
  %v1046 = vmul.f32 %v906, %v1023
  %v1047 = vmul.f32 %v907, %v1023
  %v1048 = vmul.f32 %v908, %v1023
  %v1049 = vmul.f32 %v909, %v1023
  %v1050 = vmul.f32 %v910, %v1023
  %v1051 = vmul.f32 %v911, %v1023
  %v1052 = vmul.f32 %v912, %v1023
  %v1053 = vmul.f32 %v913, %v1023
  %v1054 = vmul.f32 %v914, %v1023
  %v1055 = vmul.f32 %v915, %v1023
  %v1056 = vmul.f32 %v916, %v1023
  %v1057 = vmul.f32 %v917, %v1023
  %v1058 = vmul.f32 %v918, %v1023
  %v1059 = vmul.f32 %v919, %v1023
  %v1060 = vmul.f32 %v920, %v1023
  %v1061 = vmul.f32 %v921, %v1023
  %v1062 = vmul.f32 %v922, %v1023
  %v1063 = vmul.f32 %v923, %v1023
  %v1064 = vmul.f32 %v924, %v1023
  %v1065 = vmul.f32 %v925, %v1023
  %v1066 = vmul.f32 %v926, %v1023
  %v1067 = vmul.f32 %v927, %v1023
  %v1068 = vmax.f32 %v1024, 0.0
  %v1069 = vmax.f32 %v1025, 0.0
  %v1070 = vmax.f32 %v1026, 0.0
  %v1071 = vmax.f32 %v1027, 0.0
  %v1072 = vmax.f32 %v1028, 0.0
  %v1073 = vmax.f32 %v1029, 0.0
  %v1074 = vmax.f32 %v1030, 0.0
  %v1075 = vmax.f32 %v1031, 0.0
  %v1076 = vmax.f32 %v1032, 0.0
  %v1077 = vmax.f32 %v1033, 0.0
  %v1078 = vmax.f32 %v1034, 0.0
  %v1079 = vmax.f32 %v1035, 0.0
  %v1080 = vmax.f32 %v1036, 0.0
  %v1081 = vmax.f32 %v1037, 0.0
  %v1082 = vmax.f32 %v1038, 0.0
  %v1083 = vmax.f32 %v1039, 0.0
  %v1084 = vmax.f32 %v1040, 0.0
  %v1085 = vmax.f32 %v1041, 0.0
  %v1086 = vmax.f32 %v1042, 0.0
  %v1087 = vmax.f32 %v1043, 0.0
  %v1088 = vmax.f32 %v1044, 0.0
  %v1089 = vmax.f32 %v1045, 0.0
  %v1090 = vmax.f32 %v1046, 0.0
  %v1091 = vmax.f32 %v1047, 0.0
  %v1092 = vmax.f32 %v1048, 0.0
  %v1093 = vmax.f32 %v1049, 0.0
  %v1094 = vmax.f32 %v1050, 0.0
  %v1095 = vmax.f32 %v1051, 0.0
  %v1096 = vmax.f32 %v1052, 0.0
  %v1097 = vmax.f32 %v1053, 0.0
  %v1098 = vmax.f32 %v1054, 0.0
  %v1099 = vmax.f32 %v1055, 0.0
  %v1100 = vmax.f32 %v1056, 0.0
  %v1101 = vmax.f32 %v1057, 0.0
  %v1102 = vmax.f32 %v1058, 0.0
  %v1103 = vmax.f32 %v1059, 0.0
  %v1104 = vmax.f32 %v1060, 0.0
  %v1105 = vmax.f32 %v1061, 0.0
  %v1106 = vmax.f32 %v1062, 0.0
  %v1107 = vmax.f32 %v1063, 0.0
  %v1108 = vmax.f32 %v1064, 0.0
  %v1109 = vmax.f32 %v1065, 0.0
  %v1110 = vmax.f32 %v1066, 0.0
  %v1111 = vmax.f32 %v1067, 0.0
  %1112 = vst [vmem:[%s2] sm:$0xff] %v1068
  %1113 = vst [vmem:[%s2 + $0x8] sm:$0xff] %v1069
  %1114 = vst [vmem:[%s2 + $0x10] sm:$0xff] %v1070
  %1115 = vst [vmem:[%s2 + $0x18] sm:$0xff] %v1071
  %1116 = vst [vmem:[%s2 + $0x20] sm:$0xff] %v1072
  %1117 = vst [vmem:[%s2 + $0x28] sm:$0xff] %v1073
  %1118 = vst [vmem:[%s2 + $0x30] sm:$0xff] %v1074
  %1119 = vst [vmem:[%s2 + $0x38] sm:$0xff] %v1075
  %1120 = vst [vmem:[%s2 + $0x40] sm:$0xff] %v1076
  %1121 = vst [vmem:[%s2 + $0x48] sm:$0xff] %v1077
  %1122 = vst [vmem:[%s2 + $0x50] sm:$0xff] %v1078
  %1123 = vst [vmem:[%s2 + $0x58] sm:$0xff] %v1079
  %1124 = vst [vmem:[%s2 + $0x60] sm:$0xff] %v1080
  %1125 = vst [vmem:[%s2 + $0x68] sm:$0xff] %v1081
  %1126 = vst [vmem:[%s2 + $0x70] sm:$0xff] %v1082
  %1127 = vst [vmem:[%s2 + $0x78] sm:$0xff] %v1083
  %1128 = vst [vmem:[%s2 + $0x80] sm:$0xff] %v1084
  %1129 = vst [vmem:[%s2 + $0x88] sm:$0xff] %v1085
  %1130 = vst [vmem:[%s2 + $0x90] sm:$0xff] %v1086
  %1131 = vst [vmem:[%s2 + $0x98] sm:$0xff] %v1087
  %1132 = vst [vmem:[%s2 + $0xa0] sm:$0xff] %v1088
  %1133 = vst [vmem:[%s2 + $0xa8] sm:$0xff] %v1089
  %1134 = vst [vmem:[%s2 + $0xb0] sm:$0xff] %v1090
  %1135 = vst [vmem:[%s2 + $0xb8] sm:$0xff] %v1091
  %1136 = vst [vmem:[%s2 + $0xc0] sm:$0xff] %v1092
  %1137 = vst [vmem:[%s2 + $0xc8] sm:$0xff] %v1093
  %1138 = vst [vmem:[%s2 + $0xd0] sm:$0xff] %v1094
  %1139 = vst [vmem:[%s2 + $0xd8] sm:$0xff] %v1095
  %1140 = vst [vmem:[%s2 + $0xe0] sm:$0xff] %v1096
  %1141 = vst [vmem:[%s2 + $0xe8] sm:$0xff] %v1097
  %1142 = vst [vmem:[%s2 + $0xf0] sm:$0xff] %v1098
  %1143 = vst [vmem:[%s2 + $0xf8] sm:$0xff] %v1099
  %1144 = vst [vmem:[%s2 + $0x100] sm:$0xff] %v1100
  %1145 = vst [vmem:[%s2 + $0x108] sm:$0xff] %v1101
  %1146 = vst [vmem:[%s2 + $0x110] sm:$0xff] %v1102
  %1147 = vst [vmem:[%s2 + $0x118] sm:$0xff] %v1103
  %1148 = vst [vmem:[%s2 + $0x120] sm:$0xff] %v1104
  %1149 = vst [vmem:[%s2 + $0x128] sm:$0xff] %v1105
  %1150 = vst [vmem:[%s2 + $0x130] sm:$0xff] %v1106
  %1151 = vst [vmem:[%s2 + $0x138] sm:$0xff] %v1107
  %1152 = vst [vmem:[%s2 + $0x140] sm:$0xff] %v1108
  %1153 = vst [vmem:[%s2 + $0x148] sm:$0xff] %v1109
  %1154 = vst [vmem:[%s2 + $0x150] sm:$0xff] %v1110
  %1155 = vst [vmem:[%s2 + $0x158] sm:$0xff] %v1111
  // Predicated region
  $region10: #{resnet_forward.9} parent=0 // pred_check
    _
  $region11: #{resnet_forward.9} parent=0 // pred_check_branch
    %1157 = sbr.rel (0) target = $region13
  $region12: #{resnet_forward.9} parent=0 // pred_region
    _
  $region13: #{resnet_forward.9} parent=0 // pred_fallthru
    _
  // Predicated region
  $region14: #{resnet_forward.9} parent=0 // pred_check
    _
  $region15: #{resnet_forward.9} parent=0 // pred_check_branch
    %1159 = sbr.rel (0) target = $region17
  $region16: #{resnet_forward.9} parent=0 // pred_region
    _
  $region17: #{resnet_forward.9} parent=0 // pred_fallthru
    _

// kernel: resnet_forward.10
$region0: #{resnet_forward.10}
  #allocation0 [shape = 'u32[]', space=smem, size = 0x4, offset = 0x4, fixed_abs, tag = 'smem constant byte address 0x4 - core index']
  #allocation1 [shape = 'u32[144,128]{1,0:T(1,128)}', space=vmem, size = 0x12000, scoped, tag = 'internal scratch']
  %s0 = inlined_call_operand.vmem [shape: f32[112,128], index: 0, kind: input, shape index: {}]
  %s1 = inlined_call_operand.vmem [shape: f32[112,128], index: 1, kind: input, shape index: {}]
  %s2 = inlined_call_operand.vmem [shape: f32[112,128], index: 2, kind: input, shape index: {}]
  %s3 = inlined_call_operand.vmem [shape: f32[112,128], index: 3, kind: input, shape index: {}]
  %s4 = inlined_call_operand.vmem [shape: f32[112,128], index: 4, kind: input, shape index: {}]
  %s5 = inlined_call_operand.vmem [shape: f32[112,128], index: 5, kind: input, shape index: {}]
  %s6 = inlined_call_operand.vmem [shape: f32[112,128], index: 6, kind: input, shape index: {}]
  %s7 = inlined_call_operand.vmem [shape: f32[112,128], index: 7, kind: input, shape index: {}]
  %s8 = inlined_call_operand.vmem [shape: f32[112,128], index: 8, kind: input, shape index: {}]
  %s9 = inlined_call_operand.vmem [shape: f32[112,128], index: 9, kind: output, shape index: {}]
  %s10 = sld [smem:[#allocation0]]
  $region46: #{resnet_forward.10} parent=0
    _
  %s12 = ssub.s32 1, %s10
  %s13 = scalar_select 0, %s12, %s10
  // Predicated region
  $region2: #{resnet_forward.10} parent=0 // pred_check
    _
  $region3: #{resnet_forward.10} parent=0 // pred_check_branch
    %15 = sbr.rel (0) target = $region5
  $region4: #{resnet_forward.10} parent=0 // pred_region
    _
  $region5: #{resnet_forward.10} parent=0 // pred_fallthru
    _
  // Predicated region
  $region6: #{resnet_forward.10} parent=0 // pred_check
    _
  $region7: #{resnet_forward.10} parent=0 // pred_check_branch
    %17 = sbr.rel (0) target = $region9
  $region8: #{resnet_forward.10} parent=0 // pred_region
    _
  $region9: #{resnet_forward.10} parent=0 // pred_fallthru
    _
  // Predicated region
  $region10: #{resnet_forward.10} parent=0 // pred_check
    _
  $region11: #{resnet_forward.10} parent=0 // pred_check_branch
    %19 = sbr.rel (0) target = $region13
  $region12: #{resnet_forward.10} parent=0 // pred_region
    _
  $region13: #{resnet_forward.10} parent=0 // pred_fallthru
    _
  // Predicated region
  $region14: #{resnet_forward.10} parent=0 // pred_check
    _
  $region15: #{resnet_forward.10} parent=0 // pred_check_branch
    %21 = sbr.rel (0) target = $region17
  $region16: #{resnet_forward.10} parent=0 // pred_region
    _
  $region17: #{resnet_forward.10} parent=0 // pred_fallthru
    _
  // Predicated region
  $region18: #{resnet_forward.10} parent=0 // pred_check
    _
  $region19: #{resnet_forward.10} parent=0 // pred_check_branch
    %23 = sbr.rel (0) target = $region21
  $region20: #{resnet_forward.10} parent=0 // pred_region
    _
  $region21: #{resnet_forward.10} parent=0 // pred_fallthru
    _
  // Predicated region
  $region22: #{resnet_forward.10} parent=0 // pred_check
    _
  $region23: #{resnet_forward.10} parent=0 // pred_check_branch
    %25 = sbr.rel (0) target = $region25
  $region24: #{resnet_forward.10} parent=0 // pred_region
    _
  $region25: #{resnet_forward.10} parent=0 // pred_fallthru
    _
  // Predicated region
  $region26: #{resnet_forward.10} parent=0 // pred_check
    _
  $region27: #{resnet_forward.10} parent=0 // pred_check_branch
    %27 = sbr.rel (0) target = $region29
  $region28: #{resnet_forward.10} parent=0 // pred_region
    _
  $region29: #{resnet_forward.10} parent=0 // pred_fallthru
    _
  // Predicated region
  $region30: #{resnet_forward.10} parent=0 // pred_check
    _
  $region31: #{resnet_forward.10} parent=0 // pred_check_branch
    %29 = sbr.rel (0) target = $region33
  $region32: #{resnet_forward.10} parent=0 // pred_region
    _
  $region33: #{resnet_forward.10} parent=0 // pred_fallthru
    _
  // Predicated region
  $region34: #{resnet_forward.10} parent=0 // pred_check
    _
  $region35: #{resnet_forward.10} parent=0 // pred_check_branch
    %31 = sbr.rel (0) target = $region37
  $region36: #{resnet_forward.10} parent=0 // pred_region
    _
  $region37: #{resnet_forward.10} parent=0 // pred_fallthru
    _
  %v32 = vld [vmem:[%s0] sm:$0xff]
  %v33 = vld [vmem:[%s0 + $0x8] sm:$0xff]
  %v34 = vld [vmem:[%s0 + $0x10] sm:$0xff]
  %v35 = vld [vmem:[%s0 + $0x18] sm:$0xff]
  %v36 = vld [vmem:[%s0 + $0x20] sm:$0xff]
  %v37 = vld [vmem:[%s0 + $0x28] sm:$0xff]
  %v38 = vld [vmem:[%s0 + $0x30] sm:$0xff]
  %v39 = vld [vmem:[%s0 + $0x38] sm:$0xff]
  %v40 = vld [vmem:[%s0 + $0x40] sm:$0xff]
  %v41 = vld [vmem:[%s0 + $0x48] sm:$0xff]
  %v42 = vld [vmem:[%s0 + $0x50] sm:$0xff]
  %v43 = vld [vmem:[%s0 + $0x58] sm:$0xff]
  %v44 = vld [vmem:[%s0 + $0x60] sm:$0xff]
  %v45 = vld [vmem:[%s0 + $0x68] sm:$0xff]
  %v46 = vld [vmem:[%s1] sm:$0xff]
  %v47 = vld [vmem:[%s1 + $0x8] sm:$0xff]
  %v48 = vld [vmem:[%s1 + $0x10] sm:$0xff]
  %v49 = vld [vmem:[%s1 + $0x18] sm:$0xff]
  %v50 = vld [vmem:[%s1 + $0x20] sm:$0xff]
  %v51 = vld [vmem:[%s1 + $0x28] sm:$0xff]
  %v52 = vld [vmem:[%s1 + $0x30] sm:$0xff]
  %v53 = vld [vmem:[%s1 + $0x38] sm:$0xff]
  %v54 = vld [vmem:[%s1 + $0x40] sm:$0xff]
  %v55 = vld [vmem:[%s1 + $0x48] sm:$0xff]
  %v56 = vld [vmem:[%s1 + $0x50] sm:$0xff]
  %v57 = vld [vmem:[%s1 + $0x58] sm:$0xff]
  %v58 = vld [vmem:[%s1 + $0x60] sm:$0xff]
  %v59 = vld [vmem:[%s1 + $0x68] sm:$0xff]
  %v60 = vmax.f32 %v32, %v46
  %v61 = vmax.f32 %v33, %v47
  %v62 = vmax.f32 %v34, %v48
  %v63 = vmax.f32 %v35, %v49
  %v64 = vmax.f32 %v36, %v50
  %v65 = vmax.f32 %v37, %v51
  %v66 = vmax.f32 %v38, %v52
  %v67 = vmax.f32 %v39, %v53
  %v68 = vmax.f32 %v40, %v54
  %v69 = vmax.f32 %v41, %v55
  %v70 = vmax.f32 %v42, %v56
  %v71 = vmax.f32 %v43, %v57
  %v72 = vmax.f32 %v44, %v58
  %v73 = vmax.f32 %v45, %v59
  %v74 = vld [vmem:[%s2] sm:$0xff]
  %v75 = vld [vmem:[%s2 + $0x8] sm:$0xff]
  %v76 = vld [vmem:[%s2 + $0x10] sm:$0xff]
  %v77 = vld [vmem:[%s2 + $0x18] sm:$0xff]
  %v78 = vld [vmem:[%s2 + $0x20] sm:$0xff]
  %v79 = vld [vmem:[%s2 + $0x28] sm:$0xff]
  %v80 = vld [vmem:[%s2 + $0x30] sm:$0xff]
  %v81 = vld [vmem:[%s2 + $0x38] sm:$0xff]
  %v82 = vld [vmem:[%s2 + $0x40] sm:$0xff]
  %v83 = vld [vmem:[%s2 + $0x48] sm:$0xff]
  %v84 = vld [vmem:[%s2 + $0x50] sm:$0xff]
  %v85 = vld [vmem:[%s2 + $0x58] sm:$0xff]
  %v86 = vld [vmem:[%s2 + $0x60] sm:$0xff]
  %v87 = vld [vmem:[%s2 + $0x68] sm:$0xff]
  %v88 = vld [vmem:[%s3] sm:$0xff]
  %v89 = vld [vmem:[%s3 + $0x8] sm:$0xff]
  %v90 = vld [vmem:[%s3 + $0x10] sm:$0xff]
  %v91 = vld [vmem:[%s3 + $0x18] sm:$0xff]
  %v92 = vld [vmem:[%s3 + $0x20] sm:$0xff]
  %v93 = vld [vmem:[%s3 + $0x28] sm:$0xff]
  %v94 = vld [vmem:[%s3 + $0x30] sm:$0xff]
  %v95 = vld [vmem:[%s3 + $0x38] sm:$0xff]
  %v96 = vld [vmem:[%s3 + $0x40] sm:$0xff]
  %v97 = vld [vmem:[%s3 + $0x48] sm:$0xff]
  %v98 = vld [vmem:[%s3 + $0x50] sm:$0xff]
  %v99 = vld [vmem:[%s3 + $0x58] sm:$0xff]
  %v100 = vld [vmem:[%s3 + $0x60] sm:$0xff]
  %v101 = vld [vmem:[%s3 + $0x68] sm:$0xff]
  %v102 = vmax.f32 %v74, %v88
  %v103 = vmax.f32 %v75, %v89
  %v104 = vmax.f32 %v76, %v90
  %v105 = vmax.f32 %v77, %v91
  %v106 = vmax.f32 %v78, %v92
  %v107 = vmax.f32 %v79, %v93
  %v108 = vmax.f32 %v80, %v94
  %v109 = vmax.f32 %v81, %v95
  %v110 = vmax.f32 %v82, %v96
  %v111 = vmax.f32 %v83, %v97
  %v112 = vmax.f32 %v84, %v98
  %v113 = vmax.f32 %v85, %v99
  %v114 = vmax.f32 %v86, %v100
  %v115 = vmax.f32 %v87, %v101
  %v116 = vld [vmem:[%s4] sm:$0xff]
  %v117 = vld [vmem:[%s4 + $0x8] sm:$0xff]
  %v118 = vld [vmem:[%s4 + $0x10] sm:$0xff]
  %v119 = vld [vmem:[%s4 + $0x18] sm:$0xff]
  %v120 = vld [vmem:[%s4 + $0x20] sm:$0xff]
  %v121 = vld [vmem:[%s4 + $0x28] sm:$0xff]
  %v122 = vld [vmem:[%s4 + $0x30] sm:$0xff]
  %v123 = vld [vmem:[%s4 + $0x38] sm:$0xff]
  %v124 = vld [vmem:[%s4 + $0x40] sm:$0xff]
  %v125 = vld [vmem:[%s4 + $0x48] sm:$0xff]
  %v126 = vld [vmem:[%s4 + $0x50] sm:$0xff]
  %v127 = vld [vmem:[%s4 + $0x58] sm:$0xff]
  %v128 = vld [vmem:[%s4 + $0x60] sm:$0xff]
  %v129 = vld [vmem:[%s4 + $0x68] sm:$0xff]
  %v130 = vld [vmem:[%s5] sm:$0xff]
  %v131 = vld [vmem:[%s5 + $0x8] sm:$0xff]
  %v132 = vld [vmem:[%s5 + $0x10] sm:$0xff]
  %v133 = vld [vmem:[%s5 + $0x18] sm:$0xff]
  %v134 = vld [vmem:[%s5 + $0x20] sm:$0xff]
  %v135 = vld [vmem:[%s5 + $0x28] sm:$0xff]
  %v136 = vld [vmem:[%s5 + $0x30] sm:$0xff]
  %v137 = vld [vmem:[%s5 + $0x38] sm:$0xff]
  %v138 = vld [vmem:[%s5 + $0x40] sm:$0xff]
  %v139 = vld [vmem:[%s5 + $0x48] sm:$0xff]
  %v140 = vld [vmem:[%s5 + $0x50] sm:$0xff]
  %v141 = vld [vmem:[%s5 + $0x58] sm:$0xff]
  %v142 = vld [vmem:[%s5 + $0x60] sm:$0xff]
  %v143 = vld [vmem:[%s5 + $0x68] sm:$0xff]
  %v144 = vmax.f32 %v116, %v130
  %v145 = vmax.f32 %v117, %v131
  %v146 = vmax.f32 %v118, %v132
  %v147 = vmax.f32 %v119, %v133
  %v148 = vmax.f32 %v120, %v134
  %v149 = vmax.f32 %v121, %v135
  %v150 = vmax.f32 %v122, %v136
  %v151 = vmax.f32 %v123, %v137
  %v152 = vmax.f32 %v124, %v138
  %v153 = vmax.f32 %v125, %v139
  %v154 = vmax.f32 %v126, %v140
  %v155 = vmax.f32 %v127, %v141
  %v156 = vmax.f32 %v128, %v142
  %v157 = vmax.f32 %v129, %v143
  %v158 = vld [vmem:[%s6] sm:$0xff]
  %v159 = vld [vmem:[%s6 + $0x8] sm:$0xff]
  %v160 = vld [vmem:[%s6 + $0x10] sm:$0xff]
  %v161 = vld [vmem:[%s6 + $0x18] sm:$0xff]
  %v162 = vld [vmem:[%s6 + $0x20] sm:$0xff]
  %v163 = vld [vmem:[%s6 + $0x28] sm:$0xff]
  %v164 = vld [vmem:[%s6 + $0x30] sm:$0xff]
  %v165 = vld [vmem:[%s6 + $0x38] sm:$0xff]
  %v166 = vld [vmem:[%s6 + $0x40] sm:$0xff]
  %v167 = vld [vmem:[%s6 + $0x48] sm:$0xff]
  %v168 = vld [vmem:[%s6 + $0x50] sm:$0xff]
  %v169 = vld [vmem:[%s6 + $0x58] sm:$0xff]
  %v170 = vld [vmem:[%s6 + $0x60] sm:$0xff]
  %v171 = vld [vmem:[%s6 + $0x68] sm:$0xff]
  %v172 = vld [vmem:[%s7] sm:$0xff]
  %v173 = vld [vmem:[%s7 + $0x8] sm:$0xff]
  %v174 = vld [vmem:[%s7 + $0x10] sm:$0xff]
  %v175 = vld [vmem:[%s7 + $0x18] sm:$0xff]
  %v176 = vld [vmem:[%s7 + $0x20] sm:$0xff]
  %v177 = vld [vmem:[%s7 + $0x28] sm:$0xff]
  %v178 = vld [vmem:[%s7 + $0x30] sm:$0xff]
  %v179 = vld [vmem:[%s7 + $0x38] sm:$0xff]
  %v180 = vld [vmem:[%s7 + $0x40] sm:$0xff]
  %v181 = vld [vmem:[%s7 + $0x48] sm:$0xff]
  %v182 = vld [vmem:[%s7 + $0x50] sm:$0xff]
  %v183 = vld [vmem:[%s7 + $0x58] sm:$0xff]
  %v184 = vld [vmem:[%s7 + $0x60] sm:$0xff]
  %v185 = vld [vmem:[%s7 + $0x68] sm:$0xff]
  %v186 = vmax.f32 %v158, %v172
  %v187 = vmax.f32 %v159, %v173
  %v188 = vmax.f32 %v160, %v174
  %v189 = vmax.f32 %v161, %v175
  %v190 = vmax.f32 %v162, %v176
  %v191 = vmax.f32 %v163, %v177
  %v192 = vmax.f32 %v164, %v178
  %v193 = vmax.f32 %v165, %v179
  %v194 = vmax.f32 %v166, %v180
  %v195 = vmax.f32 %v167, %v181
  %v196 = vmax.f32 %v168, %v182
  %v197 = vmax.f32 %v169, %v183
  %v198 = vmax.f32 %v170, %v184
  %v199 = vmax.f32 %v171, %v185
  %v200 = vmax.f32 %v60, %v102
  %v201 = vmax.f32 %v61, %v103
  %v202 = vmax.f32 %v62, %v104
  %v203 = vmax.f32 %v63, %v105
  %v204 = vmax.f32 %v64, %v106
  %v205 = vmax.f32 %v65, %v107
  %v206 = vmax.f32 %v66, %v108
  %v207 = vmax.f32 %v67, %v109
  %v208 = vmax.f32 %v68, %v110
  %v209 = vmax.f32 %v69, %v111
  %v210 = vmax.f32 %v70, %v112
  %v211 = vmax.f32 %v71, %v113
  %v212 = vmax.f32 %v72, %v114
  %v213 = vmax.f32 %v73, %v115
  %v214 = vmax.f32 %v144, %v186
  %v215 = vmax.f32 %v145, %v187
  %v216 = vmax.f32 %v146, %v188
  %v217 = vmax.f32 %v147, %v189
  %v218 = vmax.f32 %v148, %v190
  %v219 = vmax.f32 %v149, %v191
  %v220 = vmax.f32 %v150, %v192
  %v221 = vmax.f32 %v151, %v193
  %v222 = vmax.f32 %v152, %v194
  %v223 = vmax.f32 %v153, %v195
  %v224 = vmax.f32 %v154, %v196
  %v225 = vmax.f32 %v155, %v197
  %v226 = vmax.f32 %v156, %v198
  %v227 = vmax.f32 %v157, %v199
  %v228 = vmax.f32 %v200, %v214
  %v229 = vmax.f32 %v201, %v215
  %v230 = vmax.f32 %v202, %v216
  %v231 = vmax.f32 %v203, %v217
  %v232 = vmax.f32 %v204, %v218
  %v233 = vmax.f32 %v205, %v219
  %v234 = vmax.f32 %v206, %v220
  %v235 = vmax.f32 %v207, %v221
  %v236 = vmax.f32 %v208, %v222
  %v237 = vmax.f32 %v209, %v223
  %v238 = vmax.f32 %v210, %v224
  %v239 = vmax.f32 %v211, %v225
  %v240 = vmax.f32 %v212, %v226
  %v241 = vmax.f32 %v213, %v227
  %v242 = vld [vmem:[%s8] sm:$0xff]
  %v243 = vld [vmem:[%s8 + $0x8] sm:$0xff]
  %v244 = vld [vmem:[%s8 + $0x10] sm:$0xff]
  %v245 = vld [vmem:[%s8 + $0x18] sm:$0xff]
  %v246 = vld [vmem:[%s8 + $0x20] sm:$0xff]
  %v247 = vld [vmem:[%s8 + $0x28] sm:$0xff]
  %v248 = vld [vmem:[%s8 + $0x30] sm:$0xff]
  %v249 = vld [vmem:[%s8 + $0x38] sm:$0xff]
  %v250 = vld [vmem:[%s8 + $0x40] sm:$0xff]
  %v251 = vld [vmem:[%s8 + $0x48] sm:$0xff]
  %v252 = vld [vmem:[%s8 + $0x50] sm:$0xff]
  %v253 = vld [vmem:[%s8 + $0x58] sm:$0xff]
  %v254 = vld [vmem:[%s8 + $0x60] sm:$0xff]
  %v255 = vld [vmem:[%s8 + $0x68] sm:$0xff]
  %v256 = vmax.f32 %v228, %v242
  %v257 = vmax.f32 %v229, %v243
  %v258 = vmax.f32 %v230, %v244
  %v259 = vmax.f32 %v231, %v245
  %v260 = vmax.f32 %v232, %v246
  %v261 = vmax.f32 %v233, %v247
  %v262 = vmax.f32 %v234, %v248
  %v263 = vmax.f32 %v235, %v249
  %v264 = vmax.f32 %v236, %v250
  %v265 = vmax.f32 %v237, %v251
  %v266 = vmax.f32 %v238, %v252
  %v267 = vmax.f32 %v239, %v253
  %v268 = vmax.f32 %v240, %v254
  %v269 = vmax.f32 %v241, %v255
  %270 = vst [vmem:[%s9] sm:$0xff] %v256
  %271 = vst [vmem:[%s9 + $0x8] sm:$0xff] %v257
  %272 = vst [vmem:[%s9 + $0x10] sm:$0xff] %v258
  %273 = vst [vmem:[%s9 + $0x18] sm:$0xff] %v259
  %274 = vst [vmem:[%s9 + $0x20] sm:$0xff] %v260
  %275 = vst [vmem:[%s9 + $0x28] sm:$0xff] %v261
  %276 = vst [vmem:[%s9 + $0x30] sm:$0xff] %v262
  %277 = vst [vmem:[%s9 + $0x38] sm:$0xff] %v263
  %278 = vst [vmem:[%s9 + $0x40] sm:$0xff] %v264
  %279 = vst [vmem:[%s9 + $0x48] sm:$0xff] %v265
  %280 = vst [vmem:[%s9 + $0x50] sm:$0xff] %v266
  %281 = vst [vmem:[%s9 + $0x58] sm:$0xff] %v267
  %282 = vst [vmem:[%s9 + $0x60] sm:$0xff] %v268
  %283 = vst [vmem:[%s9 + $0x68] sm:$0xff] %v269
  // Predicated region
  $region38: #{resnet_forward.10} parent=0 // pred_check
    _
  $region39: #{resnet_forward.10} parent=0 // pred_check_branch
    %285 = sbr.rel (0) target = $region41
  $region40: #{resnet_forward.10} parent=0 // pred_region
    _
  $region41: #{resnet_forward.10} parent=0 // pred_fallthru
    _
  // Predicated region
  $region42: #{resnet_forward.10} parent=0 // pred_check
    _
  $region43: #{resnet_forward.10} parent=0 // pred_check_branch
    %287 = sbr.rel (0) target = $region45
  $region44: #{resnet_forward.10} parent=0 // pred_region
    _
  $region45: #{resnet_forward.10} parent=0 // pred_fallthru
    _

// kernel: resnet_forward.11
$region0: #{resnet_forward.11}
  #allocation0 [shape = 'u32[]', space=smem, size = 0x4, offset = 0x4, fixed_abs, tag = 'smem constant byte address 0x4 - core index']
  #allocation1 [shape = 'u32[144,128]{1,0:T(1,128)}', space=vmem, size = 0x12000, scoped, tag = 'internal scratch']
  %s0 = inlined_call_operand.vmem [shape: bf16[112,128], index: 0, kind: input, shape index: {}]
  %s1 = inlined_call_operand.vmem [shape: bf16[128,384], index: 1, kind: input, shape index: {}]
  %s2 = inlined_call_operand.vmem [shape: f32[112,128], index: 2, kind: output, shape index: {0}]
  %s3 = inlined_call_operand.vmem [shape: f32[112,256], index: 3, kind: output, shape index: {1}]
  %4 = xla_tuple %s2, %s3
  %s5 = sld [smem:[#allocation0]]
  $region26: #{resnet_forward.11} parent=0
    _
  %s7 = ssub.s32 1, %s5
  %s8 = scalar_select 0, %s7, %s5
  // Predicated region
  $region2: #{resnet_forward.11} parent=0 // pred_check
    _
  $region3: #{resnet_forward.11} parent=0 // pred_check_branch
    %10 = sbr.rel (0) target = $region5
  $region4: #{resnet_forward.11} parent=0 // pred_region
    _
  $region5: #{resnet_forward.11} parent=0 // pred_fallthru
    _
  // Predicated region
  $region6: #{resnet_forward.11} parent=0 // pred_check
    _
  $region7: #{resnet_forward.11} parent=0 // pred_check_branch
    %12 = sbr.rel (0) target = $region9
  $region8: #{resnet_forward.11} parent=0 // pred_region
    _
  $region9: #{resnet_forward.11} parent=0 // pred_fallthru
    _
  %v14 = vld [vmem:[%s0] sm:$0xf]
  %v15 = vld [vmem:[%s0 + $0x4] sm:$0xf]
  %v16 = vld [vmem:[%s0 + $0x8] sm:$0xf]
  %v17 = vld [vmem:[%s0 + $0xc] sm:$0xf]
  %v18 = vld [vmem:[%s0 + $0x10] sm:$0xf]
  %v19 = vld [vmem:[%s0 + $0x14] sm:$0xf]
  %v20 = vld [vmem:[%s0 + $0x18] sm:$0xf]
  %v21 = vld [vmem:[%s0 + $0x1c] sm:$0xf]
  %v22 = vld [vmem:[%s0 + $0x20] sm:$0xf]
  %v23 = vld [vmem:[%s0 + $0x24] sm:$0xf]
  %v24 = vld [vmem:[%s0 + $0x28] sm:$0xf]
  %v25 = vld [vmem:[%s0 + $0x2c] sm:$0xf]
  %v26 = vld [vmem:[%s0 + $0x30] sm:$0xf]
  %v27 = vld [vmem:[%s0 + $0x34] sm:$0xf]
  %v28 = vld [vmem:[%s1] sm:$0xff]
  %v29 = vld [vmem:[%s1 + $0x8] sm:$0xf]
  %v30 = vld [vmem:[%s1 + $0xc] sm:$0xff]
  %v31 = vld [vmem:[%s1 + $0x14] sm:$0xf]
  %v32 = vld [vmem:[%s1 + $0x18] sm:$0xff]
  %v33 = vld [vmem:[%s1 + $0x20] sm:$0xf]
  %v34 = vld [vmem:[%s1 + $0x24] sm:$0xff]
  %v35 = vld [vmem:[%s1 + $0x2c] sm:$0xf]
  %v36 = vld [vmem:[%s1 + $0x30] sm:$0xff]
  %v37 = vld [vmem:[%s1 + $0x38] sm:$0xf]
  %v38 = vld [vmem:[%s1 + $0x3c] sm:$0xff]
  %v39 = vld [vmem:[%s1 + $0x44] sm:$0xf]
  %v40 = vld [vmem:[%s1 + $0x48] sm:$0xff]
  %v41 = vld [vmem:[%s1 + $0x50] sm:$0xf]
  %v42 = vld [vmem:[%s1 + $0x54] sm:$0xff]
  %v43 = vld [vmem:[%s1 + $0x5c] sm:$0xf]
  %v44 = vld [vmem:[%s1 + $0x60] sm:$0xff]
  %v45 = vld [vmem:[%s1 + $0x68] sm:$0xf]
  %v46 = vld [vmem:[%s1 + $0x6c] sm:$0xff]
  %v47 = vld [vmem:[%s1 + $0x74] sm:$0xf]
  %v48 = vld [vmem:[%s1 + $0x78] sm:$0xff]
  %v49 = vld [vmem:[%s1 + $0x80] sm:$0xf]
  %v50 = vld [vmem:[%s1 + $0x84] sm:$0xff]
  %v51 = vld [vmem:[%s1 + $0x8c] sm:$0xf]
  %v52 = vld [vmem:[%s1 + $0x90] sm:$0xff]
  %v53 = vld [vmem:[%s1 + $0x98] sm:$0xf]
  %v54 = vld [vmem:[%s1 + $0x9c] sm:$0xff]
  %v55 = vld [vmem:[%s1 + $0xa4] sm:$0xf]
  %v56 = vld [vmem:[%s1 + $0xa8] sm:$0xff]
  %v57 = vld [vmem:[%s1 + $0xb0] sm:$0xf]
  %v58 = vld [vmem:[%s1 + $0xb4] sm:$0xff]
  %v59 = vld [vmem:[%s1 + $0xbc] sm:$0xf]
  %v74 = vunpack.c.l.b16 %v14
  %v75 = vunpack.c.l.b16 %v15
  %v76 = vunpack.c.l.b16 %v16
  %v77 = vunpack.c.l.b16 %v17
  %v78 = vunpack.c.l.b16 %v18
  %v79 = vunpack.c.l.b16 %v19
  %v80 = vunpack.c.l.b16 %v20
  %v81 = vunpack.c.l.b16 %v21
  %v82 = vunpack.c.l.b16 %v22
  %v83 = vunpack.c.l.b16 %v23
  %v84 = vunpack.c.l.b16 %v24
  %v85 = vunpack.c.l.b16 %v25
  %v86 = vunpack.c.l.b16 %v26
  %v87 = vunpack.c.l.b16 %v27
  %v88 = vpack.c.b16 %v75, %v74
  %v89 = vpack.c.b16 %v77, %v76
  %v90 = vpack.c.b16 %v79, %v78
  %v91 = vpack.c.b16 %v81, %v80
  %v92 = vpack.c.b16 %v83, %v82
  %v93 = vpack.c.b16 %v85, %v84
  %v94 = vpack.c.b16 %v87, %v86
  %v134 = vunpack.c.l.b16 %v28
  %v135 = vunpack.c.h.b16 %v28
  %v136 = vunpack.c.l.b16 %v29
  %v137 = vunpack.c.l.b16 %v30
  %v138 = vunpack.c.h.b16 %v30
  %v139 = vunpack.c.l.b16 %v31
  %v140 = vunpack.c.l.b16 %v32
  %v141 = vunpack.c.h.b16 %v32
  %v142 = vunpack.c.l.b16 %v33
  %v143 = vunpack.c.l.b16 %v34
  %v144 = vunpack.c.h.b16 %v34
  %v145 = vunpack.c.l.b16 %v35
  %v146 = vunpack.c.l.b16 %v36
  %v147 = vunpack.c.h.b16 %v36
  %v148 = vunpack.c.l.b16 %v37
  %v149 = vunpack.c.l.b16 %v38
  %v150 = vunpack.c.h.b16 %v38
  %v151 = vunpack.c.l.b16 %v39
  %v152 = vunpack.c.l.b16 %v40
  %v153 = vunpack.c.h.b16 %v40
  %v154 = vunpack.c.l.b16 %v41
  %v155 = vunpack.c.l.b16 %v42
  %v156 = vunpack.c.h.b16 %v42
  %v157 = vunpack.c.l.b16 %v43
  %v158 = vunpack.c.l.b16 %v44
  %v159 = vunpack.c.h.b16 %v44
  %v160 = vunpack.c.l.b16 %v45
  %v161 = vunpack.c.l.b16 %v46
  %v162 = vunpack.c.h.b16 %v46
  %v163 = vunpack.c.l.b16 %v47
  %v164 = vunpack.c.l.b16 %v48
  %v165 = vunpack.c.h.b16 %v48
  %v166 = vunpack.c.l.b16 %v49
  %v167 = vunpack.c.l.b16 %v50
  %v168 = vunpack.c.h.b16 %v50
  %v169 = vunpack.c.l.b16 %v51
  %v170 = vunpack.c.l.b16 %v52
  %v171 = vunpack.c.h.b16 %v52
  %v172 = vunpack.c.l.b16 %v53
  %v173 = vunpack.c.l.b16 %v54
  %v174 = vunpack.c.h.b16 %v54
  %v175 = vunpack.c.l.b16 %v55
  %v176 = vunpack.c.l.b16 %v56
  %v177 = vunpack.c.h.b16 %v56
  %v178 = vunpack.c.l.b16 %v57
  %v179 = vunpack.c.l.b16 %v58
  %v180 = vunpack.c.h.b16 %v58
  %v181 = vunpack.c.l.b16 %v59
  %v182 = vpack.c.b16 %v137, %v134
  %v183 = vpack.c.b16 %v138, %v135
  %v184 = vpack.c.b16 %v139, %v136
  %v185 = vpack.c.b16 %v143, %v140
  %v186 = vpack.c.b16 %v144, %v141
  %v187 = vpack.c.b16 %v145, %v142
  %v188 = vpack.c.b16 %v149, %v146
  %v189 = vpack.c.b16 %v150, %v147
  %v190 = vpack.c.b16 %v151, %v148
  %v191 = vpack.c.b16 %v155, %v152
  %v192 = vpack.c.b16 %v156, %v153
  %v193 = vpack.c.b16 %v157, %v154
  %v194 = vpack.c.b16 %v161, %v158
  %v195 = vpack.c.b16 %v162, %v159
  %v196 = vpack.c.b16 %v163, %v160
  %v197 = vpack.c.b16 %v167, %v164
  %v198 = vpack.c.b16 %v168, %v165
  %v199 = vpack.c.b16 %v169, %v166
  %v200 = vpack.c.b16 %v173, %v170
  %v201 = vpack.c.b16 %v174, %v171
  %v202 = vpack.c.b16 %v175, %v172
  %v203 = vpack.c.b16 %v179, %v176
  %v204 = vpack.c.b16 %v180, %v177
  %v205 = vpack.c.b16 %v181, %v178
  %230 = vmatprep.subr.bf16.mxu0 %v183
  %231 = vmatpush1.bf16.msra.mxu0 %v182
  %232 = vmatprep.subr.bf16.mxu0 %v186
  %233 = vmatpush1.bf16.msra.mxu0 %v185
  %234 = vmatprep.subr.bf16.mxu0 %v189
  %235 = vmatpush1.bf16.msra.mxu0 %v188
  %236 = vmatprep.subr.bf16.mxu0 %v192
  %237 = vmatpush1.bf16.msra.mxu0 %v191
  %238 = vmatprep.subr.bf16.mxu0 %v195
  %239 = vmatpush1.bf16.msra.mxu0 %v194
  %240 = vmatprep.subr.bf16.mxu0 %v198
  %241 = vmatpush1.bf16.msra.mxu0 %v197
  %242 = vmatprep.subr.bf16.mxu0 %v201
  %243 = vmatpush1.bf16.msra.mxu0 %v200
  %244 = vmatprep.subr.bf16.mxu0 %v204
  %245 = vmatpush1.bf16.msra.mxu0 %v203
  %246 = vmatprep.subr.bf16.mxu0 0
  %247 = vmatpush1.bf16.msra.mxu0 0
  %248 = vmatprep.subr.bf16.mxu0 0
  %249 = vmatpush1.bf16.msra.mxu0 0
  %250 = vmatprep.subr.bf16.mxu0 0
  %251 = vmatpush1.bf16.msra.mxu0 0
  %252 = vmatprep.subr.bf16.mxu0 0
  %253 = vmatpush1.bf16.msra.mxu0 0
  %254 = vmatprep.subr.bf16.mxu0 0
  %255 = vmatpush1.bf16.msra.mxu0 0
  %256 = vmatprep.subr.bf16.mxu0 0
  %257 = vmatpush1.bf16.msra.mxu0 0
  %258 = vmatprep.subr.bf16.mxu0 0
  %259 = vmatpush1.bf16.msra.mxu0 0
  %260 = vmatprep.subr.bf16.mxu0 0
  %261 = vmatpush1.bf16.msra.mxu0 0
  %262 = vmatprep.mubr.bf16.mxu0 0
  %263 = vmatmul.mubr.bf16.gmra.mrb[0].mxu0 %v88
  %v264 = vpop.f32.mrb[0].mxu0
  %v265 = vadd.f32 0.0, %v264
  %v266 = vpop.f32.mrb[0].mxu0
  %v267 = vadd.f32 0.0, %v266
  %v268 = vpop.f32.mrb[0].mxu0
  %v269 = vadd.f32 0.0, %v268
  %v270 = vpop.f32.mrb[0].mxu0
  %v271 = vadd.f32 0.0, %v270
  %272 = vmatprep.mubr.bf16.mxu0 0
  %273 = vmatmul.mubr.bf16.gmra.mrb[0].mxu0 %v89
  %v274 = vpop.f32.mrb[0].mxu0
  %v275 = vadd.f32 0.0, %v274
  %v276 = vpop.f32.mrb[0].mxu0
  %v277 = vadd.f32 0.0, %v276
  %v278 = vpop.f32.mrb[0].mxu0
  %v279 = vadd.f32 0.0, %v278
  %v280 = vpop.f32.mrb[0].mxu0
  %v281 = vadd.f32 0.0, %v280
  %282 = vmatprep.mubr.bf16.mxu0 0
  %283 = vmatmul.mubr.bf16.gmra.mrb[0].mxu0 %v90
  %v284 = vpop.f32.mrb[0].mxu0
  %v285 = vadd.f32 0.0, %v284
  %v286 = vpop.f32.mrb[0].mxu0
  %v287 = vadd.f32 0.0, %v286
  %v288 = vpop.f32.mrb[0].mxu0
  %v289 = vadd.f32 0.0, %v288
  %v290 = vpop.f32.mrb[0].mxu0
  %v291 = vadd.f32 0.0, %v290
  %292 = vmatprep.mubr.bf16.mxu0 0
  %293 = vmatmul.mubr.bf16.gmra.mrb[0].mxu0 %v91
  %v294 = vpop.f32.mrb[0].mxu0
  %v295 = vadd.f32 0.0, %v294
  %v296 = vpop.f32.mrb[0].mxu0
  %v297 = vadd.f32 0.0, %v296
  %v298 = vpop.f32.mrb[0].mxu0
  %v299 = vadd.f32 0.0, %v298
  %v300 = vpop.f32.mrb[0].mxu0
  %v301 = vadd.f32 0.0, %v300
  %302 = vmatprep.mubr.bf16.mxu0 0
  %303 = vmatmul.mubr.bf16.gmra.mrb[0].mxu0 %v92
  %v304 = vpop.f32.mrb[0].mxu0
  %v305 = vadd.f32 0.0, %v304
  %v306 = vpop.f32.mrb[0].mxu0
  %v307 = vadd.f32 0.0, %v306
  %v308 = vpop.f32.mrb[0].mxu0
  %v309 = vadd.f32 0.0, %v308
  %v310 = vpop.f32.mrb[0].mxu0
  %v311 = vadd.f32 0.0, %v310
  %312 = vmatprep.mubr.bf16.mxu0 0
  %313 = vmatmul.mubr.bf16.gmra.mrb[0].mxu0 %v93
  %v314 = vpop.f32.mrb[0].mxu0
  %v315 = vadd.f32 0.0, %v314
  %v316 = vpop.f32.mrb[0].mxu0
  %v317 = vadd.f32 0.0, %v316
  %v318 = vpop.f32.mrb[0].mxu0
  %v319 = vadd.f32 0.0, %v318
  %v320 = vpop.f32.mrb[0].mxu0
  %v321 = vadd.f32 0.0, %v320
  %322 = vmatprep.mubr.bf16.mxu0 0
  %323 = vmatmul.mubr.bf16.gmra.mrb[0].mxu0 %v94
  %v324 = vpop.f32.mrb[0].mxu0
  %v325 = vadd.f32 0.0, %v324
  %v326 = vpop.f32.mrb[0].mxu0
  %v327 = vadd.f32 0.0, %v326
  %v328 = vpop.f32.mrb[0].mxu0
  %v329 = vadd.f32 0.0, %v328
  %v330 = vpop.f32.mrb[0].mxu0
  %v331 = vadd.f32 0.0, %v330
  %332 = vdwg.mxu0
  %333 = vmatprep.subr.bf16.mxu0 0
  %334 = vmatpush1.bf16.msra.mxu0 %v184
  %335 = vmatprep.subr.bf16.mxu0 0
  %336 = vmatpush1.bf16.msra.mxu0 %v187
  %337 = vmatprep.subr.bf16.mxu0 0
  %338 = vmatpush1.bf16.msra.mxu0 %v190
  %339 = vmatprep.subr.bf16.mxu0 0
  %340 = vmatpush1.bf16.msra.mxu0 %v193
  %341 = vmatprep.subr.bf16.mxu0 0
  %342 = vmatpush1.bf16.msra.mxu0 %v196
  %343 = vmatprep.subr.bf16.mxu0 0
  %344 = vmatpush1.bf16.msra.mxu0 %v199
  %345 = vmatprep.subr.bf16.mxu0 0
  %346 = vmatpush1.bf16.msra.mxu0 %v202
  %347 = vmatprep.subr.bf16.mxu0 0
  %348 = vmatpush1.bf16.msra.mxu0 %v205
  %349 = vmatprep.subr.bf16.mxu0 0
  %350 = vmatpush1.bf16.msra.mxu0 0
  %351 = vmatprep.subr.bf16.mxu0 0
  %352 = vmatpush1.bf16.msra.mxu0 0
  %353 = vmatprep.subr.bf16.mxu0 0
  %354 = vmatpush1.bf16.msra.mxu0 0
  %355 = vmatprep.subr.bf16.mxu0 0
  %356 = vmatpush1.bf16.msra.mxu0 0
  %357 = vmatprep.subr.bf16.mxu0 0
  %358 = vmatpush1.bf16.msra.mxu0 0
  %359 = vmatprep.subr.bf16.mxu0 0
  %360 = vmatpush1.bf16.msra.mxu0 0
  %361 = vmatprep.subr.bf16.mxu0 0
  %362 = vmatpush1.bf16.msra.mxu0 0
  %363 = vmatprep.subr.bf16.mxu0 0
  %364 = vmatpush1.bf16.msra.mxu0 0
  %365 = vmatprep.mubr.bf16.mxu0 0
  %366 = vmatmul.mubr.bf16.gmra.mrb[0].mxu0 %v88
  %v367 = vpop.f32.mrb[0].mxu0
  %v368 = vadd.f32 0.0, %v367
  %v369 = vpop.f32.mrb[0].mxu0
  %v370 = vpop.f32.mrb[0].mxu0
  %v371 = vadd.f32 0.0, %v370
  %v372 = vpop.f32.mrb[0].mxu0
  %373 = vmatprep.mubr.bf16.mxu0 0
  %374 = vmatmul.mubr.bf16.gmra.mrb[0].mxu0 %v89
  %v375 = vpop.f32.mrb[0].mxu0
  %v376 = vadd.f32 0.0, %v375
  %v377 = vpop.f32.mrb[0].mxu0
  %v378 = vpop.f32.mrb[0].mxu0
  %v379 = vadd.f32 0.0, %v378
  %v380 = vpop.f32.mrb[0].mxu0
  %381 = vmatprep.mubr.bf16.mxu0 0
  %382 = vmatmul.mubr.bf16.gmra.mrb[0].mxu0 %v90
  %v383 = vpop.f32.mrb[0].mxu0
  %v384 = vadd.f32 0.0, %v383
  %v385 = vpop.f32.mrb[0].mxu0
  %v386 = vpop.f32.mrb[0].mxu0
  %v387 = vadd.f32 0.0, %v386
  %v388 = vpop.f32.mrb[0].mxu0
  %389 = vmatprep.mubr.bf16.mxu0 0
  %390 = vmatmul.mubr.bf16.gmra.mrb[0].mxu0 %v91
  %v391 = vpop.f32.mrb[0].mxu0
  %v392 = vadd.f32 0.0, %v391
  %v393 = vpop.f32.mrb[0].mxu0
  %v394 = vpop.f32.mrb[0].mxu0
  %v395 = vadd.f32 0.0, %v394
  %v396 = vpop.f32.mrb[0].mxu0
  %397 = vmatprep.mubr.bf16.mxu0 0
  %398 = vmatmul.mubr.bf16.gmra.mrb[0].mxu0 %v92
  %v399 = vpop.f32.mrb[0].mxu0
  %v400 = vadd.f32 0.0, %v399
  %v401 = vpop.f32.mrb[0].mxu0
  %v402 = vpop.f32.mrb[0].mxu0
  %v403 = vadd.f32 0.0, %v402
  %v404 = vpop.f32.mrb[0].mxu0
  %405 = vmatprep.mubr.bf16.mxu0 0
  %406 = vmatmul.mubr.bf16.gmra.mrb[0].mxu0 %v93
  %v407 = vpop.f32.mrb[0].mxu0
  %v408 = vadd.f32 0.0, %v407
  %v409 = vpop.f32.mrb[0].mxu0
  %v410 = vpop.f32.mrb[0].mxu0
  %v411 = vadd.f32 0.0, %v410
  %v412 = vpop.f32.mrb[0].mxu0
  %413 = vmatprep.mubr.bf16.mxu0 0
  %414 = vmatmul.mubr.bf16.gmra.mrb[0].mxu0 %v94
  %v415 = vpop.f32.mrb[0].mxu0
  %v416 = vadd.f32 0.0, %v415
  %v417 = vpop.f32.mrb[0].mxu0
  %v418 = vpop.f32.mrb[0].mxu0
  %v419 = vadd.f32 0.0, %v418
  %v420 = vpop.f32.mrb[0].mxu0
  %421 = vdwg.mxu0
  %v422 = vadd.f32 %v265, %v269
  %v423 = vadd.f32 %v422, %v275
  %v424 = vadd.f32 %v423, %v279
  %v425 = vadd.f32 %v424, %v285
  %v426 = vadd.f32 %v425, %v289
  %v427 = vadd.f32 %v426, %v295
  %v428 = vadd.f32 %v427, %v299
  %v429 = vadd.f32 %v428, %v305
  %v430 = vadd.f32 %v429, %v309
  %v431 = vadd.f32 %v430, %v315
  %v432 = vadd.f32 %v431, %v319
  %v433 = vadd.f32 %v432, %v325
  %v434 = vadd.f32 %v433, %v329
  %v435 = vrot.slane %v434, 4
  %v436 = vadd.f32 %v434, %v435
  %v437 = vrot.slane %v436, 2
  %v438 = vadd.f32 %v436, %v437
  %v439 = vrot.slane %v438, 1
  %v440 = vadd.f32 %v438, %v439
  %v441 = vmul.f32 %v440, 0.010204081
  %v442 = vlaneseq
  %v443 = vshrl.u32 %v442, 7
  %v444 = vadd.s32 %v443, 8
  %v445 = vadd.s32 %v443, 16
  %v446 = vadd.s32 %v443, 24
  %v447 = vadd.s32 %v443, 32
  %v448 = vadd.s32 %v443, 40
  %v449 = vadd.s32 %v443, 48
  %v450 = vadd.s32 %v443, 56
  %v451 = vadd.s32 %v443, 64
  %v452 = vadd.s32 %v443, 72
  %v453 = vadd.s32 %v443, 80
  %v454 = vadd.s32 %v443, 88
  %v455 = vadd.s32 %v443, 96
  %v456 = vadd.s32 %v443, 104
  %vm457 = vcmp.lt.s32.totalorder %v443, 98
  %vm458 = vcmp.lt.s32.totalorder %v444, 98
  %vm459 = vcmp.lt.s32.totalorder %v445, 98
  %vm460 = vcmp.lt.s32.totalorder %v446, 98
  %vm461 = vcmp.lt.s32.totalorder %v447, 98
  %vm462 = vcmp.lt.s32.totalorder %v448, 98
  %vm463 = vcmp.lt.s32.totalorder %v449, 98
  %vm464 = vcmp.lt.s32.totalorder %v450, 98
  %vm465 = vcmp.lt.s32.totalorder %v451, 98
  %vm466 = vcmp.lt.s32.totalorder %v452, 98
  %vm467 = vcmp.lt.s32.totalorder %v453, 98
  %vm468 = vcmp.lt.s32.totalorder %v454, 98
  %vm469 = vcmp.lt.s32.totalorder %v455, 98
  %vm470 = vcmp.lt.s32.totalorder %v456, 98
  %v471 = vsub.f32 %v265, %v441
  %v472 = vsub.f32 %v269, %v441
  %v473 = vsub.f32 %v275, %v441
  %v474 = vsub.f32 %v279, %v441
  %v475 = vsub.f32 %v285, %v441
  %v476 = vsub.f32 %v289, %v441
  %v477 = vsub.f32 %v295, %v441
  %v478 = vsub.f32 %v299, %v441
  %v479 = vsub.f32 %v305, %v441
  %v480 = vsub.f32 %v309, %v441
  %v481 = vsub.f32 %v315, %v441
  %v482 = vsub.f32 %v319, %v441
  %v483 = vsub.f32 %v325, %v441
  %v484 = vsub.f32 %v329, %v441
  %v485 = vsel %vm457, 1, 0
  %v486 = vsel %vm458, 1, 0
  %v487 = vsel %vm459, 1, 0
  %v488 = vsel %vm460, 1, 0
  %v489 = vsel %vm461, 1, 0
  %v490 = vsel %vm462, 1, 0
  %v491 = vsel %vm463, 1, 0
  %v492 = vsel %vm464, 1, 0
  %v493 = vsel %vm465, 1, 0
  %v494 = vsel %vm466, 1, 0
  %v495 = vsel %vm467, 1, 0
  %v496 = vsel %vm468, 1, 0
  %v497 = vsel %vm469, 1, 0
  %v498 = vsel %vm470, 1, 0
  %vm499 = vcmp.eq.s32.totalorder %v485, 1
  %vm500 = vcmp.eq.s32.totalorder %v486, 1
  %vm501 = vcmp.eq.s32.totalorder %v487, 1
  %vm502 = vcmp.eq.s32.totalorder %v488, 1
  %vm503 = vcmp.eq.s32.totalorder %v489, 1
  %vm504 = vcmp.eq.s32.totalorder %v490, 1
  %vm505 = vcmp.eq.s32.totalorder %v491, 1
  %vm506 = vcmp.eq.s32.totalorder %v492, 1
  %vm507 = vcmp.eq.s32.totalorder %v493, 1
  %vm508 = vcmp.eq.s32.totalorder %v494, 1
  %vm509 = vcmp.eq.s32.totalorder %v495, 1
  %vm510 = vcmp.eq.s32.totalorder %v496, 1
  %vm511 = vcmp.eq.s32.totalorder %v497, 1
  %vm512 = vcmp.eq.s32.totalorder %v498, 1
  %v513 = vsel %vm499, %v471, 0.0
  %v514 = vsel %vm500, %v472, 0.0
  %v515 = vsel %vm501, %v473, 0.0
  %v516 = vsel %vm502, %v474, 0.0
  %v517 = vsel %vm503, %v475, 0.0
  %v518 = vsel %vm504, %v476, 0.0
  %v519 = vsel %vm505, %v477, 0.0
  %v520 = vsel %vm506, %v478, 0.0
  %v521 = vsel %vm507, %v479, 0.0
  %v522 = vsel %vm508, %v480, 0.0
  %v523 = vsel %vm509, %v481, 0.0
  %v524 = vsel %vm510, %v482, 0.0
  %v525 = vsel %vm511, %v483, 0.0
  %v526 = vsel %vm512, %v484, 0.0
  %v527 = vmul.f32 %v513, %v513
  %v528 = vmul.f32 %v514, %v514
  %v529 = vmul.f32 %v515, %v515
  %v530 = vmul.f32 %v516, %v516
  %v531 = vmul.f32 %v517, %v517
  %v532 = vmul.f32 %v518, %v518
  %v533 = vmul.f32 %v519, %v519
  %v534 = vmul.f32 %v520, %v520
  %v535 = vmul.f32 %v521, %v521
  %v536 = vmul.f32 %v522, %v522
  %v537 = vmul.f32 %v523, %v523
  %v538 = vmul.f32 %v524, %v524
  %v539 = vmul.f32 %v525, %v525
  %v540 = vmul.f32 %v526, %v526
  %v541 = vadd.f32 %v527, %v528
  %v542 = vadd.f32 %v541, %v529
  %v543 = vadd.f32 %v542, %v530
  %v544 = vadd.f32 %v543, %v531
  %v545 = vadd.f32 %v544, %v532
  %v546 = vadd.f32 %v545, %v533
  %v547 = vadd.f32 %v546, %v534
  %v548 = vadd.f32 %v547, %v535
  %v549 = vadd.f32 %v548, %v536
  %v550 = vadd.f32 %v549, %v537
  %v551 = vadd.f32 %v550, %v538
  %v552 = vadd.f32 %v551, %v539
  %v553 = vadd.f32 %v552, %v540
  %v554 = vrot.slane %v553, 4
  %v555 = vadd.f32 %v553, %v554
  %v556 = vrot.slane %v555, 2
  %v557 = vadd.f32 %v555, %v556
  %v558 = vrot.slane %v557, 1
  %v559 = vadd.f32 %v557, %v558
  %v560 = vmul.f32 %v559, 0.010204081
  %v561 = vadd.f32 %v560, 1e-05
  %v562 = vrsqrt.pop %v561
  %v563 = vmul.f32 %v513, %v562
  %v564 = vmul.f32 %v514, %v562
  %v565 = vmul.f32 %v515, %v562
  %v566 = vmul.f32 %v516, %v562
  %v567 = vmul.f32 %v517, %v562
  %v568 = vmul.f32 %v518, %v562
  %v569 = vmul.f32 %v519, %v562
  %v570 = vmul.f32 %v520, %v562
  %v571 = vmul.f32 %v521, %v562
  %v572 = vmul.f32 %v522, %v562
  %v573 = vmul.f32 %v523, %v562
  %v574 = vmul.f32 %v524, %v562
  %v575 = vmul.f32 %v525, %v562
  %v576 = vmul.f32 %v526, %v562
  %v577 = vmax.f32 %v563, 0.0
  %v578 = vmax.f32 %v564, 0.0
  %v579 = vmax.f32 %v565, 0.0
  %v580 = vmax.f32 %v566, 0.0
  %v581 = vmax.f32 %v567, 0.0
  %v582 = vmax.f32 %v568, 0.0
  %v583 = vmax.f32 %v569, 0.0
  %v584 = vmax.f32 %v570, 0.0
  %v585 = vmax.f32 %v571, 0.0
  %v586 = vmax.f32 %v572, 0.0
  %v587 = vmax.f32 %v573, 0.0
  %v588 = vmax.f32 %v574, 0.0
  %v589 = vmax.f32 %v575, 0.0
  %v590 = vmax.f32 %v576, 0.0
  %591 = vst [vmem:[%s2] sm:$0xff] %v577
  %592 = vst [vmem:[%s2 + $0x8] sm:$0xff] %v578
  %593 = vst [vmem:[%s2 + $0x10] sm:$0xff] %v579
  %594 = vst [vmem:[%s2 + $0x18] sm:$0xff] %v580
  %595 = vst [vmem:[%s2 + $0x20] sm:$0xff] %v581
  %596 = vst [vmem:[%s2 + $0x28] sm:$0xff] %v582
  %597 = vst [vmem:[%s2 + $0x30] sm:$0xff] %v583
  %598 = vst [vmem:[%s2 + $0x38] sm:$0xff] %v584
  %599 = vst [vmem:[%s2 + $0x40] sm:$0xff] %v585
  %600 = vst [vmem:[%s2 + $0x48] sm:$0xff] %v586
  %601 = vst [vmem:[%s2 + $0x50] sm:$0xff] %v587
  %602 = vst [vmem:[%s2 + $0x58] sm:$0xff] %v588
  %603 = vst [vmem:[%s2 + $0x60] sm:$0xff] %v589
  %604 = vst [vmem:[%s2 + $0x68] sm:$0xff] %v590
  %v605 = vadd.f32 %v267, %v271
  %v606 = vadd.f32 %v605, %v277
  %v607 = vadd.f32 %v606, %v281
  %v608 = vadd.f32 %v607, %v287
  %v609 = vadd.f32 %v608, %v291
  %v610 = vadd.f32 %v609, %v297
  %v611 = vadd.f32 %v610, %v301
  %v612 = vadd.f32 %v611, %v307
  %v613 = vadd.f32 %v612, %v311
  %v614 = vadd.f32 %v613, %v317
  %v615 = vadd.f32 %v614, %v321
  %v616 = vadd.f32 %v615, %v327
  %v617 = vadd.f32 %v616, %v331
  %v618 = vrot.slane %v617, 4
  %v619 = vadd.f32 %v617, %v618
  %v620 = vrot.slane %v619, 2
  %v621 = vadd.f32 %v619, %v620
  %v622 = vrot.slane %v621, 1
  %v623 = vadd.f32 %v621, %v622
  %v624 = vadd.f32 %v368, %v371
  %v625 = vadd.f32 %v624, %v376
  %v626 = vadd.f32 %v625, %v379
  %v627 = vadd.f32 %v626, %v384
  %v628 = vadd.f32 %v627, %v387
  %v629 = vadd.f32 %v628, %v392
  %v630 = vadd.f32 %v629, %v395
  %v631 = vadd.f32 %v630, %v400
  %v632 = vadd.f32 %v631, %v403
  %v633 = vadd.f32 %v632, %v408
  %v634 = vadd.f32 %v633, %v411
  %v635 = vadd.f32 %v634, %v416
  %v636 = vadd.f32 %v635, %v419
  %v637 = vrot.slane %v636, 4
  %v638 = vadd.f32 %v636, %v637
  %v639 = vrot.slane %v638, 2
  %v640 = vadd.f32 %v638, %v639
  %v641 = vrot.slane %v640, 1
  %v642 = vadd.f32 %v640, %v641
  %v643 = vmul.f32 %v623, 0.010204081
  %v644 = vmul.f32 %v642, 0.010204081
  %v645 = vsub.f32 %v267, %v643
  %v646 = vsub.f32 %v368, %v644
  %v647 = vsub.f32 %v271, %v643
  %v648 = vsub.f32 %v371, %v644
  %v649 = vsub.f32 %v277, %v643
  %v650 = vsub.f32 %v376, %v644
  %v651 = vsub.f32 %v281, %v643
  %v652 = vsub.f32 %v379, %v644
  %v653 = vsub.f32 %v287, %v643
  %v654 = vsub.f32 %v384, %v644
  %v655 = vsub.f32 %v291, %v643
  %v656 = vsub.f32 %v387, %v644
  %v657 = vsub.f32 %v297, %v643
  %v658 = vsub.f32 %v392, %v644
  %v659 = vsub.f32 %v301, %v643
  %v660 = vsub.f32 %v395, %v644
  %v661 = vsub.f32 %v307, %v643
  %v662 = vsub.f32 %v400, %v644
  %v663 = vsub.f32 %v311, %v643
  %v664 = vsub.f32 %v403, %v644
  %v665 = vsub.f32 %v317, %v643
  %v666 = vsub.f32 %v408, %v644
  %v667 = vsub.f32 %v321, %v643
  %v668 = vsub.f32 %v411, %v644
  %v669 = vsub.f32 %v327, %v643
  %v670 = vsub.f32 %v416, %v644
  %v671 = vsub.f32 %v331, %v643
  %v672 = vsub.f32 %v419, %v644
  %v673 = vsel %vm499, %v645, 0.0
  %v674 = vsel %vm499, %v646, 0.0
  %v675 = vsel %vm500, %v647, 0.0
  %v676 = vsel %vm500, %v648, 0.0
  %v677 = vsel %vm501, %v649, 0.0
  %v678 = vsel %vm501, %v650, 0.0
  %v679 = vsel %vm502, %v651, 0.0
  %v680 = vsel %vm502, %v652, 0.0
  %v681 = vsel %vm503, %v653, 0.0
  %v682 = vsel %vm503, %v654, 0.0
  %v683 = vsel %vm504, %v655, 0.0
  %v684 = vsel %vm504, %v656, 0.0
  %v685 = vsel %vm505, %v657, 0.0
  %v686 = vsel %vm505, %v658, 0.0
  %v687 = vsel %vm506, %v659, 0.0
  %v688 = vsel %vm506, %v660, 0.0
  %v689 = vsel %vm507, %v661, 0.0
  %v690 = vsel %vm507, %v662, 0.0
  %v691 = vsel %vm508, %v663, 0.0
  %v692 = vsel %vm508, %v664, 0.0
  %v693 = vsel %vm509, %v665, 0.0
  %v694 = vsel %vm509, %v666, 0.0
  %v695 = vsel %vm510, %v667, 0.0
  %v696 = vsel %vm510, %v668, 0.0
  %v697 = vsel %vm511, %v669, 0.0
  %v698 = vsel %vm511, %v670, 0.0
  %v699 = vsel %vm512, %v671, 0.0
  %v700 = vsel %vm512, %v672, 0.0
  %v701 = vmul.f32 %v673, %v673
  %v702 = vmul.f32 %v674, %v674
  %v703 = vmul.f32 %v675, %v675
  %v704 = vmul.f32 %v676, %v676
  %v705 = vmul.f32 %v677, %v677
  %v706 = vmul.f32 %v678, %v678
  %v707 = vmul.f32 %v679, %v679
  %v708 = vmul.f32 %v680, %v680
  %v709 = vmul.f32 %v681, %v681
  %v710 = vmul.f32 %v682, %v682
  %v711 = vmul.f32 %v683, %v683
  %v712 = vmul.f32 %v684, %v684
  %v713 = vmul.f32 %v685, %v685
  %v714 = vmul.f32 %v686, %v686
  %v715 = vmul.f32 %v687, %v687
  %v716 = vmul.f32 %v688, %v688
  %v717 = vmul.f32 %v689, %v689
  %v718 = vmul.f32 %v690, %v690
  %v719 = vmul.f32 %v691, %v691
  %v720 = vmul.f32 %v692, %v692
  %v721 = vmul.f32 %v693, %v693
  %v722 = vmul.f32 %v694, %v694
  %v723 = vmul.f32 %v695, %v695
  %v724 = vmul.f32 %v696, %v696
  %v725 = vmul.f32 %v697, %v697
  %v726 = vmul.f32 %v698, %v698
  %v727 = vmul.f32 %v699, %v699
  %v728 = vmul.f32 %v700, %v700
  %v729 = vadd.f32 %v701, %v703
  %v730 = vadd.f32 %v729, %v705
  %v731 = vadd.f32 %v730, %v707
  %v732 = vadd.f32 %v731, %v709
  %v733 = vadd.f32 %v732, %v711
  %v734 = vadd.f32 %v733, %v713
  %v735 = vadd.f32 %v734, %v715
  %v736 = vadd.f32 %v735, %v717
  %v737 = vadd.f32 %v736, %v719
  %v738 = vadd.f32 %v737, %v721
  %v739 = vadd.f32 %v738, %v723
  %v740 = vadd.f32 %v739, %v725
  %v741 = vadd.f32 %v740, %v727
  %v742 = vrot.slane %v741, 4
  %v743 = vadd.f32 %v741, %v742
  %v744 = vrot.slane %v743, 2
  %v745 = vadd.f32 %v743, %v744
  %v746 = vrot.slane %v745, 1
  %v747 = vadd.f32 %v745, %v746
  %v748 = vadd.f32 %v702, %v704
  %v749 = vadd.f32 %v748, %v706
  %v750 = vadd.f32 %v749, %v708
  %v751 = vadd.f32 %v750, %v710
  %v752 = vadd.f32 %v751, %v712
  %v753 = vadd.f32 %v752, %v714
  %v754 = vadd.f32 %v753, %v716
  %v755 = vadd.f32 %v754, %v718
  %v756 = vadd.f32 %v755, %v720
  %v757 = vadd.f32 %v756, %v722
  %v758 = vadd.f32 %v757, %v724
  %v759 = vadd.f32 %v758, %v726
  %v760 = vadd.f32 %v759, %v728
  %v761 = vrot.slane %v760, 4
  %v762 = vadd.f32 %v760, %v761
  %v763 = vrot.slane %v762, 2
  %v764 = vadd.f32 %v762, %v763
  %v765 = vrot.slane %v764, 1
  %v766 = vadd.f32 %v764, %v765
  %v767 = vmul.f32 %v747, 0.010204081
  %v768 = vmul.f32 %v766, 0.010204081
  %v769 = vadd.f32 %v767, 1e-05
  %v770 = vadd.f32 %v768, 1e-05
  %v771 = vrsqrt.pop %v769
  %v772 = vrsqrt.pop %v770
  %v773 = vmul.f32 %v673, %v771
  %v774 = vmul.f32 %v674, %v772
  %v775 = vmul.f32 %v675, %v771
  %v776 = vmul.f32 %v676, %v772
  %v777 = vmul.f32 %v677, %v771
  %v778 = vmul.f32 %v678, %v772
  %v779 = vmul.f32 %v679, %v771
  %v780 = vmul.f32 %v680, %v772
  %v781 = vmul.f32 %v681, %v771
  %v782 = vmul.f32 %v682, %v772
  %v783 = vmul.f32 %v683, %v771
  %v784 = vmul.f32 %v684, %v772
  %v785 = vmul.f32 %v685, %v771
  %v786 = vmul.f32 %v686, %v772
  %v787 = vmul.f32 %v687, %v771
  %v788 = vmul.f32 %v688, %v772
  %v789 = vmul.f32 %v689, %v771
  %v790 = vmul.f32 %v690, %v772
  %v791 = vmul.f32 %v691, %v771
  %v792 = vmul.f32 %v692, %v772
  %v793 = vmul.f32 %v693, %v771
  %v794 = vmul.f32 %v694, %v772
  %v795 = vmul.f32 %v695, %v771
  %v796 = vmul.f32 %v696, %v772
  %v797 = vmul.f32 %v697, %v771
  %v798 = vmul.f32 %v698, %v772
  %v799 = vmul.f32 %v699, %v771
  %v800 = vmul.f32 %v700, %v772
  %801 = vst [vmem:[%s3] sm:$0xff] %v773
  %802 = vst [vmem:[%s3 + $0x8] sm:$0xff] %v774
  %803 = vst [vmem:[%s3 + $0x10] sm:$0xff] %v775
  %804 = vst [vmem:[%s3 + $0x18] sm:$0xff] %v776
  %805 = vst [vmem:[%s3 + $0x20] sm:$0xff] %v777
  %806 = vst [vmem:[%s3 + $0x28] sm:$0xff] %v778
  %807 = vst [vmem:[%s3 + $0x30] sm:$0xff] %v779
  %808 = vst [vmem:[%s3 + $0x38] sm:$0xff] %v780
  %809 = vst [vmem:[%s3 + $0x40] sm:$0xff] %v781
  %810 = vst [vmem:[%s3 + $0x48] sm:$0xff] %v782
  %811 = vst [vmem:[%s3 + $0x50] sm:$0xff] %v783
  %812 = vst [vmem:[%s3 + $0x58] sm:$0xff] %v784
  %813 = vst [vmem:[%s3 + $0x60] sm:$0xff] %v785
  %814 = vst [vmem:[%s3 + $0x68] sm:$0xff] %v786
  %815 = vst [vmem:[%s3 + $0x70] sm:$0xff] %v787
  %816 = vst [vmem:[%s3 + $0x78] sm:$0xff] %v788
  %817 = vst [vmem:[%s3 + $0x80] sm:$0xff] %v789
  %818 = vst [vmem:[%s3 + $0x88] sm:$0xff] %v790
  %819 = vst [vmem:[%s3 + $0x90] sm:$0xff] %v791
  %820 = vst [vmem:[%s3 + $0x98] sm:$0xff] %v792
  %821 = vst [vmem:[%s3 + $0xa0] sm:$0xff] %v793
  %822 = vst [vmem:[%s3 + $0xa8] sm:$0xff] %v794
  %823 = vst [vmem:[%s3 + $0xb0] sm:$0xff] %v795
  %824 = vst [vmem:[%s3 + $0xb8] sm:$0xff] %v796
  %825 = vst [vmem:[%s3 + $0xc0] sm:$0xff] %v797
  %826 = vst [vmem:[%s3 + $0xc8] sm:$0xff] %v798
  %827 = vst [vmem:[%s3 + $0xd0] sm:$0xff] %v799
  %828 = vst [vmem:[%s3 + $0xd8] sm:$0xff] %v800
  // Predicated region
  $region10: #{resnet_forward.11} parent=0 // pred_check
    _
  $region11: #{resnet_forward.11} parent=0 // pred_check_branch
    %830 = sbr.rel (0) target = $region13
  $region12: #{resnet_forward.11} parent=0 // pred_region
    _
  $region13: #{resnet_forward.11} parent=0 // pred_fallthru
    _
  // Predicated region
  $region14: #{resnet_forward.11} parent=0 // pred_check
    _
  $region15: #{resnet_forward.11} parent=0 // pred_check_branch
    %832 = sbr.rel (0) target = $region17
  $region16: #{resnet_forward.11} parent=0 // pred_region
    _
  $region17: #{resnet_forward.11} parent=0 // pred_fallthru
    _
  // Predicated region
  $region18: #{resnet_forward.11} parent=0 // pred_check
    _
  $region19: #{resnet_forward.11} parent=0 // pred_check_branch
    %834 = sbr.rel (0) target = $region21
  $region20: #{resnet_forward.11} parent=0 // pred_region
    _
  $region21: #{resnet_forward.11} parent=0 // pred_fallthru
    _
  // Predicated region
  $region22: #{resnet_forward.11} parent=0 // pred_check
    _
  $region23: #{resnet_forward.11} parent=0 // pred_check_branch
    %836 = sbr.rel (0) target = $region25
  $region24: #{resnet_forward.11} parent=0 // pred_region
    _
  $region25: #{resnet_forward.11} parent=0 // pred_fallthru
    _

// kernel: resnet_forward.13
$region0: #{resnet_forward.13}
  #allocation0 [shape = 'u32[]', space=smem, size = 0x4, offset = 0x4, fixed_abs, tag = 'smem constant byte address 0x4 - core index']
  #allocation1 [shape = 'u32[144,128]{1,0:T(1,128)}', space=vmem, size = 0x12000, scoped, tag = 'internal scratch']
  %s0 = inlined_call_operand.vmem [shape: bf16[112,128], index: 0, kind: input, shape index: {}]
  %s1 = inlined_call_operand.vmem [shape: bf16[128,256], index: 1, kind: input, shape index: {}]
  %s2 = inlined_call_operand.vmem [shape: f32[112,256], index: 2, kind: input, shape index: {}]
  %s3 = inlined_call_operand.vmem [shape: f32[112,256], index: 3, kind: output, shape index: {}]
  %s4 = sld [smem:[#allocation0]]
  $region22: #{resnet_forward.13} parent=0
    _
  %s6 = ssub.s32 1, %s4
  %s7 = scalar_select 0, %s6, %s4
  // Predicated region
  $region2: #{resnet_forward.13} parent=0 // pred_check
    _
  $region3: #{resnet_forward.13} parent=0 // pred_check_branch
    %9 = sbr.rel (0) target = $region5
  $region4: #{resnet_forward.13} parent=0 // pred_region
    _
  $region5: #{resnet_forward.13} parent=0 // pred_fallthru
    _
  // Predicated region
  $region6: #{resnet_forward.13} parent=0 // pred_check
    _
  $region7: #{resnet_forward.13} parent=0 // pred_check_branch
    %11 = sbr.rel (0) target = $region9
  $region8: #{resnet_forward.13} parent=0 // pred_region
    _
  $region9: #{resnet_forward.13} parent=0 // pred_fallthru
    _
  // Predicated region
  $region10: #{resnet_forward.13} parent=0 // pred_check
    _
  $region11: #{resnet_forward.13} parent=0 // pred_check_branch
    %13 = sbr.rel (0) target = $region13
  $region12: #{resnet_forward.13} parent=0 // pred_region
    _
  $region13: #{resnet_forward.13} parent=0 // pred_fallthru
    _
  %v15 = vld [vmem:[%s0] sm:$0xf]
  %v16 = vld [vmem:[%s0 + $0x4] sm:$0xf]
  %v17 = vld [vmem:[%s0 + $0x8] sm:$0xf]
  %v18 = vld [vmem:[%s0 + $0xc] sm:$0xf]
  %v19 = vld [vmem:[%s0 + $0x10] sm:$0xf]
  %v20 = vld [vmem:[%s0 + $0x14] sm:$0xf]
  %v21 = vld [vmem:[%s0 + $0x18] sm:$0xf]
  %v22 = vld [vmem:[%s0 + $0x1c] sm:$0xf]
  %v23 = vld [vmem:[%s0 + $0x20] sm:$0xf]
  %v24 = vld [vmem:[%s0 + $0x24] sm:$0xf]
  %v25 = vld [vmem:[%s0 + $0x28] sm:$0xf]
  %v26 = vld [vmem:[%s0 + $0x2c] sm:$0xf]
  %v27 = vld [vmem:[%s0 + $0x30] sm:$0xf]
  %v28 = vld [vmem:[%s0 + $0x34] sm:$0xf]
  %v29 = vld [vmem:[%s1] sm:$0xff]
  %v30 = vld [vmem:[%s1 + $0x8] sm:$0xff]
  %v31 = vld [vmem:[%s1 + $0x10] sm:$0xff]
  %v32 = vld [vmem:[%s1 + $0x18] sm:$0xff]
  %v33 = vld [vmem:[%s1 + $0x20] sm:$0xff]
  %v34 = vld [vmem:[%s1 + $0x28] sm:$0xff]
  %v35 = vld [vmem:[%s1 + $0x30] sm:$0xff]
  %v36 = vld [vmem:[%s1 + $0x38] sm:$0xff]
  %v37 = vld [vmem:[%s1 + $0x40] sm:$0xff]
  %v38 = vld [vmem:[%s1 + $0x48] sm:$0xff]
  %v39 = vld [vmem:[%s1 + $0x50] sm:$0xff]
  %v40 = vld [vmem:[%s1 + $0x58] sm:$0xff]
  %v41 = vld [vmem:[%s1 + $0x60] sm:$0xff]
  %v42 = vld [vmem:[%s1 + $0x68] sm:$0xff]
  %v43 = vld [vmem:[%s1 + $0x70] sm:$0xff]
  %v44 = vld [vmem:[%s1 + $0x78] sm:$0xff]
  %v59 = vunpack.c.l.b16 %v15
  %v60 = vunpack.c.l.b16 %v16
  %v61 = vunpack.c.l.b16 %v17
  %v62 = vunpack.c.l.b16 %v18
  %v63 = vunpack.c.l.b16 %v19
  %v64 = vunpack.c.l.b16 %v20
  %v65 = vunpack.c.l.b16 %v21
  %v66 = vunpack.c.l.b16 %v22
  %v67 = vunpack.c.l.b16 %v23
  %v68 = vunpack.c.l.b16 %v24
  %v69 = vunpack.c.l.b16 %v25
  %v70 = vunpack.c.l.b16 %v26
  %v71 = vunpack.c.l.b16 %v27
  %v72 = vunpack.c.l.b16 %v28
  %v73 = vpack.c.b16 %v60, %v59
  %v74 = vpack.c.b16 %v62, %v61
  %v75 = vpack.c.b16 %v64, %v63
  %v76 = vpack.c.b16 %v66, %v65
  %v77 = vpack.c.b16 %v68, %v67
  %v78 = vpack.c.b16 %v70, %v69
  %v79 = vpack.c.b16 %v72, %v71
  %v103 = vunpack.c.l.b16 %v29
  %v104 = vunpack.c.h.b16 %v29
  %v105 = vunpack.c.l.b16 %v30
  %v106 = vunpack.c.h.b16 %v30
  %v107 = vunpack.c.l.b16 %v31
  %v108 = vunpack.c.h.b16 %v31
  %v109 = vunpack.c.l.b16 %v32
  %v110 = vunpack.c.h.b16 %v32
  %v111 = vunpack.c.l.b16 %v33
  %v112 = vunpack.c.h.b16 %v33
  %v113 = vunpack.c.l.b16 %v34
  %v114 = vunpack.c.h.b16 %v34
  %v115 = vunpack.c.l.b16 %v35
  %v116 = vunpack.c.h.b16 %v35
  %v117 = vunpack.c.l.b16 %v36
  %v118 = vunpack.c.h.b16 %v36
  %v119 = vunpack.c.l.b16 %v37
  %v120 = vunpack.c.h.b16 %v37
  %v121 = vunpack.c.l.b16 %v38
  %v122 = vunpack.c.h.b16 %v38
  %v123 = vunpack.c.l.b16 %v39
  %v124 = vunpack.c.h.b16 %v39
  %v125 = vunpack.c.l.b16 %v40
  %v126 = vunpack.c.h.b16 %v40
  %v127 = vunpack.c.l.b16 %v41
  %v128 = vunpack.c.h.b16 %v41
  %v129 = vunpack.c.l.b16 %v42
  %v130 = vunpack.c.h.b16 %v42
  %v131 = vunpack.c.l.b16 %v43
  %v132 = vunpack.c.h.b16 %v43
  %v133 = vunpack.c.l.b16 %v44
  %v134 = vunpack.c.h.b16 %v44
  %v135 = vpack.c.b16 %v105, %v103
  %v136 = vpack.c.b16 %v106, %v104
  %v137 = vpack.c.b16 %v109, %v107
  %v138 = vpack.c.b16 %v110, %v108
  %v139 = vpack.c.b16 %v113, %v111
  %v140 = vpack.c.b16 %v114, %v112
  %v141 = vpack.c.b16 %v117, %v115
  %v142 = vpack.c.b16 %v118, %v116
  %v143 = vpack.c.b16 %v121, %v119
  %v144 = vpack.c.b16 %v122, %v120
  %v145 = vpack.c.b16 %v125, %v123
  %v146 = vpack.c.b16 %v126, %v124
  %v147 = vpack.c.b16 %v129, %v127
  %v148 = vpack.c.b16 %v130, %v128
  %v149 = vpack.c.b16 %v133, %v131
  %v150 = vpack.c.b16 %v134, %v132
  %167 = vmatprep.subr.bf16.mxu0 %v136
  %168 = vmatpush1.bf16.msra.mxu0 %v135
  %169 = vmatprep.subr.bf16.mxu0 %v138
  %170 = vmatpush1.bf16.msra.mxu0 %v137
  %171 = vmatprep.subr.bf16.mxu0 %v140
  %172 = vmatpush1.bf16.msra.mxu0 %v139
  %173 = vmatprep.subr.bf16.mxu0 %v142
  %174 = vmatpush1.bf16.msra.mxu0 %v141
  %175 = vmatprep.subr.bf16.mxu0 %v144
  %176 = vmatpush1.bf16.msra.mxu0 %v143
  %177 = vmatprep.subr.bf16.mxu0 %v146
  %178 = vmatpush1.bf16.msra.mxu0 %v145
  %179 = vmatprep.subr.bf16.mxu0 %v148
  %180 = vmatpush1.bf16.msra.mxu0 %v147
  %181 = vmatprep.subr.bf16.mxu0 %v150
  %182 = vmatpush1.bf16.msra.mxu0 %v149
  %183 = vmatprep.subr.bf16.mxu0 0
  %184 = vmatpush1.bf16.msra.mxu0 0
  %185 = vmatprep.subr.bf16.mxu0 0
  %186 = vmatpush1.bf16.msra.mxu0 0
  %187 = vmatprep.subr.bf16.mxu0 0
  %188 = vmatpush1.bf16.msra.mxu0 0
  %189 = vmatprep.subr.bf16.mxu0 0
  %190 = vmatpush1.bf16.msra.mxu0 0
  %191 = vmatprep.subr.bf16.mxu0 0
  %192 = vmatpush1.bf16.msra.mxu0 0
  %193 = vmatprep.subr.bf16.mxu0 0
  %194 = vmatpush1.bf16.msra.mxu0 0
  %195 = vmatprep.subr.bf16.mxu0 0
  %196 = vmatpush1.bf16.msra.mxu0 0
  %197 = vmatprep.subr.bf16.mxu0 0
  %198 = vmatpush1.bf16.msra.mxu0 0
  %199 = vmatprep.mubr.bf16.mxu0 0
  %200 = vmatmul.mubr.bf16.gmra.mrb[0].mxu0 %v73
  %v201 = vpop.f32.mrb[0].mxu0
  %v202 = vadd.f32 0.0, %v201
  %v203 = vpop.f32.mrb[0].mxu0
  %v204 = vadd.f32 0.0, %v203
  %v205 = vpop.f32.mrb[0].mxu0
  %v206 = vadd.f32 0.0, %v205
  %v207 = vpop.f32.mrb[0].mxu0
  %v208 = vadd.f32 0.0, %v207
  %209 = vmatprep.mubr.bf16.mxu0 0
  %210 = vmatmul.mubr.bf16.gmra.mrb[0].mxu0 %v74
  %v211 = vpop.f32.mrb[0].mxu0
  %v212 = vadd.f32 0.0, %v211
  %v213 = vpop.f32.mrb[0].mxu0
  %v214 = vadd.f32 0.0, %v213
  %v215 = vpop.f32.mrb[0].mxu0
  %v216 = vadd.f32 0.0, %v215
  %v217 = vpop.f32.mrb[0].mxu0
  %v218 = vadd.f32 0.0, %v217
  %219 = vmatprep.mubr.bf16.mxu0 0
  %220 = vmatmul.mubr.bf16.gmra.mrb[0].mxu0 %v75
  %v221 = vpop.f32.mrb[0].mxu0
  %v222 = vadd.f32 0.0, %v221
  %v223 = vpop.f32.mrb[0].mxu0
  %v224 = vadd.f32 0.0, %v223
  %v225 = vpop.f32.mrb[0].mxu0
  %v226 = vadd.f32 0.0, %v225
  %v227 = vpop.f32.mrb[0].mxu0
  %v228 = vadd.f32 0.0, %v227
  %229 = vmatprep.mubr.bf16.mxu0 0
  %230 = vmatmul.mubr.bf16.gmra.mrb[0].mxu0 %v76
  %v231 = vpop.f32.mrb[0].mxu0
  %v232 = vadd.f32 0.0, %v231
  %v233 = vpop.f32.mrb[0].mxu0
  %v234 = vadd.f32 0.0, %v233
  %v235 = vpop.f32.mrb[0].mxu0
  %v236 = vadd.f32 0.0, %v235
  %v237 = vpop.f32.mrb[0].mxu0
  %v238 = vadd.f32 0.0, %v237
  %239 = vmatprep.mubr.bf16.mxu0 0
  %240 = vmatmul.mubr.bf16.gmra.mrb[0].mxu0 %v77
  %v241 = vpop.f32.mrb[0].mxu0
  %v242 = vadd.f32 0.0, %v241
  %v243 = vpop.f32.mrb[0].mxu0
  %v244 = vadd.f32 0.0, %v243
  %v245 = vpop.f32.mrb[0].mxu0
  %v246 = vadd.f32 0.0, %v245
  %v247 = vpop.f32.mrb[0].mxu0
  %v248 = vadd.f32 0.0, %v247
  %249 = vmatprep.mubr.bf16.mxu0 0
  %250 = vmatmul.mubr.bf16.gmra.mrb[0].mxu0 %v78
  %v251 = vpop.f32.mrb[0].mxu0
  %v252 = vadd.f32 0.0, %v251
  %v253 = vpop.f32.mrb[0].mxu0
  %v254 = vadd.f32 0.0, %v253
  %v255 = vpop.f32.mrb[0].mxu0
  %v256 = vadd.f32 0.0, %v255
  %v257 = vpop.f32.mrb[0].mxu0
  %v258 = vadd.f32 0.0, %v257
  %259 = vmatprep.mubr.bf16.mxu0 0
  %260 = vmatmul.mubr.bf16.gmra.mrb[0].mxu0 %v79
  %v261 = vpop.f32.mrb[0].mxu0
  %v262 = vadd.f32 0.0, %v261
  %v263 = vpop.f32.mrb[0].mxu0
  %v264 = vadd.f32 0.0, %v263
  %v265 = vpop.f32.mrb[0].mxu0
  %v266 = vadd.f32 0.0, %v265
  %v267 = vpop.f32.mrb[0].mxu0
  %v268 = vadd.f32 0.0, %v267
  %269 = vdwg.mxu0
  %v270 = vadd.f32 %v202, %v206
  %v271 = vadd.f32 %v270, %v212
  %v272 = vadd.f32 %v271, %v216
  %v273 = vadd.f32 %v272, %v222
  %v274 = vadd.f32 %v273, %v226
  %v275 = vadd.f32 %v274, %v232
  %v276 = vadd.f32 %v275, %v236
  %v277 = vadd.f32 %v276, %v242
  %v278 = vadd.f32 %v277, %v246
  %v279 = vadd.f32 %v278, %v252
  %v280 = vadd.f32 %v279, %v256
  %v281 = vadd.f32 %v280, %v262
  %v282 = vadd.f32 %v281, %v266
  %v283 = vrot.slane %v282, 4
  %v284 = vadd.f32 %v282, %v283
  %v285 = vrot.slane %v284, 2
  %v286 = vadd.f32 %v284, %v285
  %v287 = vrot.slane %v286, 1
  %v288 = vadd.f32 %v286, %v287
  %v289 = vadd.f32 %v204, %v208
  %v290 = vadd.f32 %v289, %v214
  %v291 = vadd.f32 %v290, %v218
  %v292 = vadd.f32 %v291, %v224
  %v293 = vadd.f32 %v292, %v228
  %v294 = vadd.f32 %v293, %v234
  %v295 = vadd.f32 %v294, %v238
  %v296 = vadd.f32 %v295, %v244
  %v297 = vadd.f32 %v296, %v248
  %v298 = vadd.f32 %v297, %v254
  %v299 = vadd.f32 %v298, %v258
  %v300 = vadd.f32 %v299, %v264
  %v301 = vadd.f32 %v300, %v268
  %v302 = vrot.slane %v301, 4
  %v303 = vadd.f32 %v301, %v302
  %v304 = vrot.slane %v303, 2
  %v305 = vadd.f32 %v303, %v304
  %v306 = vrot.slane %v305, 1
  %v307 = vadd.f32 %v305, %v306
  %v308 = vmul.f32 %v288, 0.010204081
  %v309 = vmul.f32 %v307, 0.010204081
  %v310 = vlaneseq
  %v311 = vshrl.u32 %v310, 7
  %v312 = vadd.s32 %v311, 8
  %v313 = vadd.s32 %v311, 16
  %v314 = vadd.s32 %v311, 24
  %v315 = vadd.s32 %v311, 32
  %v316 = vadd.s32 %v311, 40
  %v317 = vadd.s32 %v311, 48
  %v318 = vadd.s32 %v311, 56
  %v319 = vadd.s32 %v311, 64
  %v320 = vadd.s32 %v311, 72
  %v321 = vadd.s32 %v311, 80
  %v322 = vadd.s32 %v311, 88
  %v323 = vadd.s32 %v311, 96
  %v324 = vadd.s32 %v311, 104
  %vm325 = vcmp.lt.s32.totalorder %v311, 98
  %vm326 = vcmp.lt.s32.totalorder %v312, 98
  %vm327 = vcmp.lt.s32.totalorder %v313, 98
  %vm328 = vcmp.lt.s32.totalorder %v314, 98
  %vm329 = vcmp.lt.s32.totalorder %v315, 98
  %vm330 = vcmp.lt.s32.totalorder %v316, 98
  %vm331 = vcmp.lt.s32.totalorder %v317, 98
  %vm332 = vcmp.lt.s32.totalorder %v318, 98
  %vm333 = vcmp.lt.s32.totalorder %v319, 98
  %vm334 = vcmp.lt.s32.totalorder %v320, 98
  %vm335 = vcmp.lt.s32.totalorder %v321, 98
  %vm336 = vcmp.lt.s32.totalorder %v322, 98
  %vm337 = vcmp.lt.s32.totalorder %v323, 98
  %vm338 = vcmp.lt.s32.totalorder %v324, 98
  %v339 = vsub.f32 %v202, %v308
  %v340 = vsub.f32 %v204, %v309
  %v341 = vsub.f32 %v206, %v308
  %v342 = vsub.f32 %v208, %v309
  %v343 = vsub.f32 %v212, %v308
  %v344 = vsub.f32 %v214, %v309
  %v345 = vsub.f32 %v216, %v308
  %v346 = vsub.f32 %v218, %v309
  %v347 = vsub.f32 %v222, %v308
  %v348 = vsub.f32 %v224, %v309
  %v349 = vsub.f32 %v226, %v308
  %v350 = vsub.f32 %v228, %v309
  %v351 = vsub.f32 %v232, %v308
  %v352 = vsub.f32 %v234, %v309
  %v353 = vsub.f32 %v236, %v308
  %v354 = vsub.f32 %v238, %v309
  %v355 = vsub.f32 %v242, %v308
  %v356 = vsub.f32 %v244, %v309
  %v357 = vsub.f32 %v246, %v308
  %v358 = vsub.f32 %v248, %v309
  %v359 = vsub.f32 %v252, %v308
  %v360 = vsub.f32 %v254, %v309
  %v361 = vsub.f32 %v256, %v308
  %v362 = vsub.f32 %v258, %v309
  %v363 = vsub.f32 %v262, %v308
  %v364 = vsub.f32 %v264, %v309
  %v365 = vsub.f32 %v266, %v308
  %v366 = vsub.f32 %v268, %v309
  %v367 = vsel %vm325, 1, 0
  %v368 = vsel %vm326, 1, 0
  %v369 = vsel %vm327, 1, 0
  %v370 = vsel %vm328, 1, 0
  %v371 = vsel %vm329, 1, 0
  %v372 = vsel %vm330, 1, 0
  %v373 = vsel %vm331, 1, 0
  %v374 = vsel %vm332, 1, 0
  %v375 = vsel %vm333, 1, 0
  %v376 = vsel %vm334, 1, 0
  %v377 = vsel %vm335, 1, 0
  %v378 = vsel %vm336, 1, 0
  %v379 = vsel %vm337, 1, 0
  %v380 = vsel %vm338, 1, 0
  %vm381 = vcmp.eq.s32.totalorder %v367, 1
  %vm382 = vcmp.eq.s32.totalorder %v368, 1
  %vm383 = vcmp.eq.s32.totalorder %v369, 1
  %vm384 = vcmp.eq.s32.totalorder %v370, 1
  %vm385 = vcmp.eq.s32.totalorder %v371, 1
  %vm386 = vcmp.eq.s32.totalorder %v372, 1
  %vm387 = vcmp.eq.s32.totalorder %v373, 1
  %vm388 = vcmp.eq.s32.totalorder %v374, 1
  %vm389 = vcmp.eq.s32.totalorder %v375, 1
  %vm390 = vcmp.eq.s32.totalorder %v376, 1
  %vm391 = vcmp.eq.s32.totalorder %v377, 1
  %vm392 = vcmp.eq.s32.totalorder %v378, 1
  %vm393 = vcmp.eq.s32.totalorder %v379, 1
  %vm394 = vcmp.eq.s32.totalorder %v380, 1
  %v395 = vsel %vm381, %v339, 0.0
  %v396 = vsel %vm381, %v340, 0.0
  %v397 = vsel %vm382, %v341, 0.0
  %v398 = vsel %vm382, %v342, 0.0
  %v399 = vsel %vm383, %v343, 0.0
  %v400 = vsel %vm383, %v344, 0.0
  %v401 = vsel %vm384, %v345, 0.0
  %v402 = vsel %vm384, %v346, 0.0
  %v403 = vsel %vm385, %v347, 0.0
  %v404 = vsel %vm385, %v348, 0.0
  %v405 = vsel %vm386, %v349, 0.0
  %v406 = vsel %vm386, %v350, 0.0
  %v407 = vsel %vm387, %v351, 0.0
  %v408 = vsel %vm387, %v352, 0.0
  %v409 = vsel %vm388, %v353, 0.0
  %v410 = vsel %vm388, %v354, 0.0
  %v411 = vsel %vm389, %v355, 0.0
  %v412 = vsel %vm389, %v356, 0.0
  %v413 = vsel %vm390, %v357, 0.0
  %v414 = vsel %vm390, %v358, 0.0
  %v415 = vsel %vm391, %v359, 0.0
  %v416 = vsel %vm391, %v360, 0.0
  %v417 = vsel %vm392, %v361, 0.0
  %v418 = vsel %vm392, %v362, 0.0
  %v419 = vsel %vm393, %v363, 0.0
  %v420 = vsel %vm393, %v364, 0.0
  %v421 = vsel %vm394, %v365, 0.0
  %v422 = vsel %vm394, %v366, 0.0
  %v423 = vmul.f32 %v395, %v395
  %v424 = vmul.f32 %v396, %v396
  %v425 = vmul.f32 %v397, %v397
  %v426 = vmul.f32 %v398, %v398
  %v427 = vmul.f32 %v399, %v399
  %v428 = vmul.f32 %v400, %v400
  %v429 = vmul.f32 %v401, %v401
  %v430 = vmul.f32 %v402, %v402
  %v431 = vmul.f32 %v403, %v403
  %v432 = vmul.f32 %v404, %v404
  %v433 = vmul.f32 %v405, %v405
  %v434 = vmul.f32 %v406, %v406
  %v435 = vmul.f32 %v407, %v407
  %v436 = vmul.f32 %v408, %v408
  %v437 = vmul.f32 %v409, %v409
  %v438 = vmul.f32 %v410, %v410
  %v439 = vmul.f32 %v411, %v411
  %v440 = vmul.f32 %v412, %v412
  %v441 = vmul.f32 %v413, %v413
  %v442 = vmul.f32 %v414, %v414
  %v443 = vmul.f32 %v415, %v415
  %v444 = vmul.f32 %v416, %v416
  %v445 = vmul.f32 %v417, %v417
  %v446 = vmul.f32 %v418, %v418
  %v447 = vmul.f32 %v419, %v419
  %v448 = vmul.f32 %v420, %v420
  %v449 = vmul.f32 %v421, %v421
  %v450 = vmul.f32 %v422, %v422
  %v451 = vadd.f32 %v423, %v425
  %v452 = vadd.f32 %v451, %v427
  %v453 = vadd.f32 %v452, %v429
  %v454 = vadd.f32 %v453, %v431
  %v455 = vadd.f32 %v454, %v433
  %v456 = vadd.f32 %v455, %v435
  %v457 = vadd.f32 %v456, %v437
  %v458 = vadd.f32 %v457, %v439
  %v459 = vadd.f32 %v458, %v441
  %v460 = vadd.f32 %v459, %v443
  %v461 = vadd.f32 %v460, %v445
  %v462 = vadd.f32 %v461, %v447
  %v463 = vadd.f32 %v462, %v449
  %v464 = vrot.slane %v463, 4
  %v465 = vadd.f32 %v463, %v464
  %v466 = vrot.slane %v465, 2
  %v467 = vadd.f32 %v465, %v466
  %v468 = vrot.slane %v467, 1
  %v469 = vadd.f32 %v467, %v468
  %v470 = vadd.f32 %v424, %v426
  %v471 = vadd.f32 %v470, %v428
  %v472 = vadd.f32 %v471, %v430
  %v473 = vadd.f32 %v472, %v432
  %v474 = vadd.f32 %v473, %v434
  %v475 = vadd.f32 %v474, %v436
  %v476 = vadd.f32 %v475, %v438
  %v477 = vadd.f32 %v476, %v440
  %v478 = vadd.f32 %v477, %v442
  %v479 = vadd.f32 %v478, %v444
  %v480 = vadd.f32 %v479, %v446
  %v481 = vadd.f32 %v480, %v448
  %v482 = vadd.f32 %v481, %v450
  %v483 = vrot.slane %v482, 4
  %v484 = vadd.f32 %v482, %v483
  %v485 = vrot.slane %v484, 2
  %v486 = vadd.f32 %v484, %v485
  %v487 = vrot.slane %v486, 1
  %v488 = vadd.f32 %v486, %v487
  %v489 = vmul.f32 %v469, 0.010204081
  %v490 = vmul.f32 %v488, 0.010204081
  %v491 = vadd.f32 %v489, 1e-05
  %v492 = vadd.f32 %v490, 1e-05
  %v493 = vrsqrt.pop %v491
  %v494 = vrsqrt.pop %v492
  %v495 = vmul.f32 %v395, %v493
  %v496 = vmul.f32 %v396, %v494
  %v497 = vmul.f32 %v397, %v493
  %v498 = vmul.f32 %v398, %v494
  %v499 = vmul.f32 %v399, %v493
  %v500 = vmul.f32 %v400, %v494
  %v501 = vmul.f32 %v401, %v493
  %v502 = vmul.f32 %v402, %v494
  %v503 = vmul.f32 %v403, %v493
  %v504 = vmul.f32 %v404, %v494
  %v505 = vmul.f32 %v405, %v493
  %v506 = vmul.f32 %v406, %v494
  %v507 = vmul.f32 %v407, %v493
  %v508 = vmul.f32 %v408, %v494
  %v509 = vmul.f32 %v409, %v493
  %v510 = vmul.f32 %v410, %v494
  %v511 = vmul.f32 %v411, %v493
  %v512 = vmul.f32 %v412, %v494
  %v513 = vmul.f32 %v413, %v493
  %v514 = vmul.f32 %v414, %v494
  %v515 = vmul.f32 %v415, %v493
  %v516 = vmul.f32 %v416, %v494
  %v517 = vmul.f32 %v417, %v493
  %v518 = vmul.f32 %v418, %v494
  %v519 = vmul.f32 %v419, %v493
  %v520 = vmul.f32 %v420, %v494
  %v521 = vmul.f32 %v421, %v493
  %v522 = vmul.f32 %v422, %v494
  %v523 = vld [vmem:[%s2] sm:$0xff]
  %v524 = vld [vmem:[%s2 + $0x8] sm:$0xff]
  %v525 = vld [vmem:[%s2 + $0x10] sm:$0xff]
  %v526 = vld [vmem:[%s2 + $0x18] sm:$0xff]
  %v527 = vld [vmem:[%s2 + $0x20] sm:$0xff]
  %v528 = vld [vmem:[%s2 + $0x28] sm:$0xff]
  %v529 = vld [vmem:[%s2 + $0x30] sm:$0xff]
  %v530 = vld [vmem:[%s2 + $0x38] sm:$0xff]
  %v531 = vld [vmem:[%s2 + $0x40] sm:$0xff]
  %v532 = vld [vmem:[%s2 + $0x48] sm:$0xff]
  %v533 = vld [vmem:[%s2 + $0x50] sm:$0xff]
  %v534 = vld [vmem:[%s2 + $0x58] sm:$0xff]
  %v535 = vld [vmem:[%s2 + $0x60] sm:$0xff]
  %v536 = vld [vmem:[%s2 + $0x68] sm:$0xff]
  %v537 = vld [vmem:[%s2 + $0x70] sm:$0xff]
  %v538 = vld [vmem:[%s2 + $0x78] sm:$0xff]
  %v539 = vld [vmem:[%s2 + $0x80] sm:$0xff]
  %v540 = vld [vmem:[%s2 + $0x88] sm:$0xff]
  %v541 = vld [vmem:[%s2 + $0x90] sm:$0xff]
  %v542 = vld [vmem:[%s2 + $0x98] sm:$0xff]
  %v543 = vld [vmem:[%s2 + $0xa0] sm:$0xff]
  %v544 = vld [vmem:[%s2 + $0xa8] sm:$0xff]
  %v545 = vld [vmem:[%s2 + $0xb0] sm:$0xff]
  %v546 = vld [vmem:[%s2 + $0xb8] sm:$0xff]
  %v547 = vld [vmem:[%s2 + $0xc0] sm:$0xff]
  %v548 = vld [vmem:[%s2 + $0xc8] sm:$0xff]
  %v549 = vld [vmem:[%s2 + $0xd0] sm:$0xff]
  %v550 = vld [vmem:[%s2 + $0xd8] sm:$0xff]
  %v551 = vadd.f32 %v495, %v523
  %v552 = vadd.f32 %v496, %v524
  %v553 = vadd.f32 %v497, %v525
  %v554 = vadd.f32 %v498, %v526
  %v555 = vadd.f32 %v499, %v527
  %v556 = vadd.f32 %v500, %v528
  %v557 = vadd.f32 %v501, %v529
  %v558 = vadd.f32 %v502, %v530
  %v559 = vadd.f32 %v503, %v531
  %v560 = vadd.f32 %v504, %v532
  %v561 = vadd.f32 %v505, %v533
  %v562 = vadd.f32 %v506, %v534
  %v563 = vadd.f32 %v507, %v535
  %v564 = vadd.f32 %v508, %v536
  %v565 = vadd.f32 %v509, %v537
  %v566 = vadd.f32 %v510, %v538
  %v567 = vadd.f32 %v511, %v539
  %v568 = vadd.f32 %v512, %v540
  %v569 = vadd.f32 %v513, %v541
  %v570 = vadd.f32 %v514, %v542
  %v571 = vadd.f32 %v515, %v543
  %v572 = vadd.f32 %v516, %v544
  %v573 = vadd.f32 %v517, %v545
  %v574 = vadd.f32 %v518, %v546
  %v575 = vadd.f32 %v519, %v547
  %v576 = vadd.f32 %v520, %v548
  %v577 = vadd.f32 %v521, %v549
  %v578 = vadd.f32 %v522, %v550
  %v579 = vmax.f32 %v551, 0.0
  %v580 = vmax.f32 %v552, 0.0
  %v581 = vmax.f32 %v553, 0.0
  %v582 = vmax.f32 %v554, 0.0
  %v583 = vmax.f32 %v555, 0.0
  %v584 = vmax.f32 %v556, 0.0
  %v585 = vmax.f32 %v557, 0.0
  %v586 = vmax.f32 %v558, 0.0
  %v587 = vmax.f32 %v559, 0.0
  %v588 = vmax.f32 %v560, 0.0
  %v589 = vmax.f32 %v561, 0.0
  %v590 = vmax.f32 %v562, 0.0
  %v591 = vmax.f32 %v563, 0.0
  %v592 = vmax.f32 %v564, 0.0
  %v593 = vmax.f32 %v565, 0.0
  %v594 = vmax.f32 %v566, 0.0
  %v595 = vmax.f32 %v567, 0.0
  %v596 = vmax.f32 %v568, 0.0
  %v597 = vmax.f32 %v569, 0.0
  %v598 = vmax.f32 %v570, 0.0
  %v599 = vmax.f32 %v571, 0.0
  %v600 = vmax.f32 %v572, 0.0
  %v601 = vmax.f32 %v573, 0.0
  %v602 = vmax.f32 %v574, 0.0
  %v603 = vmax.f32 %v575, 0.0
  %v604 = vmax.f32 %v576, 0.0
  %v605 = vmax.f32 %v577, 0.0
  %v606 = vmax.f32 %v578, 0.0
  %607 = vst [vmem:[%s3] sm:$0xff] %v579
  %608 = vst [vmem:[%s3 + $0x8] sm:$0xff] %v580
  %609 = vst [vmem:[%s3 + $0x10] sm:$0xff] %v581
  %610 = vst [vmem:[%s3 + $0x18] sm:$0xff] %v582
  %611 = vst [vmem:[%s3 + $0x20] sm:$0xff] %v583
  %612 = vst [vmem:[%s3 + $0x28] sm:$0xff] %v584
  %613 = vst [vmem:[%s3 + $0x30] sm:$0xff] %v585
  %614 = vst [vmem:[%s3 + $0x38] sm:$0xff] %v586
  %615 = vst [vmem:[%s3 + $0x40] sm:$0xff] %v587
  %616 = vst [vmem:[%s3 + $0x48] sm:$0xff] %v588
  %617 = vst [vmem:[%s3 + $0x50] sm:$0xff] %v589
  %618 = vst [vmem:[%s3 + $0x58] sm:$0xff] %v590
  %619 = vst [vmem:[%s3 + $0x60] sm:$0xff] %v591
  %620 = vst [vmem:[%s3 + $0x68] sm:$0xff] %v592
  %621 = vst [vmem:[%s3 + $0x70] sm:$0xff] %v593
  %622 = vst [vmem:[%s3 + $0x78] sm:$0xff] %v594
  %623 = vst [vmem:[%s3 + $0x80] sm:$0xff] %v595
  %624 = vst [vmem:[%s3 + $0x88] sm:$0xff] %v596
  %625 = vst [vmem:[%s3 + $0x90] sm:$0xff] %v597
  %626 = vst [vmem:[%s3 + $0x98] sm:$0xff] %v598
  %627 = vst [vmem:[%s3 + $0xa0] sm:$0xff] %v599
  %628 = vst [vmem:[%s3 + $0xa8] sm:$0xff] %v600
  %629 = vst [vmem:[%s3 + $0xb0] sm:$0xff] %v601
  %630 = vst [vmem:[%s3 + $0xb8] sm:$0xff] %v602
  %631 = vst [vmem:[%s3 + $0xc0] sm:$0xff] %v603
  %632 = vst [vmem:[%s3 + $0xc8] sm:$0xff] %v604
  %633 = vst [vmem:[%s3 + $0xd0] sm:$0xff] %v605
  %634 = vst [vmem:[%s3 + $0xd8] sm:$0xff] %v606
  // Predicated region
  $region14: #{resnet_forward.13} parent=0 // pred_check
    _
  $region15: #{resnet_forward.13} parent=0 // pred_check_branch
    %636 = sbr.rel (0) target = $region17
  $region16: #{resnet_forward.13} parent=0 // pred_region
    _
  $region17: #{resnet_forward.13} parent=0 // pred_fallthru
    _
  // Predicated region
  $region18: #{resnet_forward.13} parent=0 // pred_check
    _
  $region19: #{resnet_forward.13} parent=0 // pred_check_branch
    %638 = sbr.rel (0) target = $region21
  $region20: #{resnet_forward.13} parent=0 // pred_region
    _
  $region21: #{resnet_forward.13} parent=0 // pred_fallthru
    _

// kernel: resnet_forward.12
$region0: #{resnet_forward.12}
  #allocation0 [shape = 'u32[]', space=smem, size = 0x4, offset = 0x4, fixed_abs, tag = 'smem constant byte address 0x4 - core index']
  #allocation1 [shape = 'u32[144,128]{1,0:T(1,128)}', space=vmem, size = 0x12000, scoped, tag = 'internal scratch']
  %s0 = inlined_call_operand.vmem [shape: bf16[112,1152], index: 0, kind: input, shape index: {}]
  %s1 = inlined_call_operand.vmem [shape: bf16[1152,128], index: 1, kind: input, shape index: {}]
  %s2 = inlined_call_operand.vmem [shape: f32[112,128], index: 2, kind: output, shape index: {}]
  %s3 = sld [smem:[#allocation0]]
  $region18: #{resnet_forward.12} parent=0
    _
  %s5 = ssub.s32 1, %s3
  %s6 = scalar_select 0, %s5, %s3
  // Predicated region
  $region2: #{resnet_forward.12} parent=0 // pred_check
    _
  $region3: #{resnet_forward.12} parent=0 // pred_check_branch
    %8 = sbr.rel (0) target = $region5
  $region4: #{resnet_forward.12} parent=0 // pred_region
    _
  $region5: #{resnet_forward.12} parent=0 // pred_fallthru
    _
  // Predicated region
  $region6: #{resnet_forward.12} parent=0 // pred_check
    _
  $region7: #{resnet_forward.12} parent=0 // pred_check_branch
    %10 = sbr.rel (0) target = $region9
  $region8: #{resnet_forward.12} parent=0 // pred_region
    _
  $region9: #{resnet_forward.12} parent=0 // pred_fallthru
    _
  %v12 = vld [vmem:[%s0] sm:$0xff]
  %v13 = vld [vmem:[%s0 + $0x8] sm:$0xff]
  %v14 = vld [vmem:[%s0 + $0x10] sm:$0xff]
  %v15 = vld [vmem:[%s0 + $0x18] sm:$0xff]
  %v16 = vld [vmem:[%s0 + $0x20] sm:$0xf]
  %v17 = vld [vmem:[%s0 + $0x24] sm:$0xff]
  %v18 = vld [vmem:[%s0 + $0x2c] sm:$0xff]
  %v19 = vld [vmem:[%s0 + $0x34] sm:$0xff]
  %v20 = vld [vmem:[%s0 + $0x3c] sm:$0xff]
  %v21 = vld [vmem:[%s0 + $0x44] sm:$0xf]
  %v22 = vld [vmem:[%s0 + $0x48] sm:$0xff]
  %v23 = vld [vmem:[%s0 + $0x50] sm:$0xff]
  %v24 = vld [vmem:[%s0 + $0x58] sm:$0xff]
  %v25 = vld [vmem:[%s0 + $0x60] sm:$0xff]
  %v26 = vld [vmem:[%s0 + $0x68] sm:$0xf]
  %v27 = vld [vmem:[%s0 + $0x6c] sm:$0xff]
  %v28 = vld [vmem:[%s0 + $0x74] sm:$0xff]
  %v29 = vld [vmem:[%s0 + $0x7c] sm:$0xff]
  %v30 = vld [vmem:[%s0 + $0x84] sm:$0xff]
  %v31 = vld [vmem:[%s0 + $0x8c] sm:$0xf]
  %v32 = vld [vmem:[%s0 + $0x90] sm:$0xff]
  %v33 = vld [vmem:[%s0 + $0x98] sm:$0xff]
  %v34 = vld [vmem:[%s0 + $0xa0] sm:$0xff]
  %v35 = vld [vmem:[%s0 + $0xa8] sm:$0xff]
  %v36 = vld [vmem:[%s0 + $0xb0] sm:$0xf]
  %v37 = vld [vmem:[%s0 + $0xb4] sm:$0xff]
  %v38 = vld [vmem:[%s0 + $0xbc] sm:$0xff]
  %v39 = vld [vmem:[%s0 + $0xc4] sm:$0xff]
  %v40 = vld [vmem:[%s0 + $0xcc] sm:$0xff]
  %v41 = vld [vmem:[%s0 + $0xd4] sm:$0xf]
  %v42 = vld [vmem:[%s0 + $0xd8] sm:$0xff]
  %v43 = vld [vmem:[%s0 + $0xe0] sm:$0xff]
  %v44 = vld [vmem:[%s0 + $0xe8] sm:$0xff]
  %v45 = vld [vmem:[%s0 + $0xf0] sm:$0xff]
  %v46 = vld [vmem:[%s0 + $0xf8] sm:$0xf]
  %v47 = vld [vmem:[%s0 + $0xfc] sm:$0xff]
  %v48 = vld [vmem:[%s0 + $0x104] sm:$0xff]
  %v49 = vld [vmem:[%s0 + $0x10c] sm:$0xff]
  %v50 = vld [vmem:[%s0 + $0x114] sm:$0xff]
  %v51 = vld [vmem:[%s0 + $0x11c] sm:$0xf]
  %v52 = vld [vmem:[%s0 + $0x120] sm:$0xff]
  %v53 = vld [vmem:[%s0 + $0x128] sm:$0xff]
  %v54 = vld [vmem:[%s0 + $0x130] sm:$0xff]
  %v55 = vld [vmem:[%s0 + $0x138] sm:$0xff]
  %v56 = vld [vmem:[%s0 + $0x140] sm:$0xf]
  %v57 = vld [vmem:[%s0 + $0x144] sm:$0xff]
  %v58 = vld [vmem:[%s0 + $0x14c] sm:$0xff]
  %v59 = vld [vmem:[%s0 + $0x154] sm:$0xff]
  %v60 = vld [vmem:[%s0 + $0x15c] sm:$0xff]
  %v61 = vld [vmem:[%s0 + $0x164] sm:$0xf]
  %v62 = vld [vmem:[%s0 + $0x168] sm:$0xff]
  %v63 = vld [vmem:[%s0 + $0x170] sm:$0xff]
  %v64 = vld [vmem:[%s0 + $0x178] sm:$0xff]
  %v65 = vld [vmem:[%s0 + $0x180] sm:$0xff]
  %v66 = vld [vmem:[%s0 + $0x188] sm:$0xf]
  %v67 = vld [vmem:[%s0 + $0x18c] sm:$0xff]
  %v68 = vld [vmem:[%s0 + $0x194] sm:$0xff]
  %v69 = vld [vmem:[%s0 + $0x19c] sm:$0xff]
  %v70 = vld [vmem:[%s0 + $0x1a4] sm:$0xff]
  %v71 = vld [vmem:[%s0 + $0x1ac] sm:$0xf]
  %v72 = vld [vmem:[%s0 + $0x1b0] sm:$0xff]
  %v73 = vld [vmem:[%s0 + $0x1b8] sm:$0xff]
  %v74 = vld [vmem:[%s0 + $0x1c0] sm:$0xff]
  %v75 = vld [vmem:[%s0 + $0x1c8] sm:$0xff]
  %v76 = vld [vmem:[%s0 + $0x1d0] sm:$0xf]
  %v77 = vld [vmem:[%s0 + $0x1d4] sm:$0xff]
  %v78 = vld [vmem:[%s0 + $0x1dc] sm:$0xff]
  %v79 = vld [vmem:[%s0 + $0x1e4] sm:$0xff]
  %v80 = vld [vmem:[%s0 + $0x1ec] sm:$0xff]
  %v81 = vld [vmem:[%s0 + $0x1f4] sm:$0xf]
  %v82 = vld [vmem:[%s1] sm:$0xf]
  %v83 = vld [vmem:[%s1 + $0x4] sm:$0xf]
  %v84 = vld [vmem:[%s1 + $0x8] sm:$0xf]
  %v85 = vld [vmem:[%s1 + $0xc] sm:$0xf]
  %v86 = vld [vmem:[%s1 + $0x10] sm:$0xf]
  %v87 = vld [vmem:[%s1 + $0x14] sm:$0xf]
  %v88 = vld [vmem:[%s1 + $0x18] sm:$0xf]
  %v89 = vld [vmem:[%s1 + $0x1c] sm:$0xf]
  %v90 = vld [vmem:[%s1 + $0x20] sm:$0xf]
  %v91 = vld [vmem:[%s1 + $0x24] sm:$0xf]
  %v92 = vld [vmem:[%s1 + $0x28] sm:$0xf]
  %v93 = vld [vmem:[%s1 + $0x2c] sm:$0xf]
  %v94 = vld [vmem:[%s1 + $0x30] sm:$0xf]
  %v95 = vld [vmem:[%s1 + $0x34] sm:$0xf]
  %v96 = vld [vmem:[%s1 + $0x38] sm:$0xf]
  %v97 = vld [vmem:[%s1 + $0x3c] sm:$0xf]
  %v98 = vld [vmem:[%s1 + $0x40] sm:$0xf]
  %v99 = vld [vmem:[%s1 + $0x44] sm:$0xf]
  %v100 = vld [vmem:[%s1 + $0x48] sm:$0xf]
  %v101 = vld [vmem:[%s1 + $0x4c] sm:$0xf]
  %v102 = vld [vmem:[%s1 + $0x50] sm:$0xf]
  %v103 = vld [vmem:[%s1 + $0x54] sm:$0xf]
  %v104 = vld [vmem:[%s1 + $0x58] sm:$0xf]
  %v105 = vld [vmem:[%s1 + $0x5c] sm:$0xf]
  %v106 = vld [vmem:[%s1 + $0x60] sm:$0xf]
  %v107 = vld [vmem:[%s1 + $0x64] sm:$0xf]
  %v108 = vld [vmem:[%s1 + $0x68] sm:$0xf]
  %v109 = vld [vmem:[%s1 + $0x6c] sm:$0xf]
  %v110 = vld [vmem:[%s1 + $0x70] sm:$0xf]
  %v111 = vld [vmem:[%s1 + $0x74] sm:$0xf]
  %v112 = vld [vmem:[%s1 + $0x78] sm:$0xf]
  %v113 = vld [vmem:[%s1 + $0x7c] sm:$0xf]
  %v114 = vld [vmem:[%s1 + $0x80] sm:$0xf]
  %v115 = vld [vmem:[%s1 + $0x84] sm:$0xf]
  %v116 = vld [vmem:[%s1 + $0x88] sm:$0xf]
  %v117 = vld [vmem:[%s1 + $0x8c] sm:$0xf]
  %v118 = vld [vmem:[%s1 + $0x90] sm:$0xf]
  %v119 = vld [vmem:[%s1 + $0x94] sm:$0xf]
  %v120 = vld [vmem:[%s1 + $0x98] sm:$0xf]
  %v121 = vld [vmem:[%s1 + $0x9c] sm:$0xf]
  %v122 = vld [vmem:[%s1 + $0xa0] sm:$0xf]
  %v123 = vld [vmem:[%s1 + $0xa4] sm:$0xf]
  %v124 = vld [vmem:[%s1 + $0xa8] sm:$0xf]
  %v125 = vld [vmem:[%s1 + $0xac] sm:$0xf]
  %v126 = vld [vmem:[%s1 + $0xb0] sm:$0xf]
  %v127 = vld [vmem:[%s1 + $0xb4] sm:$0xf]
  %v128 = vld [vmem:[%s1 + $0xb8] sm:$0xf]
  %v129 = vld [vmem:[%s1 + $0xbc] sm:$0xf]
  %v130 = vld [vmem:[%s1 + $0xc0] sm:$0xf]
  %v131 = vld [vmem:[%s1 + $0xc4] sm:$0xf]
  %v132 = vld [vmem:[%s1 + $0xc8] sm:$0xf]
  %v133 = vld [vmem:[%s1 + $0xcc] sm:$0xf]
  %v134 = vld [vmem:[%s1 + $0xd0] sm:$0xf]
  %v135 = vld [vmem:[%s1 + $0xd4] sm:$0xf]
  %v136 = vld [vmem:[%s1 + $0xd8] sm:$0xf]
  %v137 = vld [vmem:[%s1 + $0xdc] sm:$0xf]
  %v138 = vld [vmem:[%s1 + $0xe0] sm:$0xf]
  %v139 = vld [vmem:[%s1 + $0xe4] sm:$0xf]
  %v140 = vld [vmem:[%s1 + $0xe8] sm:$0xf]
  %v141 = vld [vmem:[%s1 + $0xec] sm:$0xf]
  %v142 = vld [vmem:[%s1 + $0xf0] sm:$0xf]
  %v143 = vld [vmem:[%s1 + $0xf4] sm:$0xf]
  %v144 = vld [vmem:[%s1 + $0xf8] sm:$0xf]
  %v145 = vld [vmem:[%s1 + $0xfc] sm:$0xf]
  %v146 = vld [vmem:[%s1 + $0x100] sm:$0xf]
  %v147 = vld [vmem:[%s1 + $0x104] sm:$0xf]
  %v148 = vld [vmem:[%s1 + $0x108] sm:$0xf]
  %v149 = vld [vmem:[%s1 + $0x10c] sm:$0xf]
  %v150 = vld [vmem:[%s1 + $0x110] sm:$0xf]
  %v151 = vld [vmem:[%s1 + $0x114] sm:$0xf]
  %v152 = vld [vmem:[%s1 + $0x118] sm:$0xf]
  %v153 = vld [vmem:[%s1 + $0x11c] sm:$0xf]
  %v154 = vld [vmem:[%s1 + $0x120] sm:$0xf]
  %v155 = vld [vmem:[%s1 + $0x124] sm:$0xf]
  %v156 = vld [vmem:[%s1 + $0x128] sm:$0xf]
  %v157 = vld [vmem:[%s1 + $0x12c] sm:$0xf]
  %v158 = vld [vmem:[%s1 + $0x130] sm:$0xf]
  %v159 = vld [vmem:[%s1 + $0x134] sm:$0xf]
  %v160 = vld [vmem:[%s1 + $0x138] sm:$0xf]
  %v161 = vld [vmem:[%s1 + $0x13c] sm:$0xf]
  %v162 = vld [vmem:[%s1 + $0x140] sm:$0xf]
  %v163 = vld [vmem:[%s1 + $0x144] sm:$0xf]
  %v164 = vld [vmem:[%s1 + $0x148] sm:$0xf]
  %v165 = vld [vmem:[%s1 + $0x14c] sm:$0xf]
  %v166 = vld [vmem:[%s1 + $0x150] sm:$0xf]
  %v167 = vld [vmem:[%s1 + $0x154] sm:$0xf]
  %v168 = vld [vmem:[%s1 + $0x158] sm:$0xf]
  %v169 = vld [vmem:[%s1 + $0x15c] sm:$0xf]
  %v170 = vld [vmem:[%s1 + $0x160] sm:$0xf]
  %v171 = vld [vmem:[%s1 + $0x164] sm:$0xf]
  %v172 = vld [vmem:[%s1 + $0x168] sm:$0xf]
  %v173 = vld [vmem:[%s1 + $0x16c] sm:$0xf]
  %v174 = vld [vmem:[%s1 + $0x170] sm:$0xf]
  %v175 = vld [vmem:[%s1 + $0x174] sm:$0xf]
  %v176 = vld [vmem:[%s1 + $0x178] sm:$0xf]
  %v177 = vld [vmem:[%s1 + $0x17c] sm:$0xf]
  %v178 = vld [vmem:[%s1 + $0x180] sm:$0xf]
  %v179 = vld [vmem:[%s1 + $0x184] sm:$0xf]
  %v180 = vld [vmem:[%s1 + $0x188] sm:$0xf]
  %v181 = vld [vmem:[%s1 + $0x18c] sm:$0xf]
  %v182 = vld [vmem:[%s1 + $0x190] sm:$0xf]
  %v183 = vld [vmem:[%s1 + $0x194] sm:$0xf]
  %v184 = vld [vmem:[%s1 + $0x198] sm:$0xf]
  %v185 = vld [vmem:[%s1 + $0x19c] sm:$0xf]
  %v186 = vld [vmem:[%s1 + $0x1a0] sm:$0xf]
  %v187 = vld [vmem:[%s1 + $0x1a4] sm:$0xf]
  %v188 = vld [vmem:[%s1 + $0x1a8] sm:$0xf]
  %v189 = vld [vmem:[%s1 + $0x1ac] sm:$0xf]
  %v190 = vld [vmem:[%s1 + $0x1b0] sm:$0xf]
  %v191 = vld [vmem:[%s1 + $0x1b4] sm:$0xf]
  %v192 = vld [vmem:[%s1 + $0x1b8] sm:$0xf]
  %v193 = vld [vmem:[%s1 + $0x1bc] sm:$0xf]
  %v194 = vld [vmem:[%s1 + $0x1c0] sm:$0xf]
  %v195 = vld [vmem:[%s1 + $0x1c4] sm:$0xf]
  %v196 = vld [vmem:[%s1 + $0x1c8] sm:$0xf]
  %v197 = vld [vmem:[%s1 + $0x1cc] sm:$0xf]
  %v198 = vld [vmem:[%s1 + $0x1d0] sm:$0xf]
  %v199 = vld [vmem:[%s1 + $0x1d4] sm:$0xf]
  %v200 = vld [vmem:[%s1 + $0x1d8] sm:$0xf]
  %v201 = vld [vmem:[%s1 + $0x1dc] sm:$0xf]
  %v202 = vld [vmem:[%s1 + $0x1e0] sm:$0xf]
  %v203 = vld [vmem:[%s1 + $0x1e4] sm:$0xf]
  %v204 = vld [vmem:[%s1 + $0x1e8] sm:$0xf]
  %v205 = vld [vmem:[%s1 + $0x1ec] sm:$0xf]
  %v206 = vld [vmem:[%s1 + $0x1f0] sm:$0xf]
  %v207 = vld [vmem:[%s1 + $0x1f4] sm:$0xf]
  %v208 = vld [vmem:[%s1 + $0x1f8] sm:$0xf]
  %v209 = vld [vmem:[%s1 + $0x1fc] sm:$0xf]
  %v210 = vld [vmem:[%s1 + $0x200] sm:$0xf]
  %v211 = vld [vmem:[%s1 + $0x204] sm:$0xf]
  %v212 = vld [vmem:[%s1 + $0x208] sm:$0xf]
  %v213 = vld [vmem:[%s1 + $0x20c] sm:$0xf]
  %v214 = vld [vmem:[%s1 + $0x210] sm:$0xf]
  %v215 = vld [vmem:[%s1 + $0x214] sm:$0xf]
  %v216 = vld [vmem:[%s1 + $0x218] sm:$0xf]
  %v217 = vld [vmem:[%s1 + $0x21c] sm:$0xf]
  %v218 = vld [vmem:[%s1 + $0x220] sm:$0xf]
  %v219 = vld [vmem:[%s1 + $0x224] sm:$0xf]
  %v220 = vld [vmem:[%s1 + $0x228] sm:$0xf]
  %v221 = vld [vmem:[%s1 + $0x22c] sm:$0xf]
  %v222 = vld [vmem:[%s1 + $0x230] sm:$0xf]
  %v223 = vld [vmem:[%s1 + $0x234] sm:$0xf]
  %v224 = vld [vmem:[%s1 + $0x238] sm:$0xf]
  %v225 = vld [vmem:[%s1 + $0x23c] sm:$0xf]
  %v296 = vunpack.c.l.b16 %v12
  %v297 = vunpack.c.h.b16 %v12
  %v298 = vunpack.c.l.b16 %v13
  %v299 = vunpack.c.h.b16 %v13
  %v300 = vunpack.c.l.b16 %v14
  %v301 = vunpack.c.h.b16 %v14
  %v302 = vunpack.c.l.b16 %v15
  %v303 = vunpack.c.h.b16 %v15
  %v304 = vunpack.c.l.b16 %v16
  %v305 = vunpack.c.l.b16 %v17
  %v306 = vunpack.c.h.b16 %v17
  %v307 = vunpack.c.l.b16 %v18
  %v308 = vunpack.c.h.b16 %v18
  %v309 = vunpack.c.l.b16 %v19
  %v310 = vunpack.c.h.b16 %v19
  %v311 = vunpack.c.l.b16 %v20
  %v312 = vunpack.c.h.b16 %v20
  %v313 = vunpack.c.l.b16 %v21
  %v314 = vunpack.c.l.b16 %v22
  %v315 = vunpack.c.h.b16 %v22
  %v316 = vunpack.c.l.b16 %v23
  %v317 = vunpack.c.h.b16 %v23
  %v318 = vunpack.c.l.b16 %v24
  %v319 = vunpack.c.h.b16 %v24
  %v320 = vunpack.c.l.b16 %v25
  %v321 = vunpack.c.h.b16 %v25
  %v322 = vunpack.c.l.b16 %v26
  %v323 = vunpack.c.l.b16 %v27
  %v324 = vunpack.c.h.b16 %v27
  %v325 = vunpack.c.l.b16 %v28
  %v326 = vunpack.c.h.b16 %v28
  %v327 = vunpack.c.l.b16 %v29
  %v328 = vunpack.c.h.b16 %v29
  %v329 = vunpack.c.l.b16 %v30
  %v330 = vunpack.c.h.b16 %v30
  %v331 = vunpack.c.l.b16 %v31
  %v332 = vunpack.c.l.b16 %v32
  %v333 = vunpack.c.h.b16 %v32
  %v334 = vunpack.c.l.b16 %v33
  %v335 = vunpack.c.h.b16 %v33
  %v336 = vunpack.c.l.b16 %v34
  %v337 = vunpack.c.h.b16 %v34
  %v338 = vunpack.c.l.b16 %v35
  %v339 = vunpack.c.h.b16 %v35
  %v340 = vunpack.c.l.b16 %v36
  %v341 = vunpack.c.l.b16 %v37
  %v342 = vunpack.c.h.b16 %v37
  %v343 = vunpack.c.l.b16 %v38
  %v344 = vunpack.c.h.b16 %v38
  %v345 = vunpack.c.l.b16 %v39
  %v346 = vunpack.c.h.b16 %v39
  %v347 = vunpack.c.l.b16 %v40
  %v348 = vunpack.c.h.b16 %v40
  %v349 = vunpack.c.l.b16 %v41
  %v350 = vunpack.c.l.b16 %v42
  %v351 = vunpack.c.h.b16 %v42
  %v352 = vunpack.c.l.b16 %v43
  %v353 = vunpack.c.h.b16 %v43
  %v354 = vunpack.c.l.b16 %v44
  %v355 = vunpack.c.h.b16 %v44
  %v356 = vunpack.c.l.b16 %v45
  %v357 = vunpack.c.h.b16 %v45
  %v358 = vunpack.c.l.b16 %v46
  %v359 = vunpack.c.l.b16 %v47
  %v360 = vunpack.c.h.b16 %v47
  %v361 = vunpack.c.l.b16 %v48
  %v362 = vunpack.c.h.b16 %v48
  %v363 = vunpack.c.l.b16 %v49
  %v364 = vunpack.c.h.b16 %v49
  %v365 = vunpack.c.l.b16 %v50
  %v366 = vunpack.c.h.b16 %v50
  %v367 = vunpack.c.l.b16 %v51
  %v368 = vunpack.c.l.b16 %v52
  %v369 = vunpack.c.h.b16 %v52
  %v370 = vunpack.c.l.b16 %v53
  %v371 = vunpack.c.h.b16 %v53
  %v372 = vunpack.c.l.b16 %v54
  %v373 = vunpack.c.h.b16 %v54
  %v374 = vunpack.c.l.b16 %v55
  %v375 = vunpack.c.h.b16 %v55
  %v376 = vunpack.c.l.b16 %v56
  %v377 = vunpack.c.l.b16 %v57
  %v378 = vunpack.c.h.b16 %v57
  %v379 = vunpack.c.l.b16 %v58
  %v380 = vunpack.c.h.b16 %v58
  %v381 = vunpack.c.l.b16 %v59
  %v382 = vunpack.c.h.b16 %v59
  %v383 = vunpack.c.l.b16 %v60
  %v384 = vunpack.c.h.b16 %v60
  %v385 = vunpack.c.l.b16 %v61
  %v386 = vunpack.c.l.b16 %v62
  %v387 = vunpack.c.h.b16 %v62
  %v388 = vunpack.c.l.b16 %v63
  %v389 = vunpack.c.h.b16 %v63
  %v390 = vunpack.c.l.b16 %v64
  %v391 = vunpack.c.h.b16 %v64
  %v392 = vunpack.c.l.b16 %v65
  %v393 = vunpack.c.h.b16 %v65
  %v394 = vunpack.c.l.b16 %v66
  %v395 = vunpack.c.l.b16 %v67
  %v396 = vunpack.c.h.b16 %v67
  %v397 = vunpack.c.l.b16 %v68
  %v398 = vunpack.c.h.b16 %v68
  %v399 = vunpack.c.l.b16 %v69
  %v400 = vunpack.c.h.b16 %v69
  %v401 = vunpack.c.l.b16 %v70
  %v402 = vunpack.c.h.b16 %v70
  %v403 = vunpack.c.l.b16 %v71
  %v404 = vunpack.c.l.b16 %v72
  %v405 = vunpack.c.h.b16 %v72
  %v406 = vunpack.c.l.b16 %v73
  %v407 = vunpack.c.h.b16 %v73
  %v408 = vunpack.c.l.b16 %v74
  %v409 = vunpack.c.h.b16 %v74
  %v410 = vunpack.c.l.b16 %v75
  %v411 = vunpack.c.h.b16 %v75
  %v412 = vunpack.c.l.b16 %v76
  %v413 = vunpack.c.l.b16 %v77
  %v414 = vunpack.c.h.b16 %v77
  %v415 = vunpack.c.l.b16 %v78
  %v416 = vunpack.c.h.b16 %v78
  %v417 = vunpack.c.l.b16 %v79
  %v418 = vunpack.c.h.b16 %v79
  %v419 = vunpack.c.l.b16 %v80
  %v420 = vunpack.c.h.b16 %v80
  %v421 = vunpack.c.l.b16 %v81
  %v422 = vpack.c.b16 %v305, %v296
  %v423 = vpack.c.b16 %v306, %v297
  %v424 = vpack.c.b16 %v307, %v298
  %v425 = vpack.c.b16 %v308, %v299
  %v426 = vpack.c.b16 %v309, %v300
  %v427 = vpack.c.b16 %v310, %v301
  %v428 = vpack.c.b16 %v311, %v302
  %v429 = vpack.c.b16 %v312, %v303
  %v430 = vpack.c.b16 %v313, %v304
  %v431 = vpack.c.b16 %v323, %v314
  %v432 = vpack.c.b16 %v324, %v315
  %v433 = vpack.c.b16 %v325, %v316
  %v434 = vpack.c.b16 %v326, %v317
  %v435 = vpack.c.b16 %v327, %v318
  %v436 = vpack.c.b16 %v328, %v319
  %v437 = vpack.c.b16 %v329, %v320
  %v438 = vpack.c.b16 %v330, %v321
  %v439 = vpack.c.b16 %v331, %v322
  %v440 = vpack.c.b16 %v341, %v332
  %v441 = vpack.c.b16 %v342, %v333
  %v442 = vpack.c.b16 %v343, %v334
  %v443 = vpack.c.b16 %v344, %v335
  %v444 = vpack.c.b16 %v345, %v336
  %v445 = vpack.c.b16 %v346, %v337
  %v446 = vpack.c.b16 %v347, %v338
  %v447 = vpack.c.b16 %v348, %v339
  %v448 = vpack.c.b16 %v349, %v340
  %v449 = vpack.c.b16 %v359, %v350
  %v450 = vpack.c.b16 %v360, %v351
  %v451 = vpack.c.b16 %v361, %v352
  %v452 = vpack.c.b16 %v362, %v353
  %v453 = vpack.c.b16 %v363, %v354
  %v454 = vpack.c.b16 %v364, %v355
  %v455 = vpack.c.b16 %v365, %v356
  %v456 = vpack.c.b16 %v366, %v357
  %v457 = vpack.c.b16 %v367, %v358
  %v458 = vpack.c.b16 %v377, %v368
  %v459 = vpack.c.b16 %v378, %v369
  %v460 = vpack.c.b16 %v379, %v370
  %v461 = vpack.c.b16 %v380, %v371
  %v462 = vpack.c.b16 %v381, %v372
  %v463 = vpack.c.b16 %v382, %v373
  %v464 = vpack.c.b16 %v383, %v374
  %v465 = vpack.c.b16 %v384, %v375
  %v466 = vpack.c.b16 %v385, %v376
  %v467 = vpack.c.b16 %v395, %v386
  %v468 = vpack.c.b16 %v396, %v387
  %v469 = vpack.c.b16 %v397, %v388
  %v470 = vpack.c.b16 %v398, %v389
  %v471 = vpack.c.b16 %v399, %v390
  %v472 = vpack.c.b16 %v400, %v391
  %v473 = vpack.c.b16 %v401, %v392
  %v474 = vpack.c.b16 %v402, %v393
  %v475 = vpack.c.b16 %v403, %v394
  %v476 = vpack.c.b16 %v413, %v404
  %v477 = vpack.c.b16 %v414, %v405
  %v478 = vpack.c.b16 %v415, %v406
  %v479 = vpack.c.b16 %v416, %v407
  %v480 = vpack.c.b16 %v417, %v408
  %v481 = vpack.c.b16 %v418, %v409
  %v482 = vpack.c.b16 %v419, %v410
  %v483 = vpack.c.b16 %v420, %v411
  %v484 = vpack.c.b16 %v421, %v412
  %v692 = vunpack.c.l.b16 %v82
  %v693 = vunpack.c.l.b16 %v83
  %v694 = vunpack.c.l.b16 %v84
  %v695 = vunpack.c.l.b16 %v85
  %v696 = vunpack.c.l.b16 %v86
  %v697 = vunpack.c.l.b16 %v87
  %v698 = vunpack.c.l.b16 %v88
  %v699 = vunpack.c.l.b16 %v89
  %v700 = vunpack.c.l.b16 %v90
  %v701 = vunpack.c.l.b16 %v91
  %v702 = vunpack.c.l.b16 %v92
  %v703 = vunpack.c.l.b16 %v93
  %v704 = vunpack.c.l.b16 %v94
  %v705 = vunpack.c.l.b16 %v95
  %v706 = vunpack.c.l.b16 %v96
  %v707 = vunpack.c.l.b16 %v97
  %v708 = vunpack.c.l.b16 %v98
  %v709 = vunpack.c.l.b16 %v99
  %v710 = vunpack.c.l.b16 %v100
  %v711 = vunpack.c.l.b16 %v101
  %v712 = vunpack.c.l.b16 %v102
  %v713 = vunpack.c.l.b16 %v103
  %v714 = vunpack.c.l.b16 %v104
  %v715 = vunpack.c.l.b16 %v105
  %v716 = vunpack.c.l.b16 %v106
  %v717 = vunpack.c.l.b16 %v107
  %v718 = vunpack.c.l.b16 %v108
  %v719 = vunpack.c.l.b16 %v109
  %v720 = vunpack.c.l.b16 %v110
  %v721 = vunpack.c.l.b16 %v111
  %v722 = vunpack.c.l.b16 %v112
  %v723 = vunpack.c.l.b16 %v113
  %v724 = vunpack.c.l.b16 %v114
  %v725 = vunpack.c.l.b16 %v115
  %v726 = vunpack.c.l.b16 %v116
  %v727 = vunpack.c.l.b16 %v117
  %v728 = vunpack.c.l.b16 %v118
  %v729 = vunpack.c.l.b16 %v119
  %v730 = vunpack.c.l.b16 %v120
  %v731 = vunpack.c.l.b16 %v121
  %v732 = vunpack.c.l.b16 %v122
  %v733 = vunpack.c.l.b16 %v123
  %v734 = vunpack.c.l.b16 %v124
  %v735 = vunpack.c.l.b16 %v125
  %v736 = vunpack.c.l.b16 %v126
  %v737 = vunpack.c.l.b16 %v127
  %v738 = vunpack.c.l.b16 %v128
  %v739 = vunpack.c.l.b16 %v129
  %v740 = vunpack.c.l.b16 %v130
  %v741 = vunpack.c.l.b16 %v131
  %v742 = vunpack.c.l.b16 %v132
  %v743 = vunpack.c.l.b16 %v133
  %v744 = vunpack.c.l.b16 %v134
  %v745 = vunpack.c.l.b16 %v135
  %v746 = vunpack.c.l.b16 %v136
  %v747 = vunpack.c.l.b16 %v137
  %v748 = vunpack.c.l.b16 %v138
  %v749 = vunpack.c.l.b16 %v139
  %v750 = vunpack.c.l.b16 %v140
  %v751 = vunpack.c.l.b16 %v141
  %v752 = vunpack.c.l.b16 %v142
  %v753 = vunpack.c.l.b16 %v143
  %v754 = vunpack.c.l.b16 %v144
  %v755 = vunpack.c.l.b16 %v145
  %v756 = vunpack.c.l.b16 %v146
  %v757 = vunpack.c.l.b16 %v147
  %v758 = vunpack.c.l.b16 %v148
  %v759 = vunpack.c.l.b16 %v149
  %v760 = vunpack.c.l.b16 %v150
  %v761 = vunpack.c.l.b16 %v151
  %v762 = vunpack.c.l.b16 %v152
  %v763 = vunpack.c.l.b16 %v153
  %v764 = vunpack.c.l.b16 %v154
  %v765 = vunpack.c.l.b16 %v155
  %v766 = vunpack.c.l.b16 %v156
  %v767 = vunpack.c.l.b16 %v157
  %v768 = vunpack.c.l.b16 %v158
  %v769 = vunpack.c.l.b16 %v159
  %v770 = vunpack.c.l.b16 %v160
  %v771 = vunpack.c.l.b16 %v161
  %v772 = vunpack.c.l.b16 %v162
  %v773 = vunpack.c.l.b16 %v163
  %v774 = vunpack.c.l.b16 %v164
  %v775 = vunpack.c.l.b16 %v165
  %v776 = vunpack.c.l.b16 %v166
  %v777 = vunpack.c.l.b16 %v167
  %v778 = vunpack.c.l.b16 %v168
  %v779 = vunpack.c.l.b16 %v169
  %v780 = vunpack.c.l.b16 %v170
  %v781 = vunpack.c.l.b16 %v171
  %v782 = vunpack.c.l.b16 %v172
  %v783 = vunpack.c.l.b16 %v173
  %v784 = vunpack.c.l.b16 %v174
  %v785 = vunpack.c.l.b16 %v175
  %v786 = vunpack.c.l.b16 %v176
  %v787 = vunpack.c.l.b16 %v177
  %v788 = vunpack.c.l.b16 %v178
  %v789 = vunpack.c.l.b16 %v179
  %v790 = vunpack.c.l.b16 %v180
  %v791 = vunpack.c.l.b16 %v181
  %v792 = vunpack.c.l.b16 %v182
  %v793 = vunpack.c.l.b16 %v183
  %v794 = vunpack.c.l.b16 %v184
  %v795 = vunpack.c.l.b16 %v185
  %v796 = vunpack.c.l.b16 %v186
  %v797 = vunpack.c.l.b16 %v187
  %v798 = vunpack.c.l.b16 %v188
  %v799 = vunpack.c.l.b16 %v189
  %v800 = vunpack.c.l.b16 %v190
  %v801 = vunpack.c.l.b16 %v191
  %v802 = vunpack.c.l.b16 %v192
  %v803 = vunpack.c.l.b16 %v193
  %v804 = vunpack.c.l.b16 %v194
  %v805 = vunpack.c.l.b16 %v195
  %v806 = vunpack.c.l.b16 %v196
  %v807 = vunpack.c.l.b16 %v197
  %v808 = vunpack.c.l.b16 %v198
  %v809 = vunpack.c.l.b16 %v199
  %v810 = vunpack.c.l.b16 %v200
  %v811 = vunpack.c.l.b16 %v201
  %v812 = vunpack.c.l.b16 %v202
  %v813 = vunpack.c.l.b16 %v203
  %v814 = vunpack.c.l.b16 %v204
  %v815 = vunpack.c.l.b16 %v205
  %v816 = vunpack.c.l.b16 %v206
  %v817 = vunpack.c.l.b16 %v207
  %v818 = vunpack.c.l.b16 %v208
  %v819 = vunpack.c.l.b16 %v209
  %v820 = vunpack.c.l.b16 %v210
  %v821 = vunpack.c.l.b16 %v211
  %v822 = vunpack.c.l.b16 %v212
  %v823 = vunpack.c.l.b16 %v213
  %v824 = vunpack.c.l.b16 %v214
  %v825 = vunpack.c.l.b16 %v215
  %v826 = vunpack.c.l.b16 %v216
  %v827 = vunpack.c.l.b16 %v217
  %v828 = vunpack.c.l.b16 %v218
  %v829 = vunpack.c.l.b16 %v219
  %v830 = vunpack.c.l.b16 %v220
  %v831 = vunpack.c.l.b16 %v221
  %v832 = vunpack.c.l.b16 %v222
  %v833 = vunpack.c.l.b16 %v223
  %v834 = vunpack.c.l.b16 %v224
  %v835 = vunpack.c.l.b16 %v225
  %v836 = vpack.c.b16 %v693, %v692
  %v837 = vpack.c.b16 %v695, %v694
  %v838 = vpack.c.b16 %v697, %v696
  %v839 = vpack.c.b16 %v699, %v698
  %v840 = vpack.c.b16 %v701, %v700
  %v841 = vpack.c.b16 %v703, %v702
  %v842 = vpack.c.b16 %v705, %v704
  %v843 = vpack.c.b16 %v707, %v706
  %v844 = vpack.c.b16 %v709, %v708
  %v845 = vpack.c.b16 %v711, %v710
  %v846 = vpack.c.b16 %v713, %v712
  %v847 = vpack.c.b16 %v715, %v714
  %v848 = vpack.c.b16 %v717, %v716
  %v849 = vpack.c.b16 %v719, %v718
  %v850 = vpack.c.b16 %v721, %v720
  %v851 = vpack.c.b16 %v723, %v722
  %v852 = vpack.c.b16 %v725, %v724
  %v853 = vpack.c.b16 %v727, %v726
  %v854 = vpack.c.b16 %v729, %v728
  %v855 = vpack.c.b16 %v731, %v730
  %v856 = vpack.c.b16 %v733, %v732
  %v857 = vpack.c.b16 %v735, %v734
  %v858 = vpack.c.b16 %v737, %v736
  %v859 = vpack.c.b16 %v739, %v738
  %v860 = vpack.c.b16 %v741, %v740
  %v861 = vpack.c.b16 %v743, %v742
  %v862 = vpack.c.b16 %v745, %v744
  %v863 = vpack.c.b16 %v747, %v746
  %v864 = vpack.c.b16 %v749, %v748
  %v865 = vpack.c.b16 %v751, %v750
  %v866 = vpack.c.b16 %v753, %v752
  %v867 = vpack.c.b16 %v755, %v754
  %v868 = vpack.c.b16 %v757, %v756
  %v869 = vpack.c.b16 %v759, %v758
  %v870 = vpack.c.b16 %v761, %v760
  %v871 = vpack.c.b16 %v763, %v762
  %v872 = vpack.c.b16 %v765, %v764
  %v873 = vpack.c.b16 %v767, %v766
  %v874 = vpack.c.b16 %v769, %v768
  %v875 = vpack.c.b16 %v771, %v770
  %v876 = vpack.c.b16 %v773, %v772
  %v877 = vpack.c.b16 %v775, %v774
  %v878 = vpack.c.b16 %v777, %v776
  %v879 = vpack.c.b16 %v779, %v778
  %v880 = vpack.c.b16 %v781, %v780
  %v881 = vpack.c.b16 %v783, %v782
  %v882 = vpack.c.b16 %v785, %v784
  %v883 = vpack.c.b16 %v787, %v786
  %v884 = vpack.c.b16 %v789, %v788
  %v885 = vpack.c.b16 %v791, %v790
  %v886 = vpack.c.b16 %v793, %v792
  %v887 = vpack.c.b16 %v795, %v794
  %v888 = vpack.c.b16 %v797, %v796
  %v889 = vpack.c.b16 %v799, %v798
  %v890 = vpack.c.b16 %v801, %v800
  %v891 = vpack.c.b16 %v803, %v802
  %v892 = vpack.c.b16 %v805, %v804
  %v893 = vpack.c.b16 %v807, %v806
  %v894 = vpack.c.b16 %v809, %v808
  %v895 = vpack.c.b16 %v811, %v810
  %v896 = vpack.c.b16 %v813, %v812
  %v897 = vpack.c.b16 %v815, %v814
  %v898 = vpack.c.b16 %v817, %v816
  %v899 = vpack.c.b16 %v819, %v818
  %v900 = vpack.c.b16 %v821, %v820
  %v901 = vpack.c.b16 %v823, %v822
  %v902 = vpack.c.b16 %v825, %v824
  %v903 = vpack.c.b16 %v827, %v826
  %v904 = vpack.c.b16 %v829, %v828
  %v905 = vpack.c.b16 %v831, %v830
  %v906 = vpack.c.b16 %v833, %v832
  %v907 = vpack.c.b16 %v835, %v834
  %980 = vmatprep.subr.bf16.mxu0 0
  %981 = vmatpush1.bf16.msra.mxu0 %v836
  %982 = vmatprep.subr.bf16.mxu0 0
  %983 = vmatpush1.bf16.msra.mxu0 %v837
  %984 = vmatprep.subr.bf16.mxu0 0
  %985 = vmatpush1.bf16.msra.mxu0 %v838
  %986 = vmatprep.subr.bf16.mxu0 0
  %987 = vmatpush1.bf16.msra.mxu0 %v839
  %988 = vmatprep.subr.bf16.mxu0 0
  %989 = vmatpush1.bf16.msra.mxu0 %v840
  %990 = vmatprep.subr.bf16.mxu0 0
  %991 = vmatpush1.bf16.msra.mxu0 %v841
  %992 = vmatprep.subr.bf16.mxu0 0
  %993 = vmatpush1.bf16.msra.mxu0 %v842
  %994 = vmatprep.subr.bf16.mxu0 0
  %995 = vmatpush1.bf16.msra.mxu0 %v843
  %996 = vmatprep.subr.bf16.mxu0 0
  %997 = vmatpush1.bf16.msra.mxu0 %v844
  %998 = vmatprep.subr.bf16.mxu0 0
  %999 = vmatpush1.bf16.msra.mxu0 %v845
  %1000 = vmatprep.subr.bf16.mxu0 0
  %1001 = vmatpush1.bf16.msra.mxu0 %v846
  %1002 = vmatprep.subr.bf16.mxu0 0
  %1003 = vmatpush1.bf16.msra.mxu0 %v847
  %1004 = vmatprep.subr.bf16.mxu0 0
  %1005 = vmatpush1.bf16.msra.mxu0 %v848
  %1006 = vmatprep.subr.bf16.mxu0 0
  %1007 = vmatpush1.bf16.msra.mxu0 %v849
  %1008 = vmatprep.subr.bf16.mxu0 0
  %1009 = vmatpush1.bf16.msra.mxu0 %v850
  %1010 = vmatprep.subr.bf16.mxu0 0
  %1011 = vmatpush1.bf16.msra.mxu0 %v851
  %1012 = vmatprep.mubr.bf16.mxu0 %v423
  %1013 = vmatmul.mubr.bf16.gmra.mrb[0].mxu0 %v422
  %v1014 = vpop.f32.mrb[0].mxu0
  %v1015 = vadd.f32 0.0, %v1014
  %v1016 = vpop.f32.mrb[0].mxu0
  %v1017 = vpop.f32.mrb[0].mxu0
  %v1018 = vadd.f32 0.0, %v1017
  %v1019 = vpop.f32.mrb[0].mxu0
  %1020 = vmatprep.mubr.bf16.mxu0 %v432
  %1021 = vmatmul.mubr.bf16.gmra.mrb[0].mxu0 %v431
  %v1022 = vpop.f32.mrb[0].mxu0
  %v1023 = vadd.f32 0.0, %v1022
  %v1024 = vpop.f32.mrb[0].mxu0
  %v1025 = vpop.f32.mrb[0].mxu0
  %v1026 = vadd.f32 0.0, %v1025
  %v1027 = vpop.f32.mrb[0].mxu0
  %1028 = vmatprep.mubr.bf16.mxu0 %v441
  %1029 = vmatmul.mubr.bf16.gmra.mrb[0].mxu0 %v440
  %v1030 = vpop.f32.mrb[0].mxu0
  %v1031 = vadd.f32 0.0, %v1030
  %v1032 = vpop.f32.mrb[0].mxu0
  %v1033 = vpop.f32.mrb[0].mxu0
  %v1034 = vadd.f32 0.0, %v1033
  %v1035 = vpop.f32.mrb[0].mxu0
  %1036 = vmatprep.mubr.bf16.mxu0 %v450
  %1037 = vmatmul.mubr.bf16.gmra.mrb[0].mxu0 %v449
  %v1038 = vpop.f32.mrb[0].mxu0
  %v1039 = vadd.f32 0.0, %v1038
  %v1040 = vpop.f32.mrb[0].mxu0
  %v1041 = vpop.f32.mrb[0].mxu0
  %v1042 = vadd.f32 0.0, %v1041
  %v1043 = vpop.f32.mrb[0].mxu0
  %1044 = vmatprep.mubr.bf16.mxu0 %v459
  %1045 = vmatmul.mubr.bf16.gmra.mrb[0].mxu0 %v458
  %v1046 = vpop.f32.mrb[0].mxu0
  %v1047 = vadd.f32 0.0, %v1046
  %v1048 = vpop.f32.mrb[0].mxu0
  %v1049 = vpop.f32.mrb[0].mxu0
  %v1050 = vadd.f32 0.0, %v1049
  %v1051 = vpop.f32.mrb[0].mxu0
  %1052 = vmatprep.mubr.bf16.mxu0 %v468
  %1053 = vmatmul.mubr.bf16.gmra.mrb[0].mxu0 %v467
  %v1054 = vpop.f32.mrb[0].mxu0
  %v1055 = vadd.f32 0.0, %v1054
  %v1056 = vpop.f32.mrb[0].mxu0
  %v1057 = vpop.f32.mrb[0].mxu0
  %v1058 = vadd.f32 0.0, %v1057
  %v1059 = vpop.f32.mrb[0].mxu0
  %1060 = vmatprep.mubr.bf16.mxu0 %v477
  %1061 = vmatmul.mubr.bf16.gmra.mrb[0].mxu0 %v476
  %v1062 = vpop.f32.mrb[0].mxu0
  %v1063 = vadd.f32 0.0, %v1062
  %v1064 = vpop.f32.mrb[0].mxu0
  %v1065 = vpop.f32.mrb[0].mxu0
  %v1066 = vadd.f32 0.0, %v1065
  %v1067 = vpop.f32.mrb[0].mxu0
  %1068 = vdwg.mxu0
  %1069 = vmatprep.subr.bf16.mxu0 0
  %1070 = vmatpush1.bf16.msra.mxu0 %v852
  %1071 = vmatprep.subr.bf16.mxu0 0
  %1072 = vmatpush1.bf16.msra.mxu0 %v853
  %1073 = vmatprep.subr.bf16.mxu0 0
  %1074 = vmatpush1.bf16.msra.mxu0 %v854
  %1075 = vmatprep.subr.bf16.mxu0 0
  %1076 = vmatpush1.bf16.msra.mxu0 %v855
  %1077 = vmatprep.subr.bf16.mxu0 0
  %1078 = vmatpush1.bf16.msra.mxu0 %v856
  %1079 = vmatprep.subr.bf16.mxu0 0
  %1080 = vmatpush1.bf16.msra.mxu0 %v857
  %1081 = vmatprep.subr.bf16.mxu0 0
  %1082 = vmatpush1.bf16.msra.mxu0 %v858
  %1083 = vmatprep.subr.bf16.mxu0 0
  %1084 = vmatpush1.bf16.msra.mxu0 %v859
  %1085 = vmatprep.subr.bf16.mxu0 0
  %1086 = vmatpush1.bf16.msra.mxu0 %v860
  %1087 = vmatprep.subr.bf16.mxu0 0
  %1088 = vmatpush1.bf16.msra.mxu0 %v861
  %1089 = vmatprep.subr.bf16.mxu0 0
  %1090 = vmatpush1.bf16.msra.mxu0 %v862
  %1091 = vmatprep.subr.bf16.mxu0 0
  %1092 = vmatpush1.bf16.msra.mxu0 %v863
  %1093 = vmatprep.subr.bf16.mxu0 0
  %1094 = vmatpush1.bf16.msra.mxu0 %v864
  %1095 = vmatprep.subr.bf16.mxu0 0
  %1096 = vmatpush1.bf16.msra.mxu0 %v865
  %1097 = vmatprep.subr.bf16.mxu0 0
  %1098 = vmatpush1.bf16.msra.mxu0 %v866
  %1099 = vmatprep.subr.bf16.mxu0 0
  %1100 = vmatpush1.bf16.msra.mxu0 %v867
  %1101 = vmatprep.mubr.bf16.mxu0 %v425
  %1102 = vmatmul.mubr.bf16.gmra.mrb[0].mxu0 %v424
  %v1103 = vpop.f32.mrb[0].mxu0
  %v1104 = vadd.f32 %v1015, %v1103
  %v1105 = vpop.f32.mrb[0].mxu0
  %v1106 = vpop.f32.mrb[0].mxu0
  %v1107 = vadd.f32 %v1018, %v1106
  %v1108 = vpop.f32.mrb[0].mxu0
  %1109 = vmatprep.mubr.bf16.mxu0 %v434
  %1110 = vmatmul.mubr.bf16.gmra.mrb[0].mxu0 %v433
  %v1111 = vpop.f32.mrb[0].mxu0
  %v1112 = vadd.f32 %v1023, %v1111
  %v1113 = vpop.f32.mrb[0].mxu0
  %v1114 = vpop.f32.mrb[0].mxu0
  %v1115 = vadd.f32 %v1026, %v1114
  %v1116 = vpop.f32.mrb[0].mxu0
  %1117 = vmatprep.mubr.bf16.mxu0 %v443
  %1118 = vmatmul.mubr.bf16.gmra.mrb[0].mxu0 %v442
  %v1119 = vpop.f32.mrb[0].mxu0
  %v1120 = vadd.f32 %v1031, %v1119
  %v1121 = vpop.f32.mrb[0].mxu0
  %v1122 = vpop.f32.mrb[0].mxu0
  %v1123 = vadd.f32 %v1034, %v1122
  %v1124 = vpop.f32.mrb[0].mxu0
  %1125 = vmatprep.mubr.bf16.mxu0 %v452
  %1126 = vmatmul.mubr.bf16.gmra.mrb[0].mxu0 %v451
  %v1127 = vpop.f32.mrb[0].mxu0
  %v1128 = vadd.f32 %v1039, %v1127
  %v1129 = vpop.f32.mrb[0].mxu0
  %v1130 = vpop.f32.mrb[0].mxu0
  %v1131 = vadd.f32 %v1042, %v1130
  %v1132 = vpop.f32.mrb[0].mxu0
  %1133 = vmatprep.mubr.bf16.mxu0 %v461
  %1134 = vmatmul.mubr.bf16.gmra.mrb[0].mxu0 %v460
  %v1135 = vpop.f32.mrb[0].mxu0
  %v1136 = vadd.f32 %v1047, %v1135
  %v1137 = vpop.f32.mrb[0].mxu0
  %v1138 = vpop.f32.mrb[0].mxu0
  %v1139 = vadd.f32 %v1050, %v1138
  %v1140 = vpop.f32.mrb[0].mxu0
  %1141 = vmatprep.mubr.bf16.mxu0 %v470
  %1142 = vmatmul.mubr.bf16.gmra.mrb[0].mxu0 %v469
  %v1143 = vpop.f32.mrb[0].mxu0
  %v1144 = vadd.f32 %v1055, %v1143
  %v1145 = vpop.f32.mrb[0].mxu0
  %v1146 = vpop.f32.mrb[0].mxu0
  %v1147 = vadd.f32 %v1058, %v1146
  %v1148 = vpop.f32.mrb[0].mxu0
  %1149 = vmatprep.mubr.bf16.mxu0 %v479
  %1150 = vmatmul.mubr.bf16.gmra.mrb[0].mxu0 %v478
  %v1151 = vpop.f32.mrb[0].mxu0
  %v1152 = vadd.f32 %v1063, %v1151
  %v1153 = vpop.f32.mrb[0].mxu0
  %v1154 = vpop.f32.mrb[0].mxu0
  %v1155 = vadd.f32 %v1066, %v1154
  %v1156 = vpop.f32.mrb[0].mxu0
  %1157 = vdwg.mxu0
  %1158 = vmatprep.subr.bf16.mxu0 0
  %1159 = vmatpush1.bf16.msra.mxu0 %v868
  %1160 = vmatprep.subr.bf16.mxu0 0
  %1161 = vmatpush1.bf16.msra.mxu0 %v869
  %1162 = vmatprep.subr.bf16.mxu0 0
  %1163 = vmatpush1.bf16.msra.mxu0 %v870
  %1164 = vmatprep.subr.bf16.mxu0 0
  %1165 = vmatpush1.bf16.msra.mxu0 %v871
  %1166 = vmatprep.subr.bf16.mxu0 0
  %1167 = vmatpush1.bf16.msra.mxu0 %v872
  %1168 = vmatprep.subr.bf16.mxu0 0
  %1169 = vmatpush1.bf16.msra.mxu0 %v873
  %1170 = vmatprep.subr.bf16.mxu0 0
  %1171 = vmatpush1.bf16.msra.mxu0 %v874
  %1172 = vmatprep.subr.bf16.mxu0 0
  %1173 = vmatpush1.bf16.msra.mxu0 %v875
  %1174 = vmatprep.subr.bf16.mxu0 0
  %1175 = vmatpush1.bf16.msra.mxu0 %v876
  %1176 = vmatprep.subr.bf16.mxu0 0
  %1177 = vmatpush1.bf16.msra.mxu0 %v877
  %1178 = vmatprep.subr.bf16.mxu0 0
  %1179 = vmatpush1.bf16.msra.mxu0 %v878
  %1180 = vmatprep.subr.bf16.mxu0 0
  %1181 = vmatpush1.bf16.msra.mxu0 %v879
  %1182 = vmatprep.subr.bf16.mxu0 0
  %1183 = vmatpush1.bf16.msra.mxu0 %v880
  %1184 = vmatprep.subr.bf16.mxu0 0
  %1185 = vmatpush1.bf16.msra.mxu0 %v881
  %1186 = vmatprep.subr.bf16.mxu0 0
  %1187 = vmatpush1.bf16.msra.mxu0 %v882
  %1188 = vmatprep.subr.bf16.mxu0 0
  %1189 = vmatpush1.bf16.msra.mxu0 %v883
  %1190 = vmatprep.mubr.bf16.mxu0 %v427
  %1191 = vmatmul.mubr.bf16.gmra.mrb[0].mxu0 %v426
  %v1192 = vpop.f32.mrb[0].mxu0
  %v1193 = vadd.f32 %v1104, %v1192
  %v1194 = vpop.f32.mrb[0].mxu0
  %v1195 = vpop.f32.mrb[0].mxu0
  %v1196 = vadd.f32 %v1107, %v1195
  %v1197 = vpop.f32.mrb[0].mxu0
  %1198 = vmatprep.mubr.bf16.mxu0 %v436
  %1199 = vmatmul.mubr.bf16.gmra.mrb[0].mxu0 %v435
  %v1200 = vpop.f32.mrb[0].mxu0
  %v1201 = vadd.f32 %v1112, %v1200
  %v1202 = vpop.f32.mrb[0].mxu0
  %v1203 = vpop.f32.mrb[0].mxu0
  %v1204 = vadd.f32 %v1115, %v1203
  %v1205 = vpop.f32.mrb[0].mxu0
  %1206 = vmatprep.mubr.bf16.mxu0 %v445
  %1207 = vmatmul.mubr.bf16.gmra.mrb[0].mxu0 %v444
  %v1208 = vpop.f32.mrb[0].mxu0
  %v1209 = vadd.f32 %v1120, %v1208
  %v1210 = vpop.f32.mrb[0].mxu0
  %v1211 = vpop.f32.mrb[0].mxu0
  %v1212 = vadd.f32 %v1123, %v1211
  %v1213 = vpop.f32.mrb[0].mxu0
  %1214 = vmatprep.mubr.bf16.mxu0 %v454
  %1215 = vmatmul.mubr.bf16.gmra.mrb[0].mxu0 %v453
  %v1216 = vpop.f32.mrb[0].mxu0
  %v1217 = vadd.f32 %v1128, %v1216
  %v1218 = vpop.f32.mrb[0].mxu0
  %v1219 = vpop.f32.mrb[0].mxu0
  %v1220 = vadd.f32 %v1131, %v1219
  %v1221 = vpop.f32.mrb[0].mxu0
  %1222 = vmatprep.mubr.bf16.mxu0 %v463
  %1223 = vmatmul.mubr.bf16.gmra.mrb[0].mxu0 %v462
  %v1224 = vpop.f32.mrb[0].mxu0
  %v1225 = vadd.f32 %v1136, %v1224
  %v1226 = vpop.f32.mrb[0].mxu0
  %v1227 = vpop.f32.mrb[0].mxu0
  %v1228 = vadd.f32 %v1139, %v1227
  %v1229 = vpop.f32.mrb[0].mxu0
  %1230 = vmatprep.mubr.bf16.mxu0 %v472
  %1231 = vmatmul.mubr.bf16.gmra.mrb[0].mxu0 %v471
  %v1232 = vpop.f32.mrb[0].mxu0
  %v1233 = vadd.f32 %v1144, %v1232
  %v1234 = vpop.f32.mrb[0].mxu0
  %v1235 = vpop.f32.mrb[0].mxu0
  %v1236 = vadd.f32 %v1147, %v1235
  %v1237 = vpop.f32.mrb[0].mxu0
  %1238 = vmatprep.mubr.bf16.mxu0 %v481
  %1239 = vmatmul.mubr.bf16.gmra.mrb[0].mxu0 %v480
  %v1240 = vpop.f32.mrb[0].mxu0
  %v1241 = vadd.f32 %v1152, %v1240
  %v1242 = vpop.f32.mrb[0].mxu0
  %v1243 = vpop.f32.mrb[0].mxu0
  %v1244 = vadd.f32 %v1155, %v1243
  %v1245 = vpop.f32.mrb[0].mxu0
  %1246 = vdwg.mxu0
  %1247 = vmatprep.subr.bf16.mxu0 0
  %1248 = vmatpush1.bf16.msra.mxu0 %v884
  %1249 = vmatprep.subr.bf16.mxu0 0
  %1250 = vmatpush1.bf16.msra.mxu0 %v885
  %1251 = vmatprep.subr.bf16.mxu0 0
  %1252 = vmatpush1.bf16.msra.mxu0 %v886
  %1253 = vmatprep.subr.bf16.mxu0 0
  %1254 = vmatpush1.bf16.msra.mxu0 %v887
  %1255 = vmatprep.subr.bf16.mxu0 0
  %1256 = vmatpush1.bf16.msra.mxu0 %v888
  %1257 = vmatprep.subr.bf16.mxu0 0
  %1258 = vmatpush1.bf16.msra.mxu0 %v889
  %1259 = vmatprep.subr.bf16.mxu0 0
  %1260 = vmatpush1.bf16.msra.mxu0 %v890
  %1261 = vmatprep.subr.bf16.mxu0 0
  %1262 = vmatpush1.bf16.msra.mxu0 %v891
  %1263 = vmatprep.subr.bf16.mxu0 0
  %1264 = vmatpush1.bf16.msra.mxu0 %v892
  %1265 = vmatprep.subr.bf16.mxu0 0
  %1266 = vmatpush1.bf16.msra.mxu0 %v893
  %1267 = vmatprep.subr.bf16.mxu0 0
  %1268 = vmatpush1.bf16.msra.mxu0 %v894
  %1269 = vmatprep.subr.bf16.mxu0 0
  %1270 = vmatpush1.bf16.msra.mxu0 %v895
  %1271 = vmatprep.subr.bf16.mxu0 0
  %1272 = vmatpush1.bf16.msra.mxu0 %v896
  %1273 = vmatprep.subr.bf16.mxu0 0
  %1274 = vmatpush1.bf16.msra.mxu0 %v897
  %1275 = vmatprep.subr.bf16.mxu0 0
  %1276 = vmatpush1.bf16.msra.mxu0 %v898
  %1277 = vmatprep.subr.bf16.mxu0 0
  %1278 = vmatpush1.bf16.msra.mxu0 %v899
  %1279 = vmatprep.mubr.bf16.mxu0 %v429
  %1280 = vmatmul.mubr.bf16.gmra.mrb[0].mxu0 %v428
  %v1281 = vpop.f32.mrb[0].mxu0
  %v1282 = vadd.f32 %v1193, %v1281
  %v1283 = vpop.f32.mrb[0].mxu0
  %v1284 = vpop.f32.mrb[0].mxu0
  %v1285 = vadd.f32 %v1196, %v1284
  %v1286 = vpop.f32.mrb[0].mxu0
  %1287 = vmatprep.mubr.bf16.mxu0 %v438
  %1288 = vmatmul.mubr.bf16.gmra.mrb[0].mxu0 %v437
  %v1289 = vpop.f32.mrb[0].mxu0
  %v1290 = vadd.f32 %v1201, %v1289
  %v1291 = vpop.f32.mrb[0].mxu0
  %v1292 = vpop.f32.mrb[0].mxu0
  %v1293 = vadd.f32 %v1204, %v1292
  %v1294 = vpop.f32.mrb[0].mxu0
  %1295 = vmatprep.mubr.bf16.mxu0 %v447
  %1296 = vmatmul.mubr.bf16.gmra.mrb[0].mxu0 %v446
  %v1297 = vpop.f32.mrb[0].mxu0
  %v1298 = vadd.f32 %v1209, %v1297
  %v1299 = vpop.f32.mrb[0].mxu0
  %v1300 = vpop.f32.mrb[0].mxu0
  %v1301 = vadd.f32 %v1212, %v1300
  %v1302 = vpop.f32.mrb[0].mxu0
  %1303 = vmatprep.mubr.bf16.mxu0 %v456
  %1304 = vmatmul.mubr.bf16.gmra.mrb[0].mxu0 %v455
  %v1305 = vpop.f32.mrb[0].mxu0
  %v1306 = vadd.f32 %v1217, %v1305
  %v1307 = vpop.f32.mrb[0].mxu0
  %v1308 = vpop.f32.mrb[0].mxu0
  %v1309 = vadd.f32 %v1220, %v1308
  %v1310 = vpop.f32.mrb[0].mxu0
  %1311 = vmatprep.mubr.bf16.mxu0 %v465
  %1312 = vmatmul.mubr.bf16.gmra.mrb[0].mxu0 %v464
  %v1313 = vpop.f32.mrb[0].mxu0
  %v1314 = vadd.f32 %v1225, %v1313
  %v1315 = vpop.f32.mrb[0].mxu0
  %v1316 = vpop.f32.mrb[0].mxu0
  %v1317 = vadd.f32 %v1228, %v1316
  %v1318 = vpop.f32.mrb[0].mxu0
  %1319 = vmatprep.mubr.bf16.mxu0 %v474
  %1320 = vmatmul.mubr.bf16.gmra.mrb[0].mxu0 %v473
  %v1321 = vpop.f32.mrb[0].mxu0
  %v1322 = vadd.f32 %v1233, %v1321
  %v1323 = vpop.f32.mrb[0].mxu0
  %v1324 = vpop.f32.mrb[0].mxu0
  %v1325 = vadd.f32 %v1236, %v1324
  %v1326 = vpop.f32.mrb[0].mxu0
  %1327 = vmatprep.mubr.bf16.mxu0 %v483
  %1328 = vmatmul.mubr.bf16.gmra.mrb[0].mxu0 %v482
  %v1329 = vpop.f32.mrb[0].mxu0
  %v1330 = vadd.f32 %v1241, %v1329
  %v1331 = vpop.f32.mrb[0].mxu0
  %v1332 = vpop.f32.mrb[0].mxu0
  %v1333 = vadd.f32 %v1244, %v1332
  %v1334 = vpop.f32.mrb[0].mxu0
  %1335 = vdwg.mxu0
  %1336 = vmatprep.subr.bf16.mxu0 0
  %1337 = vmatpush1.bf16.msra.mxu0 %v900
  %1338 = vmatprep.subr.bf16.mxu0 0
  %1339 = vmatpush1.bf16.msra.mxu0 %v901
  %1340 = vmatprep.subr.bf16.mxu0 0
  %1341 = vmatpush1.bf16.msra.mxu0 %v902
  %1342 = vmatprep.subr.bf16.mxu0 0
  %1343 = vmatpush1.bf16.msra.mxu0 %v903
  %1344 = vmatprep.subr.bf16.mxu0 0
  %1345 = vmatpush1.bf16.msra.mxu0 %v904
  %1346 = vmatprep.subr.bf16.mxu0 0
  %1347 = vmatpush1.bf16.msra.mxu0 %v905
  %1348 = vmatprep.subr.bf16.mxu0 0
  %1349 = vmatpush1.bf16.msra.mxu0 %v906
  %1350 = vmatprep.subr.bf16.mxu0 0
  %1351 = vmatpush1.bf16.msra.mxu0 %v907
  %1352 = vmatprep.subr.bf16.mxu0 0
  %1353 = vmatpush1.bf16.msra.mxu0 0
  %1354 = vmatprep.subr.bf16.mxu0 0
  %1355 = vmatpush1.bf16.msra.mxu0 0
  %1356 = vmatprep.subr.bf16.mxu0 0
  %1357 = vmatpush1.bf16.msra.mxu0 0
  %1358 = vmatprep.subr.bf16.mxu0 0
  %1359 = vmatpush1.bf16.msra.mxu0 0
  %1360 = vmatprep.subr.bf16.mxu0 0
  %1361 = vmatpush1.bf16.msra.mxu0 0
  %1362 = vmatprep.subr.bf16.mxu0 0
  %1363 = vmatpush1.bf16.msra.mxu0 0
  %1364 = vmatprep.subr.bf16.mxu0 0
  %1365 = vmatpush1.bf16.msra.mxu0 0
  %1366 = vmatprep.subr.bf16.mxu0 0
  %1367 = vmatpush1.bf16.msra.mxu0 0
  %1368 = vmatprep.mubr.bf16.mxu0 0
  %1369 = vmatmul.mubr.bf16.gmra.mrb[0].mxu0 %v430
  %v1370 = vpop.f32.mrb[0].mxu0
  %v1371 = vadd.f32 %v1282, %v1370
  %v1372 = vpop.f32.mrb[0].mxu0
  %v1373 = vpop.f32.mrb[0].mxu0
  %v1374 = vadd.f32 %v1285, %v1373
  %v1375 = vpop.f32.mrb[0].mxu0
  %1376 = vmatprep.mubr.bf16.mxu0 0
  %1377 = vmatmul.mubr.bf16.gmra.mrb[0].mxu0 %v439
  %v1378 = vpop.f32.mrb[0].mxu0
  %v1379 = vadd.f32 %v1290, %v1378
  %v1380 = vpop.f32.mrb[0].mxu0
  %v1381 = vpop.f32.mrb[0].mxu0
  %v1382 = vadd.f32 %v1293, %v1381
  %v1383 = vpop.f32.mrb[0].mxu0
  %1384 = vmatprep.mubr.bf16.mxu0 0
  %1385 = vmatmul.mubr.bf16.gmra.mrb[0].mxu0 %v448
  %v1386 = vpop.f32.mrb[0].mxu0
  %v1387 = vadd.f32 %v1298, %v1386
  %v1388 = vpop.f32.mrb[0].mxu0
  %v1389 = vpop.f32.mrb[0].mxu0
  %v1390 = vadd.f32 %v1301, %v1389
  %v1391 = vpop.f32.mrb[0].mxu0
  %1392 = vmatprep.mubr.bf16.mxu0 0
  %1393 = vmatmul.mubr.bf16.gmra.mrb[0].mxu0 %v457
  %v1394 = vpop.f32.mrb[0].mxu0
  %v1395 = vadd.f32 %v1306, %v1394
  %v1396 = vpop.f32.mrb[0].mxu0
  %v1397 = vpop.f32.mrb[0].mxu0
  %v1398 = vadd.f32 %v1309, %v1397
  %v1399 = vpop.f32.mrb[0].mxu0
  %1400 = vmatprep.mubr.bf16.mxu0 0
  %1401 = vmatmul.mubr.bf16.gmra.mrb[0].mxu0 %v466
  %v1402 = vpop.f32.mrb[0].mxu0
  %v1403 = vadd.f32 %v1314, %v1402
  %v1404 = vpop.f32.mrb[0].mxu0
  %v1405 = vpop.f32.mrb[0].mxu0
  %v1406 = vadd.f32 %v1317, %v1405
  %v1407 = vpop.f32.mrb[0].mxu0
  %1408 = vmatprep.mubr.bf16.mxu0 0
  %1409 = vmatmul.mubr.bf16.gmra.mrb[0].mxu0 %v475
  %v1410 = vpop.f32.mrb[0].mxu0
  %v1411 = vadd.f32 %v1322, %v1410
  %v1412 = vpop.f32.mrb[0].mxu0
  %v1413 = vpop.f32.mrb[0].mxu0
  %v1414 = vadd.f32 %v1325, %v1413
  %v1415 = vpop.f32.mrb[0].mxu0
  %1416 = vmatprep.mubr.bf16.mxu0 0
  %1417 = vmatmul.mubr.bf16.gmra.mrb[0].mxu0 %v484
  %v1418 = vpop.f32.mrb[0].mxu0
  %v1419 = vadd.f32 %v1330, %v1418
  %v1420 = vpop.f32.mrb[0].mxu0
  %v1421 = vpop.f32.mrb[0].mxu0
  %v1422 = vadd.f32 %v1333, %v1421
  %v1423 = vpop.f32.mrb[0].mxu0
  %1424 = vdwg.mxu0
  %v1425 = vadd.f32 %v1371, %v1374
  %v1426 = vadd.f32 %v1425, %v1379
  %v1427 = vadd.f32 %v1426, %v1382
  %v1428 = vadd.f32 %v1427, %v1387
  %v1429 = vadd.f32 %v1428, %v1390
  %v1430 = vadd.f32 %v1429, %v1395
  %v1431 = vadd.f32 %v1430, %v1398
  %v1432 = vadd.f32 %v1431, %v1403
  %v1433 = vadd.f32 %v1432, %v1406
  %v1434 = vadd.f32 %v1433, %v1411
  %v1435 = vadd.f32 %v1434, %v1414
  %v1436 = vadd.f32 %v1435, %v1419
  %v1437 = vadd.f32 %v1436, %v1422
  %v1438 = vrot.slane %v1437, 4
  %v1439 = vadd.f32 %v1437, %v1438
  %v1440 = vrot.slane %v1439, 2
  %v1441 = vadd.f32 %v1439, %v1440
  %v1442 = vrot.slane %v1441, 1
  %v1443 = vadd.f32 %v1441, %v1442
  %v1444 = vmul.f32 %v1443, 0.010204081
  %v1445 = vlaneseq
  %v1446 = vshrl.u32 %v1445, 7
  %v1447 = vadd.s32 %v1446, 8
  %v1448 = vadd.s32 %v1446, 16
  %v1449 = vadd.s32 %v1446, 24
  %v1450 = vadd.s32 %v1446, 32
  %v1451 = vadd.s32 %v1446, 40
  %v1452 = vadd.s32 %v1446, 48
  %v1453 = vadd.s32 %v1446, 56
  %v1454 = vadd.s32 %v1446, 64
  %v1455 = vadd.s32 %v1446, 72
  %v1456 = vadd.s32 %v1446, 80
  %v1457 = vadd.s32 %v1446, 88
  %v1458 = vadd.s32 %v1446, 96
  %v1459 = vadd.s32 %v1446, 104
  %vm1460 = vcmp.lt.s32.totalorder %v1446, 98
  %vm1461 = vcmp.lt.s32.totalorder %v1447, 98
  %vm1462 = vcmp.lt.s32.totalorder %v1448, 98
  %vm1463 = vcmp.lt.s32.totalorder %v1449, 98
  %vm1464 = vcmp.lt.s32.totalorder %v1450, 98
  %vm1465 = vcmp.lt.s32.totalorder %v1451, 98
  %vm1466 = vcmp.lt.s32.totalorder %v1452, 98
  %vm1467 = vcmp.lt.s32.totalorder %v1453, 98
  %vm1468 = vcmp.lt.s32.totalorder %v1454, 98
  %vm1469 = vcmp.lt.s32.totalorder %v1455, 98
  %vm1470 = vcmp.lt.s32.totalorder %v1456, 98
  %vm1471 = vcmp.lt.s32.totalorder %v1457, 98
  %vm1472 = vcmp.lt.s32.totalorder %v1458, 98
  %vm1473 = vcmp.lt.s32.totalorder %v1459, 98
  %v1474 = vsub.f32 %v1371, %v1444
  %v1475 = vsub.f32 %v1374, %v1444
  %v1476 = vsub.f32 %v1379, %v1444
  %v1477 = vsub.f32 %v1382, %v1444
  %v1478 = vsub.f32 %v1387, %v1444
  %v1479 = vsub.f32 %v1390, %v1444
  %v1480 = vsub.f32 %v1395, %v1444
  %v1481 = vsub.f32 %v1398, %v1444
  %v1482 = vsub.f32 %v1403, %v1444
  %v1483 = vsub.f32 %v1406, %v1444
  %v1484 = vsub.f32 %v1411, %v1444
  %v1485 = vsub.f32 %v1414, %v1444
  %v1486 = vsub.f32 %v1419, %v1444
  %v1487 = vsub.f32 %v1422, %v1444
  %v1488 = vsel %vm1460, 1, 0
  %v1489 = vsel %vm1461, 1, 0
  %v1490 = vsel %vm1462, 1, 0
  %v1491 = vsel %vm1463, 1, 0
  %v1492 = vsel %vm1464, 1, 0
  %v1493 = vsel %vm1465, 1, 0
  %v1494 = vsel %vm1466, 1, 0
  %v1495 = vsel %vm1467, 1, 0
  %v1496 = vsel %vm1468, 1, 0
  %v1497 = vsel %vm1469, 1, 0
  %v1498 = vsel %vm1470, 1, 0
  %v1499 = vsel %vm1471, 1, 0
  %v1500 = vsel %vm1472, 1, 0
  %v1501 = vsel %vm1473, 1, 0
  %vm1502 = vcmp.eq.s32.totalorder %v1488, 1
  %vm1503 = vcmp.eq.s32.totalorder %v1489, 1
  %vm1504 = vcmp.eq.s32.totalorder %v1490, 1
  %vm1505 = vcmp.eq.s32.totalorder %v1491, 1
  %vm1506 = vcmp.eq.s32.totalorder %v1492, 1
  %vm1507 = vcmp.eq.s32.totalorder %v1493, 1
  %vm1508 = vcmp.eq.s32.totalorder %v1494, 1
  %vm1509 = vcmp.eq.s32.totalorder %v1495, 1
  %vm1510 = vcmp.eq.s32.totalorder %v1496, 1
  %vm1511 = vcmp.eq.s32.totalorder %v1497, 1
  %vm1512 = vcmp.eq.s32.totalorder %v1498, 1
  %vm1513 = vcmp.eq.s32.totalorder %v1499, 1
  %vm1514 = vcmp.eq.s32.totalorder %v1500, 1
  %vm1515 = vcmp.eq.s32.totalorder %v1501, 1
  %v1516 = vsel %vm1502, %v1474, 0.0
  %v1517 = vsel %vm1503, %v1475, 0.0
  %v1518 = vsel %vm1504, %v1476, 0.0
  %v1519 = vsel %vm1505, %v1477, 0.0
  %v1520 = vsel %vm1506, %v1478, 0.0
  %v1521 = vsel %vm1507, %v1479, 0.0
  %v1522 = vsel %vm1508, %v1480, 0.0
  %v1523 = vsel %vm1509, %v1481, 0.0
  %v1524 = vsel %vm1510, %v1482, 0.0
  %v1525 = vsel %vm1511, %v1483, 0.0
  %v1526 = vsel %vm1512, %v1484, 0.0
  %v1527 = vsel %vm1513, %v1485, 0.0
  %v1528 = vsel %vm1514, %v1486, 0.0
  %v1529 = vsel %vm1515, %v1487, 0.0
  %v1530 = vmul.f32 %v1516, %v1516
  %v1531 = vmul.f32 %v1517, %v1517
  %v1532 = vmul.f32 %v1518, %v1518
  %v1533 = vmul.f32 %v1519, %v1519
  %v1534 = vmul.f32 %v1520, %v1520
  %v1535 = vmul.f32 %v1521, %v1521
  %v1536 = vmul.f32 %v1522, %v1522
  %v1537 = vmul.f32 %v1523, %v1523
  %v1538 = vmul.f32 %v1524, %v1524
  %v1539 = vmul.f32 %v1525, %v1525
  %v1540 = vmul.f32 %v1526, %v1526
  %v1541 = vmul.f32 %v1527, %v1527
  %v1542 = vmul.f32 %v1528, %v1528
  %v1543 = vmul.f32 %v1529, %v1529
  %v1544 = vadd.f32 %v1530, %v1531
  %v1545 = vadd.f32 %v1544, %v1532
  %v1546 = vadd.f32 %v1545, %v1533
  %v1547 = vadd.f32 %v1546, %v1534
  %v1548 = vadd.f32 %v1547, %v1535
  %v1549 = vadd.f32 %v1548, %v1536
  %v1550 = vadd.f32 %v1549, %v1537
  %v1551 = vadd.f32 %v1550, %v1538
  %v1552 = vadd.f32 %v1551, %v1539
  %v1553 = vadd.f32 %v1552, %v1540
  %v1554 = vadd.f32 %v1553, %v1541
  %v1555 = vadd.f32 %v1554, %v1542
  %v1556 = vadd.f32 %v1555, %v1543
  %v1557 = vrot.slane %v1556, 4
  %v1558 = vadd.f32 %v1556, %v1557
  %v1559 = vrot.slane %v1558, 2
  %v1560 = vadd.f32 %v1558, %v1559
  %v1561 = vrot.slane %v1560, 1
  %v1562 = vadd.f32 %v1560, %v1561
  %v1563 = vmul.f32 %v1562, 0.010204081
  %v1564 = vadd.f32 %v1563, 1e-05
  %v1565 = vrsqrt.pop %v1564
  %v1566 = vmul.f32 %v1516, %v1565
  %v1567 = vmul.f32 %v1517, %v1565
  %v1568 = vmul.f32 %v1518, %v1565
  %v1569 = vmul.f32 %v1519, %v1565
  %v1570 = vmul.f32 %v1520, %v1565
  %v1571 = vmul.f32 %v1521, %v1565
  %v1572 = vmul.f32 %v1522, %v1565
  %v1573 = vmul.f32 %v1523, %v1565
  %v1574 = vmul.f32 %v1524, %v1565
  %v1575 = vmul.f32 %v1525, %v1565
  %v1576 = vmul.f32 %v1526, %v1565
  %v1577 = vmul.f32 %v1527, %v1565
  %v1578 = vmul.f32 %v1528, %v1565
  %v1579 = vmul.f32 %v1529, %v1565
  %v1580 = vmax.f32 %v1566, 0.0
  %v1581 = vmax.f32 %v1567, 0.0
  %v1582 = vmax.f32 %v1568, 0.0
  %v1583 = vmax.f32 %v1569, 0.0
  %v1584 = vmax.f32 %v1570, 0.0
  %v1585 = vmax.f32 %v1571, 0.0
  %v1586 = vmax.f32 %v1572, 0.0
  %v1587 = vmax.f32 %v1573, 0.0
  %v1588 = vmax.f32 %v1574, 0.0
  %v1589 = vmax.f32 %v1575, 0.0
  %v1590 = vmax.f32 %v1576, 0.0
  %v1591 = vmax.f32 %v1577, 0.0
  %v1592 = vmax.f32 %v1578, 0.0
  %v1593 = vmax.f32 %v1579, 0.0
  %1594 = vst [vmem:[%s2] sm:$0xff] %v1580
  %1595 = vst [vmem:[%s2 + $0x8] sm:$0xff] %v1581
  %1596 = vst [vmem:[%s2 + $0x10] sm:$0xff] %v1582
  %1597 = vst [vmem:[%s2 + $0x18] sm:$0xff] %v1583
  %1598 = vst [vmem:[%s2 + $0x20] sm:$0xff] %v1584
  %1599 = vst [vmem:[%s2 + $0x28] sm:$0xff] %v1585
  %1600 = vst [vmem:[%s2 + $0x30] sm:$0xff] %v1586
  %1601 = vst [vmem:[%s2 + $0x38] sm:$0xff] %v1587
  %1602 = vst [vmem:[%s2 + $0x40] sm:$0xff] %v1588
  %1603 = vst [vmem:[%s2 + $0x48] sm:$0xff] %v1589
  %1604 = vst [vmem:[%s2 + $0x50] sm:$0xff] %v1590
  %1605 = vst [vmem:[%s2 + $0x58] sm:$0xff] %v1591
  %1606 = vst [vmem:[%s2 + $0x60] sm:$0xff] %v1592
  %1607 = vst [vmem:[%s2 + $0x68] sm:$0xff] %v1593
  // Predicated region
  $region10: #{resnet_forward.12} parent=0 // pred_check
    _
  $region11: #{resnet_forward.12} parent=0 // pred_check_branch
    %1609 = sbr.rel (0) target = $region13
  $region12: #{resnet_forward.12} parent=0 // pred_region
    _
  $region13: #{resnet_forward.12} parent=0 // pred_fallthru
    _
  // Predicated region
  $region14: #{resnet_forward.12} parent=0 // pred_check
    _
  $region15: #{resnet_forward.12} parent=0 // pred_check_branch
    %1611 = sbr.rel (0) target = $region17
  $region16: #{resnet_forward.12} parent=0 // pred_region
    _
  $region17: #{resnet_forward.12} parent=0 // pred_fallthru
    _

// kernel: resnet_forward.15
$region0: #{resnet_forward.15}
  #allocation0 [shape = 'u32[]', space=smem, size = 0x4, offset = 0x4, fixed_abs, tag = 'smem constant byte address 0x4 - core index']
  #allocation1 [shape = 'u32[144,128]{1,0:T(1,128)}', space=vmem, size = 0x12000, scoped, tag = 'internal scratch']
  %s0 = inlined_call_operand.vmem [shape: bf16[32,2304], index: 0, kind: input, shape index: {}]
  %s1 = inlined_call_operand.vmem [shape: bf16[2304,512], index: 1, kind: input, shape index: {}]
  %s2 = inlined_call_operand.vmem [shape: f32[32,512], index: 2, kind: output, shape index: {}]
  %s3 = sld [smem:[#allocation0]]
  $region18: #{resnet_forward.15} parent=0
    _
  %s5 = ssub.s32 1, %s3
  %s6 = scalar_select 0, %s5, %s3
  // Predicated region
  $region2: #{resnet_forward.15} parent=0 // pred_check
    _
  $region3: #{resnet_forward.15} parent=0 // pred_check_branch
    %8 = sbr.rel (0) target = $region5
  $region4: #{resnet_forward.15} parent=0 // pred_region
    _
  $region5: #{resnet_forward.15} parent=0 // pred_fallthru
    _
  // Predicated region
  $region6: #{resnet_forward.15} parent=0 // pred_check
    _
  $region7: #{resnet_forward.15} parent=0 // pred_check_branch
    %10 = sbr.rel (0) target = $region9
  $region8: #{resnet_forward.15} parent=0 // pred_region
    _
  $region9: #{resnet_forward.15} parent=0 // pred_fallthru
    _
  %v11 = vld [vmem:[%s0] sm:$0xff]
  %v12 = vld [vmem:[%s0 + $0x8] sm:$0xff]
  %v13 = vld [vmem:[%s0 + $0x10] sm:$0xff]
  %v14 = vld [vmem:[%s0 + $0x18] sm:$0xff]
  %v15 = vld [vmem:[%s0 + $0x20] sm:$0xff]
  %v16 = vld [vmem:[%s0 + $0x28] sm:$0xff]
  %v17 = vld [vmem:[%s0 + $0x30] sm:$0xff]
  %v18 = vld [vmem:[%s0 + $0x38] sm:$0xff]
  %v19 = vld [vmem:[%s0 + $0x40] sm:$0xff]
  %v20 = vld [vmem:[%s0 + $0x48] sm:$0xff]
  %v21 = vld [vmem:[%s0 + $0x50] sm:$0xff]
  %v22 = vld [vmem:[%s0 + $0x58] sm:$0xff]
  %v23 = vld [vmem:[%s0 + $0x60] sm:$0xff]
  %v24 = vld [vmem:[%s0 + $0x68] sm:$0xff]
  %v25 = vld [vmem:[%s0 + $0x70] sm:$0xff]
  %v26 = vld [vmem:[%s0 + $0x78] sm:$0xff]
  %v27 = vld [vmem:[%s0 + $0x80] sm:$0xff]
  %v28 = vld [vmem:[%s0 + $0x88] sm:$0xff]
  %v29 = vld [vmem:[%s0 + $0x90] sm:$0xff]
  %v30 = vld [vmem:[%s0 + $0x98] sm:$0xff]
  %v31 = vld [vmem:[%s0 + $0xa0] sm:$0xff]
  %v32 = vld [vmem:[%s0 + $0xa8] sm:$0xff]
  %v33 = vld [vmem:[%s0 + $0xb0] sm:$0xff]
  %v34 = vld [vmem:[%s0 + $0xb8] sm:$0xff]
  %v35 = vld [vmem:[%s0 + $0xc0] sm:$0xff]
  %v36 = vld [vmem:[%s0 + $0xc8] sm:$0xff]
  %v37 = vld [vmem:[%s0 + $0xd0] sm:$0xff]
  %v38 = vld [vmem:[%s0 + $0xd8] sm:$0xff]
  %v39 = vld [vmem:[%s0 + $0xe0] sm:$0xff]
  %v40 = vld [vmem:[%s0 + $0xe8] sm:$0xff]
  %v41 = vld [vmem:[%s0 + $0xf0] sm:$0xff]
  %v42 = vld [vmem:[%s0 + $0xf8] sm:$0xff]
  %v43 = vld [vmem:[%s0 + $0x100] sm:$0xff]
  %v44 = vld [vmem:[%s0 + $0x108] sm:$0xff]
  %v45 = vld [vmem:[%s0 + $0x110] sm:$0xff]
  %v46 = vld [vmem:[%s0 + $0x118] sm:$0xff]
  %v47 = vld [vmem:[%s1] sm:$0xff]
  %v48 = vld [vmem:[%s1 + $0x8] sm:$0xff]
  %v49 = vld [vmem:[%s1 + $0x10] sm:$0xff]
  %v50 = vld [vmem:[%s1 + $0x18] sm:$0xff]
  %v51 = vld [vmem:[%s1 + $0x20] sm:$0xff]
  %v52 = vld [vmem:[%s1 + $0x28] sm:$0xff]
  %v53 = vld [vmem:[%s1 + $0x30] sm:$0xff]
  %v54 = vld [vmem:[%s1 + $0x38] sm:$0xff]
  %v55 = vld [vmem:[%s1 + $0x40] sm:$0xff]
  %v56 = vld [vmem:[%s1 + $0x48] sm:$0xff]
  %v57 = vld [vmem:[%s1 + $0x50] sm:$0xff]
  %v58 = vld [vmem:[%s1 + $0x58] sm:$0xff]
  %v59 = vld [vmem:[%s1 + $0x60] sm:$0xff]
  %v60 = vld [vmem:[%s1 + $0x68] sm:$0xff]
  %v61 = vld [vmem:[%s1 + $0x70] sm:$0xff]
  %v62 = vld [vmem:[%s1 + $0x78] sm:$0xff]
  %v63 = vld [vmem:[%s1 + $0x80] sm:$0xff]
  %v64 = vld [vmem:[%s1 + $0x88] sm:$0xff]
  %v65 = vld [vmem:[%s1 + $0x90] sm:$0xff]
  %v66 = vld [vmem:[%s1 + $0x98] sm:$0xff]
  %v67 = vld [vmem:[%s1 + $0xa0] sm:$0xff]
  %v68 = vld [vmem:[%s1 + $0xa8] sm:$0xff]
  %v69 = vld [vmem:[%s1 + $0xb0] sm:$0xff]
  %v70 = vld [vmem:[%s1 + $0xb8] sm:$0xff]
  %v71 = vld [vmem:[%s1 + $0xc0] sm:$0xff]
  %v72 = vld [vmem:[%s1 + $0xc8] sm:$0xff]
  %v73 = vld [vmem:[%s1 + $0xd0] sm:$0xff]
  %v74 = vld [vmem:[%s1 + $0xd8] sm:$0xff]
  %v75 = vld [vmem:[%s1 + $0xe0] sm:$0xff]
  %v76 = vld [vmem:[%s1 + $0xe8] sm:$0xff]
  %v77 = vld [vmem:[%s1 + $0xf0] sm:$0xff]
  %v78 = vld [vmem:[%s1 + $0xf8] sm:$0xff]
  %v79 = vld [vmem:[%s1 + $0x100] sm:$0xff]
  %v80 = vld [vmem:[%s1 + $0x108] sm:$0xff]
  %v81 = vld [vmem:[%s1 + $0x110] sm:$0xff]
  %v82 = vld [vmem:[%s1 + $0x118] sm:$0xff]
  %v83 = vld [vmem:[%s1 + $0x120] sm:$0xff]
  %v84 = vld [vmem:[%s1 + $0x128] sm:$0xff]
  %v85 = vld [vmem:[%s1 + $0x130] sm:$0xff]
  %v86 = vld [vmem:[%s1 + $0x138] sm:$0xff]
  %v87 = vld [vmem:[%s1 + $0x140] sm:$0xff]
  %v88 = vld [vmem:[%s1 + $0x148] sm:$0xff]
  %v89 = vld [vmem:[%s1 + $0x150] sm:$0xff]
  %v90 = vld [vmem:[%s1 + $0x158] sm:$0xff]
  %v91 = vld [vmem:[%s1 + $0x160] sm:$0xff]
  %v92 = vld [vmem:[%s1 + $0x168] sm:$0xff]
  %v93 = vld [vmem:[%s1 + $0x170] sm:$0xff]
  %v94 = vld [vmem:[%s1 + $0x178] sm:$0xff]
  %v95 = vld [vmem:[%s1 + $0x180] sm:$0xff]
  %v96 = vld [vmem:[%s1 + $0x188] sm:$0xff]
  %v97 = vld [vmem:[%s1 + $0x190] sm:$0xff]
  %v98 = vld [vmem:[%s1 + $0x198] sm:$0xff]
  %v99 = vld [vmem:[%s1 + $0x1a0] sm:$0xff]
  %v100 = vld [vmem:[%s1 + $0x1a8] sm:$0xff]
  %v101 = vld [vmem:[%s1 + $0x1b0] sm:$0xff]
  %v102 = vld [vmem:[%s1 + $0x1b8] sm:$0xff]
  %v103 = vld [vmem:[%s1 + $0x1c0] sm:$0xff]
  %v104 = vld [vmem:[%s1 + $0x1c8] sm:$0xff]
  %v105 = vld [vmem:[%s1 + $0x1d0] sm:$0xff]
  %v106 = vld [vmem:[%s1 + $0x1d8] sm:$0xff]
  %v107 = vld [vmem:[%s1 + $0x1e0] sm:$0xff]
  %v108 = vld [vmem:[%s1 + $0x1e8] sm:$0xff]
  %v109 = vld [vmem:[%s1 + $0x1f0] sm:$0xff]
  %v110 = vld [vmem:[%s1 + $0x1f8] sm:$0xff]
  %v111 = vld [vmem:[%s1 + $0x200] sm:$0xff]
  %v112 = vld [vmem:[%s1 + $0x208] sm:$0xff]
  %v113 = vld [vmem:[%s1 + $0x210] sm:$0xff]
  %v114 = vld [vmem:[%s1 + $0x218] sm:$0xff]
  %v115 = vld [vmem:[%s1 + $0x220] sm:$0xff]
  %v116 = vld [vmem:[%s1 + $0x228] sm:$0xff]
  %v117 = vld [vmem:[%s1 + $0x230] sm:$0xff]
  %v118 = vld [vmem:[%s1 + $0x238] sm:$0xff]
  %v119 = vld [vmem:[%s1 + $0x240] sm:$0xff]
  %v120 = vld [vmem:[%s1 + $0x248] sm:$0xff]
  %v121 = vld [vmem:[%s1 + $0x250] sm:$0xff]
  %v122 = vld [vmem:[%s1 + $0x258] sm:$0xff]
  %v123 = vld [vmem:[%s1 + $0x260] sm:$0xff]
  %v124 = vld [vmem:[%s1 + $0x268] sm:$0xff]
  %v125 = vld [vmem:[%s1 + $0x270] sm:$0xff]
  %v126 = vld [vmem:[%s1 + $0x278] sm:$0xff]
  %v127 = vld [vmem:[%s1 + $0x280] sm:$0xff]
  %v128 = vld [vmem:[%s1 + $0x288] sm:$0xff]
  %v129 = vld [vmem:[%s1 + $0x290] sm:$0xff]
  %v130 = vld [vmem:[%s1 + $0x298] sm:$0xff]
  %v131 = vld [vmem:[%s1 + $0x2a0] sm:$0xff]
  %v132 = vld [vmem:[%s1 + $0x2a8] sm:$0xff]
  %v133 = vld [vmem:[%s1 + $0x2b0] sm:$0xff]
  %v134 = vld [vmem:[%s1 + $0x2b8] sm:$0xff]
  %v135 = vld [vmem:[%s1 + $0x2c0] sm:$0xff]
  %v136 = vld [vmem:[%s1 + $0x2c8] sm:$0xff]
  %v137 = vld [vmem:[%s1 + $0x2d0] sm:$0xff]
  %v138 = vld [vmem:[%s1 + $0x2d8] sm:$0xff]
  %v139 = vld [vmem:[%s1 + $0x2e0] sm:$0xff]
  %v140 = vld [vmem:[%s1 + $0x2e8] sm:$0xff]
  %v141 = vld [vmem:[%s1 + $0x2f0] sm:$0xff]
  %v142 = vld [vmem:[%s1 + $0x2f8] sm:$0xff]
  %v143 = vld [vmem:[%s1 + $0x300] sm:$0xff]
  %v144 = vld [vmem:[%s1 + $0x308] sm:$0xff]
  %v145 = vld [vmem:[%s1 + $0x310] sm:$0xff]
  %v146 = vld [vmem:[%s1 + $0x318] sm:$0xff]
  %v147 = vld [vmem:[%s1 + $0x320] sm:$0xff]
  %v148 = vld [vmem:[%s1 + $0x328] sm:$0xff]
  %v149 = vld [vmem:[%s1 + $0x330] sm:$0xff]
  %v150 = vld [vmem:[%s1 + $0x338] sm:$0xff]
  %v151 = vld [vmem:[%s1 + $0x340] sm:$0xff]
  %v152 = vld [vmem:[%s1 + $0x348] sm:$0xff]
  %v153 = vld [vmem:[%s1 + $0x350] sm:$0xff]
  %v154 = vld [vmem:[%s1 + $0x358] sm:$0xff]
  %v155 = vld [vmem:[%s1 + $0x360] sm:$0xff]
  %v156 = vld [vmem:[%s1 + $0x368] sm:$0xff]
  %v157 = vld [vmem:[%s1 + $0x370] sm:$0xff]
  %v158 = vld [vmem:[%s1 + $0x378] sm:$0xff]
  %v159 = vld [vmem:[%s1 + $0x380] sm:$0xff]
  %v160 = vld [vmem:[%s1 + $0x388] sm:$0xff]
  %v161 = vld [vmem:[%s1 + $0x390] sm:$0xff]
  %v162 = vld [vmem:[%s1 + $0x398] sm:$0xff]
  %v163 = vld [vmem:[%s1 + $0x3a0] sm:$0xff]
  %v164 = vld [vmem:[%s1 + $0x3a8] sm:$0xff]
  %v165 = vld [vmem:[%s1 + $0x3b0] sm:$0xff]
  %v166 = vld [vmem:[%s1 + $0x3b8] sm:$0xff]
  %v167 = vld [vmem:[%s1 + $0x3c0] sm:$0xff]
  %v168 = vld [vmem:[%s1 + $0x3c8] sm:$0xff]
  %v169 = vld [vmem:[%s1 + $0x3d0] sm:$0xff]
  %v170 = vld [vmem:[%s1 + $0x3d8] sm:$0xff]
  %v171 = vld [vmem:[%s1 + $0x3e0] sm:$0xff]
  %v172 = vld [vmem:[%s1 + $0x3e8] sm:$0xff]
  %v173 = vld [vmem:[%s1 + $0x3f0] sm:$0xff]
  %v174 = vld [vmem:[%s1 + $0x3f8] sm:$0xff]
  %v175 = vld [vmem:[%s1 + $0x400] sm:$0xff]
  %v176 = vld [vmem:[%s1 + $0x408] sm:$0xff]
  %v177 = vld [vmem:[%s1 + $0x410] sm:$0xff]
  %v178 = vld [vmem:[%s1 + $0x418] sm:$0xff]
  %v179 = vld [vmem:[%s1 + $0x420] sm:$0xff]
  %v180 = vld [vmem:[%s1 + $0x428] sm:$0xff]
  %v181 = vld [vmem:[%s1 + $0x430] sm:$0xff]
  %v182 = vld [vmem:[%s1 + $0x438] sm:$0xff]
  %v183 = vld [vmem:[%s1 + $0x440] sm:$0xff]
  %v184 = vld [vmem:[%s1 + $0x448] sm:$0xff]
  %v185 = vld [vmem:[%s1 + $0x450] sm:$0xff]
  %v186 = vld [vmem:[%s1 + $0x458] sm:$0xff]
  %v187 = vld [vmem:[%s1 + $0x460] sm:$0xff]
  %v188 = vld [vmem:[%s1 + $0x468] sm:$0xff]
  %v189 = vld [vmem:[%s1 + $0x470] sm:$0xff]
  %v190 = vld [vmem:[%s1 + $0x478] sm:$0xff]
  %v191 = vld [vmem:[%s1 + $0x480] sm:$0xff]
  %v192 = vld [vmem:[%s1 + $0x488] sm:$0xff]
  %v193 = vld [vmem:[%s1 + $0x490] sm:$0xff]
  %v194 = vld [vmem:[%s1 + $0x498] sm:$0xff]
  %v195 = vld [vmem:[%s1 + $0x4a0] sm:$0xff]
  %v196 = vld [vmem:[%s1 + $0x4a8] sm:$0xff]
  %v197 = vld [vmem:[%s1 + $0x4b0] sm:$0xff]
  %v198 = vld [vmem:[%s1 + $0x4b8] sm:$0xff]
  %v199 = vld [vmem:[%s1 + $0x4c0] sm:$0xff]
  %v200 = vld [vmem:[%s1 + $0x4c8] sm:$0xff]
  %v201 = vld [vmem:[%s1 + $0x4d0] sm:$0xff]
  %v202 = vld [vmem:[%s1 + $0x4d8] sm:$0xff]
  %v203 = vld [vmem:[%s1 + $0x4e0] sm:$0xff]
  %v204 = vld [vmem:[%s1 + $0x4e8] sm:$0xff]
  %v205 = vld [vmem:[%s1 + $0x4f0] sm:$0xff]
  %v206 = vld [vmem:[%s1 + $0x4f8] sm:$0xff]
  %v207 = vld [vmem:[%s1 + $0x500] sm:$0xff]
  %v208 = vld [vmem:[%s1 + $0x508] sm:$0xff]
  %v209 = vld [vmem:[%s1 + $0x510] sm:$0xff]
  %v210 = vld [vmem:[%s1 + $0x518] sm:$0xff]
  %v211 = vld [vmem:[%s1 + $0x520] sm:$0xff]
  %v212 = vld [vmem:[%s1 + $0x528] sm:$0xff]
  %v213 = vld [vmem:[%s1 + $0x530] sm:$0xff]
  %v214 = vld [vmem:[%s1 + $0x538] sm:$0xff]
  %v215 = vld [vmem:[%s1 + $0x540] sm:$0xff]
  %v216 = vld [vmem:[%s1 + $0x548] sm:$0xff]
  %v217 = vld [vmem:[%s1 + $0x550] sm:$0xff]
  %v218 = vld [vmem:[%s1 + $0x558] sm:$0xff]
  %v219 = vld [vmem:[%s1 + $0x560] sm:$0xff]
  %v220 = vld [vmem:[%s1 + $0x568] sm:$0xff]
  %v221 = vld [vmem:[%s1 + $0x570] sm:$0xff]
  %v222 = vld [vmem:[%s1 + $0x578] sm:$0xff]
  %v223 = vld [vmem:[%s1 + $0x580] sm:$0xff]
  %v224 = vld [vmem:[%s1 + $0x588] sm:$0xff]
  %v225 = vld [vmem:[%s1 + $0x590] sm:$0xff]
  %v226 = vld [vmem:[%s1 + $0x598] sm:$0xff]
  %v227 = vld [vmem:[%s1 + $0x5a0] sm:$0xff]
  %v228 = vld [vmem:[%s1 + $0x5a8] sm:$0xff]
  %v229 = vld [vmem:[%s1 + $0x5b0] sm:$0xff]
  %v230 = vld [vmem:[%s1 + $0x5b8] sm:$0xff]
  %v231 = vld [vmem:[%s1 + $0x5c0] sm:$0xff]
  %v232 = vld [vmem:[%s1 + $0x5c8] sm:$0xff]
  %v233 = vld [vmem:[%s1 + $0x5d0] sm:$0xff]
  %v234 = vld [vmem:[%s1 + $0x5d8] sm:$0xff]
  %v235 = vld [vmem:[%s1 + $0x5e0] sm:$0xff]
  %v236 = vld [vmem:[%s1 + $0x5e8] sm:$0xff]
  %v237 = vld [vmem:[%s1 + $0x5f0] sm:$0xff]
  %v238 = vld [vmem:[%s1 + $0x5f8] sm:$0xff]
  %v239 = vld [vmem:[%s1 + $0x600] sm:$0xff]
  %v240 = vld [vmem:[%s1 + $0x608] sm:$0xff]
  %v241 = vld [vmem:[%s1 + $0x610] sm:$0xff]
  %v242 = vld [vmem:[%s1 + $0x618] sm:$0xff]
  %v243 = vld [vmem:[%s1 + $0x620] sm:$0xff]
  %v244 = vld [vmem:[%s1 + $0x628] sm:$0xff]
  %v245 = vld [vmem:[%s1 + $0x630] sm:$0xff]
  %v246 = vld [vmem:[%s1 + $0x638] sm:$0xff]
  %v247 = vld [vmem:[%s1 + $0x640] sm:$0xff]
  %v248 = vld [vmem:[%s1 + $0x648] sm:$0xff]
  %v249 = vld [vmem:[%s1 + $0x650] sm:$0xff]
  %v250 = vld [vmem:[%s1 + $0x658] sm:$0xff]
  %v251 = vld [vmem:[%s1 + $0x660] sm:$0xff]
  %v252 = vld [vmem:[%s1 + $0x668] sm:$0xff]
  %v253 = vld [vmem:[%s1 + $0x670] sm:$0xff]
  %v254 = vld [vmem:[%s1 + $0x678] sm:$0xff]
  %v255 = vld [vmem:[%s1 + $0x680] sm:$0xff]
  %v256 = vld [vmem:[%s1 + $0x688] sm:$0xff]
  %v257 = vld [vmem:[%s1 + $0x690] sm:$0xff]
  %v258 = vld [vmem:[%s1 + $0x698] sm:$0xff]
  %v259 = vld [vmem:[%s1 + $0x6a0] sm:$0xff]
  %v260 = vld [vmem:[%s1 + $0x6a8] sm:$0xff]
  %v261 = vld [vmem:[%s1 + $0x6b0] sm:$0xff]
  %v262 = vld [vmem:[%s1 + $0x6b8] sm:$0xff]
  %v263 = vld [vmem:[%s1 + $0x6c0] sm:$0xff]
  %v264 = vld [vmem:[%s1 + $0x6c8] sm:$0xff]
  %v265 = vld [vmem:[%s1 + $0x6d0] sm:$0xff]
  %v266 = vld [vmem:[%s1 + $0x6d8] sm:$0xff]
  %v267 = vld [vmem:[%s1 + $0x6e0] sm:$0xff]
  %v268 = vld [vmem:[%s1 + $0x6e8] sm:$0xff]
  %v269 = vld [vmem:[%s1 + $0x6f0] sm:$0xff]
  %v270 = vld [vmem:[%s1 + $0x6f8] sm:$0xff]
  %v271 = vld [vmem:[%s1 + $0x700] sm:$0xff]
  %v272 = vld [vmem:[%s1 + $0x708] sm:$0xff]
  %v273 = vld [vmem:[%s1 + $0x710] sm:$0xff]
  %v274 = vld [vmem:[%s1 + $0x718] sm:$0xff]
  %v275 = vld [vmem:[%s1 + $0x720] sm:$0xff]
  %v276 = vld [vmem:[%s1 + $0x728] sm:$0xff]
  %v277 = vld [vmem:[%s1 + $0x730] sm:$0xff]
  %v278 = vld [vmem:[%s1 + $0x738] sm:$0xff]
  %v279 = vld [vmem:[%s1 + $0x740] sm:$0xff]
  %v280 = vld [vmem:[%s1 + $0x748] sm:$0xff]
  %v281 = vld [vmem:[%s1 + $0x750] sm:$0xff]
  %v282 = vld [vmem:[%s1 + $0x758] sm:$0xff]
  %v283 = vld [vmem:[%s1 + $0x760] sm:$0xff]
  %v284 = vld [vmem:[%s1 + $0x768] sm:$0xff]
  %v285 = vld [vmem:[%s1 + $0x770] sm:$0xff]
  %v286 = vld [vmem:[%s1 + $0x778] sm:$0xff]
  %v287 = vld [vmem:[%s1 + $0x780] sm:$0xff]
  %v288 = vld [vmem:[%s1 + $0x788] sm:$0xff]
  %v289 = vld [vmem:[%s1 + $0x790] sm:$0xff]
  %v290 = vld [vmem:[%s1 + $0x798] sm:$0xff]
  %v291 = vld [vmem:[%s1 + $0x7a0] sm:$0xff]
  %v292 = vld [vmem:[%s1 + $0x7a8] sm:$0xff]
  %v293 = vld [vmem:[%s1 + $0x7b0] sm:$0xff]
  %v294 = vld [vmem:[%s1 + $0x7b8] sm:$0xff]
  %v295 = vld [vmem:[%s1 + $0x7c0] sm:$0xff]
  %v296 = vld [vmem:[%s1 + $0x7c8] sm:$0xff]
  %v297 = vld [vmem:[%s1 + $0x7d0] sm:$0xff]
  %v298 = vld [vmem:[%s1 + $0x7d8] sm:$0xff]
  %v299 = vld [vmem:[%s1 + $0x7e0] sm:$0xff]
  %v300 = vld [vmem:[%s1 + $0x7e8] sm:$0xff]
  %v301 = vld [vmem:[%s1 + $0x7f0] sm:$0xff]
  %v302 = vld [vmem:[%s1 + $0x7f8] sm:$0xff]
  %v303 = vld [vmem:[%s1 + $0x800] sm:$0xff]
  %v304 = vld [vmem:[%s1 + $0x808] sm:$0xff]
  %v305 = vld [vmem:[%s1 + $0x810] sm:$0xff]
  %v306 = vld [vmem:[%s1 + $0x818] sm:$0xff]
  %v307 = vld [vmem:[%s1 + $0x820] sm:$0xff]
  %v308 = vld [vmem:[%s1 + $0x828] sm:$0xff]
  %v309 = vld [vmem:[%s1 + $0x830] sm:$0xff]
  %v310 = vld [vmem:[%s1 + $0x838] sm:$0xff]
  %v311 = vld [vmem:[%s1 + $0x840] sm:$0xff]
  %v312 = vld [vmem:[%s1 + $0x848] sm:$0xff]
  %v313 = vld [vmem:[%s1 + $0x850] sm:$0xff]
  %v314 = vld [vmem:[%s1 + $0x858] sm:$0xff]
  %v315 = vld [vmem:[%s1 + $0x860] sm:$0xff]
  %v316 = vld [vmem:[%s1 + $0x868] sm:$0xff]
  %v317 = vld [vmem:[%s1 + $0x870] sm:$0xff]
  %v318 = vld [vmem:[%s1 + $0x878] sm:$0xff]
  %v319 = vld [vmem:[%s1 + $0x880] sm:$0xff]
  %v320 = vld [vmem:[%s1 + $0x888] sm:$0xff]
  %v321 = vld [vmem:[%s1 + $0x890] sm:$0xff]
  %v322 = vld [vmem:[%s1 + $0x898] sm:$0xff]
  %v323 = vld [vmem:[%s1 + $0x8a0] sm:$0xff]
  %v324 = vld [vmem:[%s1 + $0x8a8] sm:$0xff]
  %v325 = vld [vmem:[%s1 + $0x8b0] sm:$0xff]
  %v326 = vld [vmem:[%s1 + $0x8b8] sm:$0xff]
  %v327 = vld [vmem:[%s1 + $0x8c0] sm:$0xff]
  %v328 = vld [vmem:[%s1 + $0x8c8] sm:$0xff]
  %v329 = vld [vmem:[%s1 + $0x8d0] sm:$0xff]
  %v330 = vld [vmem:[%s1 + $0x8d8] sm:$0xff]
  %v331 = vld [vmem:[%s1 + $0x8e0] sm:$0xff]
  %v332 = vld [vmem:[%s1 + $0x8e8] sm:$0xff]
  %v333 = vld [vmem:[%s1 + $0x8f0] sm:$0xff]
  %v334 = vld [vmem:[%s1 + $0x8f8] sm:$0xff]
  %v335 = vld [vmem:[%s1 + $0x900] sm:$0xff]
  %v336 = vld [vmem:[%s1 + $0x908] sm:$0xff]
  %v337 = vld [vmem:[%s1 + $0x910] sm:$0xff]
  %v338 = vld [vmem:[%s1 + $0x918] sm:$0xff]
  %v339 = vld [vmem:[%s1 + $0x920] sm:$0xff]
  %v340 = vld [vmem:[%s1 + $0x928] sm:$0xff]
  %v341 = vld [vmem:[%s1 + $0x930] sm:$0xff]
  %v342 = vld [vmem:[%s1 + $0x938] sm:$0xff]
  %v343 = vld [vmem:[%s1 + $0x940] sm:$0xff]
  %v344 = vld [vmem:[%s1 + $0x948] sm:$0xff]
  %v345 = vld [vmem:[%s1 + $0x950] sm:$0xff]
  %v346 = vld [vmem:[%s1 + $0x958] sm:$0xff]
  %v347 = vld [vmem:[%s1 + $0x960] sm:$0xff]
  %v348 = vld [vmem:[%s1 + $0x968] sm:$0xff]
  %v349 = vld [vmem:[%s1 + $0x970] sm:$0xff]
  %v350 = vld [vmem:[%s1 + $0x978] sm:$0xff]
  %v351 = vld [vmem:[%s1 + $0x980] sm:$0xff]
  %v352 = vld [vmem:[%s1 + $0x988] sm:$0xff]
  %v353 = vld [vmem:[%s1 + $0x990] sm:$0xff]
  %v354 = vld [vmem:[%s1 + $0x998] sm:$0xff]
  %v355 = vld [vmem:[%s1 + $0x9a0] sm:$0xff]
  %v356 = vld [vmem:[%s1 + $0x9a8] sm:$0xff]
  %v357 = vld [vmem:[%s1 + $0x9b0] sm:$0xff]
  %v358 = vld [vmem:[%s1 + $0x9b8] sm:$0xff]
  %v359 = vld [vmem:[%s1 + $0x9c0] sm:$0xff]
  %v360 = vld [vmem:[%s1 + $0x9c8] sm:$0xff]
  %v361 = vld [vmem:[%s1 + $0x9d0] sm:$0xff]
  %v362 = vld [vmem:[%s1 + $0x9d8] sm:$0xff]
  %v363 = vld [vmem:[%s1 + $0x9e0] sm:$0xff]
  %v364 = vld [vmem:[%s1 + $0x9e8] sm:$0xff]
  %v365 = vld [vmem:[%s1 + $0x9f0] sm:$0xff]
  %v366 = vld [vmem:[%s1 + $0x9f8] sm:$0xff]
  %v367 = vld [vmem:[%s1 + $0xa00] sm:$0xff]
  %v368 = vld [vmem:[%s1 + $0xa08] sm:$0xff]
  %v369 = vld [vmem:[%s1 + $0xa10] sm:$0xff]
  %v370 = vld [vmem:[%s1 + $0xa18] sm:$0xff]
  %v371 = vld [vmem:[%s1 + $0xa20] sm:$0xff]
  %v372 = vld [vmem:[%s1 + $0xa28] sm:$0xff]
  %v373 = vld [vmem:[%s1 + $0xa30] sm:$0xff]
  %v374 = vld [vmem:[%s1 + $0xa38] sm:$0xff]
  %v375 = vld [vmem:[%s1 + $0xa40] sm:$0xff]
  %v376 = vld [vmem:[%s1 + $0xa48] sm:$0xff]
  %v377 = vld [vmem:[%s1 + $0xa50] sm:$0xff]
  %v378 = vld [vmem:[%s1 + $0xa58] sm:$0xff]
  %v379 = vld [vmem:[%s1 + $0xa60] sm:$0xff]
  %v380 = vld [vmem:[%s1 + $0xa68] sm:$0xff]
  %v381 = vld [vmem:[%s1 + $0xa70] sm:$0xff]
  %v382 = vld [vmem:[%s1 + $0xa78] sm:$0xff]
  %v383 = vld [vmem:[%s1 + $0xa80] sm:$0xff]
  %v384 = vld [vmem:[%s1 + $0xa88] sm:$0xff]
  %v385 = vld [vmem:[%s1 + $0xa90] sm:$0xff]
  %v386 = vld [vmem:[%s1 + $0xa98] sm:$0xff]
  %v387 = vld [vmem:[%s1 + $0xaa0] sm:$0xff]
  %v388 = vld [vmem:[%s1 + $0xaa8] sm:$0xff]
  %v389 = vld [vmem:[%s1 + $0xab0] sm:$0xff]
  %v390 = vld [vmem:[%s1 + $0xab8] sm:$0xff]
  %v391 = vld [vmem:[%s1 + $0xac0] sm:$0xff]
  %v392 = vld [vmem:[%s1 + $0xac8] sm:$0xff]
  %v393 = vld [vmem:[%s1 + $0xad0] sm:$0xff]
  %v394 = vld [vmem:[%s1 + $0xad8] sm:$0xff]
  %v395 = vld [vmem:[%s1 + $0xae0] sm:$0xff]
  %v396 = vld [vmem:[%s1 + $0xae8] sm:$0xff]
  %v397 = vld [vmem:[%s1 + $0xaf0] sm:$0xff]
  %v398 = vld [vmem:[%s1 + $0xaf8] sm:$0xff]
  %v399 = vld [vmem:[%s1 + $0xb00] sm:$0xff]
  %v400 = vld [vmem:[%s1 + $0xb08] sm:$0xff]
  %v401 = vld [vmem:[%s1 + $0xb10] sm:$0xff]
  %v402 = vld [vmem:[%s1 + $0xb18] sm:$0xff]
  %v403 = vld [vmem:[%s1 + $0xb20] sm:$0xff]
  %v404 = vld [vmem:[%s1 + $0xb28] sm:$0xff]
  %v405 = vld [vmem:[%s1 + $0xb30] sm:$0xff]
  %v406 = vld [vmem:[%s1 + $0xb38] sm:$0xff]
  %v407 = vld [vmem:[%s1 + $0xb40] sm:$0xff]
  %v408 = vld [vmem:[%s1 + $0xb48] sm:$0xff]
  %v409 = vld [vmem:[%s1 + $0xb50] sm:$0xff]
  %v410 = vld [vmem:[%s1 + $0xb58] sm:$0xff]
  %v411 = vld [vmem:[%s1 + $0xb60] sm:$0xff]
  %v412 = vld [vmem:[%s1 + $0xb68] sm:$0xff]
  %v413 = vld [vmem:[%s1 + $0xb70] sm:$0xff]
  %v414 = vld [vmem:[%s1 + $0xb78] sm:$0xff]
  %v415 = vld [vmem:[%s1 + $0xb80] sm:$0xff]
  %v416 = vld [vmem:[%s1 + $0xb88] sm:$0xff]
  %v417 = vld [vmem:[%s1 + $0xb90] sm:$0xff]
  %v418 = vld [vmem:[%s1 + $0xb98] sm:$0xff]
  %v419 = vld [vmem:[%s1 + $0xba0] sm:$0xff]
  %v420 = vld [vmem:[%s1 + $0xba8] sm:$0xff]
  %v421 = vld [vmem:[%s1 + $0xbb0] sm:$0xff]
  %v422 = vld [vmem:[%s1 + $0xbb8] sm:$0xff]
  %v423 = vld [vmem:[%s1 + $0xbc0] sm:$0xff]
  %v424 = vld [vmem:[%s1 + $0xbc8] sm:$0xff]
  %v425 = vld [vmem:[%s1 + $0xbd0] sm:$0xff]
  %v426 = vld [vmem:[%s1 + $0xbd8] sm:$0xff]
  %v427 = vld [vmem:[%s1 + $0xbe0] sm:$0xff]
  %v428 = vld [vmem:[%s1 + $0xbe8] sm:$0xff]
  %v429 = vld [vmem:[%s1 + $0xbf0] sm:$0xff]
  %v430 = vld [vmem:[%s1 + $0xbf8] sm:$0xff]
  %v431 = vld [vmem:[%s1 + $0xc00] sm:$0xff]
  %v432 = vld [vmem:[%s1 + $0xc08] sm:$0xff]
  %v433 = vld [vmem:[%s1 + $0xc10] sm:$0xff]
  %v434 = vld [vmem:[%s1 + $0xc18] sm:$0xff]
  %v435 = vld [vmem:[%s1 + $0xc20] sm:$0xff]
  %v436 = vld [vmem:[%s1 + $0xc28] sm:$0xff]
  %v437 = vld [vmem:[%s1 + $0xc30] sm:$0xff]
  %v438 = vld [vmem:[%s1 + $0xc38] sm:$0xff]
  %v439 = vld [vmem:[%s1 + $0xc40] sm:$0xff]
  %v440 = vld [vmem:[%s1 + $0xc48] sm:$0xff]
  %v441 = vld [vmem:[%s1 + $0xc50] sm:$0xff]
  %v442 = vld [vmem:[%s1 + $0xc58] sm:$0xff]
  %v443 = vld [vmem:[%s1 + $0xc60] sm:$0xff]
  %v444 = vld [vmem:[%s1 + $0xc68] sm:$0xff]
  %v445 = vld [vmem:[%s1 + $0xc70] sm:$0xff]
  %v446 = vld [vmem:[%s1 + $0xc78] sm:$0xff]
  %v447 = vld [vmem:[%s1 + $0xc80] sm:$0xff]
  %v448 = vld [vmem:[%s1 + $0xc88] sm:$0xff]
  %v449 = vld [vmem:[%s1 + $0xc90] sm:$0xff]
  %v450 = vld [vmem:[%s1 + $0xc98] sm:$0xff]
  %v451 = vld [vmem:[%s1 + $0xca0] sm:$0xff]
  %v452 = vld [vmem:[%s1 + $0xca8] sm:$0xff]
  %v453 = vld [vmem:[%s1 + $0xcb0] sm:$0xff]
  %v454 = vld [vmem:[%s1 + $0xcb8] sm:$0xff]
  %v455 = vld [vmem:[%s1 + $0xcc0] sm:$0xff]
  %v456 = vld [vmem:[%s1 + $0xcc8] sm:$0xff]
  %v457 = vld [vmem:[%s1 + $0xcd0] sm:$0xff]
  %v458 = vld [vmem:[%s1 + $0xcd8] sm:$0xff]
  %v459 = vld [vmem:[%s1 + $0xce0] sm:$0xff]
  %v460 = vld [vmem:[%s1 + $0xce8] sm:$0xff]
  %v461 = vld [vmem:[%s1 + $0xcf0] sm:$0xff]
  %v462 = vld [vmem:[%s1 + $0xcf8] sm:$0xff]
  %v463 = vld [vmem:[%s1 + $0xd00] sm:$0xff]
  %v464 = vld [vmem:[%s1 + $0xd08] sm:$0xff]
  %v465 = vld [vmem:[%s1 + $0xd10] sm:$0xff]
  %v466 = vld [vmem:[%s1 + $0xd18] sm:$0xff]
  %v467 = vld [vmem:[%s1 + $0xd20] sm:$0xff]
  %v468 = vld [vmem:[%s1 + $0xd28] sm:$0xff]
  %v469 = vld [vmem:[%s1 + $0xd30] sm:$0xff]
  %v470 = vld [vmem:[%s1 + $0xd38] sm:$0xff]
  %v471 = vld [vmem:[%s1 + $0xd40] sm:$0xff]
  %v472 = vld [vmem:[%s1 + $0xd48] sm:$0xff]
  %v473 = vld [vmem:[%s1 + $0xd50] sm:$0xff]
  %v474 = vld [vmem:[%s1 + $0xd58] sm:$0xff]
  %v475 = vld [vmem:[%s1 + $0xd60] sm:$0xff]
  %v476 = vld [vmem:[%s1 + $0xd68] sm:$0xff]
  %v477 = vld [vmem:[%s1 + $0xd70] sm:$0xff]
  %v478 = vld [vmem:[%s1 + $0xd78] sm:$0xff]
  %v479 = vld [vmem:[%s1 + $0xd80] sm:$0xff]
  %v480 = vld [vmem:[%s1 + $0xd88] sm:$0xff]
  %v481 = vld [vmem:[%s1 + $0xd90] sm:$0xff]
  %v482 = vld [vmem:[%s1 + $0xd98] sm:$0xff]
  %v483 = vld [vmem:[%s1 + $0xda0] sm:$0xff]
  %v484 = vld [vmem:[%s1 + $0xda8] sm:$0xff]
  %v485 = vld [vmem:[%s1 + $0xdb0] sm:$0xff]
  %v486 = vld [vmem:[%s1 + $0xdb8] sm:$0xff]
  %v487 = vld [vmem:[%s1 + $0xdc0] sm:$0xff]
  %v488 = vld [vmem:[%s1 + $0xdc8] sm:$0xff]
  %v489 = vld [vmem:[%s1 + $0xdd0] sm:$0xff]
  %v490 = vld [vmem:[%s1 + $0xdd8] sm:$0xff]
  %v491 = vld [vmem:[%s1 + $0xde0] sm:$0xff]
  %v492 = vld [vmem:[%s1 + $0xde8] sm:$0xff]
  %v493 = vld [vmem:[%s1 + $0xdf0] sm:$0xff]
  %v494 = vld [vmem:[%s1 + $0xdf8] sm:$0xff]
  %v495 = vld [vmem:[%s1 + $0xe00] sm:$0xff]
  %v496 = vld [vmem:[%s1 + $0xe08] sm:$0xff]
  %v497 = vld [vmem:[%s1 + $0xe10] sm:$0xff]
  %v498 = vld [vmem:[%s1 + $0xe18] sm:$0xff]
  %v499 = vld [vmem:[%s1 + $0xe20] sm:$0xff]
  %v500 = vld [vmem:[%s1 + $0xe28] sm:$0xff]
  %v501 = vld [vmem:[%s1 + $0xe30] sm:$0xff]
  %v502 = vld [vmem:[%s1 + $0xe38] sm:$0xff]
  %v503 = vld [vmem:[%s1 + $0xe40] sm:$0xff]
  %v504 = vld [vmem:[%s1 + $0xe48] sm:$0xff]
  %v505 = vld [vmem:[%s1 + $0xe50] sm:$0xff]
  %v506 = vld [vmem:[%s1 + $0xe58] sm:$0xff]
  %v507 = vld [vmem:[%s1 + $0xe60] sm:$0xff]
  %v508 = vld [vmem:[%s1 + $0xe68] sm:$0xff]
  %v509 = vld [vmem:[%s1 + $0xe70] sm:$0xff]
  %v510 = vld [vmem:[%s1 + $0xe78] sm:$0xff]
  %v511 = vld [vmem:[%s1 + $0xe80] sm:$0xff]
  %v512 = vld [vmem:[%s1 + $0xe88] sm:$0xff]
  %v513 = vld [vmem:[%s1 + $0xe90] sm:$0xff]
  %v514 = vld [vmem:[%s1 + $0xe98] sm:$0xff]
  %v515 = vld [vmem:[%s1 + $0xea0] sm:$0xff]
  %v516 = vld [vmem:[%s1 + $0xea8] sm:$0xff]
  %v517 = vld [vmem:[%s1 + $0xeb0] sm:$0xff]
  %v518 = vld [vmem:[%s1 + $0xeb8] sm:$0xff]
  %v519 = vld [vmem:[%s1 + $0xec0] sm:$0xff]
  %v520 = vld [vmem:[%s1 + $0xec8] sm:$0xff]
  %v521 = vld [vmem:[%s1 + $0xed0] sm:$0xff]
  %v522 = vld [vmem:[%s1 + $0xed8] sm:$0xff]
  %v523 = vld [vmem:[%s1 + $0xee0] sm:$0xff]
  %v524 = vld [vmem:[%s1 + $0xee8] sm:$0xff]
  %v525 = vld [vmem:[%s1 + $0xef0] sm:$0xff]
  %v526 = vld [vmem:[%s1 + $0xef8] sm:$0xff]
  %v527 = vld [vmem:[%s1 + $0xf00] sm:$0xff]
  %v528 = vld [vmem:[%s1 + $0xf08] sm:$0xff]
  %v529 = vld [vmem:[%s1 + $0xf10] sm:$0xff]
  %v530 = vld [vmem:[%s1 + $0xf18] sm:$0xff]
  %v531 = vld [vmem:[%s1 + $0xf20] sm:$0xff]
  %v532 = vld [vmem:[%s1 + $0xf28] sm:$0xff]
  %v533 = vld [vmem:[%s1 + $0xf30] sm:$0xff]
  %v534 = vld [vmem:[%s1 + $0xf38] sm:$0xff]
  %v535 = vld [vmem:[%s1 + $0xf40] sm:$0xff]
  %v536 = vld [vmem:[%s1 + $0xf48] sm:$0xff]
  %v537 = vld [vmem:[%s1 + $0xf50] sm:$0xff]
  %v538 = vld [vmem:[%s1 + $0xf58] sm:$0xff]
  %v539 = vld [vmem:[%s1 + $0xf60] sm:$0xff]
  %v540 = vld [vmem:[%s1 + $0xf68] sm:$0xff]
  %v541 = vld [vmem:[%s1 + $0xf70] sm:$0xff]
  %v542 = vld [vmem:[%s1 + $0xf78] sm:$0xff]
  %v543 = vld [vmem:[%s1 + $0xf80] sm:$0xff]
  %v544 = vld [vmem:[%s1 + $0xf88] sm:$0xff]
  %v545 = vld [vmem:[%s1 + $0xf90] sm:$0xff]
  %v546 = vld [vmem:[%s1 + $0xf98] sm:$0xff]
  %v547 = vld [vmem:[%s1 + $0xfa0] sm:$0xff]
  %v548 = vld [vmem:[%s1 + $0xfa8] sm:$0xff]
  %v549 = vld [vmem:[%s1 + $0xfb0] sm:$0xff]
  %v550 = vld [vmem:[%s1 + $0xfb8] sm:$0xff]
  %v551 = vld [vmem:[%s1 + $0xfc0] sm:$0xff]
  %v552 = vld [vmem:[%s1 + $0xfc8] sm:$0xff]
  %v553 = vld [vmem:[%s1 + $0xfd0] sm:$0xff]
  %v554 = vld [vmem:[%s1 + $0xfd8] sm:$0xff]
  %v555 = vld [vmem:[%s1 + $0xfe0] sm:$0xff]
  %v556 = vld [vmem:[%s1 + $0xfe8] sm:$0xff]
  %v557 = vld [vmem:[%s1 + $0xff0] sm:$0xff]
  %v558 = vld [vmem:[%s1 + $0xff8] sm:$0xff]
  %v559 = vld [vmem:[%s1 + $0x1000] sm:$0xff]
  %v560 = vld [vmem:[%s1 + $0x1008] sm:$0xff]
  %v561 = vld [vmem:[%s1 + $0x1010] sm:$0xff]
  %v562 = vld [vmem:[%s1 + $0x1018] sm:$0xff]
  %v563 = vld [vmem:[%s1 + $0x1020] sm:$0xff]
  %v564 = vld [vmem:[%s1 + $0x1028] sm:$0xff]
  %v565 = vld [vmem:[%s1 + $0x1030] sm:$0xff]
  %v566 = vld [vmem:[%s1 + $0x1038] sm:$0xff]
  %v567 = vld [vmem:[%s1 + $0x1040] sm:$0xff]
  %v568 = vld [vmem:[%s1 + $0x1048] sm:$0xff]
  %v569 = vld [vmem:[%s1 + $0x1050] sm:$0xff]
  %v570 = vld [vmem:[%s1 + $0x1058] sm:$0xff]
  %v571 = vld [vmem:[%s1 + $0x1060] sm:$0xff]
  %v572 = vld [vmem:[%s1 + $0x1068] sm:$0xff]
  %v573 = vld [vmem:[%s1 + $0x1070] sm:$0xff]
  %v574 = vld [vmem:[%s1 + $0x1078] sm:$0xff]
  %v575 = vld [vmem:[%s1 + $0x1080] sm:$0xff]
  %v576 = vld [vmem:[%s1 + $0x1088] sm:$0xff]
  %v577 = vld [vmem:[%s1 + $0x1090] sm:$0xff]
  %v578 = vld [vmem:[%s1 + $0x1098] sm:$0xff]
  %v579 = vld [vmem:[%s1 + $0x10a0] sm:$0xff]
  %v580 = vld [vmem:[%s1 + $0x10a8] sm:$0xff]
  %v581 = vld [vmem:[%s1 + $0x10b0] sm:$0xff]
  %v582 = vld [vmem:[%s1 + $0x10b8] sm:$0xff]
  %v583 = vld [vmem:[%s1 + $0x10c0] sm:$0xff]
  %v584 = vld [vmem:[%s1 + $0x10c8] sm:$0xff]
  %v585 = vld [vmem:[%s1 + $0x10d0] sm:$0xff]
  %v586 = vld [vmem:[%s1 + $0x10d8] sm:$0xff]
  %v587 = vld [vmem:[%s1 + $0x10e0] sm:$0xff]
  %v588 = vld [vmem:[%s1 + $0x10e8] sm:$0xff]
  %v589 = vld [vmem:[%s1 + $0x10f0] sm:$0xff]
  %v590 = vld [vmem:[%s1 + $0x10f8] sm:$0xff]
  %v591 = vld [vmem:[%s1 + $0x1100] sm:$0xff]
  %v592 = vld [vmem:[%s1 + $0x1108] sm:$0xff]
  %v593 = vld [vmem:[%s1 + $0x1110] sm:$0xff]
  %v594 = vld [vmem:[%s1 + $0x1118] sm:$0xff]
  %v595 = vld [vmem:[%s1 + $0x1120] sm:$0xff]
  %v596 = vld [vmem:[%s1 + $0x1128] sm:$0xff]
  %v597 = vld [vmem:[%s1 + $0x1130] sm:$0xff]
  %v598 = vld [vmem:[%s1 + $0x1138] sm:$0xff]
  %v599 = vld [vmem:[%s1 + $0x1140] sm:$0xff]
  %v600 = vld [vmem:[%s1 + $0x1148] sm:$0xff]
  %v601 = vld [vmem:[%s1 + $0x1150] sm:$0xff]
  %v602 = vld [vmem:[%s1 + $0x1158] sm:$0xff]
  %v603 = vld [vmem:[%s1 + $0x1160] sm:$0xff]
  %v604 = vld [vmem:[%s1 + $0x1168] sm:$0xff]
  %v605 = vld [vmem:[%s1 + $0x1170] sm:$0xff]
  %v606 = vld [vmem:[%s1 + $0x1178] sm:$0xff]
  %v607 = vld [vmem:[%s1 + $0x1180] sm:$0xff]
  %v608 = vld [vmem:[%s1 + $0x1188] sm:$0xff]
  %v609 = vld [vmem:[%s1 + $0x1190] sm:$0xff]
  %v610 = vld [vmem:[%s1 + $0x1198] sm:$0xff]
  %v611 = vld [vmem:[%s1 + $0x11a0] sm:$0xff]
  %v612 = vld [vmem:[%s1 + $0x11a8] sm:$0xff]
  %v613 = vld [vmem:[%s1 + $0x11b0] sm:$0xff]
  %v614 = vld [vmem:[%s1 + $0x11b8] sm:$0xff]
  %v615 = vld [vmem:[%s1 + $0x11c0] sm:$0xff]
  %v616 = vld [vmem:[%s1 + $0x11c8] sm:$0xff]
  %v617 = vld [vmem:[%s1 + $0x11d0] sm:$0xff]
  %v618 = vld [vmem:[%s1 + $0x11d8] sm:$0xff]
  %v619 = vld [vmem:[%s1 + $0x11e0] sm:$0xff]
  %v620 = vld [vmem:[%s1 + $0x11e8] sm:$0xff]
  %v621 = vld [vmem:[%s1 + $0x11f0] sm:$0xff]
  %v622 = vld [vmem:[%s1 + $0x11f8] sm:$0xff]
  %v659 = vunpack.c.l.b16 %v11
  %v660 = vunpack.c.h.b16 %v11
  %v661 = vunpack.c.l.b16 %v12
  %v662 = vunpack.c.h.b16 %v12
  %v663 = vunpack.c.l.b16 %v13
  %v664 = vunpack.c.h.b16 %v13
  %v665 = vunpack.c.l.b16 %v14
  %v666 = vunpack.c.h.b16 %v14
  %v667 = vunpack.c.l.b16 %v15
  %v668 = vunpack.c.h.b16 %v15
  %v669 = vunpack.c.l.b16 %v16
  %v670 = vunpack.c.h.b16 %v16
  %v671 = vunpack.c.l.b16 %v17
  %v672 = vunpack.c.h.b16 %v17
  %v673 = vunpack.c.l.b16 %v18
  %v674 = vunpack.c.h.b16 %v18
  %v675 = vunpack.c.l.b16 %v19
  %v676 = vunpack.c.h.b16 %v19
  %v677 = vunpack.c.l.b16 %v20
  %v678 = vunpack.c.h.b16 %v20
  %v679 = vunpack.c.l.b16 %v21
  %v680 = vunpack.c.h.b16 %v21
  %v681 = vunpack.c.l.b16 %v22
  %v682 = vunpack.c.h.b16 %v22
  %v683 = vunpack.c.l.b16 %v23
  %v684 = vunpack.c.h.b16 %v23
  %v685 = vunpack.c.l.b16 %v24
  %v686 = vunpack.c.h.b16 %v24
  %v687 = vunpack.c.l.b16 %v25
  %v688 = vunpack.c.h.b16 %v25
  %v689 = vunpack.c.l.b16 %v26
  %v690 = vunpack.c.h.b16 %v26
  %v691 = vunpack.c.l.b16 %v27
  %v692 = vunpack.c.h.b16 %v27
  %v693 = vunpack.c.l.b16 %v28
  %v694 = vunpack.c.h.b16 %v28
  %v695 = vunpack.c.l.b16 %v29
  %v696 = vunpack.c.h.b16 %v29
  %v697 = vunpack.c.l.b16 %v30
  %v698 = vunpack.c.h.b16 %v30
  %v699 = vunpack.c.l.b16 %v31
  %v700 = vunpack.c.h.b16 %v31
  %v701 = vunpack.c.l.b16 %v32
  %v702 = vunpack.c.h.b16 %v32
  %v703 = vunpack.c.l.b16 %v33
  %v704 = vunpack.c.h.b16 %v33
  %v705 = vunpack.c.l.b16 %v34
  %v706 = vunpack.c.h.b16 %v34
  %v707 = vunpack.c.l.b16 %v35
  %v708 = vunpack.c.h.b16 %v35
  %v709 = vunpack.c.l.b16 %v36
  %v710 = vunpack.c.h.b16 %v36
  %v711 = vunpack.c.l.b16 %v37
  %v712 = vunpack.c.h.b16 %v37
  %v713 = vunpack.c.l.b16 %v38
  %v714 = vunpack.c.h.b16 %v38
  %v715 = vunpack.c.l.b16 %v39
  %v716 = vunpack.c.h.b16 %v39
  %v717 = vunpack.c.l.b16 %v40
  %v718 = vunpack.c.h.b16 %v40
  %v719 = vunpack.c.l.b16 %v41
  %v720 = vunpack.c.h.b16 %v41
  %v721 = vunpack.c.l.b16 %v42
  %v722 = vunpack.c.h.b16 %v42
  %v723 = vunpack.c.l.b16 %v43
  %v724 = vunpack.c.h.b16 %v43
  %v725 = vunpack.c.l.b16 %v44
  %v726 = vunpack.c.h.b16 %v44
  %v727 = vunpack.c.l.b16 %v45
  %v728 = vunpack.c.h.b16 %v45
  %v729 = vunpack.c.l.b16 %v46
  %v730 = vunpack.c.h.b16 %v46
  %v731 = vpack.c.b16 %v677, %v659
  %v732 = vpack.c.b16 %v678, %v660
  %v733 = vpack.c.b16 %v679, %v661
  %v734 = vpack.c.b16 %v680, %v662
  %v735 = vpack.c.b16 %v681, %v663
  %v736 = vpack.c.b16 %v682, %v664
  %v737 = vpack.c.b16 %v683, %v665
  %v738 = vpack.c.b16 %v684, %v666
  %v739 = vpack.c.b16 %v685, %v667
  %v740 = vpack.c.b16 %v686, %v668
  %v741 = vpack.c.b16 %v687, %v669
  %v742 = vpack.c.b16 %v688, %v670
  %v743 = vpack.c.b16 %v689, %v671
  %v744 = vpack.c.b16 %v690, %v672
  %v745 = vpack.c.b16 %v691, %v673
  %v746 = vpack.c.b16 %v692, %v674
  %v747 = vpack.c.b16 %v693, %v675
  %v748 = vpack.c.b16 %v694, %v676
  %v749 = vpack.c.b16 %v713, %v695
  %v750 = vpack.c.b16 %v714, %v696
  %v751 = vpack.c.b16 %v715, %v697
  %v752 = vpack.c.b16 %v716, %v698
  %v753 = vpack.c.b16 %v717, %v699
  %v754 = vpack.c.b16 %v718, %v700
  %v755 = vpack.c.b16 %v719, %v701
  %v756 = vpack.c.b16 %v720, %v702
  %v757 = vpack.c.b16 %v721, %v703
  %v758 = vpack.c.b16 %v722, %v704
  %v759 = vpack.c.b16 %v723, %v705
  %v760 = vpack.c.b16 %v724, %v706
  %v761 = vpack.c.b16 %v725, %v707
  %v762 = vpack.c.b16 %v726, %v708
  %v763 = vpack.c.b16 %v727, %v709
  %v764 = vpack.c.b16 %v728, %v710
  %v765 = vpack.c.b16 %v729, %v711
  %v766 = vpack.c.b16 %v730, %v712
  %v1379 = vunpack.c.l.b16 %v47
  %v1380 = vunpack.c.h.b16 %v47
  %v1381 = vunpack.c.l.b16 %v48
  %v1382 = vunpack.c.h.b16 %v48
  %v1383 = vunpack.c.l.b16 %v49
  %v1384 = vunpack.c.h.b16 %v49
  %v1385 = vunpack.c.l.b16 %v50
  %v1386 = vunpack.c.h.b16 %v50
  %v1387 = vunpack.c.l.b16 %v51
  %v1388 = vunpack.c.h.b16 %v51
  %v1389 = vunpack.c.l.b16 %v52
  %v1390 = vunpack.c.h.b16 %v52
  %v1391 = vunpack.c.l.b16 %v53
  %v1392 = vunpack.c.h.b16 %v53
  %v1393 = vunpack.c.l.b16 %v54
  %v1394 = vunpack.c.h.b16 %v54
  %v1395 = vunpack.c.l.b16 %v55
  %v1396 = vunpack.c.h.b16 %v55
  %v1397 = vunpack.c.l.b16 %v56
  %v1398 = vunpack.c.h.b16 %v56
  %v1399 = vunpack.c.l.b16 %v57
  %v1400 = vunpack.c.h.b16 %v57
  %v1401 = vunpack.c.l.b16 %v58
  %v1402 = vunpack.c.h.b16 %v58
  %v1403 = vunpack.c.l.b16 %v59
  %v1404 = vunpack.c.h.b16 %v59
  %v1405 = vunpack.c.l.b16 %v60
  %v1406 = vunpack.c.h.b16 %v60
  %v1407 = vunpack.c.l.b16 %v61
  %v1408 = vunpack.c.h.b16 %v61
  %v1409 = vunpack.c.l.b16 %v62
  %v1410 = vunpack.c.h.b16 %v62
  %v1411 = vunpack.c.l.b16 %v63
  %v1412 = vunpack.c.h.b16 %v63
  %v1413 = vunpack.c.l.b16 %v64
  %v1414 = vunpack.c.h.b16 %v64
  %v1415 = vunpack.c.l.b16 %v65
  %v1416 = vunpack.c.h.b16 %v65
  %v1417 = vunpack.c.l.b16 %v66
  %v1418 = vunpack.c.h.b16 %v66
  %v1419 = vunpack.c.l.b16 %v67
  %v1420 = vunpack.c.h.b16 %v67
  %v1421 = vunpack.c.l.b16 %v68
  %v1422 = vunpack.c.h.b16 %v68
  %v1423 = vunpack.c.l.b16 %v69
  %v1424 = vunpack.c.h.b16 %v69
  %v1425 = vunpack.c.l.b16 %v70
  %v1426 = vunpack.c.h.b16 %v70
  %v1427 = vunpack.c.l.b16 %v71
  %v1428 = vunpack.c.h.b16 %v71
  %v1429 = vunpack.c.l.b16 %v72
  %v1430 = vunpack.c.h.b16 %v72
  %v1431 = vunpack.c.l.b16 %v73
  %v1432 = vunpack.c.h.b16 %v73
  %v1433 = vunpack.c.l.b16 %v74
  %v1434 = vunpack.c.h.b16 %v74
  %v1435 = vunpack.c.l.b16 %v75
  %v1436 = vunpack.c.h.b16 %v75
  %v1437 = vunpack.c.l.b16 %v76
  %v1438 = vunpack.c.h.b16 %v76
  %v1439 = vunpack.c.l.b16 %v77
  %v1440 = vunpack.c.h.b16 %v77
  %v1441 = vunpack.c.l.b16 %v78
  %v1442 = vunpack.c.h.b16 %v78
  %v1443 = vunpack.c.l.b16 %v79
  %v1444 = vunpack.c.h.b16 %v79
  %v1445 = vunpack.c.l.b16 %v80
  %v1446 = vunpack.c.h.b16 %v80
  %v1447 = vunpack.c.l.b16 %v81
  %v1448 = vunpack.c.h.b16 %v81
  %v1449 = vunpack.c.l.b16 %v82
  %v1450 = vunpack.c.h.b16 %v82
  %v1451 = vunpack.c.l.b16 %v83
  %v1452 = vunpack.c.h.b16 %v83
  %v1453 = vunpack.c.l.b16 %v84
  %v1454 = vunpack.c.h.b16 %v84
  %v1455 = vunpack.c.l.b16 %v85
  %v1456 = vunpack.c.h.b16 %v85
  %v1457 = vunpack.c.l.b16 %v86
  %v1458 = vunpack.c.h.b16 %v86
  %v1459 = vunpack.c.l.b16 %v87
  %v1460 = vunpack.c.h.b16 %v87
  %v1461 = vunpack.c.l.b16 %v88
  %v1462 = vunpack.c.h.b16 %v88
  %v1463 = vunpack.c.l.b16 %v89
  %v1464 = vunpack.c.h.b16 %v89
  %v1465 = vunpack.c.l.b16 %v90
  %v1466 = vunpack.c.h.b16 %v90
  %v1467 = vunpack.c.l.b16 %v91
  %v1468 = vunpack.c.h.b16 %v91
  %v1469 = vunpack.c.l.b16 %v92
  %v1470 = vunpack.c.h.b16 %v92
  %v1471 = vunpack.c.l.b16 %v93
  %v1472 = vunpack.c.h.b16 %v93
  %v1473 = vunpack.c.l.b16 %v94
  %v1474 = vunpack.c.h.b16 %v94
  %v1475 = vunpack.c.l.b16 %v95
  %v1476 = vunpack.c.h.b16 %v95
  %v1477 = vunpack.c.l.b16 %v96
  %v1478 = vunpack.c.h.b16 %v96
  %v1479 = vunpack.c.l.b16 %v97
  %v1480 = vunpack.c.h.b16 %v97
  %v1481 = vunpack.c.l.b16 %v98
  %v1482 = vunpack.c.h.b16 %v98
  %v1483 = vunpack.c.l.b16 %v99
  %v1484 = vunpack.c.h.b16 %v99
  %v1485 = vunpack.c.l.b16 %v100
  %v1486 = vunpack.c.h.b16 %v100
  %v1487 = vunpack.c.l.b16 %v101
  %v1488 = vunpack.c.h.b16 %v101
  %v1489 = vunpack.c.l.b16 %v102
  %v1490 = vunpack.c.h.b16 %v102
  %v1491 = vunpack.c.l.b16 %v103
  %v1492 = vunpack.c.h.b16 %v103
  %v1493 = vunpack.c.l.b16 %v104
  %v1494 = vunpack.c.h.b16 %v104
  %v1495 = vunpack.c.l.b16 %v105
  %v1496 = vunpack.c.h.b16 %v105
  %v1497 = vunpack.c.l.b16 %v106
  %v1498 = vunpack.c.h.b16 %v106
  %v1499 = vunpack.c.l.b16 %v107
  %v1500 = vunpack.c.h.b16 %v107
  %v1501 = vunpack.c.l.b16 %v108
  %v1502 = vunpack.c.h.b16 %v108
  %v1503 = vunpack.c.l.b16 %v109
  %v1504 = vunpack.c.h.b16 %v109
  %v1505 = vunpack.c.l.b16 %v110
  %v1506 = vunpack.c.h.b16 %v110
  %v1507 = vunpack.c.l.b16 %v111
  %v1508 = vunpack.c.h.b16 %v111
  %v1509 = vunpack.c.l.b16 %v112
  %v1510 = vunpack.c.h.b16 %v112
  %v1511 = vunpack.c.l.b16 %v113
  %v1512 = vunpack.c.h.b16 %v113
  %v1513 = vunpack.c.l.b16 %v114
  %v1514 = vunpack.c.h.b16 %v114
  %v1515 = vunpack.c.l.b16 %v115
  %v1516 = vunpack.c.h.b16 %v115
  %v1517 = vunpack.c.l.b16 %v116
  %v1518 = vunpack.c.h.b16 %v116
  %v1519 = vunpack.c.l.b16 %v117
  %v1520 = vunpack.c.h.b16 %v117
  %v1521 = vunpack.c.l.b16 %v118
  %v1522 = vunpack.c.h.b16 %v118
  %v1523 = vunpack.c.l.b16 %v119
  %v1524 = vunpack.c.h.b16 %v119
  %v1525 = vunpack.c.l.b16 %v120
  %v1526 = vunpack.c.h.b16 %v120
  %v1527 = vunpack.c.l.b16 %v121
  %v1528 = vunpack.c.h.b16 %v121
  %v1529 = vunpack.c.l.b16 %v122
  %v1530 = vunpack.c.h.b16 %v122
  %v1531 = vunpack.c.l.b16 %v123
  %v1532 = vunpack.c.h.b16 %v123
  %v1533 = vunpack.c.l.b16 %v124
  %v1534 = vunpack.c.h.b16 %v124
  %v1535 = vunpack.c.l.b16 %v125
  %v1536 = vunpack.c.h.b16 %v125
  %v1537 = vunpack.c.l.b16 %v126
  %v1538 = vunpack.c.h.b16 %v126
  %v1539 = vunpack.c.l.b16 %v127
  %v1540 = vunpack.c.h.b16 %v127
  %v1541 = vunpack.c.l.b16 %v128
  %v1542 = vunpack.c.h.b16 %v128
  %v1543 = vunpack.c.l.b16 %v129
  %v1544 = vunpack.c.h.b16 %v129
  %v1545 = vunpack.c.l.b16 %v130
  %v1546 = vunpack.c.h.b16 %v130
  %v1547 = vunpack.c.l.b16 %v131
  %v1548 = vunpack.c.h.b16 %v131
  %v1549 = vunpack.c.l.b16 %v132
  %v1550 = vunpack.c.h.b16 %v132
  %v1551 = vunpack.c.l.b16 %v133
  %v1552 = vunpack.c.h.b16 %v133
  %v1553 = vunpack.c.l.b16 %v134
  %v1554 = vunpack.c.h.b16 %v134
  %v1555 = vunpack.c.l.b16 %v135
  %v1556 = vunpack.c.h.b16 %v135
  %v1557 = vunpack.c.l.b16 %v136
  %v1558 = vunpack.c.h.b16 %v136
  %v1559 = vunpack.c.l.b16 %v137
  %v1560 = vunpack.c.h.b16 %v137
  %v1561 = vunpack.c.l.b16 %v138
  %v1562 = vunpack.c.h.b16 %v138
  %v1563 = vunpack.c.l.b16 %v139
  %v1564 = vunpack.c.h.b16 %v139
  %v1565 = vunpack.c.l.b16 %v140
  %v1566 = vunpack.c.h.b16 %v140
  %v1567 = vunpack.c.l.b16 %v141
  %v1568 = vunpack.c.h.b16 %v141
  %v1569 = vunpack.c.l.b16 %v142
  %v1570 = vunpack.c.h.b16 %v142
  %v1571 = vunpack.c.l.b16 %v143
  %v1572 = vunpack.c.h.b16 %v143
  %v1573 = vunpack.c.l.b16 %v144
  %v1574 = vunpack.c.h.b16 %v144
  %v1575 = vunpack.c.l.b16 %v145
  %v1576 = vunpack.c.h.b16 %v145
  %v1577 = vunpack.c.l.b16 %v146
  %v1578 = vunpack.c.h.b16 %v146
  %v1579 = vunpack.c.l.b16 %v147
  %v1580 = vunpack.c.h.b16 %v147
  %v1581 = vunpack.c.l.b16 %v148
  %v1582 = vunpack.c.h.b16 %v148
  %v1583 = vunpack.c.l.b16 %v149
  %v1584 = vunpack.c.h.b16 %v149
  %v1585 = vunpack.c.l.b16 %v150
  %v1586 = vunpack.c.h.b16 %v150
  %v1587 = vunpack.c.l.b16 %v151
  %v1588 = vunpack.c.h.b16 %v151
  %v1589 = vunpack.c.l.b16 %v152
  %v1590 = vunpack.c.h.b16 %v152
  %v1591 = vunpack.c.l.b16 %v153
  %v1592 = vunpack.c.h.b16 %v153
  %v1593 = vunpack.c.l.b16 %v154
  %v1594 = vunpack.c.h.b16 %v154
  %v1595 = vunpack.c.l.b16 %v155
  %v1596 = vunpack.c.h.b16 %v155
  %v1597 = vunpack.c.l.b16 %v156
  %v1598 = vunpack.c.h.b16 %v156
  %v1599 = vunpack.c.l.b16 %v157
  %v1600 = vunpack.c.h.b16 %v157
  %v1601 = vunpack.c.l.b16 %v158
  %v1602 = vunpack.c.h.b16 %v158
  %v1603 = vunpack.c.l.b16 %v159
  %v1604 = vunpack.c.h.b16 %v159
  %v1605 = vunpack.c.l.b16 %v160
  %v1606 = vunpack.c.h.b16 %v160
  %v1607 = vunpack.c.l.b16 %v161
  %v1608 = vunpack.c.h.b16 %v161
  %v1609 = vunpack.c.l.b16 %v162
  %v1610 = vunpack.c.h.b16 %v162
  %v1611 = vunpack.c.l.b16 %v163
  %v1612 = vunpack.c.h.b16 %v163
  %v1613 = vunpack.c.l.b16 %v164
  %v1614 = vunpack.c.h.b16 %v164
  %v1615 = vunpack.c.l.b16 %v165
  %v1616 = vunpack.c.h.b16 %v165
  %v1617 = vunpack.c.l.b16 %v166
  %v1618 = vunpack.c.h.b16 %v166
  %v1619 = vunpack.c.l.b16 %v167
  %v1620 = vunpack.c.h.b16 %v167
  %v1621 = vunpack.c.l.b16 %v168
  %v1622 = vunpack.c.h.b16 %v168
  %v1623 = vunpack.c.l.b16 %v169
  %v1624 = vunpack.c.h.b16 %v169
  %v1625 = vunpack.c.l.b16 %v170
  %v1626 = vunpack.c.h.b16 %v170
  %v1627 = vunpack.c.l.b16 %v171
  %v1628 = vunpack.c.h.b16 %v171
  %v1629 = vunpack.c.l.b16 %v172
  %v1630 = vunpack.c.h.b16 %v172
  %v1631 = vunpack.c.l.b16 %v173
  %v1632 = vunpack.c.h.b16 %v173
  %v1633 = vunpack.c.l.b16 %v174
  %v1634 = vunpack.c.h.b16 %v174
  %v1635 = vunpack.c.l.b16 %v175
  %v1636 = vunpack.c.h.b16 %v175
  %v1637 = vunpack.c.l.b16 %v176
  %v1638 = vunpack.c.h.b16 %v176
  %v1639 = vunpack.c.l.b16 %v177
  %v1640 = vunpack.c.h.b16 %v177
  %v1641 = vunpack.c.l.b16 %v178
  %v1642 = vunpack.c.h.b16 %v178
  %v1643 = vunpack.c.l.b16 %v179
  %v1644 = vunpack.c.h.b16 %v179
  %v1645 = vunpack.c.l.b16 %v180
  %v1646 = vunpack.c.h.b16 %v180
  %v1647 = vunpack.c.l.b16 %v181
  %v1648 = vunpack.c.h.b16 %v181
  %v1649 = vunpack.c.l.b16 %v182
  %v1650 = vunpack.c.h.b16 %v182
  %v1651 = vunpack.c.l.b16 %v183
  %v1652 = vunpack.c.h.b16 %v183
  %v1653 = vunpack.c.l.b16 %v184
  %v1654 = vunpack.c.h.b16 %v184
  %v1655 = vunpack.c.l.b16 %v185
  %v1656 = vunpack.c.h.b16 %v185
  %v1657 = vunpack.c.l.b16 %v186
  %v1658 = vunpack.c.h.b16 %v186
  %v1659 = vunpack.c.l.b16 %v187
  %v1660 = vunpack.c.h.b16 %v187
  %v1661 = vunpack.c.l.b16 %v188
  %v1662 = vunpack.c.h.b16 %v188
  %v1663 = vunpack.c.l.b16 %v189
  %v1664 = vunpack.c.h.b16 %v189
  %v1665 = vunpack.c.l.b16 %v190
  %v1666 = vunpack.c.h.b16 %v190
  %v1667 = vunpack.c.l.b16 %v191
  %v1668 = vunpack.c.h.b16 %v191
  %v1669 = vunpack.c.l.b16 %v192
  %v1670 = vunpack.c.h.b16 %v192
  %v1671 = vunpack.c.l.b16 %v193
  %v1672 = vunpack.c.h.b16 %v193
  %v1673 = vunpack.c.l.b16 %v194
  %v1674 = vunpack.c.h.b16 %v194
  %v1675 = vunpack.c.l.b16 %v195
  %v1676 = vunpack.c.h.b16 %v195
  %v1677 = vunpack.c.l.b16 %v196
  %v1678 = vunpack.c.h.b16 %v196
  %v1679 = vunpack.c.l.b16 %v197
  %v1680 = vunpack.c.h.b16 %v197
  %v1681 = vunpack.c.l.b16 %v198
  %v1682 = vunpack.c.h.b16 %v198
  %v1683 = vunpack.c.l.b16 %v199
  %v1684 = vunpack.c.h.b16 %v199
  %v1685 = vunpack.c.l.b16 %v200
  %v1686 = vunpack.c.h.b16 %v200
  %v1687 = vunpack.c.l.b16 %v201
  %v1688 = vunpack.c.h.b16 %v201
  %v1689 = vunpack.c.l.b16 %v202
  %v1690 = vunpack.c.h.b16 %v202
  %v1691 = vunpack.c.l.b16 %v203
  %v1692 = vunpack.c.h.b16 %v203
  %v1693 = vunpack.c.l.b16 %v204
  %v1694 = vunpack.c.h.b16 %v204
  %v1695 = vunpack.c.l.b16 %v205
  %v1696 = vunpack.c.h.b16 %v205
  %v1697 = vunpack.c.l.b16 %v206
  %v1698 = vunpack.c.h.b16 %v206
  %v1699 = vunpack.c.l.b16 %v207
  %v1700 = vunpack.c.h.b16 %v207
  %v1701 = vunpack.c.l.b16 %v208
  %v1702 = vunpack.c.h.b16 %v208
  %v1703 = vunpack.c.l.b16 %v209
  %v1704 = vunpack.c.h.b16 %v209
  %v1705 = vunpack.c.l.b16 %v210
  %v1706 = vunpack.c.h.b16 %v210
  %v1707 = vunpack.c.l.b16 %v211
  %v1708 = vunpack.c.h.b16 %v211
  %v1709 = vunpack.c.l.b16 %v212
  %v1710 = vunpack.c.h.b16 %v212
  %v1711 = vunpack.c.l.b16 %v213
  %v1712 = vunpack.c.h.b16 %v213
  %v1713 = vunpack.c.l.b16 %v214
  %v1714 = vunpack.c.h.b16 %v214
  %v1715 = vunpack.c.l.b16 %v215
  %v1716 = vunpack.c.h.b16 %v215
  %v1717 = vunpack.c.l.b16 %v216
  %v1718 = vunpack.c.h.b16 %v216
  %v1719 = vunpack.c.l.b16 %v217
  %v1720 = vunpack.c.h.b16 %v217
  %v1721 = vunpack.c.l.b16 %v218
  %v1722 = vunpack.c.h.b16 %v218
  %v1723 = vunpack.c.l.b16 %v219
  %v1724 = vunpack.c.h.b16 %v219
  %v1725 = vunpack.c.l.b16 %v220
  %v1726 = vunpack.c.h.b16 %v220
  %v1727 = vunpack.c.l.b16 %v221
  %v1728 = vunpack.c.h.b16 %v221
  %v1729 = vunpack.c.l.b16 %v222
  %v1730 = vunpack.c.h.b16 %v222
  %v1731 = vunpack.c.l.b16 %v223
  %v1732 = vunpack.c.h.b16 %v223
  %v1733 = vunpack.c.l.b16 %v224
  %v1734 = vunpack.c.h.b16 %v224
  %v1735 = vunpack.c.l.b16 %v225
  %v1736 = vunpack.c.h.b16 %v225
  %v1737 = vunpack.c.l.b16 %v226
  %v1738 = vunpack.c.h.b16 %v226
  %v1739 = vunpack.c.l.b16 %v227
  %v1740 = vunpack.c.h.b16 %v227
  %v1741 = vunpack.c.l.b16 %v228
  %v1742 = vunpack.c.h.b16 %v228
  %v1743 = vunpack.c.l.b16 %v229
  %v1744 = vunpack.c.h.b16 %v229
  %v1745 = vunpack.c.l.b16 %v230
  %v1746 = vunpack.c.h.b16 %v230
  %v1747 = vunpack.c.l.b16 %v231
  %v1748 = vunpack.c.h.b16 %v231
  %v1749 = vunpack.c.l.b16 %v232
  %v1750 = vunpack.c.h.b16 %v232
  %v1751 = vunpack.c.l.b16 %v233
  %v1752 = vunpack.c.h.b16 %v233
  %v1753 = vunpack.c.l.b16 %v234
  %v1754 = vunpack.c.h.b16 %v234
  %v1755 = vunpack.c.l.b16 %v235
  %v1756 = vunpack.c.h.b16 %v235
  %v1757 = vunpack.c.l.b16 %v236
  %v1758 = vunpack.c.h.b16 %v236
  %v1759 = vunpack.c.l.b16 %v237
  %v1760 = vunpack.c.h.b16 %v237
  %v1761 = vunpack.c.l.b16 %v238
  %v1762 = vunpack.c.h.b16 %v238
  %v1763 = vunpack.c.l.b16 %v239
  %v1764 = vunpack.c.h.b16 %v239
  %v1765 = vunpack.c.l.b16 %v240
  %v1766 = vunpack.c.h.b16 %v240
  %v1767 = vunpack.c.l.b16 %v241
  %v1768 = vunpack.c.h.b16 %v241
  %v1769 = vunpack.c.l.b16 %v242
  %v1770 = vunpack.c.h.b16 %v242
  %v1771 = vunpack.c.l.b16 %v243
  %v1772 = vunpack.c.h.b16 %v243
  %v1773 = vunpack.c.l.b16 %v244
  %v1774 = vunpack.c.h.b16 %v244
  %v1775 = vunpack.c.l.b16 %v245
  %v1776 = vunpack.c.h.b16 %v245
  %v1777 = vunpack.c.l.b16 %v246
  %v1778 = vunpack.c.h.b16 %v246
  %v1779 = vunpack.c.l.b16 %v247
  %v1780 = vunpack.c.h.b16 %v247
  %v1781 = vunpack.c.l.b16 %v248
  %v1782 = vunpack.c.h.b16 %v248
  %v1783 = vunpack.c.l.b16 %v249
  %v1784 = vunpack.c.h.b16 %v249
  %v1785 = vunpack.c.l.b16 %v250
  %v1786 = vunpack.c.h.b16 %v250
  %v1787 = vunpack.c.l.b16 %v251
  %v1788 = vunpack.c.h.b16 %v251
  %v1789 = vunpack.c.l.b16 %v252
  %v1790 = vunpack.c.h.b16 %v252
  %v1791 = vunpack.c.l.b16 %v253
  %v1792 = vunpack.c.h.b16 %v253
  %v1793 = vunpack.c.l.b16 %v254
  %v1794 = vunpack.c.h.b16 %v254
  %v1795 = vunpack.c.l.b16 %v255
  %v1796 = vunpack.c.h.b16 %v255
  %v1797 = vunpack.c.l.b16 %v256
  %v1798 = vunpack.c.h.b16 %v256
  %v1799 = vunpack.c.l.b16 %v257
  %v1800 = vunpack.c.h.b16 %v257
  %v1801 = vunpack.c.l.b16 %v258
  %v1802 = vunpack.c.h.b16 %v258
  %v1803 = vunpack.c.l.b16 %v259
  %v1804 = vunpack.c.h.b16 %v259
  %v1805 = vunpack.c.l.b16 %v260
  %v1806 = vunpack.c.h.b16 %v260
  %v1807 = vunpack.c.l.b16 %v261
  %v1808 = vunpack.c.h.b16 %v261
  %v1809 = vunpack.c.l.b16 %v262
  %v1810 = vunpack.c.h.b16 %v262
  %v1811 = vunpack.c.l.b16 %v263
  %v1812 = vunpack.c.h.b16 %v263
  %v1813 = vunpack.c.l.b16 %v264
  %v1814 = vunpack.c.h.b16 %v264
  %v1815 = vunpack.c.l.b16 %v265
  %v1816 = vunpack.c.h.b16 %v265
  %v1817 = vunpack.c.l.b16 %v266
  %v1818 = vunpack.c.h.b16 %v266
  %v1819 = vunpack.c.l.b16 %v267
  %v1820 = vunpack.c.h.b16 %v267
  %v1821 = vunpack.c.l.b16 %v268
  %v1822 = vunpack.c.h.b16 %v268
  %v1823 = vunpack.c.l.b16 %v269
  %v1824 = vunpack.c.h.b16 %v269
  %v1825 = vunpack.c.l.b16 %v270
  %v1826 = vunpack.c.h.b16 %v270
  %v1827 = vunpack.c.l.b16 %v271
  %v1828 = vunpack.c.h.b16 %v271
  %v1829 = vunpack.c.l.b16 %v272
  %v1830 = vunpack.c.h.b16 %v272
  %v1831 = vunpack.c.l.b16 %v273
  %v1832 = vunpack.c.h.b16 %v273
  %v1833 = vunpack.c.l.b16 %v274
  %v1834 = vunpack.c.h.b16 %v274
  %v1835 = vunpack.c.l.b16 %v275
  %v1836 = vunpack.c.h.b16 %v275
  %v1837 = vunpack.c.l.b16 %v276
  %v1838 = vunpack.c.h.b16 %v276
  %v1839 = vunpack.c.l.b16 %v277
  %v1840 = vunpack.c.h.b16 %v277
  %v1841 = vunpack.c.l.b16 %v278
  %v1842 = vunpack.c.h.b16 %v278
  %v1843 = vunpack.c.l.b16 %v279
  %v1844 = vunpack.c.h.b16 %v279
  %v1845 = vunpack.c.l.b16 %v280
  %v1846 = vunpack.c.h.b16 %v280
  %v1847 = vunpack.c.l.b16 %v281
  %v1848 = vunpack.c.h.b16 %v281
  %v1849 = vunpack.c.l.b16 %v282
  %v1850 = vunpack.c.h.b16 %v282
  %v1851 = vunpack.c.l.b16 %v283
  %v1852 = vunpack.c.h.b16 %v283
  %v1853 = vunpack.c.l.b16 %v284
  %v1854 = vunpack.c.h.b16 %v284
  %v1855 = vunpack.c.l.b16 %v285
  %v1856 = vunpack.c.h.b16 %v285
  %v1857 = vunpack.c.l.b16 %v286
  %v1858 = vunpack.c.h.b16 %v286
  %v1859 = vunpack.c.l.b16 %v287
  %v1860 = vunpack.c.h.b16 %v287
  %v1861 = vunpack.c.l.b16 %v288
  %v1862 = vunpack.c.h.b16 %v288
  %v1863 = vunpack.c.l.b16 %v289
  %v1864 = vunpack.c.h.b16 %v289
  %v1865 = vunpack.c.l.b16 %v290
  %v1866 = vunpack.c.h.b16 %v290
  %v1867 = vunpack.c.l.b16 %v291
  %v1868 = vunpack.c.h.b16 %v291
  %v1869 = vunpack.c.l.b16 %v292
  %v1870 = vunpack.c.h.b16 %v292
  %v1871 = vunpack.c.l.b16 %v293
  %v1872 = vunpack.c.h.b16 %v293
  %v1873 = vunpack.c.l.b16 %v294
  %v1874 = vunpack.c.h.b16 %v294
  %v1875 = vunpack.c.l.b16 %v295
  %v1876 = vunpack.c.h.b16 %v295
  %v1877 = vunpack.c.l.b16 %v296
  %v1878 = vunpack.c.h.b16 %v296
  %v1879 = vunpack.c.l.b16 %v297
  %v1880 = vunpack.c.h.b16 %v297
  %v1881 = vunpack.c.l.b16 %v298
  %v1882 = vunpack.c.h.b16 %v298
  %v1883 = vunpack.c.l.b16 %v299
  %v1884 = vunpack.c.h.b16 %v299
  %v1885 = vunpack.c.l.b16 %v300
  %v1886 = vunpack.c.h.b16 %v300
  %v1887 = vunpack.c.l.b16 %v301
  %v1888 = vunpack.c.h.b16 %v301
  %v1889 = vunpack.c.l.b16 %v302
  %v1890 = vunpack.c.h.b16 %v302
  %v1891 = vunpack.c.l.b16 %v303
  %v1892 = vunpack.c.h.b16 %v303
  %v1893 = vunpack.c.l.b16 %v304
  %v1894 = vunpack.c.h.b16 %v304
  %v1895 = vunpack.c.l.b16 %v305
  %v1896 = vunpack.c.h.b16 %v305
  %v1897 = vunpack.c.l.b16 %v306
  %v1898 = vunpack.c.h.b16 %v306
  %v1899 = vunpack.c.l.b16 %v307
  %v1900 = vunpack.c.h.b16 %v307
  %v1901 = vunpack.c.l.b16 %v308
  %v1902 = vunpack.c.h.b16 %v308
  %v1903 = vunpack.c.l.b16 %v309
  %v1904 = vunpack.c.h.b16 %v309
  %v1905 = vunpack.c.l.b16 %v310
  %v1906 = vunpack.c.h.b16 %v310
  %v1907 = vunpack.c.l.b16 %v311
  %v1908 = vunpack.c.h.b16 %v311
  %v1909 = vunpack.c.l.b16 %v312
  %v1910 = vunpack.c.h.b16 %v312
  %v1911 = vunpack.c.l.b16 %v313
  %v1912 = vunpack.c.h.b16 %v313
  %v1913 = vunpack.c.l.b16 %v314
  %v1914 = vunpack.c.h.b16 %v314
  %v1915 = vunpack.c.l.b16 %v315
  %v1916 = vunpack.c.h.b16 %v315
  %v1917 = vunpack.c.l.b16 %v316
  %v1918 = vunpack.c.h.b16 %v316
  %v1919 = vunpack.c.l.b16 %v317
  %v1920 = vunpack.c.h.b16 %v317
  %v1921 = vunpack.c.l.b16 %v318
  %v1922 = vunpack.c.h.b16 %v318
  %v1923 = vunpack.c.l.b16 %v319
  %v1924 = vunpack.c.h.b16 %v319
  %v1925 = vunpack.c.l.b16 %v320
  %v1926 = vunpack.c.h.b16 %v320
  %v1927 = vunpack.c.l.b16 %v321
  %v1928 = vunpack.c.h.b16 %v321
  %v1929 = vunpack.c.l.b16 %v322
  %v1930 = vunpack.c.h.b16 %v322
  %v1931 = vunpack.c.l.b16 %v323
  %v1932 = vunpack.c.h.b16 %v323
  %v1933 = vunpack.c.l.b16 %v324
  %v1934 = vunpack.c.h.b16 %v324
  %v1935 = vunpack.c.l.b16 %v325
  %v1936 = vunpack.c.h.b16 %v325
  %v1937 = vunpack.c.l.b16 %v326
  %v1938 = vunpack.c.h.b16 %v326
  %v1939 = vunpack.c.l.b16 %v327
  %v1940 = vunpack.c.h.b16 %v327
  %v1941 = vunpack.c.l.b16 %v328
  %v1942 = vunpack.c.h.b16 %v328
  %v1943 = vunpack.c.l.b16 %v329
  %v1944 = vunpack.c.h.b16 %v329
  %v1945 = vunpack.c.l.b16 %v330
  %v1946 = vunpack.c.h.b16 %v330
  %v1947 = vunpack.c.l.b16 %v331
  %v1948 = vunpack.c.h.b16 %v331
  %v1949 = vunpack.c.l.b16 %v332
  %v1950 = vunpack.c.h.b16 %v332
  %v1951 = vunpack.c.l.b16 %v333
  %v1952 = vunpack.c.h.b16 %v333
  %v1953 = vunpack.c.l.b16 %v334
  %v1954 = vunpack.c.h.b16 %v334
  %v1955 = vunpack.c.l.b16 %v335
  %v1956 = vunpack.c.h.b16 %v335
  %v1957 = vunpack.c.l.b16 %v336
  %v1958 = vunpack.c.h.b16 %v336
  %v1959 = vunpack.c.l.b16 %v337
  %v1960 = vunpack.c.h.b16 %v337
  %v1961 = vunpack.c.l.b16 %v338
  %v1962 = vunpack.c.h.b16 %v338
  %v1963 = vunpack.c.l.b16 %v339
  %v1964 = vunpack.c.h.b16 %v339
  %v1965 = vunpack.c.l.b16 %v340
  %v1966 = vunpack.c.h.b16 %v340
  %v1967 = vunpack.c.l.b16 %v341
  %v1968 = vunpack.c.h.b16 %v341
  %v1969 = vunpack.c.l.b16 %v342
  %v1970 = vunpack.c.h.b16 %v342
  %v1971 = vunpack.c.l.b16 %v343
  %v1972 = vunpack.c.h.b16 %v343
  %v1973 = vunpack.c.l.b16 %v344
  %v1974 = vunpack.c.h.b16 %v344
  %v1975 = vunpack.c.l.b16 %v345
  %v1976 = vunpack.c.h.b16 %v345
  %v1977 = vunpack.c.l.b16 %v346
  %v1978 = vunpack.c.h.b16 %v346
  %v1979 = vunpack.c.l.b16 %v347
  %v1980 = vunpack.c.h.b16 %v347
  %v1981 = vunpack.c.l.b16 %v348
  %v1982 = vunpack.c.h.b16 %v348
  %v1983 = vunpack.c.l.b16 %v349
  %v1984 = vunpack.c.h.b16 %v349
  %v1985 = vunpack.c.l.b16 %v350
  %v1986 = vunpack.c.h.b16 %v350
  %v1987 = vunpack.c.l.b16 %v351
  %v1988 = vunpack.c.h.b16 %v351
  %v1989 = vunpack.c.l.b16 %v352
  %v1990 = vunpack.c.h.b16 %v352
  %v1991 = vunpack.c.l.b16 %v353
  %v1992 = vunpack.c.h.b16 %v353
  %v1993 = vunpack.c.l.b16 %v354
  %v1994 = vunpack.c.h.b16 %v354
  %v1995 = vunpack.c.l.b16 %v355
  %v1996 = vunpack.c.h.b16 %v355
  %v1997 = vunpack.c.l.b16 %v356
  %v1998 = vunpack.c.h.b16 %v356
  %v1999 = vunpack.c.l.b16 %v357
  %v2000 = vunpack.c.h.b16 %v357
  %v2001 = vunpack.c.l.b16 %v358
  %v2002 = vunpack.c.h.b16 %v358
  %v2003 = vunpack.c.l.b16 %v359
  %v2004 = vunpack.c.h.b16 %v359
  %v2005 = vunpack.c.l.b16 %v360
  %v2006 = vunpack.c.h.b16 %v360
  %v2007 = vunpack.c.l.b16 %v361
  %v2008 = vunpack.c.h.b16 %v361
  %v2009 = vunpack.c.l.b16 %v362
  %v2010 = vunpack.c.h.b16 %v362
  %v2011 = vunpack.c.l.b16 %v363
  %v2012 = vunpack.c.h.b16 %v363
  %v2013 = vunpack.c.l.b16 %v364
  %v2014 = vunpack.c.h.b16 %v364
  %v2015 = vunpack.c.l.b16 %v365
  %v2016 = vunpack.c.h.b16 %v365
  %v2017 = vunpack.c.l.b16 %v366
  %v2018 = vunpack.c.h.b16 %v366
  %v2019 = vunpack.c.l.b16 %v367
  %v2020 = vunpack.c.h.b16 %v367
  %v2021 = vunpack.c.l.b16 %v368
  %v2022 = vunpack.c.h.b16 %v368
  %v2023 = vunpack.c.l.b16 %v369
  %v2024 = vunpack.c.h.b16 %v369
  %v2025 = vunpack.c.l.b16 %v370
  %v2026 = vunpack.c.h.b16 %v370
  %v2027 = vunpack.c.l.b16 %v371
  %v2028 = vunpack.c.h.b16 %v371
  %v2029 = vunpack.c.l.b16 %v372
  %v2030 = vunpack.c.h.b16 %v372
  %v2031 = vunpack.c.l.b16 %v373
  %v2032 = vunpack.c.h.b16 %v373
  %v2033 = vunpack.c.l.b16 %v374
  %v2034 = vunpack.c.h.b16 %v374
  %v2035 = vunpack.c.l.b16 %v375
  %v2036 = vunpack.c.h.b16 %v375
  %v2037 = vunpack.c.l.b16 %v376
  %v2038 = vunpack.c.h.b16 %v376
  %v2039 = vunpack.c.l.b16 %v377
  %v2040 = vunpack.c.h.b16 %v377
  %v2041 = vunpack.c.l.b16 %v378
  %v2042 = vunpack.c.h.b16 %v378
  %v2043 = vunpack.c.l.b16 %v379
  %v2044 = vunpack.c.h.b16 %v379
  %v2045 = vunpack.c.l.b16 %v380
  %v2046 = vunpack.c.h.b16 %v380
  %v2047 = vunpack.c.l.b16 %v381
  %v2048 = vunpack.c.h.b16 %v381
  %v2049 = vunpack.c.l.b16 %v382
  %v2050 = vunpack.c.h.b16 %v382
  %v2051 = vunpack.c.l.b16 %v383
  %v2052 = vunpack.c.h.b16 %v383
  %v2053 = vunpack.c.l.b16 %v384
  %v2054 = vunpack.c.h.b16 %v384
  %v2055 = vunpack.c.l.b16 %v385
  %v2056 = vunpack.c.h.b16 %v385
  %v2057 = vunpack.c.l.b16 %v386
  %v2058 = vunpack.c.h.b16 %v386
  %v2059 = vunpack.c.l.b16 %v387
  %v2060 = vunpack.c.h.b16 %v387
  %v2061 = vunpack.c.l.b16 %v388
  %v2062 = vunpack.c.h.b16 %v388
  %v2063 = vunpack.c.l.b16 %v389
  %v2064 = vunpack.c.h.b16 %v389
  %v2065 = vunpack.c.l.b16 %v390
  %v2066 = vunpack.c.h.b16 %v390
  %v2067 = vunpack.c.l.b16 %v391
  %v2068 = vunpack.c.h.b16 %v391
  %v2069 = vunpack.c.l.b16 %v392
  %v2070 = vunpack.c.h.b16 %v392
  %v2071 = vunpack.c.l.b16 %v393
  %v2072 = vunpack.c.h.b16 %v393
  %v2073 = vunpack.c.l.b16 %v394
  %v2074 = vunpack.c.h.b16 %v394
  %v2075 = vunpack.c.l.b16 %v395
  %v2076 = vunpack.c.h.b16 %v395
  %v2077 = vunpack.c.l.b16 %v396
  %v2078 = vunpack.c.h.b16 %v396
  %v2079 = vunpack.c.l.b16 %v397
  %v2080 = vunpack.c.h.b16 %v397
  %v2081 = vunpack.c.l.b16 %v398
  %v2082 = vunpack.c.h.b16 %v398
  %v2083 = vunpack.c.l.b16 %v399
  %v2084 = vunpack.c.h.b16 %v399
  %v2085 = vunpack.c.l.b16 %v400
  %v2086 = vunpack.c.h.b16 %v400
  %v2087 = vunpack.c.l.b16 %v401
  %v2088 = vunpack.c.h.b16 %v401
  %v2089 = vunpack.c.l.b16 %v402
  %v2090 = vunpack.c.h.b16 %v402
  %v2091 = vunpack.c.l.b16 %v403
  %v2092 = vunpack.c.h.b16 %v403
  %v2093 = vunpack.c.l.b16 %v404
  %v2094 = vunpack.c.h.b16 %v404
  %v2095 = vunpack.c.l.b16 %v405
  %v2096 = vunpack.c.h.b16 %v405
  %v2097 = vunpack.c.l.b16 %v406
  %v2098 = vunpack.c.h.b16 %v406
  %v2099 = vunpack.c.l.b16 %v407
  %v2100 = vunpack.c.h.b16 %v407
  %v2101 = vunpack.c.l.b16 %v408
  %v2102 = vunpack.c.h.b16 %v408
  %v2103 = vunpack.c.l.b16 %v409
  %v2104 = vunpack.c.h.b16 %v409
  %v2105 = vunpack.c.l.b16 %v410
  %v2106 = vunpack.c.h.b16 %v410
  %v2107 = vunpack.c.l.b16 %v411
  %v2108 = vunpack.c.h.b16 %v411
  %v2109 = vunpack.c.l.b16 %v412
  %v2110 = vunpack.c.h.b16 %v412
  %v2111 = vunpack.c.l.b16 %v413
  %v2112 = vunpack.c.h.b16 %v413
  %v2113 = vunpack.c.l.b16 %v414
  %v2114 = vunpack.c.h.b16 %v414
  %v2115 = vunpack.c.l.b16 %v415
  %v2116 = vunpack.c.h.b16 %v415
  %v2117 = vunpack.c.l.b16 %v416
  %v2118 = vunpack.c.h.b16 %v416
  %v2119 = vunpack.c.l.b16 %v417
  %v2120 = vunpack.c.h.b16 %v417
  %v2121 = vunpack.c.l.b16 %v418
  %v2122 = vunpack.c.h.b16 %v418
  %v2123 = vunpack.c.l.b16 %v419
  %v2124 = vunpack.c.h.b16 %v419
  %v2125 = vunpack.c.l.b16 %v420
  %v2126 = vunpack.c.h.b16 %v420
  %v2127 = vunpack.c.l.b16 %v421
  %v2128 = vunpack.c.h.b16 %v421
  %v2129 = vunpack.c.l.b16 %v422
  %v2130 = vunpack.c.h.b16 %v422
  %v2131 = vunpack.c.l.b16 %v423
  %v2132 = vunpack.c.h.b16 %v423
  %v2133 = vunpack.c.l.b16 %v424
  %v2134 = vunpack.c.h.b16 %v424
  %v2135 = vunpack.c.l.b16 %v425
  %v2136 = vunpack.c.h.b16 %v425
  %v2137 = vunpack.c.l.b16 %v426
  %v2138 = vunpack.c.h.b16 %v426
  %v2139 = vunpack.c.l.b16 %v427
  %v2140 = vunpack.c.h.b16 %v427
  %v2141 = vunpack.c.l.b16 %v428
  %v2142 = vunpack.c.h.b16 %v428
  %v2143 = vunpack.c.l.b16 %v429
  %v2144 = vunpack.c.h.b16 %v429
  %v2145 = vunpack.c.l.b16 %v430
  %v2146 = vunpack.c.h.b16 %v430
  %v2147 = vunpack.c.l.b16 %v431
  %v2148 = vunpack.c.h.b16 %v431
  %v2149 = vunpack.c.l.b16 %v432
  %v2150 = vunpack.c.h.b16 %v432
  %v2151 = vunpack.c.l.b16 %v433
  %v2152 = vunpack.c.h.b16 %v433
  %v2153 = vunpack.c.l.b16 %v434
  %v2154 = vunpack.c.h.b16 %v434
  %v2155 = vunpack.c.l.b16 %v435
  %v2156 = vunpack.c.h.b16 %v435
  %v2157 = vunpack.c.l.b16 %v436
  %v2158 = vunpack.c.h.b16 %v436
  %v2159 = vunpack.c.l.b16 %v437
  %v2160 = vunpack.c.h.b16 %v437
  %v2161 = vunpack.c.l.b16 %v438
  %v2162 = vunpack.c.h.b16 %v438
  %v2163 = vunpack.c.l.b16 %v439
  %v2164 = vunpack.c.h.b16 %v439
  %v2165 = vunpack.c.l.b16 %v440
  %v2166 = vunpack.c.h.b16 %v440
  %v2167 = vunpack.c.l.b16 %v441
  %v2168 = vunpack.c.h.b16 %v441
  %v2169 = vunpack.c.l.b16 %v442
  %v2170 = vunpack.c.h.b16 %v442
  %v2171 = vunpack.c.l.b16 %v443
  %v2172 = vunpack.c.h.b16 %v443
  %v2173 = vunpack.c.l.b16 %v444
  %v2174 = vunpack.c.h.b16 %v444
  %v2175 = vunpack.c.l.b16 %v445
  %v2176 = vunpack.c.h.b16 %v445
  %v2177 = vunpack.c.l.b16 %v446
  %v2178 = vunpack.c.h.b16 %v446
  %v2179 = vunpack.c.l.b16 %v447
  %v2180 = vunpack.c.h.b16 %v447
  %v2181 = vunpack.c.l.b16 %v448
  %v2182 = vunpack.c.h.b16 %v448
  %v2183 = vunpack.c.l.b16 %v449
  %v2184 = vunpack.c.h.b16 %v449
  %v2185 = vunpack.c.l.b16 %v450
  %v2186 = vunpack.c.h.b16 %v450
  %v2187 = vunpack.c.l.b16 %v451
  %v2188 = vunpack.c.h.b16 %v451
  %v2189 = vunpack.c.l.b16 %v452
  %v2190 = vunpack.c.h.b16 %v452
  %v2191 = vunpack.c.l.b16 %v453
  %v2192 = vunpack.c.h.b16 %v453
  %v2193 = vunpack.c.l.b16 %v454
  %v2194 = vunpack.c.h.b16 %v454
  %v2195 = vunpack.c.l.b16 %v455
  %v2196 = vunpack.c.h.b16 %v455
  %v2197 = vunpack.c.l.b16 %v456
  %v2198 = vunpack.c.h.b16 %v456
  %v2199 = vunpack.c.l.b16 %v457
  %v2200 = vunpack.c.h.b16 %v457
  %v2201 = vunpack.c.l.b16 %v458
  %v2202 = vunpack.c.h.b16 %v458
  %v2203 = vunpack.c.l.b16 %v459
  %v2204 = vunpack.c.h.b16 %v459
  %v2205 = vunpack.c.l.b16 %v460
  %v2206 = vunpack.c.h.b16 %v460
  %v2207 = vunpack.c.l.b16 %v461
  %v2208 = vunpack.c.h.b16 %v461
  %v2209 = vunpack.c.l.b16 %v462
  %v2210 = vunpack.c.h.b16 %v462
  %v2211 = vunpack.c.l.b16 %v463
  %v2212 = vunpack.c.h.b16 %v463
  %v2213 = vunpack.c.l.b16 %v464
  %v2214 = vunpack.c.h.b16 %v464
  %v2215 = vunpack.c.l.b16 %v465
  %v2216 = vunpack.c.h.b16 %v465
  %v2217 = vunpack.c.l.b16 %v466
  %v2218 = vunpack.c.h.b16 %v466
  %v2219 = vunpack.c.l.b16 %v467
  %v2220 = vunpack.c.h.b16 %v467
  %v2221 = vunpack.c.l.b16 %v468
  %v2222 = vunpack.c.h.b16 %v468
  %v2223 = vunpack.c.l.b16 %v469
  %v2224 = vunpack.c.h.b16 %v469
  %v2225 = vunpack.c.l.b16 %v470
  %v2226 = vunpack.c.h.b16 %v470
  %v2227 = vunpack.c.l.b16 %v471
  %v2228 = vunpack.c.h.b16 %v471
  %v2229 = vunpack.c.l.b16 %v472
  %v2230 = vunpack.c.h.b16 %v472
  %v2231 = vunpack.c.l.b16 %v473
  %v2232 = vunpack.c.h.b16 %v473
  %v2233 = vunpack.c.l.b16 %v474
  %v2234 = vunpack.c.h.b16 %v474
  %v2235 = vunpack.c.l.b16 %v475
  %v2236 = vunpack.c.h.b16 %v475
  %v2237 = vunpack.c.l.b16 %v476
  %v2238 = vunpack.c.h.b16 %v476
  %v2239 = vunpack.c.l.b16 %v477
  %v2240 = vunpack.c.h.b16 %v477
  %v2241 = vunpack.c.l.b16 %v478
  %v2242 = vunpack.c.h.b16 %v478
  %v2243 = vunpack.c.l.b16 %v479
  %v2244 = vunpack.c.h.b16 %v479
  %v2245 = vunpack.c.l.b16 %v480
  %v2246 = vunpack.c.h.b16 %v480
  %v2247 = vunpack.c.l.b16 %v481
  %v2248 = vunpack.c.h.b16 %v481
  %v2249 = vunpack.c.l.b16 %v482
  %v2250 = vunpack.c.h.b16 %v482
  %v2251 = vunpack.c.l.b16 %v483
  %v2252 = vunpack.c.h.b16 %v483
  %v2253 = vunpack.c.l.b16 %v484
  %v2254 = vunpack.c.h.b16 %v484
  %v2255 = vunpack.c.l.b16 %v485
  %v2256 = vunpack.c.h.b16 %v485
  %v2257 = vunpack.c.l.b16 %v486
  %v2258 = vunpack.c.h.b16 %v486
  %v2259 = vunpack.c.l.b16 %v487
  %v2260 = vunpack.c.h.b16 %v487
  %v2261 = vunpack.c.l.b16 %v488
  %v2262 = vunpack.c.h.b16 %v488
  %v2263 = vunpack.c.l.b16 %v489
  %v2264 = vunpack.c.h.b16 %v489
  %v2265 = vunpack.c.l.b16 %v490
  %v2266 = vunpack.c.h.b16 %v490
  %v2267 = vunpack.c.l.b16 %v491
  %v2268 = vunpack.c.h.b16 %v491
  %v2269 = vunpack.c.l.b16 %v492
  %v2270 = vunpack.c.h.b16 %v492
  %v2271 = vunpack.c.l.b16 %v493
  %v2272 = vunpack.c.h.b16 %v493
  %v2273 = vunpack.c.l.b16 %v494
  %v2274 = vunpack.c.h.b16 %v494
  %v2275 = vunpack.c.l.b16 %v495
  %v2276 = vunpack.c.h.b16 %v495
  %v2277 = vunpack.c.l.b16 %v496
  %v2278 = vunpack.c.h.b16 %v496
  %v2279 = vunpack.c.l.b16 %v497
  %v2280 = vunpack.c.h.b16 %v497
  %v2281 = vunpack.c.l.b16 %v498
  %v2282 = vunpack.c.h.b16 %v498
  %v2283 = vunpack.c.l.b16 %v499
  %v2284 = vunpack.c.h.b16 %v499
  %v2285 = vunpack.c.l.b16 %v500
  %v2286 = vunpack.c.h.b16 %v500
  %v2287 = vunpack.c.l.b16 %v501
  %v2288 = vunpack.c.h.b16 %v501
  %v2289 = vunpack.c.l.b16 %v502
  %v2290 = vunpack.c.h.b16 %v502
  %v2291 = vunpack.c.l.b16 %v503
  %v2292 = vunpack.c.h.b16 %v503
  %v2293 = vunpack.c.l.b16 %v504
  %v2294 = vunpack.c.h.b16 %v504
  %v2295 = vunpack.c.l.b16 %v505
  %v2296 = vunpack.c.h.b16 %v505
  %v2297 = vunpack.c.l.b16 %v506
  %v2298 = vunpack.c.h.b16 %v506
  %v2299 = vunpack.c.l.b16 %v507
  %v2300 = vunpack.c.h.b16 %v507
  %v2301 = vunpack.c.l.b16 %v508
  %v2302 = vunpack.c.h.b16 %v508
  %v2303 = vunpack.c.l.b16 %v509
  %v2304 = vunpack.c.h.b16 %v509
  %v2305 = vunpack.c.l.b16 %v510
  %v2306 = vunpack.c.h.b16 %v510
  %v2307 = vunpack.c.l.b16 %v511
  %v2308 = vunpack.c.h.b16 %v511
  %v2309 = vunpack.c.l.b16 %v512
  %v2310 = vunpack.c.h.b16 %v512
  %v2311 = vunpack.c.l.b16 %v513
  %v2312 = vunpack.c.h.b16 %v513
  %v2313 = vunpack.c.l.b16 %v514
  %v2314 = vunpack.c.h.b16 %v514
  %v2315 = vunpack.c.l.b16 %v515
  %v2316 = vunpack.c.h.b16 %v515
  %v2317 = vunpack.c.l.b16 %v516
  %v2318 = vunpack.c.h.b16 %v516
  %v2319 = vunpack.c.l.b16 %v517
  %v2320 = vunpack.c.h.b16 %v517
  %v2321 = vunpack.c.l.b16 %v518
  %v2322 = vunpack.c.h.b16 %v518
  %v2323 = vunpack.c.l.b16 %v519
  %v2324 = vunpack.c.h.b16 %v519
  %v2325 = vunpack.c.l.b16 %v520
  %v2326 = vunpack.c.h.b16 %v520
  %v2327 = vunpack.c.l.b16 %v521
  %v2328 = vunpack.c.h.b16 %v521
  %v2329 = vunpack.c.l.b16 %v522
  %v2330 = vunpack.c.h.b16 %v522
  %v2331 = vunpack.c.l.b16 %v523
  %v2332 = vunpack.c.h.b16 %v523
  %v2333 = vunpack.c.l.b16 %v524
  %v2334 = vunpack.c.h.b16 %v524
  %v2335 = vunpack.c.l.b16 %v525
  %v2336 = vunpack.c.h.b16 %v525
  %v2337 = vunpack.c.l.b16 %v526
  %v2338 = vunpack.c.h.b16 %v526
  %v2339 = vunpack.c.l.b16 %v527
  %v2340 = vunpack.c.h.b16 %v527
  %v2341 = vunpack.c.l.b16 %v528
  %v2342 = vunpack.c.h.b16 %v528
  %v2343 = vunpack.c.l.b16 %v529
  %v2344 = vunpack.c.h.b16 %v529
  %v2345 = vunpack.c.l.b16 %v530
  %v2346 = vunpack.c.h.b16 %v530
  %v2347 = vunpack.c.l.b16 %v531
  %v2348 = vunpack.c.h.b16 %v531
  %v2349 = vunpack.c.l.b16 %v532
  %v2350 = vunpack.c.h.b16 %v532
  %v2351 = vunpack.c.l.b16 %v533
  %v2352 = vunpack.c.h.b16 %v533
  %v2353 = vunpack.c.l.b16 %v534
  %v2354 = vunpack.c.h.b16 %v534
  %v2355 = vunpack.c.l.b16 %v535
  %v2356 = vunpack.c.h.b16 %v535
  %v2357 = vunpack.c.l.b16 %v536
  %v2358 = vunpack.c.h.b16 %v536
  %v2359 = vunpack.c.l.b16 %v537
  %v2360 = vunpack.c.h.b16 %v537
  %v2361 = vunpack.c.l.b16 %v538
  %v2362 = vunpack.c.h.b16 %v538
  %v2363 = vunpack.c.l.b16 %v539
  %v2364 = vunpack.c.h.b16 %v539
  %v2365 = vunpack.c.l.b16 %v540
  %v2366 = vunpack.c.h.b16 %v540
  %v2367 = vunpack.c.l.b16 %v541
  %v2368 = vunpack.c.h.b16 %v541
  %v2369 = vunpack.c.l.b16 %v542
  %v2370 = vunpack.c.h.b16 %v542
  %v2371 = vunpack.c.l.b16 %v543
  %v2372 = vunpack.c.h.b16 %v543
  %v2373 = vunpack.c.l.b16 %v544
  %v2374 = vunpack.c.h.b16 %v544
  %v2375 = vunpack.c.l.b16 %v545
  %v2376 = vunpack.c.h.b16 %v545
  %v2377 = vunpack.c.l.b16 %v546
  %v2378 = vunpack.c.h.b16 %v546
  %v2379 = vunpack.c.l.b16 %v547
  %v2380 = vunpack.c.h.b16 %v547
  %v2381 = vunpack.c.l.b16 %v548
  %v2382 = vunpack.c.h.b16 %v548
  %v2383 = vunpack.c.l.b16 %v549
  %v2384 = vunpack.c.h.b16 %v549
  %v2385 = vunpack.c.l.b16 %v550
  %v2386 = vunpack.c.h.b16 %v550
  %v2387 = vunpack.c.l.b16 %v551
  %v2388 = vunpack.c.h.b16 %v551
  %v2389 = vunpack.c.l.b16 %v552
  %v2390 = vunpack.c.h.b16 %v552
  %v2391 = vunpack.c.l.b16 %v553
  %v2392 = vunpack.c.h.b16 %v553
  %v2393 = vunpack.c.l.b16 %v554
  %v2394 = vunpack.c.h.b16 %v554
  %v2395 = vunpack.c.l.b16 %v555
  %v2396 = vunpack.c.h.b16 %v555
  %v2397 = vunpack.c.l.b16 %v556
  %v2398 = vunpack.c.h.b16 %v556
  %v2399 = vunpack.c.l.b16 %v557
  %v2400 = vunpack.c.h.b16 %v557
  %v2401 = vunpack.c.l.b16 %v558
  %v2402 = vunpack.c.h.b16 %v558
  %v2403 = vunpack.c.l.b16 %v559
  %v2404 = vunpack.c.h.b16 %v559
  %v2405 = vunpack.c.l.b16 %v560
  %v2406 = vunpack.c.h.b16 %v560
  %v2407 = vunpack.c.l.b16 %v561
  %v2408 = vunpack.c.h.b16 %v561
  %v2409 = vunpack.c.l.b16 %v562
  %v2410 = vunpack.c.h.b16 %v562
  %v2411 = vunpack.c.l.b16 %v563
  %v2412 = vunpack.c.h.b16 %v563
  %v2413 = vunpack.c.l.b16 %v564
  %v2414 = vunpack.c.h.b16 %v564
  %v2415 = vunpack.c.l.b16 %v565
  %v2416 = vunpack.c.h.b16 %v565
  %v2417 = vunpack.c.l.b16 %v566
  %v2418 = vunpack.c.h.b16 %v566
  %v2419 = vunpack.c.l.b16 %v567
  %v2420 = vunpack.c.h.b16 %v567
  %v2421 = vunpack.c.l.b16 %v568
  %v2422 = vunpack.c.h.b16 %v568
  %v2423 = vunpack.c.l.b16 %v569
  %v2424 = vunpack.c.h.b16 %v569
  %v2425 = vunpack.c.l.b16 %v570
  %v2426 = vunpack.c.h.b16 %v570
  %v2427 = vunpack.c.l.b16 %v571
  %v2428 = vunpack.c.h.b16 %v571
  %v2429 = vunpack.c.l.b16 %v572
  %v2430 = vunpack.c.h.b16 %v572
  %v2431 = vunpack.c.l.b16 %v573
  %v2432 = vunpack.c.h.b16 %v573
  %v2433 = vunpack.c.l.b16 %v574
  %v2434 = vunpack.c.h.b16 %v574
  %v2435 = vunpack.c.l.b16 %v575
  %v2436 = vunpack.c.h.b16 %v575
  %v2437 = vunpack.c.l.b16 %v576
  %v2438 = vunpack.c.h.b16 %v576
  %v2439 = vunpack.c.l.b16 %v577
  %v2440 = vunpack.c.h.b16 %v577
  %v2441 = vunpack.c.l.b16 %v578
  %v2442 = vunpack.c.h.b16 %v578
  %v2443 = vunpack.c.l.b16 %v579
  %v2444 = vunpack.c.h.b16 %v579
  %v2445 = vunpack.c.l.b16 %v580
  %v2446 = vunpack.c.h.b16 %v580
  %v2447 = vunpack.c.l.b16 %v581
  %v2448 = vunpack.c.h.b16 %v581
  %v2449 = vunpack.c.l.b16 %v582
  %v2450 = vunpack.c.h.b16 %v582
  %v2451 = vunpack.c.l.b16 %v583
  %v2452 = vunpack.c.h.b16 %v583
  %v2453 = vunpack.c.l.b16 %v584
  %v2454 = vunpack.c.h.b16 %v584
  %v2455 = vunpack.c.l.b16 %v585
  %v2456 = vunpack.c.h.b16 %v585
  %v2457 = vunpack.c.l.b16 %v586
  %v2458 = vunpack.c.h.b16 %v586
  %v2459 = vunpack.c.l.b16 %v587
  %v2460 = vunpack.c.h.b16 %v587
  %v2461 = vunpack.c.l.b16 %v588
  %v2462 = vunpack.c.h.b16 %v588
  %v2463 = vunpack.c.l.b16 %v589
  %v2464 = vunpack.c.h.b16 %v589
  %v2465 = vunpack.c.l.b16 %v590
  %v2466 = vunpack.c.h.b16 %v590
  %v2467 = vunpack.c.l.b16 %v591
  %v2468 = vunpack.c.h.b16 %v591
  %v2469 = vunpack.c.l.b16 %v592
  %v2470 = vunpack.c.h.b16 %v592
  %v2471 = vunpack.c.l.b16 %v593
  %v2472 = vunpack.c.h.b16 %v593
  %v2473 = vunpack.c.l.b16 %v594
  %v2474 = vunpack.c.h.b16 %v594
  %v2475 = vunpack.c.l.b16 %v595
  %v2476 = vunpack.c.h.b16 %v595
  %v2477 = vunpack.c.l.b16 %v596
  %v2478 = vunpack.c.h.b16 %v596
  %v2479 = vunpack.c.l.b16 %v597
  %v2480 = vunpack.c.h.b16 %v597
  %v2481 = vunpack.c.l.b16 %v598
  %v2482 = vunpack.c.h.b16 %v598
  %v2483 = vunpack.c.l.b16 %v599
  %v2484 = vunpack.c.h.b16 %v599
  %v2485 = vunpack.c.l.b16 %v600
  %v2486 = vunpack.c.h.b16 %v600
  %v2487 = vunpack.c.l.b16 %v601
  %v2488 = vunpack.c.h.b16 %v601
  %v2489 = vunpack.c.l.b16 %v602
  %v2490 = vunpack.c.h.b16 %v602
  %v2491 = vunpack.c.l.b16 %v603
  %v2492 = vunpack.c.h.b16 %v603
  %v2493 = vunpack.c.l.b16 %v604
  %v2494 = vunpack.c.h.b16 %v604
  %v2495 = vunpack.c.l.b16 %v605
  %v2496 = vunpack.c.h.b16 %v605
  %v2497 = vunpack.c.l.b16 %v606
  %v2498 = vunpack.c.h.b16 %v606
  %v2499 = vunpack.c.l.b16 %v607
  %v2500 = vunpack.c.h.b16 %v607
  %v2501 = vunpack.c.l.b16 %v608
  %v2502 = vunpack.c.h.b16 %v608
  %v2503 = vunpack.c.l.b16 %v609
  %v2504 = vunpack.c.h.b16 %v609
  %v2505 = vunpack.c.l.b16 %v610
  %v2506 = vunpack.c.h.b16 %v610
  %v2507 = vunpack.c.l.b16 %v611
  %v2508 = vunpack.c.h.b16 %v611
  %v2509 = vunpack.c.l.b16 %v612
  %v2510 = vunpack.c.h.b16 %v612
  %v2511 = vunpack.c.l.b16 %v613
  %v2512 = vunpack.c.h.b16 %v613
  %v2513 = vunpack.c.l.b16 %v614
  %v2514 = vunpack.c.h.b16 %v614
  %v2515 = vunpack.c.l.b16 %v615
  %v2516 = vunpack.c.h.b16 %v615
  %v2517 = vunpack.c.l.b16 %v616
  %v2518 = vunpack.c.h.b16 %v616
  %v2519 = vunpack.c.l.b16 %v617
  %v2520 = vunpack.c.h.b16 %v617
  %v2521 = vunpack.c.l.b16 %v618
  %v2522 = vunpack.c.h.b16 %v618
  %v2523 = vunpack.c.l.b16 %v619
  %v2524 = vunpack.c.h.b16 %v619
  %v2525 = vunpack.c.l.b16 %v620
  %v2526 = vunpack.c.h.b16 %v620
  %v2527 = vunpack.c.l.b16 %v621
  %v2528 = vunpack.c.h.b16 %v621
  %v2529 = vunpack.c.l.b16 %v622
  %v2530 = vunpack.c.h.b16 %v622
  %v2531 = vpack.c.b16 %v1383, %v1379
  %v2532 = vpack.c.b16 %v1384, %v1380
  %v2533 = vpack.c.b16 %v1385, %v1381
  %v2534 = vpack.c.b16 %v1386, %v1382
  %v2535 = vpack.c.b16 %v1391, %v1387
  %v2536 = vpack.c.b16 %v1392, %v1388
  %v2537 = vpack.c.b16 %v1393, %v1389
  %v2538 = vpack.c.b16 %v1394, %v1390
  %v2539 = vpack.c.b16 %v1399, %v1395
  %v2540 = vpack.c.b16 %v1400, %v1396
  %v2541 = vpack.c.b16 %v1401, %v1397
  %v2542 = vpack.c.b16 %v1402, %v1398
  %v2543 = vpack.c.b16 %v1407, %v1403
  %v2544 = vpack.c.b16 %v1408, %v1404
  %v2545 = vpack.c.b16 %v1409, %v1405
  %v2546 = vpack.c.b16 %v1410, %v1406
  %v2547 = vpack.c.b16 %v1415, %v1411
  %v2548 = vpack.c.b16 %v1416, %v1412
  %v2549 = vpack.c.b16 %v1417, %v1413
  %v2550 = vpack.c.b16 %v1418, %v1414
  %v2551 = vpack.c.b16 %v1423, %v1419
  %v2552 = vpack.c.b16 %v1424, %v1420
  %v2553 = vpack.c.b16 %v1425, %v1421
  %v2554 = vpack.c.b16 %v1426, %v1422
  %v2555 = vpack.c.b16 %v1431, %v1427
  %v2556 = vpack.c.b16 %v1432, %v1428
  %v2557 = vpack.c.b16 %v1433, %v1429
  %v2558 = vpack.c.b16 %v1434, %v1430
  %v2559 = vpack.c.b16 %v1439, %v1435
  %v2560 = vpack.c.b16 %v1440, %v1436
  %v2561 = vpack.c.b16 %v1441, %v1437
  %v2562 = vpack.c.b16 %v1442, %v1438
  %v2563 = vpack.c.b16 %v1447, %v1443
  %v2564 = vpack.c.b16 %v1448, %v1444
  %v2565 = vpack.c.b16 %v1449, %v1445
  %v2566 = vpack.c.b16 %v1450, %v1446
  %v2567 = vpack.c.b16 %v1455, %v1451
  %v2568 = vpack.c.b16 %v1456, %v1452
  %v2569 = vpack.c.b16 %v1457, %v1453
  %v2570 = vpack.c.b16 %v1458, %v1454
  %v2571 = vpack.c.b16 %v1463, %v1459
  %v2572 = vpack.c.b16 %v1464, %v1460
  %v2573 = vpack.c.b16 %v1465, %v1461
  %v2574 = vpack.c.b16 %v1466, %v1462
  %v2575 = vpack.c.b16 %v1471, %v1467
  %v2576 = vpack.c.b16 %v1472, %v1468
  %v2577 = vpack.c.b16 %v1473, %v1469
  %v2578 = vpack.c.b16 %v1474, %v1470
  %v2579 = vpack.c.b16 %v1479, %v1475
  %v2580 = vpack.c.b16 %v1480, %v1476
  %v2581 = vpack.c.b16 %v1481, %v1477
  %v2582 = vpack.c.b16 %v1482, %v1478
  %v2583 = vpack.c.b16 %v1487, %v1483
  %v2584 = vpack.c.b16 %v1488, %v1484
  %v2585 = vpack.c.b16 %v1489, %v1485
  %v2586 = vpack.c.b16 %v1490, %v1486
  %v2587 = vpack.c.b16 %v1495, %v1491
  %v2588 = vpack.c.b16 %v1496, %v1492
  %v2589 = vpack.c.b16 %v1497, %v1493
  %v2590 = vpack.c.b16 %v1498, %v1494
  %v2591 = vpack.c.b16 %v1503, %v1499
  %v2592 = vpack.c.b16 %v1504, %v1500
  %v2593 = vpack.c.b16 %v1505, %v1501
  %v2594 = vpack.c.b16 %v1506, %v1502
  %v2595 = vpack.c.b16 %v1511, %v1507
  %v2596 = vpack.c.b16 %v1512, %v1508
  %v2597 = vpack.c.b16 %v1513, %v1509
  %v2598 = vpack.c.b16 %v1514, %v1510
  %v2599 = vpack.c.b16 %v1519, %v1515
  %v2600 = vpack.c.b16 %v1520, %v1516
  %v2601 = vpack.c.b16 %v1521, %v1517
  %v2602 = vpack.c.b16 %v1522, %v1518
  %v2603 = vpack.c.b16 %v1527, %v1523
  %v2604 = vpack.c.b16 %v1528, %v1524
  %v2605 = vpack.c.b16 %v1529, %v1525
  %v2606 = vpack.c.b16 %v1530, %v1526
  %v2607 = vpack.c.b16 %v1535, %v1531
  %v2608 = vpack.c.b16 %v1536, %v1532
  %v2609 = vpack.c.b16 %v1537, %v1533
  %v2610 = vpack.c.b16 %v1538, %v1534
  %v2611 = vpack.c.b16 %v1543, %v1539
  %v2612 = vpack.c.b16 %v1544, %v1540
  %v2613 = vpack.c.b16 %v1545, %v1541
  %v2614 = vpack.c.b16 %v1546, %v1542
  %v2615 = vpack.c.b16 %v1551, %v1547
  %v2616 = vpack.c.b16 %v1552, %v1548
  %v2617 = vpack.c.b16 %v1553, %v1549
  %v2618 = vpack.c.b16 %v1554, %v1550
  %v2619 = vpack.c.b16 %v1559, %v1555
  %v2620 = vpack.c.b16 %v1560, %v1556
  %v2621 = vpack.c.b16 %v1561, %v1557
  %v2622 = vpack.c.b16 %v1562, %v1558
  %v2623 = vpack.c.b16 %v1567, %v1563
  %v2624 = vpack.c.b16 %v1568, %v1564
  %v2625 = vpack.c.b16 %v1569, %v1565
  %v2626 = vpack.c.b16 %v1570, %v1566
  %v2627 = vpack.c.b16 %v1575, %v1571
  %v2628 = vpack.c.b16 %v1576, %v1572
  %v2629 = vpack.c.b16 %v1577, %v1573
  %v2630 = vpack.c.b16 %v1578, %v1574
  %v2631 = vpack.c.b16 %v1583, %v1579
  %v2632 = vpack.c.b16 %v1584, %v1580
  %v2633 = vpack.c.b16 %v1585, %v1581
  %v2634 = vpack.c.b16 %v1586, %v1582
  %v2635 = vpack.c.b16 %v1591, %v1587
  %v2636 = vpack.c.b16 %v1592, %v1588
  %v2637 = vpack.c.b16 %v1593, %v1589
  %v2638 = vpack.c.b16 %v1594, %v1590
  %v2639 = vpack.c.b16 %v1599, %v1595
  %v2640 = vpack.c.b16 %v1600, %v1596
  %v2641 = vpack.c.b16 %v1601, %v1597
  %v2642 = vpack.c.b16 %v1602, %v1598
  %v2643 = vpack.c.b16 %v1607, %v1603
  %v2644 = vpack.c.b16 %v1608, %v1604
  %v2645 = vpack.c.b16 %v1609, %v1605
  %v2646 = vpack.c.b16 %v1610, %v1606
  %v2647 = vpack.c.b16 %v1615, %v1611
  %v2648 = vpack.c.b16 %v1616, %v1612
  %v2649 = vpack.c.b16 %v1617, %v1613
  %v2650 = vpack.c.b16 %v1618, %v1614
  %v2651 = vpack.c.b16 %v1623, %v1619
  %v2652 = vpack.c.b16 %v1624, %v1620
  %v2653 = vpack.c.b16 %v1625, %v1621
  %v2654 = vpack.c.b16 %v1626, %v1622
  %v2655 = vpack.c.b16 %v1631, %v1627
  %v2656 = vpack.c.b16 %v1632, %v1628
  %v2657 = vpack.c.b16 %v1633, %v1629
  %v2658 = vpack.c.b16 %v1634, %v1630
  %v2659 = vpack.c.b16 %v1639, %v1635
  %v2660 = vpack.c.b16 %v1640, %v1636
  %v2661 = vpack.c.b16 %v1641, %v1637
  %v2662 = vpack.c.b16 %v1642, %v1638
  %v2663 = vpack.c.b16 %v1647, %v1643
  %v2664 = vpack.c.b16 %v1648, %v1644
  %v2665 = vpack.c.b16 %v1649, %v1645
  %v2666 = vpack.c.b16 %v1650, %v1646
  %v2667 = vpack.c.b16 %v1655, %v1651
  %v2668 = vpack.c.b16 %v1656, %v1652
  %v2669 = vpack.c.b16 %v1657, %v1653
  %v2670 = vpack.c.b16 %v1658, %v1654
  %v2671 = vpack.c.b16 %v1663, %v1659
  %v2672 = vpack.c.b16 %v1664, %v1660
  %v2673 = vpack.c.b16 %v1665, %v1661
  %v2674 = vpack.c.b16 %v1666, %v1662
  %v2675 = vpack.c.b16 %v1671, %v1667
  %v2676 = vpack.c.b16 %v1672, %v1668
  %v2677 = vpack.c.b16 %v1673, %v1669
  %v2678 = vpack.c.b16 %v1674, %v1670
  %v2679 = vpack.c.b16 %v1679, %v1675
  %v2680 = vpack.c.b16 %v1680, %v1676
  %v2681 = vpack.c.b16 %v1681, %v1677
  %v2682 = vpack.c.b16 %v1682, %v1678
  %v2683 = vpack.c.b16 %v1687, %v1683
  %v2684 = vpack.c.b16 %v1688, %v1684
  %v2685 = vpack.c.b16 %v1689, %v1685
  %v2686 = vpack.c.b16 %v1690, %v1686
  %v2687 = vpack.c.b16 %v1695, %v1691
  %v2688 = vpack.c.b16 %v1696, %v1692
  %v2689 = vpack.c.b16 %v1697, %v1693
  %v2690 = vpack.c.b16 %v1698, %v1694
  %v2691 = vpack.c.b16 %v1703, %v1699
  %v2692 = vpack.c.b16 %v1704, %v1700
  %v2693 = vpack.c.b16 %v1705, %v1701
  %v2694 = vpack.c.b16 %v1706, %v1702
  %v2695 = vpack.c.b16 %v1711, %v1707
  %v2696 = vpack.c.b16 %v1712, %v1708
  %v2697 = vpack.c.b16 %v1713, %v1709
  %v2698 = vpack.c.b16 %v1714, %v1710
  %v2699 = vpack.c.b16 %v1719, %v1715
  %v2700 = vpack.c.b16 %v1720, %v1716
  %v2701 = vpack.c.b16 %v1721, %v1717
  %v2702 = vpack.c.b16 %v1722, %v1718
  %v2703 = vpack.c.b16 %v1727, %v1723
  %v2704 = vpack.c.b16 %v1728, %v1724
  %v2705 = vpack.c.b16 %v1729, %v1725
  %v2706 = vpack.c.b16 %v1730, %v1726
  %v2707 = vpack.c.b16 %v1735, %v1731
  %v2708 = vpack.c.b16 %v1736, %v1732
  %v2709 = vpack.c.b16 %v1737, %v1733
  %v2710 = vpack.c.b16 %v1738, %v1734
  %v2711 = vpack.c.b16 %v1743, %v1739
  %v2712 = vpack.c.b16 %v1744, %v1740
  %v2713 = vpack.c.b16 %v1745, %v1741
  %v2714 = vpack.c.b16 %v1746, %v1742
  %v2715 = vpack.c.b16 %v1751, %v1747
  %v2716 = vpack.c.b16 %v1752, %v1748
  %v2717 = vpack.c.b16 %v1753, %v1749
  %v2718 = vpack.c.b16 %v1754, %v1750
  %v2719 = vpack.c.b16 %v1759, %v1755
  %v2720 = vpack.c.b16 %v1760, %v1756
  %v2721 = vpack.c.b16 %v1761, %v1757
  %v2722 = vpack.c.b16 %v1762, %v1758
  %v2723 = vpack.c.b16 %v1767, %v1763
  %v2724 = vpack.c.b16 %v1768, %v1764
  %v2725 = vpack.c.b16 %v1769, %v1765
  %v2726 = vpack.c.b16 %v1770, %v1766
  %v2727 = vpack.c.b16 %v1775, %v1771
  %v2728 = vpack.c.b16 %v1776, %v1772
  %v2729 = vpack.c.b16 %v1777, %v1773
  %v2730 = vpack.c.b16 %v1778, %v1774
  %v2731 = vpack.c.b16 %v1783, %v1779
  %v2732 = vpack.c.b16 %v1784, %v1780
  %v2733 = vpack.c.b16 %v1785, %v1781
  %v2734 = vpack.c.b16 %v1786, %v1782
  %v2735 = vpack.c.b16 %v1791, %v1787
  %v2736 = vpack.c.b16 %v1792, %v1788
  %v2737 = vpack.c.b16 %v1793, %v1789
  %v2738 = vpack.c.b16 %v1794, %v1790
  %v2739 = vpack.c.b16 %v1799, %v1795
  %v2740 = vpack.c.b16 %v1800, %v1796
  %v2741 = vpack.c.b16 %v1801, %v1797
  %v2742 = vpack.c.b16 %v1802, %v1798
  %v2743 = vpack.c.b16 %v1807, %v1803
  %v2744 = vpack.c.b16 %v1808, %v1804
  %v2745 = vpack.c.b16 %v1809, %v1805
  %v2746 = vpack.c.b16 %v1810, %v1806
  %v2747 = vpack.c.b16 %v1815, %v1811
  %v2748 = vpack.c.b16 %v1816, %v1812
  %v2749 = vpack.c.b16 %v1817, %v1813
  %v2750 = vpack.c.b16 %v1818, %v1814
  %v2751 = vpack.c.b16 %v1823, %v1819
  %v2752 = vpack.c.b16 %v1824, %v1820
  %v2753 = vpack.c.b16 %v1825, %v1821
  %v2754 = vpack.c.b16 %v1826, %v1822
  %v2755 = vpack.c.b16 %v1831, %v1827
  %v2756 = vpack.c.b16 %v1832, %v1828
  %v2757 = vpack.c.b16 %v1833, %v1829
  %v2758 = vpack.c.b16 %v1834, %v1830
  %v2759 = vpack.c.b16 %v1839, %v1835
  %v2760 = vpack.c.b16 %v1840, %v1836
  %v2761 = vpack.c.b16 %v1841, %v1837
  %v2762 = vpack.c.b16 %v1842, %v1838
  %v2763 = vpack.c.b16 %v1847, %v1843
  %v2764 = vpack.c.b16 %v1848, %v1844
  %v2765 = vpack.c.b16 %v1849, %v1845
  %v2766 = vpack.c.b16 %v1850, %v1846
  %v2767 = vpack.c.b16 %v1855, %v1851
  %v2768 = vpack.c.b16 %v1856, %v1852
  %v2769 = vpack.c.b16 %v1857, %v1853
  %v2770 = vpack.c.b16 %v1858, %v1854
  %v2771 = vpack.c.b16 %v1863, %v1859
  %v2772 = vpack.c.b16 %v1864, %v1860
  %v2773 = vpack.c.b16 %v1865, %v1861
  %v2774 = vpack.c.b16 %v1866, %v1862
  %v2775 = vpack.c.b16 %v1871, %v1867
  %v2776 = vpack.c.b16 %v1872, %v1868
  %v2777 = vpack.c.b16 %v1873, %v1869
  %v2778 = vpack.c.b16 %v1874, %v1870
  %v2779 = vpack.c.b16 %v1879, %v1875
  %v2780 = vpack.c.b16 %v1880, %v1876
  %v2781 = vpack.c.b16 %v1881, %v1877
  %v2782 = vpack.c.b16 %v1882, %v1878
  %v2783 = vpack.c.b16 %v1887, %v1883
  %v2784 = vpack.c.b16 %v1888, %v1884
  %v2785 = vpack.c.b16 %v1889, %v1885
  %v2786 = vpack.c.b16 %v1890, %v1886
  %v2787 = vpack.c.b16 %v1895, %v1891
  %v2788 = vpack.c.b16 %v1896, %v1892
  %v2789 = vpack.c.b16 %v1897, %v1893
  %v2790 = vpack.c.b16 %v1898, %v1894
  %v2791 = vpack.c.b16 %v1903, %v1899
  %v2792 = vpack.c.b16 %v1904, %v1900
  %v2793 = vpack.c.b16 %v1905, %v1901
  %v2794 = vpack.c.b16 %v1906, %v1902
  %v2795 = vpack.c.b16 %v1911, %v1907
  %v2796 = vpack.c.b16 %v1912, %v1908
  %v2797 = vpack.c.b16 %v1913, %v1909
  %v2798 = vpack.c.b16 %v1914, %v1910
  %v2799 = vpack.c.b16 %v1919, %v1915
  %v2800 = vpack.c.b16 %v1920, %v1916
  %v2801 = vpack.c.b16 %v1921, %v1917
  %v2802 = vpack.c.b16 %v1922, %v1918
  %v2803 = vpack.c.b16 %v1927, %v1923
  %v2804 = vpack.c.b16 %v1928, %v1924
  %v2805 = vpack.c.b16 %v1929, %v1925
  %v2806 = vpack.c.b16 %v1930, %v1926
  %v2807 = vpack.c.b16 %v1935, %v1931
  %v2808 = vpack.c.b16 %v1936, %v1932
  %v2809 = vpack.c.b16 %v1937, %v1933
  %v2810 = vpack.c.b16 %v1938, %v1934
  %v2811 = vpack.c.b16 %v1943, %v1939
  %v2812 = vpack.c.b16 %v1944, %v1940
  %v2813 = vpack.c.b16 %v1945, %v1941
  %v2814 = vpack.c.b16 %v1946, %v1942
  %v2815 = vpack.c.b16 %v1951, %v1947
  %v2816 = vpack.c.b16 %v1952, %v1948
  %v2817 = vpack.c.b16 %v1953, %v1949
  %v2818 = vpack.c.b16 %v1954, %v1950
  %v2819 = vpack.c.b16 %v1959, %v1955
  %v2820 = vpack.c.b16 %v1960, %v1956
  %v2821 = vpack.c.b16 %v1961, %v1957
  %v2822 = vpack.c.b16 %v1962, %v1958
  %v2823 = vpack.c.b16 %v1967, %v1963
  %v2824 = vpack.c.b16 %v1968, %v1964
  %v2825 = vpack.c.b16 %v1969, %v1965
  %v2826 = vpack.c.b16 %v1970, %v1966
  %v2827 = vpack.c.b16 %v1975, %v1971
  %v2828 = vpack.c.b16 %v1976, %v1972
  %v2829 = vpack.c.b16 %v1977, %v1973
  %v2830 = vpack.c.b16 %v1978, %v1974
  %v2831 = vpack.c.b16 %v1983, %v1979
  %v2832 = vpack.c.b16 %v1984, %v1980
  %v2833 = vpack.c.b16 %v1985, %v1981
  %v2834 = vpack.c.b16 %v1986, %v1982
  %v2835 = vpack.c.b16 %v1991, %v1987
  %v2836 = vpack.c.b16 %v1992, %v1988
  %v2837 = vpack.c.b16 %v1993, %v1989
  %v2838 = vpack.c.b16 %v1994, %v1990
  %v2839 = vpack.c.b16 %v1999, %v1995
  %v2840 = vpack.c.b16 %v2000, %v1996
  %v2841 = vpack.c.b16 %v2001, %v1997
  %v2842 = vpack.c.b16 %v2002, %v1998
  %v2843 = vpack.c.b16 %v2007, %v2003
  %v2844 = vpack.c.b16 %v2008, %v2004
  %v2845 = vpack.c.b16 %v2009, %v2005
  %v2846 = vpack.c.b16 %v2010, %v2006
  %v2847 = vpack.c.b16 %v2015, %v2011
  %v2848 = vpack.c.b16 %v2016, %v2012
  %v2849 = vpack.c.b16 %v2017, %v2013
  %v2850 = vpack.c.b16 %v2018, %v2014
  %v2851 = vpack.c.b16 %v2023, %v2019
  %v2852 = vpack.c.b16 %v2024, %v2020
  %v2853 = vpack.c.b16 %v2025, %v2021
  %v2854 = vpack.c.b16 %v2026, %v2022
  %v2855 = vpack.c.b16 %v2031, %v2027
  %v2856 = vpack.c.b16 %v2032, %v2028
  %v2857 = vpack.c.b16 %v2033, %v2029
  %v2858 = vpack.c.b16 %v2034, %v2030
  %v2859 = vpack.c.b16 %v2039, %v2035
  %v2860 = vpack.c.b16 %v2040, %v2036
  %v2861 = vpack.c.b16 %v2041, %v2037
  %v2862 = vpack.c.b16 %v2042, %v2038
  %v2863 = vpack.c.b16 %v2047, %v2043
  %v2864 = vpack.c.b16 %v2048, %v2044
  %v2865 = vpack.c.b16 %v2049, %v2045
  %v2866 = vpack.c.b16 %v2050, %v2046
  %v2867 = vpack.c.b16 %v2055, %v2051
  %v2868 = vpack.c.b16 %v2056, %v2052
  %v2869 = vpack.c.b16 %v2057, %v2053
  %v2870 = vpack.c.b16 %v2058, %v2054
  %v2871 = vpack.c.b16 %v2063, %v2059
  %v2872 = vpack.c.b16 %v2064, %v2060
  %v2873 = vpack.c.b16 %v2065, %v2061
  %v2874 = vpack.c.b16 %v2066, %v2062
  %v2875 = vpack.c.b16 %v2071, %v2067
  %v2876 = vpack.c.b16 %v2072, %v2068
  %v2877 = vpack.c.b16 %v2073, %v2069
  %v2878 = vpack.c.b16 %v2074, %v2070
  %v2879 = vpack.c.b16 %v2079, %v2075
  %v2880 = vpack.c.b16 %v2080, %v2076
  %v2881 = vpack.c.b16 %v2081, %v2077
  %v2882 = vpack.c.b16 %v2082, %v2078
  %v2883 = vpack.c.b16 %v2087, %v2083
  %v2884 = vpack.c.b16 %v2088, %v2084
  %v2885 = vpack.c.b16 %v2089, %v2085
  %v2886 = vpack.c.b16 %v2090, %v2086
  %v2887 = vpack.c.b16 %v2095, %v2091
  %v2888 = vpack.c.b16 %v2096, %v2092
  %v2889 = vpack.c.b16 %v2097, %v2093
  %v2890 = vpack.c.b16 %v2098, %v2094
  %v2891 = vpack.c.b16 %v2103, %v2099
  %v2892 = vpack.c.b16 %v2104, %v2100
  %v2893 = vpack.c.b16 %v2105, %v2101
  %v2894 = vpack.c.b16 %v2106, %v2102
  %v2895 = vpack.c.b16 %v2111, %v2107
  %v2896 = vpack.c.b16 %v2112, %v2108
  %v2897 = vpack.c.b16 %v2113, %v2109
  %v2898 = vpack.c.b16 %v2114, %v2110
  %v2899 = vpack.c.b16 %v2119, %v2115
  %v2900 = vpack.c.b16 %v2120, %v2116
  %v2901 = vpack.c.b16 %v2121, %v2117
  %v2902 = vpack.c.b16 %v2122, %v2118
  %v2903 = vpack.c.b16 %v2127, %v2123
  %v2904 = vpack.c.b16 %v2128, %v2124
  %v2905 = vpack.c.b16 %v2129, %v2125
  %v2906 = vpack.c.b16 %v2130, %v2126
  %v2907 = vpack.c.b16 %v2135, %v2131
  %v2908 = vpack.c.b16 %v2136, %v2132
  %v2909 = vpack.c.b16 %v2137, %v2133
  %v2910 = vpack.c.b16 %v2138, %v2134
  %v2911 = vpack.c.b16 %v2143, %v2139
  %v2912 = vpack.c.b16 %v2144, %v2140
  %v2913 = vpack.c.b16 %v2145, %v2141
  %v2914 = vpack.c.b16 %v2146, %v2142
  %v2915 = vpack.c.b16 %v2151, %v2147
  %v2916 = vpack.c.b16 %v2152, %v2148
  %v2917 = vpack.c.b16 %v2153, %v2149
  %v2918 = vpack.c.b16 %v2154, %v2150
  %v2919 = vpack.c.b16 %v2159, %v2155
  %v2920 = vpack.c.b16 %v2160, %v2156
  %v2921 = vpack.c.b16 %v2161, %v2157
  %v2922 = vpack.c.b16 %v2162, %v2158
  %v2923 = vpack.c.b16 %v2167, %v2163
  %v2924 = vpack.c.b16 %v2168, %v2164
  %v2925 = vpack.c.b16 %v2169, %v2165
  %v2926 = vpack.c.b16 %v2170, %v2166
  %v2927 = vpack.c.b16 %v2175, %v2171
  %v2928 = vpack.c.b16 %v2176, %v2172
  %v2929 = vpack.c.b16 %v2177, %v2173
  %v2930 = vpack.c.b16 %v2178, %v2174
  %v2931 = vpack.c.b16 %v2183, %v2179
  %v2932 = vpack.c.b16 %v2184, %v2180
  %v2933 = vpack.c.b16 %v2185, %v2181
  %v2934 = vpack.c.b16 %v2186, %v2182
  %v2935 = vpack.c.b16 %v2191, %v2187
  %v2936 = vpack.c.b16 %v2192, %v2188
  %v2937 = vpack.c.b16 %v2193, %v2189
  %v2938 = vpack.c.b16 %v2194, %v2190
  %v2939 = vpack.c.b16 %v2199, %v2195
  %v2940 = vpack.c.b16 %v2200, %v2196
  %v2941 = vpack.c.b16 %v2201, %v2197
  %v2942 = vpack.c.b16 %v2202, %v2198
  %v2943 = vpack.c.b16 %v2207, %v2203
  %v2944 = vpack.c.b16 %v2208, %v2204
  %v2945 = vpack.c.b16 %v2209, %v2205
  %v2946 = vpack.c.b16 %v2210, %v2206
  %v2947 = vpack.c.b16 %v2215, %v2211
  %v2948 = vpack.c.b16 %v2216, %v2212
  %v2949 = vpack.c.b16 %v2217, %v2213
  %v2950 = vpack.c.b16 %v2218, %v2214
  %v2951 = vpack.c.b16 %v2223, %v2219
  %v2952 = vpack.c.b16 %v2224, %v2220
  %v2953 = vpack.c.b16 %v2225, %v2221
  %v2954 = vpack.c.b16 %v2226, %v2222
  %v2955 = vpack.c.b16 %v2231, %v2227
  %v2956 = vpack.c.b16 %v2232, %v2228
  %v2957 = vpack.c.b16 %v2233, %v2229
  %v2958 = vpack.c.b16 %v2234, %v2230
  %v2959 = vpack.c.b16 %v2239, %v2235
  %v2960 = vpack.c.b16 %v2240, %v2236
  %v2961 = vpack.c.b16 %v2241, %v2237
  %v2962 = vpack.c.b16 %v2242, %v2238
  %v2963 = vpack.c.b16 %v2247, %v2243
  %v2964 = vpack.c.b16 %v2248, %v2244
  %v2965 = vpack.c.b16 %v2249, %v2245
  %v2966 = vpack.c.b16 %v2250, %v2246
  %v2967 = vpack.c.b16 %v2255, %v2251
  %v2968 = vpack.c.b16 %v2256, %v2252
  %v2969 = vpack.c.b16 %v2257, %v2253
  %v2970 = vpack.c.b16 %v2258, %v2254
  %v2971 = vpack.c.b16 %v2263, %v2259
  %v2972 = vpack.c.b16 %v2264, %v2260
  %v2973 = vpack.c.b16 %v2265, %v2261
  %v2974 = vpack.c.b16 %v2266, %v2262
  %v2975 = vpack.c.b16 %v2271, %v2267
  %v2976 = vpack.c.b16 %v2272, %v2268
  %v2977 = vpack.c.b16 %v2273, %v2269
  %v2978 = vpack.c.b16 %v2274, %v2270
  %v2979 = vpack.c.b16 %v2279, %v2275
  %v2980 = vpack.c.b16 %v2280, %v2276
  %v2981 = vpack.c.b16 %v2281, %v2277
  %v2982 = vpack.c.b16 %v2282, %v2278
  %v2983 = vpack.c.b16 %v2287, %v2283
  %v2984 = vpack.c.b16 %v2288, %v2284
  %v2985 = vpack.c.b16 %v2289, %v2285
  %v2986 = vpack.c.b16 %v2290, %v2286
  %v2987 = vpack.c.b16 %v2295, %v2291
  %v2988 = vpack.c.b16 %v2296, %v2292
  %v2989 = vpack.c.b16 %v2297, %v2293
  %v2990 = vpack.c.b16 %v2298, %v2294
  %v2991 = vpack.c.b16 %v2303, %v2299
  %v2992 = vpack.c.b16 %v2304, %v2300
  %v2993 = vpack.c.b16 %v2305, %v2301
  %v2994 = vpack.c.b16 %v2306, %v2302
  %v2995 = vpack.c.b16 %v2311, %v2307
  %v2996 = vpack.c.b16 %v2312, %v2308
  %v2997 = vpack.c.b16 %v2313, %v2309
  %v2998 = vpack.c.b16 %v2314, %v2310
  %v2999 = vpack.c.b16 %v2319, %v2315
  %v3000 = vpack.c.b16 %v2320, %v2316
  %v3001 = vpack.c.b16 %v2321, %v2317
  %v3002 = vpack.c.b16 %v2322, %v2318
  %v3003 = vpack.c.b16 %v2327, %v2323
  %v3004 = vpack.c.b16 %v2328, %v2324
  %v3005 = vpack.c.b16 %v2329, %v2325
  %v3006 = vpack.c.b16 %v2330, %v2326
  %v3007 = vpack.c.b16 %v2335, %v2331
  %v3008 = vpack.c.b16 %v2336, %v2332
  %v3009 = vpack.c.b16 %v2337, %v2333
  %v3010 = vpack.c.b16 %v2338, %v2334
  %v3011 = vpack.c.b16 %v2343, %v2339
  %v3012 = vpack.c.b16 %v2344, %v2340
  %v3013 = vpack.c.b16 %v2345, %v2341
  %v3014 = vpack.c.b16 %v2346, %v2342
  %v3015 = vpack.c.b16 %v2351, %v2347
  %v3016 = vpack.c.b16 %v2352, %v2348
  %v3017 = vpack.c.b16 %v2353, %v2349
  %v3018 = vpack.c.b16 %v2354, %v2350
  %v3019 = vpack.c.b16 %v2359, %v2355
  %v3020 = vpack.c.b16 %v2360, %v2356
  %v3021 = vpack.c.b16 %v2361, %v2357
  %v3022 = vpack.c.b16 %v2362, %v2358
  %v3023 = vpack.c.b16 %v2367, %v2363
  %v3024 = vpack.c.b16 %v2368, %v2364
  %v3025 = vpack.c.b16 %v2369, %v2365
  %v3026 = vpack.c.b16 %v2370, %v2366
  %v3027 = vpack.c.b16 %v2375, %v2371
  %v3028 = vpack.c.b16 %v2376, %v2372
  %v3029 = vpack.c.b16 %v2377, %v2373
  %v3030 = vpack.c.b16 %v2378, %v2374
  %v3031 = vpack.c.b16 %v2383, %v2379
  %v3032 = vpack.c.b16 %v2384, %v2380
  %v3033 = vpack.c.b16 %v2385, %v2381
  %v3034 = vpack.c.b16 %v2386, %v2382
  %v3035 = vpack.c.b16 %v2391, %v2387
  %v3036 = vpack.c.b16 %v2392, %v2388
  %v3037 = vpack.c.b16 %v2393, %v2389
  %v3038 = vpack.c.b16 %v2394, %v2390
  %v3039 = vpack.c.b16 %v2399, %v2395
  %v3040 = vpack.c.b16 %v2400, %v2396
  %v3041 = vpack.c.b16 %v2401, %v2397
  %v3042 = vpack.c.b16 %v2402, %v2398
  %v3043 = vpack.c.b16 %v2407, %v2403
  %v3044 = vpack.c.b16 %v2408, %v2404
  %v3045 = vpack.c.b16 %v2409, %v2405
  %v3046 = vpack.c.b16 %v2410, %v2406
  %v3047 = vpack.c.b16 %v2415, %v2411
  %v3048 = vpack.c.b16 %v2416, %v2412
  %v3049 = vpack.c.b16 %v2417, %v2413
  %v3050 = vpack.c.b16 %v2418, %v2414
  %v3051 = vpack.c.b16 %v2423, %v2419
  %v3052 = vpack.c.b16 %v2424, %v2420
  %v3053 = vpack.c.b16 %v2425, %v2421
  %v3054 = vpack.c.b16 %v2426, %v2422
  %v3055 = vpack.c.b16 %v2431, %v2427
  %v3056 = vpack.c.b16 %v2432, %v2428
  %v3057 = vpack.c.b16 %v2433, %v2429
  %v3058 = vpack.c.b16 %v2434, %v2430
  %v3059 = vpack.c.b16 %v2439, %v2435
  %v3060 = vpack.c.b16 %v2440, %v2436
  %v3061 = vpack.c.b16 %v2441, %v2437
  %v3062 = vpack.c.b16 %v2442, %v2438
  %v3063 = vpack.c.b16 %v2447, %v2443
  %v3064 = vpack.c.b16 %v2448, %v2444
  %v3065 = vpack.c.b16 %v2449, %v2445
  %v3066 = vpack.c.b16 %v2450, %v2446
  %v3067 = vpack.c.b16 %v2455, %v2451
  %v3068 = vpack.c.b16 %v2456, %v2452
  %v3069 = vpack.c.b16 %v2457, %v2453
  %v3070 = vpack.c.b16 %v2458, %v2454
  %v3071 = vpack.c.b16 %v2463, %v2459
  %v3072 = vpack.c.b16 %v2464, %v2460
  %v3073 = vpack.c.b16 %v2465, %v2461
  %v3074 = vpack.c.b16 %v2466, %v2462
  %v3075 = vpack.c.b16 %v2471, %v2467
  %v3076 = vpack.c.b16 %v2472, %v2468
  %v3077 = vpack.c.b16 %v2473, %v2469
  %v3078 = vpack.c.b16 %v2474, %v2470
  %v3079 = vpack.c.b16 %v2479, %v2475
  %v3080 = vpack.c.b16 %v2480, %v2476
  %v3081 = vpack.c.b16 %v2481, %v2477
  %v3082 = vpack.c.b16 %v2482, %v2478
  %v3083 = vpack.c.b16 %v2487, %v2483
  %v3084 = vpack.c.b16 %v2488, %v2484
  %v3085 = vpack.c.b16 %v2489, %v2485
  %v3086 = vpack.c.b16 %v2490, %v2486
  %v3087 = vpack.c.b16 %v2495, %v2491
  %v3088 = vpack.c.b16 %v2496, %v2492
  %v3089 = vpack.c.b16 %v2497, %v2493
  %v3090 = vpack.c.b16 %v2498, %v2494
  %v3091 = vpack.c.b16 %v2503, %v2499
  %v3092 = vpack.c.b16 %v2504, %v2500
  %v3093 = vpack.c.b16 %v2505, %v2501
  %v3094 = vpack.c.b16 %v2506, %v2502
  %v3095 = vpack.c.b16 %v2511, %v2507
  %v3096 = vpack.c.b16 %v2512, %v2508
  %v3097 = vpack.c.b16 %v2513, %v2509
  %v3098 = vpack.c.b16 %v2514, %v2510
  %v3099 = vpack.c.b16 %v2519, %v2515
  %v3100 = vpack.c.b16 %v2520, %v2516
  %v3101 = vpack.c.b16 %v2521, %v2517
  %v3102 = vpack.c.b16 %v2522, %v2518
  %v3103 = vpack.c.b16 %v2527, %v2523
  %v3104 = vpack.c.b16 %v2528, %v2524
  %v3105 = vpack.c.b16 %v2529, %v2525
  %v3106 = vpack.c.b16 %v2530, %v2526
  %3683 = vmatprep.subr.bf16.mxu0 %v2532
  %3684 = vmatpush1.bf16.msra.mxu0 %v2531
  %3685 = vmatprep.subr.bf16.mxu0 %v2536
  %3686 = vmatpush1.bf16.msra.mxu0 %v2535
  %3687 = vmatprep.subr.bf16.mxu0 %v2540
  %3688 = vmatpush1.bf16.msra.mxu0 %v2539
  %3689 = vmatprep.subr.bf16.mxu0 %v2544
  %3690 = vmatpush1.bf16.msra.mxu0 %v2543
  %3691 = vmatprep.subr.bf16.mxu0 %v2548
  %3692 = vmatpush1.bf16.msra.mxu0 %v2547
  %3693 = vmatprep.subr.bf16.mxu0 %v2552
  %3694 = vmatpush1.bf16.msra.mxu0 %v2551
  %3695 = vmatprep.subr.bf16.mxu0 %v2556
  %3696 = vmatpush1.bf16.msra.mxu0 %v2555
  %3697 = vmatprep.subr.bf16.mxu0 %v2560
  %3698 = vmatpush1.bf16.msra.mxu0 %v2559
  %3699 = vmatprep.subr.bf16.mxu0 %v2564
  %3700 = vmatpush1.bf16.msra.mxu0 %v2563
  %3701 = vmatprep.subr.bf16.mxu0 %v2568
  %3702 = vmatpush1.bf16.msra.mxu0 %v2567
  %3703 = vmatprep.subr.bf16.mxu0 %v2572
  %3704 = vmatpush1.bf16.msra.mxu0 %v2571
  %3705 = vmatprep.subr.bf16.mxu0 %v2576
  %3706 = vmatpush1.bf16.msra.mxu0 %v2575
  %3707 = vmatprep.subr.bf16.mxu0 %v2580
  %3708 = vmatpush1.bf16.msra.mxu0 %v2579
  %3709 = vmatprep.subr.bf16.mxu0 %v2584
  %3710 = vmatpush1.bf16.msra.mxu0 %v2583
  %3711 = vmatprep.subr.bf16.mxu0 %v2588
  %3712 = vmatpush1.bf16.msra.mxu0 %v2587
  %3713 = vmatprep.subr.bf16.mxu0 %v2592
  %3714 = vmatpush1.bf16.msra.mxu0 %v2591
  %3715 = vmatprep.mubr.bf16.mxu0 %v732
  %3716 = vmatmul.mubr.bf16.gmra.mrb[0].mxu0 %v731
  %v3717 = vpop.f32.mrb[0].mxu0
  %v3718 = vadd.f32 0.0, %v3717
  %v3719 = vpop.f32.mrb[0].mxu0
  %v3720 = vadd.f32 0.0, %v3719
  %v3721 = vpop.f32.mrb[0].mxu0
  %v3722 = vadd.f32 0.0, %v3721
  %v3723 = vpop.f32.mrb[0].mxu0
  %v3724 = vadd.f32 0.0, %v3723
  %3725 = vmatprep.mubr.bf16.mxu0 %v750
  %3726 = vmatmul.mubr.bf16.gmra.mrb[0].mxu0 %v749
  %v3727 = vpop.f32.mrb[0].mxu0
  %v3728 = vadd.f32 0.0, %v3727
  %v3729 = vpop.f32.mrb[0].mxu0
  %v3730 = vadd.f32 0.0, %v3729
  %v3731 = vpop.f32.mrb[0].mxu0
  %v3732 = vadd.f32 0.0, %v3731
  %v3733 = vpop.f32.mrb[0].mxu0
  %v3734 = vadd.f32 0.0, %v3733
  %3735 = vdwg.mxu0
  %3736 = vmatprep.subr.bf16.mxu0 %v2596
  %3737 = vmatpush1.bf16.msra.mxu0 %v2595
  %3738 = vmatprep.subr.bf16.mxu0 %v2600
  %3739 = vmatpush1.bf16.msra.mxu0 %v2599
  %3740 = vmatprep.subr.bf16.mxu0 %v2604
  %3741 = vmatpush1.bf16.msra.mxu0 %v2603
  %3742 = vmatprep.subr.bf16.mxu0 %v2608
  %3743 = vmatpush1.bf16.msra.mxu0 %v2607
  %3744 = vmatprep.subr.bf16.mxu0 %v2612
  %3745 = vmatpush1.bf16.msra.mxu0 %v2611
  %3746 = vmatprep.subr.bf16.mxu0 %v2616
  %3747 = vmatpush1.bf16.msra.mxu0 %v2615
  %3748 = vmatprep.subr.bf16.mxu0 %v2620
  %3749 = vmatpush1.bf16.msra.mxu0 %v2619
  %3750 = vmatprep.subr.bf16.mxu0 %v2624
  %3751 = vmatpush1.bf16.msra.mxu0 %v2623
  %3752 = vmatprep.subr.bf16.mxu0 %v2628
  %3753 = vmatpush1.bf16.msra.mxu0 %v2627
  %3754 = vmatprep.subr.bf16.mxu0 %v2632
  %3755 = vmatpush1.bf16.msra.mxu0 %v2631
  %3756 = vmatprep.subr.bf16.mxu0 %v2636
  %3757 = vmatpush1.bf16.msra.mxu0 %v2635
  %3758 = vmatprep.subr.bf16.mxu0 %v2640
  %3759 = vmatpush1.bf16.msra.mxu0 %v2639
  %3760 = vmatprep.subr.bf16.mxu0 %v2644
  %3761 = vmatpush1.bf16.msra.mxu0 %v2643
  %3762 = vmatprep.subr.bf16.mxu0 %v2648
  %3763 = vmatpush1.bf16.msra.mxu0 %v2647
  %3764 = vmatprep.subr.bf16.mxu0 %v2652
  %3765 = vmatpush1.bf16.msra.mxu0 %v2651
  %3766 = vmatprep.subr.bf16.mxu0 %v2656
  %3767 = vmatpush1.bf16.msra.mxu0 %v2655
  %3768 = vmatprep.mubr.bf16.mxu0 %v734
  %3769 = vmatmul.mubr.bf16.gmra.mrb[0].mxu0 %v733
  %v3770 = vpop.f32.mrb[0].mxu0
  %v3771 = vadd.f32 %v3718, %v3770
  %v3772 = vpop.f32.mrb[0].mxu0
  %v3773 = vadd.f32 %v3720, %v3772
  %v3774 = vpop.f32.mrb[0].mxu0
  %v3775 = vadd.f32 %v3722, %v3774
  %v3776 = vpop.f32.mrb[0].mxu0
  %v3777 = vadd.f32 %v3724, %v3776
  %3778 = vmatprep.mubr.bf16.mxu0 %v752
  %3779 = vmatmul.mubr.bf16.gmra.mrb[0].mxu0 %v751
  %v3780 = vpop.f32.mrb[0].mxu0
  %v3781 = vadd.f32 %v3728, %v3780
  %v3782 = vpop.f32.mrb[0].mxu0
  %v3783 = vadd.f32 %v3730, %v3782
  %v3784 = vpop.f32.mrb[0].mxu0
  %v3785 = vadd.f32 %v3732, %v3784
  %v3786 = vpop.f32.mrb[0].mxu0
  %v3787 = vadd.f32 %v3734, %v3786
  %3788 = vdwg.mxu0
  %3789 = vmatprep.subr.bf16.mxu0 %v2660
  %3790 = vmatpush1.bf16.msra.mxu0 %v2659
  %3791 = vmatprep.subr.bf16.mxu0 %v2664
  %3792 = vmatpush1.bf16.msra.mxu0 %v2663
  %3793 = vmatprep.subr.bf16.mxu0 %v2668
  %3794 = vmatpush1.bf16.msra.mxu0 %v2667
  %3795 = vmatprep.subr.bf16.mxu0 %v2672
  %3796 = vmatpush1.bf16.msra.mxu0 %v2671
  %3797 = vmatprep.subr.bf16.mxu0 %v2676
  %3798 = vmatpush1.bf16.msra.mxu0 %v2675
  %3799 = vmatprep.subr.bf16.mxu0 %v2680
  %3800 = vmatpush1.bf16.msra.mxu0 %v2679
  %3801 = vmatprep.subr.bf16.mxu0 %v2684
  %3802 = vmatpush1.bf16.msra.mxu0 %v2683
  %3803 = vmatprep.subr.bf16.mxu0 %v2688
  %3804 = vmatpush1.bf16.msra.mxu0 %v2687
  %3805 = vmatprep.subr.bf16.mxu0 %v2692
  %3806 = vmatpush1.bf16.msra.mxu0 %v2691
  %3807 = vmatprep.subr.bf16.mxu0 %v2696
  %3808 = vmatpush1.bf16.msra.mxu0 %v2695
  %3809 = vmatprep.subr.bf16.mxu0 %v2700
  %3810 = vmatpush1.bf16.msra.mxu0 %v2699
  %3811 = vmatprep.subr.bf16.mxu0 %v2704
  %3812 = vmatpush1.bf16.msra.mxu0 %v2703
  %3813 = vmatprep.subr.bf16.mxu0 %v2708
  %3814 = vmatpush1.bf16.msra.mxu0 %v2707
  %3815 = vmatprep.subr.bf16.mxu0 %v2712
  %3816 = vmatpush1.bf16.msra.mxu0 %v2711
  %3817 = vmatprep.subr.bf16.mxu0 %v2716
  %3818 = vmatpush1.bf16.msra.mxu0 %v2715
  %3819 = vmatprep.subr.bf16.mxu0 %v2720
  %3820 = vmatpush1.bf16.msra.mxu0 %v2719
  %3821 = vmatprep.mubr.bf16.mxu0 %v736
  %3822 = vmatmul.mubr.bf16.gmra.mrb[0].mxu0 %v735
  %v3823 = vpop.f32.mrb[0].mxu0
  %v3824 = vadd.f32 %v3771, %v3823
  %v3825 = vpop.f32.mrb[0].mxu0
  %v3826 = vadd.f32 %v3773, %v3825
  %v3827 = vpop.f32.mrb[0].mxu0
  %v3828 = vadd.f32 %v3775, %v3827
  %v3829 = vpop.f32.mrb[0].mxu0
  %v3830 = vadd.f32 %v3777, %v3829
  %3831 = vmatprep.mubr.bf16.mxu0 %v754
  %3832 = vmatmul.mubr.bf16.gmra.mrb[0].mxu0 %v753
  %v3833 = vpop.f32.mrb[0].mxu0
  %v3834 = vadd.f32 %v3781, %v3833
  %v3835 = vpop.f32.mrb[0].mxu0
  %v3836 = vadd.f32 %v3783, %v3835
  %v3837 = vpop.f32.mrb[0].mxu0
  %v3838 = vadd.f32 %v3785, %v3837
  %v3839 = vpop.f32.mrb[0].mxu0
  %v3840 = vadd.f32 %v3787, %v3839
  %3841 = vdwg.mxu0
  %3842 = vmatprep.subr.bf16.mxu0 %v2724
  %3843 = vmatpush1.bf16.msra.mxu0 %v2723
  %3844 = vmatprep.subr.bf16.mxu0 %v2728
  %3845 = vmatpush1.bf16.msra.mxu0 %v2727
  %3846 = vmatprep.subr.bf16.mxu0 %v2732
  %3847 = vmatpush1.bf16.msra.mxu0 %v2731
  %3848 = vmatprep.subr.bf16.mxu0 %v2736
  %3849 = vmatpush1.bf16.msra.mxu0 %v2735
  %3850 = vmatprep.subr.bf16.mxu0 %v2740
  %3851 = vmatpush1.bf16.msra.mxu0 %v2739
  %3852 = vmatprep.subr.bf16.mxu0 %v2744
  %3853 = vmatpush1.bf16.msra.mxu0 %v2743
  %3854 = vmatprep.subr.bf16.mxu0 %v2748
  %3855 = vmatpush1.bf16.msra.mxu0 %v2747
  %3856 = vmatprep.subr.bf16.mxu0 %v2752
  %3857 = vmatpush1.bf16.msra.mxu0 %v2751
  %3858 = vmatprep.subr.bf16.mxu0 %v2756
  %3859 = vmatpush1.bf16.msra.mxu0 %v2755
  %3860 = vmatprep.subr.bf16.mxu0 %v2760
  %3861 = vmatpush1.bf16.msra.mxu0 %v2759
  %3862 = vmatprep.subr.bf16.mxu0 %v2764
  %3863 = vmatpush1.bf16.msra.mxu0 %v2763
  %3864 = vmatprep.subr.bf16.mxu0 %v2768
  %3865 = vmatpush1.bf16.msra.mxu0 %v2767
  %3866 = vmatprep.subr.bf16.mxu0 %v2772
  %3867 = vmatpush1.bf16.msra.mxu0 %v2771
  %3868 = vmatprep.subr.bf16.mxu0 %v2776
  %3869 = vmatpush1.bf16.msra.mxu0 %v2775
  %3870 = vmatprep.subr.bf16.mxu0 %v2780
  %3871 = vmatpush1.bf16.msra.mxu0 %v2779
  %3872 = vmatprep.subr.bf16.mxu0 %v2784
  %3873 = vmatpush1.bf16.msra.mxu0 %v2783
  %3874 = vmatprep.mubr.bf16.mxu0 %v738
  %3875 = vmatmul.mubr.bf16.gmra.mrb[0].mxu0 %v737
  %v3876 = vpop.f32.mrb[0].mxu0
  %v3877 = vadd.f32 %v3824, %v3876
  %v3878 = vpop.f32.mrb[0].mxu0
  %v3879 = vadd.f32 %v3826, %v3878
  %v3880 = vpop.f32.mrb[0].mxu0
  %v3881 = vadd.f32 %v3828, %v3880
  %v3882 = vpop.f32.mrb[0].mxu0
  %v3883 = vadd.f32 %v3830, %v3882
  %3884 = vmatprep.mubr.bf16.mxu0 %v756
  %3885 = vmatmul.mubr.bf16.gmra.mrb[0].mxu0 %v755
  %v3886 = vpop.f32.mrb[0].mxu0
  %v3887 = vadd.f32 %v3834, %v3886
  %v3888 = vpop.f32.mrb[0].mxu0
  %v3889 = vadd.f32 %v3836, %v3888
  %v3890 = vpop.f32.mrb[0].mxu0
  %v3891 = vadd.f32 %v3838, %v3890
  %v3892 = vpop.f32.mrb[0].mxu0
  %v3893 = vadd.f32 %v3840, %v3892
  %3894 = vdwg.mxu0
  %3895 = vmatprep.subr.bf16.mxu0 %v2788
  %3896 = vmatpush1.bf16.msra.mxu0 %v2787
  %3897 = vmatprep.subr.bf16.mxu0 %v2792
  %3898 = vmatpush1.bf16.msra.mxu0 %v2791
  %3899 = vmatprep.subr.bf16.mxu0 %v2796
  %3900 = vmatpush1.bf16.msra.mxu0 %v2795
  %3901 = vmatprep.subr.bf16.mxu0 %v2800
  %3902 = vmatpush1.bf16.msra.mxu0 %v2799
  %3903 = vmatprep.subr.bf16.mxu0 %v2804
  %3904 = vmatpush1.bf16.msra.mxu0 %v2803
  %3905 = vmatprep.subr.bf16.mxu0 %v2808
  %3906 = vmatpush1.bf16.msra.mxu0 %v2807
  %3907 = vmatprep.subr.bf16.mxu0 %v2812
  %3908 = vmatpush1.bf16.msra.mxu0 %v2811
  %3909 = vmatprep.subr.bf16.mxu0 %v2816
  %3910 = vmatpush1.bf16.msra.mxu0 %v2815
  %3911 = vmatprep.subr.bf16.mxu0 %v2820
  %3912 = vmatpush1.bf16.msra.mxu0 %v2819
  %3913 = vmatprep.subr.bf16.mxu0 %v2824
  %3914 = vmatpush1.bf16.msra.mxu0 %v2823
  %3915 = vmatprep.subr.bf16.mxu0 %v2828
  %3916 = vmatpush1.bf16.msra.mxu0 %v2827
  %3917 = vmatprep.subr.bf16.mxu0 %v2832
  %3918 = vmatpush1.bf16.msra.mxu0 %v2831
  %3919 = vmatprep.subr.bf16.mxu0 %v2836
  %3920 = vmatpush1.bf16.msra.mxu0 %v2835
  %3921 = vmatprep.subr.bf16.mxu0 %v2840
  %3922 = vmatpush1.bf16.msra.mxu0 %v2839
  %3923 = vmatprep.subr.bf16.mxu0 %v2844
  %3924 = vmatpush1.bf16.msra.mxu0 %v2843
  %3925 = vmatprep.subr.bf16.mxu0 %v2848
  %3926 = vmatpush1.bf16.msra.mxu0 %v2847
  %3927 = vmatprep.mubr.bf16.mxu0 %v740
  %3928 = vmatmul.mubr.bf16.gmra.mrb[0].mxu0 %v739
  %v3929 = vpop.f32.mrb[0].mxu0
  %v3930 = vadd.f32 %v3877, %v3929
  %v3931 = vpop.f32.mrb[0].mxu0
  %v3932 = vadd.f32 %v3879, %v3931
  %v3933 = vpop.f32.mrb[0].mxu0
  %v3934 = vadd.f32 %v3881, %v3933
  %v3935 = vpop.f32.mrb[0].mxu0
  %v3936 = vadd.f32 %v3883, %v3935
  %3937 = vmatprep.mubr.bf16.mxu0 %v758
  %3938 = vmatmul.mubr.bf16.gmra.mrb[0].mxu0 %v757
  %v3939 = vpop.f32.mrb[0].mxu0
  %v3940 = vadd.f32 %v3887, %v3939
  %v3941 = vpop.f32.mrb[0].mxu0
  %v3942 = vadd.f32 %v3889, %v3941
  %v3943 = vpop.f32.mrb[0].mxu0
  %v3944 = vadd.f32 %v3891, %v3943
  %v3945 = vpop.f32.mrb[0].mxu0
  %v3946 = vadd.f32 %v3893, %v3945
  %3947 = vdwg.mxu0
  %3948 = vmatprep.subr.bf16.mxu0 %v2852
  %3949 = vmatpush1.bf16.msra.mxu0 %v2851
  %3950 = vmatprep.subr.bf16.mxu0 %v2856
  %3951 = vmatpush1.bf16.msra.mxu0 %v2855
  %3952 = vmatprep.subr.bf16.mxu0 %v2860
  %3953 = vmatpush1.bf16.msra.mxu0 %v2859
  %3954 = vmatprep.subr.bf16.mxu0 %v2864
  %3955 = vmatpush1.bf16.msra.mxu0 %v2863
  %3956 = vmatprep.subr.bf16.mxu0 %v2868
  %3957 = vmatpush1.bf16.msra.mxu0 %v2867
  %3958 = vmatprep.subr.bf16.mxu0 %v2872
  %3959 = vmatpush1.bf16.msra.mxu0 %v2871
  %3960 = vmatprep.subr.bf16.mxu0 %v2876
  %3961 = vmatpush1.bf16.msra.mxu0 %v2875
  %3962 = vmatprep.subr.bf16.mxu0 %v2880
  %3963 = vmatpush1.bf16.msra.mxu0 %v2879
  %3964 = vmatprep.subr.bf16.mxu0 %v2884
  %3965 = vmatpush1.bf16.msra.mxu0 %v2883
  %3966 = vmatprep.subr.bf16.mxu0 %v2888
  %3967 = vmatpush1.bf16.msra.mxu0 %v2887
  %3968 = vmatprep.subr.bf16.mxu0 %v2892
  %3969 = vmatpush1.bf16.msra.mxu0 %v2891
  %3970 = vmatprep.subr.bf16.mxu0 %v2896
  %3971 = vmatpush1.bf16.msra.mxu0 %v2895
  %3972 = vmatprep.subr.bf16.mxu0 %v2900
  %3973 = vmatpush1.bf16.msra.mxu0 %v2899
  %3974 = vmatprep.subr.bf16.mxu0 %v2904
  %3975 = vmatpush1.bf16.msra.mxu0 %v2903
  %3976 = vmatprep.subr.bf16.mxu0 %v2908
  %3977 = vmatpush1.bf16.msra.mxu0 %v2907
  %3978 = vmatprep.subr.bf16.mxu0 %v2912
  %3979 = vmatpush1.bf16.msra.mxu0 %v2911
  %3980 = vmatprep.mubr.bf16.mxu0 %v742
  %3981 = vmatmul.mubr.bf16.gmra.mrb[0].mxu0 %v741
  %v3982 = vpop.f32.mrb[0].mxu0
  %v3983 = vadd.f32 %v3930, %v3982
  %v3984 = vpop.f32.mrb[0].mxu0
  %v3985 = vadd.f32 %v3932, %v3984
  %v3986 = vpop.f32.mrb[0].mxu0
  %v3987 = vadd.f32 %v3934, %v3986
  %v3988 = vpop.f32.mrb[0].mxu0
  %v3989 = vadd.f32 %v3936, %v3988
  %3990 = vmatprep.mubr.bf16.mxu0 %v760
  %3991 = vmatmul.mubr.bf16.gmra.mrb[0].mxu0 %v759
  %v3992 = vpop.f32.mrb[0].mxu0
  %v3993 = vadd.f32 %v3940, %v3992
  %v3994 = vpop.f32.mrb[0].mxu0
  %v3995 = vadd.f32 %v3942, %v3994
  %v3996 = vpop.f32.mrb[0].mxu0
  %v3997 = vadd.f32 %v3944, %v3996
  %v3998 = vpop.f32.mrb[0].mxu0
  %v3999 = vadd.f32 %v3946, %v3998
  %4000 = vdwg.mxu0
  %4001 = vmatprep.subr.bf16.mxu0 %v2916
  %4002 = vmatpush1.bf16.msra.mxu0 %v2915
  %4003 = vmatprep.subr.bf16.mxu0 %v2920
  %4004 = vmatpush1.bf16.msra.mxu0 %v2919
  %4005 = vmatprep.subr.bf16.mxu0 %v2924
  %4006 = vmatpush1.bf16.msra.mxu0 %v2923
  %4007 = vmatprep.subr.bf16.mxu0 %v2928
  %4008 = vmatpush1.bf16.msra.mxu0 %v2927
  %4009 = vmatprep.subr.bf16.mxu0 %v2932
  %4010 = vmatpush1.bf16.msra.mxu0 %v2931
  %4011 = vmatprep.subr.bf16.mxu0 %v2936
  %4012 = vmatpush1.bf16.msra.mxu0 %v2935
  %4013 = vmatprep.subr.bf16.mxu0 %v2940
  %4014 = vmatpush1.bf16.msra.mxu0 %v2939
  %4015 = vmatprep.subr.bf16.mxu0 %v2944
  %4016 = vmatpush1.bf16.msra.mxu0 %v2943
  %4017 = vmatprep.subr.bf16.mxu0 %v2948
  %4018 = vmatpush1.bf16.msra.mxu0 %v2947
  %4019 = vmatprep.subr.bf16.mxu0 %v2952
  %4020 = vmatpush1.bf16.msra.mxu0 %v2951
  %4021 = vmatprep.subr.bf16.mxu0 %v2956
  %4022 = vmatpush1.bf16.msra.mxu0 %v2955
  %4023 = vmatprep.subr.bf16.mxu0 %v2960
  %4024 = vmatpush1.bf16.msra.mxu0 %v2959
  %4025 = vmatprep.subr.bf16.mxu0 %v2964
  %4026 = vmatpush1.bf16.msra.mxu0 %v2963
  %4027 = vmatprep.subr.bf16.mxu0 %v2968
  %4028 = vmatpush1.bf16.msra.mxu0 %v2967
  %4029 = vmatprep.subr.bf16.mxu0 %v2972
  %4030 = vmatpush1.bf16.msra.mxu0 %v2971
  %4031 = vmatprep.subr.bf16.mxu0 %v2976
  %4032 = vmatpush1.bf16.msra.mxu0 %v2975
  %4033 = vmatprep.mubr.bf16.mxu0 %v744
  %4034 = vmatmul.mubr.bf16.gmra.mrb[0].mxu0 %v743
  %v4035 = vpop.f32.mrb[0].mxu0
  %v4036 = vadd.f32 %v3983, %v4035
  %v4037 = vpop.f32.mrb[0].mxu0
  %v4038 = vadd.f32 %v3985, %v4037
  %v4039 = vpop.f32.mrb[0].mxu0
  %v4040 = vadd.f32 %v3987, %v4039
  %v4041 = vpop.f32.mrb[0].mxu0
  %v4042 = vadd.f32 %v3989, %v4041
  %4043 = vmatprep.mubr.bf16.mxu0 %v762
  %4044 = vmatmul.mubr.bf16.gmra.mrb[0].mxu0 %v761
  %v4045 = vpop.f32.mrb[0].mxu0
  %v4046 = vadd.f32 %v3993, %v4045
  %v4047 = vpop.f32.mrb[0].mxu0
  %v4048 = vadd.f32 %v3995, %v4047
  %v4049 = vpop.f32.mrb[0].mxu0
  %v4050 = vadd.f32 %v3997, %v4049
  %v4051 = vpop.f32.mrb[0].mxu0
  %v4052 = vadd.f32 %v3999, %v4051
  %4053 = vdwg.mxu0
  %4054 = vmatprep.subr.bf16.mxu0 %v2980
  %4055 = vmatpush1.bf16.msra.mxu0 %v2979
  %4056 = vmatprep.subr.bf16.mxu0 %v2984
  %4057 = vmatpush1.bf16.msra.mxu0 %v2983
  %4058 = vmatprep.subr.bf16.mxu0 %v2988
  %4059 = vmatpush1.bf16.msra.mxu0 %v2987
  %4060 = vmatprep.subr.bf16.mxu0 %v2992
  %4061 = vmatpush1.bf16.msra.mxu0 %v2991
  %4062 = vmatprep.subr.bf16.mxu0 %v2996
  %4063 = vmatpush1.bf16.msra.mxu0 %v2995
  %4064 = vmatprep.subr.bf16.mxu0 %v3000
  %4065 = vmatpush1.bf16.msra.mxu0 %v2999
  %4066 = vmatprep.subr.bf16.mxu0 %v3004
  %4067 = vmatpush1.bf16.msra.mxu0 %v3003
  %4068 = vmatprep.subr.bf16.mxu0 %v3008
  %4069 = vmatpush1.bf16.msra.mxu0 %v3007
  %4070 = vmatprep.subr.bf16.mxu0 %v3012
  %4071 = vmatpush1.bf16.msra.mxu0 %v3011
  %4072 = vmatprep.subr.bf16.mxu0 %v3016
  %4073 = vmatpush1.bf16.msra.mxu0 %v3015
  %4074 = vmatprep.subr.bf16.mxu0 %v3020
  %4075 = vmatpush1.bf16.msra.mxu0 %v3019
  %4076 = vmatprep.subr.bf16.mxu0 %v3024
  %4077 = vmatpush1.bf16.msra.mxu0 %v3023
  %4078 = vmatprep.subr.bf16.mxu0 %v3028
  %4079 = vmatpush1.bf16.msra.mxu0 %v3027
  %4080 = vmatprep.subr.bf16.mxu0 %v3032
  %4081 = vmatpush1.bf16.msra.mxu0 %v3031
  %4082 = vmatprep.subr.bf16.mxu0 %v3036
  %4083 = vmatpush1.bf16.msra.mxu0 %v3035
  %4084 = vmatprep.subr.bf16.mxu0 %v3040
  %4085 = vmatpush1.bf16.msra.mxu0 %v3039
  %4086 = vmatprep.mubr.bf16.mxu0 %v746
  %4087 = vmatmul.mubr.bf16.gmra.mrb[0].mxu0 %v745
  %v4088 = vpop.f32.mrb[0].mxu0
  %v4089 = vadd.f32 %v4036, %v4088
  %v4090 = vpop.f32.mrb[0].mxu0
  %v4091 = vadd.f32 %v4038, %v4090
  %v4092 = vpop.f32.mrb[0].mxu0
  %v4093 = vadd.f32 %v4040, %v4092
  %v4094 = vpop.f32.mrb[0].mxu0
  %v4095 = vadd.f32 %v4042, %v4094
  %4096 = vmatprep.mubr.bf16.mxu0 %v764
  %4097 = vmatmul.mubr.bf16.gmra.mrb[0].mxu0 %v763
  %v4098 = vpop.f32.mrb[0].mxu0
  %v4099 = vadd.f32 %v4046, %v4098
  %v4100 = vpop.f32.mrb[0].mxu0
  %v4101 = vadd.f32 %v4048, %v4100
  %v4102 = vpop.f32.mrb[0].mxu0
  %v4103 = vadd.f32 %v4050, %v4102
  %v4104 = vpop.f32.mrb[0].mxu0
  %v4105 = vadd.f32 %v4052, %v4104
  %4106 = vdwg.mxu0
  %4107 = vmatprep.subr.bf16.mxu0 %v3044
  %4108 = vmatpush1.bf16.msra.mxu0 %v3043
  %4109 = vmatprep.subr.bf16.mxu0 %v3048
  %4110 = vmatpush1.bf16.msra.mxu0 %v3047
  %4111 = vmatprep.subr.bf16.mxu0 %v3052
  %4112 = vmatpush1.bf16.msra.mxu0 %v3051
  %4113 = vmatprep.subr.bf16.mxu0 %v3056
  %4114 = vmatpush1.bf16.msra.mxu0 %v3055
  %4115 = vmatprep.subr.bf16.mxu0 %v3060
  %4116 = vmatpush1.bf16.msra.mxu0 %v3059
  %4117 = vmatprep.subr.bf16.mxu0 %v3064
  %4118 = vmatpush1.bf16.msra.mxu0 %v3063
  %4119 = vmatprep.subr.bf16.mxu0 %v3068
  %4120 = vmatpush1.bf16.msra.mxu0 %v3067
  %4121 = vmatprep.subr.bf16.mxu0 %v3072
  %4122 = vmatpush1.bf16.msra.mxu0 %v3071
  %4123 = vmatprep.subr.bf16.mxu0 %v3076
  %4124 = vmatpush1.bf16.msra.mxu0 %v3075
  %4125 = vmatprep.subr.bf16.mxu0 %v3080
  %4126 = vmatpush1.bf16.msra.mxu0 %v3079
  %4127 = vmatprep.subr.bf16.mxu0 %v3084
  %4128 = vmatpush1.bf16.msra.mxu0 %v3083
  %4129 = vmatprep.subr.bf16.mxu0 %v3088
  %4130 = vmatpush1.bf16.msra.mxu0 %v3087
  %4131 = vmatprep.subr.bf16.mxu0 %v3092
  %4132 = vmatpush1.bf16.msra.mxu0 %v3091
  %4133 = vmatprep.subr.bf16.mxu0 %v3096
  %4134 = vmatpush1.bf16.msra.mxu0 %v3095
  %4135 = vmatprep.subr.bf16.mxu0 %v3100
  %4136 = vmatpush1.bf16.msra.mxu0 %v3099
  %4137 = vmatprep.subr.bf16.mxu0 %v3104
  %4138 = vmatpush1.bf16.msra.mxu0 %v3103
  %4139 = vmatprep.mubr.bf16.mxu0 %v748
  %4140 = vmatmul.mubr.bf16.gmra.mrb[0].mxu0 %v747
  %v4141 = vpop.f32.mrb[0].mxu0
  %v4142 = vadd.f32 %v4089, %v4141
  %v4143 = vpop.f32.mrb[0].mxu0
  %v4144 = vadd.f32 %v4091, %v4143
  %v4145 = vpop.f32.mrb[0].mxu0
  %v4146 = vadd.f32 %v4093, %v4145
  %v4147 = vpop.f32.mrb[0].mxu0
  %v4148 = vadd.f32 %v4095, %v4147
  %4149 = vmatprep.mubr.bf16.mxu0 %v766
  %4150 = vmatmul.mubr.bf16.gmra.mrb[0].mxu0 %v765
  %v4151 = vpop.f32.mrb[0].mxu0
  %v4152 = vadd.f32 %v4099, %v4151
  %v4153 = vpop.f32.mrb[0].mxu0
  %v4154 = vadd.f32 %v4101, %v4153
  %v4155 = vpop.f32.mrb[0].mxu0
  %v4156 = vadd.f32 %v4103, %v4155
  %v4157 = vpop.f32.mrb[0].mxu0
  %v4158 = vadd.f32 %v4105, %v4157
  %4159 = vdwg.mxu0
  %4160 = vmatprep.subr.bf16.mxu0 %v2534
  %4161 = vmatpush1.bf16.msra.mxu0 %v2533
  %4162 = vmatprep.subr.bf16.mxu0 %v2538
  %4163 = vmatpush1.bf16.msra.mxu0 %v2537
  %4164 = vmatprep.subr.bf16.mxu0 %v2542
  %4165 = vmatpush1.bf16.msra.mxu0 %v2541
  %4166 = vmatprep.subr.bf16.mxu0 %v2546
  %4167 = vmatpush1.bf16.msra.mxu0 %v2545
  %4168 = vmatprep.subr.bf16.mxu0 %v2550
  %4169 = vmatpush1.bf16.msra.mxu0 %v2549
  %4170 = vmatprep.subr.bf16.mxu0 %v2554
  %4171 = vmatpush1.bf16.msra.mxu0 %v2553
  %4172 = vmatprep.subr.bf16.mxu0 %v2558
  %4173 = vmatpush1.bf16.msra.mxu0 %v2557
  %4174 = vmatprep.subr.bf16.mxu0 %v2562
  %4175 = vmatpush1.bf16.msra.mxu0 %v2561
  %4176 = vmatprep.subr.bf16.mxu0 %v2566
  %4177 = vmatpush1.bf16.msra.mxu0 %v2565
  %4178 = vmatprep.subr.bf16.mxu0 %v2570
  %4179 = vmatpush1.bf16.msra.mxu0 %v2569
  %4180 = vmatprep.subr.bf16.mxu0 %v2574
  %4181 = vmatpush1.bf16.msra.mxu0 %v2573
  %4182 = vmatprep.subr.bf16.mxu0 %v2578
  %4183 = vmatpush1.bf16.msra.mxu0 %v2577
  %4184 = vmatprep.subr.bf16.mxu0 %v2582
  %4185 = vmatpush1.bf16.msra.mxu0 %v2581
  %4186 = vmatprep.subr.bf16.mxu0 %v2586
  %4187 = vmatpush1.bf16.msra.mxu0 %v2585
  %4188 = vmatprep.subr.bf16.mxu0 %v2590
  %4189 = vmatpush1.bf16.msra.mxu0 %v2589
  %4190 = vmatprep.subr.bf16.mxu0 %v2594
  %4191 = vmatpush1.bf16.msra.mxu0 %v2593
  %4192 = vmatprep.mubr.bf16.mxu0 %v732
  %4193 = vmatmul.mubr.bf16.gmra.mrb[0].mxu0 %v731
  %v4194 = vpop.f32.mrb[0].mxu0
  %v4195 = vadd.f32 0.0, %v4194
  %v4196 = vpop.f32.mrb[0].mxu0
  %v4197 = vadd.f32 0.0, %v4196
  %v4198 = vpop.f32.mrb[0].mxu0
  %v4199 = vadd.f32 0.0, %v4198
  %v4200 = vpop.f32.mrb[0].mxu0
  %v4201 = vadd.f32 0.0, %v4200
  %4202 = vmatprep.mubr.bf16.mxu0 %v750
  %4203 = vmatmul.mubr.bf16.gmra.mrb[0].mxu0 %v749
  %v4204 = vpop.f32.mrb[0].mxu0
  %v4205 = vadd.f32 0.0, %v4204
  %v4206 = vpop.f32.mrb[0].mxu0
  %v4207 = vadd.f32 0.0, %v4206
  %v4208 = vpop.f32.mrb[0].mxu0
  %v4209 = vadd.f32 0.0, %v4208
  %v4210 = vpop.f32.mrb[0].mxu0
  %v4211 = vadd.f32 0.0, %v4210
  %4212 = vdwg.mxu0
  %4213 = vmatprep.subr.bf16.mxu0 %v2598
  %4214 = vmatpush1.bf16.msra.mxu0 %v2597
  %4215 = vmatprep.subr.bf16.mxu0 %v2602
  %4216 = vmatpush1.bf16.msra.mxu0 %v2601
  %4217 = vmatprep.subr.bf16.mxu0 %v2606
  %4218 = vmatpush1.bf16.msra.mxu0 %v2605
  %4219 = vmatprep.subr.bf16.mxu0 %v2610
  %4220 = vmatpush1.bf16.msra.mxu0 %v2609
  %4221 = vmatprep.subr.bf16.mxu0 %v2614
  %4222 = vmatpush1.bf16.msra.mxu0 %v2613
  %4223 = vmatprep.subr.bf16.mxu0 %v2618
  %4224 = vmatpush1.bf16.msra.mxu0 %v2617
  %4225 = vmatprep.subr.bf16.mxu0 %v2622
  %4226 = vmatpush1.bf16.msra.mxu0 %v2621
  %4227 = vmatprep.subr.bf16.mxu0 %v2626
  %4228 = vmatpush1.bf16.msra.mxu0 %v2625
  %4229 = vmatprep.subr.bf16.mxu0 %v2630
  %4230 = vmatpush1.bf16.msra.mxu0 %v2629
  %4231 = vmatprep.subr.bf16.mxu0 %v2634
  %4232 = vmatpush1.bf16.msra.mxu0 %v2633
  %4233 = vmatprep.subr.bf16.mxu0 %v2638
  %4234 = vmatpush1.bf16.msra.mxu0 %v2637
  %4235 = vmatprep.subr.bf16.mxu0 %v2642
  %4236 = vmatpush1.bf16.msra.mxu0 %v2641
  %4237 = vmatprep.subr.bf16.mxu0 %v2646
  %4238 = vmatpush1.bf16.msra.mxu0 %v2645
  %4239 = vmatprep.subr.bf16.mxu0 %v2650
  %4240 = vmatpush1.bf16.msra.mxu0 %v2649
  %4241 = vmatprep.subr.bf16.mxu0 %v2654
  %4242 = vmatpush1.bf16.msra.mxu0 %v2653
  %4243 = vmatprep.subr.bf16.mxu0 %v2658
  %4244 = vmatpush1.bf16.msra.mxu0 %v2657
  %4245 = vmatprep.mubr.bf16.mxu0 %v734
  %4246 = vmatmul.mubr.bf16.gmra.mrb[0].mxu0 %v733
  %v4247 = vpop.f32.mrb[0].mxu0
  %v4248 = vadd.f32 %v4195, %v4247
  %v4249 = vpop.f32.mrb[0].mxu0
  %v4250 = vadd.f32 %v4197, %v4249
  %v4251 = vpop.f32.mrb[0].mxu0
  %v4252 = vadd.f32 %v4199, %v4251
  %v4253 = vpop.f32.mrb[0].mxu0
  %v4254 = vadd.f32 %v4201, %v4253
  %4255 = vmatprep.mubr.bf16.mxu0 %v752
  %4256 = vmatmul.mubr.bf16.gmra.mrb[0].mxu0 %v751
  %v4257 = vpop.f32.mrb[0].mxu0
  %v4258 = vadd.f32 %v4205, %v4257
  %v4259 = vpop.f32.mrb[0].mxu0
  %v4260 = vadd.f32 %v4207, %v4259
  %v4261 = vpop.f32.mrb[0].mxu0
  %v4262 = vadd.f32 %v4209, %v4261
  %v4263 = vpop.f32.mrb[0].mxu0
  %v4264 = vadd.f32 %v4211, %v4263
  %4265 = vdwg.mxu0
  %4266 = vmatprep.subr.bf16.mxu0 %v2662
  %4267 = vmatpush1.bf16.msra.mxu0 %v2661
  %4268 = vmatprep.subr.bf16.mxu0 %v2666
  %4269 = vmatpush1.bf16.msra.mxu0 %v2665
  %4270 = vmatprep.subr.bf16.mxu0 %v2670
  %4271 = vmatpush1.bf16.msra.mxu0 %v2669
  %4272 = vmatprep.subr.bf16.mxu0 %v2674
  %4273 = vmatpush1.bf16.msra.mxu0 %v2673
  %4274 = vmatprep.subr.bf16.mxu0 %v2678
  %4275 = vmatpush1.bf16.msra.mxu0 %v2677
  %4276 = vmatprep.subr.bf16.mxu0 %v2682
  %4277 = vmatpush1.bf16.msra.mxu0 %v2681
  %4278 = vmatprep.subr.bf16.mxu0 %v2686
  %4279 = vmatpush1.bf16.msra.mxu0 %v2685
  %4280 = vmatprep.subr.bf16.mxu0 %v2690
  %4281 = vmatpush1.bf16.msra.mxu0 %v2689
  %4282 = vmatprep.subr.bf16.mxu0 %v2694
  %4283 = vmatpush1.bf16.msra.mxu0 %v2693
  %4284 = vmatprep.subr.bf16.mxu0 %v2698
  %4285 = vmatpush1.bf16.msra.mxu0 %v2697
  %4286 = vmatprep.subr.bf16.mxu0 %v2702
  %4287 = vmatpush1.bf16.msra.mxu0 %v2701
  %4288 = vmatprep.subr.bf16.mxu0 %v2706
  %4289 = vmatpush1.bf16.msra.mxu0 %v2705
  %4290 = vmatprep.subr.bf16.mxu0 %v2710
  %4291 = vmatpush1.bf16.msra.mxu0 %v2709
  %4292 = vmatprep.subr.bf16.mxu0 %v2714
  %4293 = vmatpush1.bf16.msra.mxu0 %v2713
  %4294 = vmatprep.subr.bf16.mxu0 %v2718
  %4295 = vmatpush1.bf16.msra.mxu0 %v2717
  %4296 = vmatprep.subr.bf16.mxu0 %v2722
  %4297 = vmatpush1.bf16.msra.mxu0 %v2721
  %4298 = vmatprep.mubr.bf16.mxu0 %v736
  %4299 = vmatmul.mubr.bf16.gmra.mrb[0].mxu0 %v735
  %v4300 = vpop.f32.mrb[0].mxu0
  %v4301 = vadd.f32 %v4248, %v4300
  %v4302 = vpop.f32.mrb[0].mxu0
  %v4303 = vadd.f32 %v4250, %v4302
  %v4304 = vpop.f32.mrb[0].mxu0
  %v4305 = vadd.f32 %v4252, %v4304
  %v4306 = vpop.f32.mrb[0].mxu0
  %v4307 = vadd.f32 %v4254, %v4306
  %4308 = vmatprep.mubr.bf16.mxu0 %v754
  %4309 = vmatmul.mubr.bf16.gmra.mrb[0].mxu0 %v753
  %v4310 = vpop.f32.mrb[0].mxu0
  %v4311 = vadd.f32 %v4258, %v4310
  %v4312 = vpop.f32.mrb[0].mxu0
  %v4313 = vadd.f32 %v4260, %v4312
  %v4314 = vpop.f32.mrb[0].mxu0
  %v4315 = vadd.f32 %v4262, %v4314
  %v4316 = vpop.f32.mrb[0].mxu0
  %v4317 = vadd.f32 %v4264, %v4316
  %4318 = vdwg.mxu0
  %4319 = vmatprep.subr.bf16.mxu0 %v2726
  %4320 = vmatpush1.bf16.msra.mxu0 %v2725
  %4321 = vmatprep.subr.bf16.mxu0 %v2730
  %4322 = vmatpush1.bf16.msra.mxu0 %v2729
  %4323 = vmatprep.subr.bf16.mxu0 %v2734
  %4324 = vmatpush1.bf16.msra.mxu0 %v2733
  %4325 = vmatprep.subr.bf16.mxu0 %v2738
  %4326 = vmatpush1.bf16.msra.mxu0 %v2737
  %4327 = vmatprep.subr.bf16.mxu0 %v2742
  %4328 = vmatpush1.bf16.msra.mxu0 %v2741
  %4329 = vmatprep.subr.bf16.mxu0 %v2746
  %4330 = vmatpush1.bf16.msra.mxu0 %v2745
  %4331 = vmatprep.subr.bf16.mxu0 %v2750
  %4332 = vmatpush1.bf16.msra.mxu0 %v2749
  %4333 = vmatprep.subr.bf16.mxu0 %v2754
  %4334 = vmatpush1.bf16.msra.mxu0 %v2753
  %4335 = vmatprep.subr.bf16.mxu0 %v2758
  %4336 = vmatpush1.bf16.msra.mxu0 %v2757
  %4337 = vmatprep.subr.bf16.mxu0 %v2762
  %4338 = vmatpush1.bf16.msra.mxu0 %v2761
  %4339 = vmatprep.subr.bf16.mxu0 %v2766
  %4340 = vmatpush1.bf16.msra.mxu0 %v2765
  %4341 = vmatprep.subr.bf16.mxu0 %v2770
  %4342 = vmatpush1.bf16.msra.mxu0 %v2769
  %4343 = vmatprep.subr.bf16.mxu0 %v2774
  %4344 = vmatpush1.bf16.msra.mxu0 %v2773
  %4345 = vmatprep.subr.bf16.mxu0 %v2778
  %4346 = vmatpush1.bf16.msra.mxu0 %v2777
  %4347 = vmatprep.subr.bf16.mxu0 %v2782
  %4348 = vmatpush1.bf16.msra.mxu0 %v2781
  %4349 = vmatprep.subr.bf16.mxu0 %v2786
  %4350 = vmatpush1.bf16.msra.mxu0 %v2785
  %4351 = vmatprep.mubr.bf16.mxu0 %v738
  %4352 = vmatmul.mubr.bf16.gmra.mrb[0].mxu0 %v737
  %v4353 = vpop.f32.mrb[0].mxu0
  %v4354 = vadd.f32 %v4301, %v4353
  %v4355 = vpop.f32.mrb[0].mxu0
  %v4356 = vadd.f32 %v4303, %v4355
  %v4357 = vpop.f32.mrb[0].mxu0
  %v4358 = vadd.f32 %v4305, %v4357
  %v4359 = vpop.f32.mrb[0].mxu0
  %v4360 = vadd.f32 %v4307, %v4359
  %4361 = vmatprep.mubr.bf16.mxu0 %v756
  %4362 = vmatmul.mubr.bf16.gmra.mrb[0].mxu0 %v755
  %v4363 = vpop.f32.mrb[0].mxu0
  %v4364 = vadd.f32 %v4311, %v4363
  %v4365 = vpop.f32.mrb[0].mxu0
  %v4366 = vadd.f32 %v4313, %v4365
  %v4367 = vpop.f32.mrb[0].mxu0
  %v4368 = vadd.f32 %v4315, %v4367
  %v4369 = vpop.f32.mrb[0].mxu0
  %v4370 = vadd.f32 %v4317, %v4369
  %4371 = vdwg.mxu0
  %4372 = vmatprep.subr.bf16.mxu0 %v2790
  %4373 = vmatpush1.bf16.msra.mxu0 %v2789
  %4374 = vmatprep.subr.bf16.mxu0 %v2794
  %4375 = vmatpush1.bf16.msra.mxu0 %v2793
  %4376 = vmatprep.subr.bf16.mxu0 %v2798
  %4377 = vmatpush1.bf16.msra.mxu0 %v2797
  %4378 = vmatprep.subr.bf16.mxu0 %v2802
  %4379 = vmatpush1.bf16.msra.mxu0 %v2801
  %4380 = vmatprep.subr.bf16.mxu0 %v2806
  %4381 = vmatpush1.bf16.msra.mxu0 %v2805
  %4382 = vmatprep.subr.bf16.mxu0 %v2810
  %4383 = vmatpush1.bf16.msra.mxu0 %v2809
  %4384 = vmatprep.subr.bf16.mxu0 %v2814
  %4385 = vmatpush1.bf16.msra.mxu0 %v2813
  %4386 = vmatprep.subr.bf16.mxu0 %v2818
  %4387 = vmatpush1.bf16.msra.mxu0 %v2817
  %4388 = vmatprep.subr.bf16.mxu0 %v2822
  %4389 = vmatpush1.bf16.msra.mxu0 %v2821
  %4390 = vmatprep.subr.bf16.mxu0 %v2826
  %4391 = vmatpush1.bf16.msra.mxu0 %v2825
  %4392 = vmatprep.subr.bf16.mxu0 %v2830
  %4393 = vmatpush1.bf16.msra.mxu0 %v2829
  %4394 = vmatprep.subr.bf16.mxu0 %v2834
  %4395 = vmatpush1.bf16.msra.mxu0 %v2833
  %4396 = vmatprep.subr.bf16.mxu0 %v2838
  %4397 = vmatpush1.bf16.msra.mxu0 %v2837
  %4398 = vmatprep.subr.bf16.mxu0 %v2842
  %4399 = vmatpush1.bf16.msra.mxu0 %v2841
  %4400 = vmatprep.subr.bf16.mxu0 %v2846
  %4401 = vmatpush1.bf16.msra.mxu0 %v2845
  %4402 = vmatprep.subr.bf16.mxu0 %v2850
  %4403 = vmatpush1.bf16.msra.mxu0 %v2849
  %4404 = vmatprep.mubr.bf16.mxu0 %v740
  %4405 = vmatmul.mubr.bf16.gmra.mrb[0].mxu0 %v739
  %v4406 = vpop.f32.mrb[0].mxu0
  %v4407 = vadd.f32 %v4354, %v4406
  %v4408 = vpop.f32.mrb[0].mxu0
  %v4409 = vadd.f32 %v4356, %v4408
  %v4410 = vpop.f32.mrb[0].mxu0
  %v4411 = vadd.f32 %v4358, %v4410
  %v4412 = vpop.f32.mrb[0].mxu0
  %v4413 = vadd.f32 %v4360, %v4412
  %4414 = vmatprep.mubr.bf16.mxu0 %v758
  %4415 = vmatmul.mubr.bf16.gmra.mrb[0].mxu0 %v757
  %v4416 = vpop.f32.mrb[0].mxu0
  %v4417 = vadd.f32 %v4364, %v4416
  %v4418 = vpop.f32.mrb[0].mxu0
  %v4419 = vadd.f32 %v4366, %v4418
  %v4420 = vpop.f32.mrb[0].mxu0
  %v4421 = vadd.f32 %v4368, %v4420
  %v4422 = vpop.f32.mrb[0].mxu0
  %v4423 = vadd.f32 %v4370, %v4422
  %4424 = vdwg.mxu0
  %4425 = vmatprep.subr.bf16.mxu0 %v2854
  %4426 = vmatpush1.bf16.msra.mxu0 %v2853
  %4427 = vmatprep.subr.bf16.mxu0 %v2858
  %4428 = vmatpush1.bf16.msra.mxu0 %v2857
  %4429 = vmatprep.subr.bf16.mxu0 %v2862
  %4430 = vmatpush1.bf16.msra.mxu0 %v2861
  %4431 = vmatprep.subr.bf16.mxu0 %v2866
  %4432 = vmatpush1.bf16.msra.mxu0 %v2865
  %4433 = vmatprep.subr.bf16.mxu0 %v2870
  %4434 = vmatpush1.bf16.msra.mxu0 %v2869
  %4435 = vmatprep.subr.bf16.mxu0 %v2874
  %4436 = vmatpush1.bf16.msra.mxu0 %v2873
  %4437 = vmatprep.subr.bf16.mxu0 %v2878
  %4438 = vmatpush1.bf16.msra.mxu0 %v2877
  %4439 = vmatprep.subr.bf16.mxu0 %v2882
  %4440 = vmatpush1.bf16.msra.mxu0 %v2881
  %4441 = vmatprep.subr.bf16.mxu0 %v2886
  %4442 = vmatpush1.bf16.msra.mxu0 %v2885
  %4443 = vmatprep.subr.bf16.mxu0 %v2890
  %4444 = vmatpush1.bf16.msra.mxu0 %v2889
  %4445 = vmatprep.subr.bf16.mxu0 %v2894
  %4446 = vmatpush1.bf16.msra.mxu0 %v2893
  %4447 = vmatprep.subr.bf16.mxu0 %v2898
  %4448 = vmatpush1.bf16.msra.mxu0 %v2897
  %4449 = vmatprep.subr.bf16.mxu0 %v2902
  %4450 = vmatpush1.bf16.msra.mxu0 %v2901
  %4451 = vmatprep.subr.bf16.mxu0 %v2906
  %4452 = vmatpush1.bf16.msra.mxu0 %v2905
  %4453 = vmatprep.subr.bf16.mxu0 %v2910
  %4454 = vmatpush1.bf16.msra.mxu0 %v2909
  %4455 = vmatprep.subr.bf16.mxu0 %v2914
  %4456 = vmatpush1.bf16.msra.mxu0 %v2913
  %4457 = vmatprep.mubr.bf16.mxu0 %v742
  %4458 = vmatmul.mubr.bf16.gmra.mrb[0].mxu0 %v741
  %v4459 = vpop.f32.mrb[0].mxu0
  %v4460 = vadd.f32 %v4407, %v4459
  %v4461 = vpop.f32.mrb[0].mxu0
  %v4462 = vadd.f32 %v4409, %v4461
  %v4463 = vpop.f32.mrb[0].mxu0
  %v4464 = vadd.f32 %v4411, %v4463
  %v4465 = vpop.f32.mrb[0].mxu0
  %v4466 = vadd.f32 %v4413, %v4465
  %4467 = vmatprep.mubr.bf16.mxu0 %v760
  %4468 = vmatmul.mubr.bf16.gmra.mrb[0].mxu0 %v759
  %v4469 = vpop.f32.mrb[0].mxu0
  %v4470 = vadd.f32 %v4417, %v4469
  %v4471 = vpop.f32.mrb[0].mxu0
  %v4472 = vadd.f32 %v4419, %v4471
  %v4473 = vpop.f32.mrb[0].mxu0
  %v4474 = vadd.f32 %v4421, %v4473
  %v4475 = vpop.f32.mrb[0].mxu0
  %v4476 = vadd.f32 %v4423, %v4475
  %4477 = vdwg.mxu0
  %4478 = vmatprep.subr.bf16.mxu0 %v2918
  %4479 = vmatpush1.bf16.msra.mxu0 %v2917
  %4480 = vmatprep.subr.bf16.mxu0 %v2922
  %4481 = vmatpush1.bf16.msra.mxu0 %v2921
  %4482 = vmatprep.subr.bf16.mxu0 %v2926
  %4483 = vmatpush1.bf16.msra.mxu0 %v2925
  %4484 = vmatprep.subr.bf16.mxu0 %v2930
  %4485 = vmatpush1.bf16.msra.mxu0 %v2929
  %4486 = vmatprep.subr.bf16.mxu0 %v2934
  %4487 = vmatpush1.bf16.msra.mxu0 %v2933
  %4488 = vmatprep.subr.bf16.mxu0 %v2938
  %4489 = vmatpush1.bf16.msra.mxu0 %v2937
  %4490 = vmatprep.subr.bf16.mxu0 %v2942
  %4491 = vmatpush1.bf16.msra.mxu0 %v2941
  %4492 = vmatprep.subr.bf16.mxu0 %v2946
  %4493 = vmatpush1.bf16.msra.mxu0 %v2945
  %4494 = vmatprep.subr.bf16.mxu0 %v2950
  %4495 = vmatpush1.bf16.msra.mxu0 %v2949
  %4496 = vmatprep.subr.bf16.mxu0 %v2954
  %4497 = vmatpush1.bf16.msra.mxu0 %v2953
  %4498 = vmatprep.subr.bf16.mxu0 %v2958
  %4499 = vmatpush1.bf16.msra.mxu0 %v2957
  %4500 = vmatprep.subr.bf16.mxu0 %v2962
  %4501 = vmatpush1.bf16.msra.mxu0 %v2961
  %4502 = vmatprep.subr.bf16.mxu0 %v2966
  %4503 = vmatpush1.bf16.msra.mxu0 %v2965
  %4504 = vmatprep.subr.bf16.mxu0 %v2970
  %4505 = vmatpush1.bf16.msra.mxu0 %v2969
  %4506 = vmatprep.subr.bf16.mxu0 %v2974
  %4507 = vmatpush1.bf16.msra.mxu0 %v2973
  %4508 = vmatprep.subr.bf16.mxu0 %v2978
  %4509 = vmatpush1.bf16.msra.mxu0 %v2977
  %4510 = vmatprep.mubr.bf16.mxu0 %v744
  %4511 = vmatmul.mubr.bf16.gmra.mrb[0].mxu0 %v743
  %v4512 = vpop.f32.mrb[0].mxu0
  %v4513 = vadd.f32 %v4460, %v4512
  %v4514 = vpop.f32.mrb[0].mxu0
  %v4515 = vadd.f32 %v4462, %v4514
  %v4516 = vpop.f32.mrb[0].mxu0
  %v4517 = vadd.f32 %v4464, %v4516
  %v4518 = vpop.f32.mrb[0].mxu0
  %v4519 = vadd.f32 %v4466, %v4518
  %4520 = vmatprep.mubr.bf16.mxu0 %v762
  %4521 = vmatmul.mubr.bf16.gmra.mrb[0].mxu0 %v761
  %v4522 = vpop.f32.mrb[0].mxu0
  %v4523 = vadd.f32 %v4470, %v4522
  %v4524 = vpop.f32.mrb[0].mxu0
  %v4525 = vadd.f32 %v4472, %v4524
  %v4526 = vpop.f32.mrb[0].mxu0
  %v4527 = vadd.f32 %v4474, %v4526
  %v4528 = vpop.f32.mrb[0].mxu0
  %v4529 = vadd.f32 %v4476, %v4528
  %4530 = vdwg.mxu0
  %4531 = vmatprep.subr.bf16.mxu0 %v2982
  %4532 = vmatpush1.bf16.msra.mxu0 %v2981
  %4533 = vmatprep.subr.bf16.mxu0 %v2986
  %4534 = vmatpush1.bf16.msra.mxu0 %v2985
  %4535 = vmatprep.subr.bf16.mxu0 %v2990
  %4536 = vmatpush1.bf16.msra.mxu0 %v2989
  %4537 = vmatprep.subr.bf16.mxu0 %v2994
  %4538 = vmatpush1.bf16.msra.mxu0 %v2993
  %4539 = vmatprep.subr.bf16.mxu0 %v2998
  %4540 = vmatpush1.bf16.msra.mxu0 %v2997
  %4541 = vmatprep.subr.bf16.mxu0 %v3002
  %4542 = vmatpush1.bf16.msra.mxu0 %v3001
  %4543 = vmatprep.subr.bf16.mxu0 %v3006
  %4544 = vmatpush1.bf16.msra.mxu0 %v3005
  %4545 = vmatprep.subr.bf16.mxu0 %v3010
  %4546 = vmatpush1.bf16.msra.mxu0 %v3009
  %4547 = vmatprep.subr.bf16.mxu0 %v3014
  %4548 = vmatpush1.bf16.msra.mxu0 %v3013
  %4549 = vmatprep.subr.bf16.mxu0 %v3018
  %4550 = vmatpush1.bf16.msra.mxu0 %v3017
  %4551 = vmatprep.subr.bf16.mxu0 %v3022
  %4552 = vmatpush1.bf16.msra.mxu0 %v3021
  %4553 = vmatprep.subr.bf16.mxu0 %v3026
  %4554 = vmatpush1.bf16.msra.mxu0 %v3025
  %4555 = vmatprep.subr.bf16.mxu0 %v3030
  %4556 = vmatpush1.bf16.msra.mxu0 %v3029
  %4557 = vmatprep.subr.bf16.mxu0 %v3034
  %4558 = vmatpush1.bf16.msra.mxu0 %v3033
  %4559 = vmatprep.subr.bf16.mxu0 %v3038
  %4560 = vmatpush1.bf16.msra.mxu0 %v3037
  %4561 = vmatprep.subr.bf16.mxu0 %v3042
  %4562 = vmatpush1.bf16.msra.mxu0 %v3041
  %4563 = vmatprep.mubr.bf16.mxu0 %v746
  %4564 = vmatmul.mubr.bf16.gmra.mrb[0].mxu0 %v745
  %v4565 = vpop.f32.mrb[0].mxu0
  %v4566 = vadd.f32 %v4513, %v4565
  %v4567 = vpop.f32.mrb[0].mxu0
  %v4568 = vadd.f32 %v4515, %v4567
  %v4569 = vpop.f32.mrb[0].mxu0
  %v4570 = vadd.f32 %v4517, %v4569
  %v4571 = vpop.f32.mrb[0].mxu0
  %v4572 = vadd.f32 %v4519, %v4571
  %4573 = vmatprep.mubr.bf16.mxu0 %v764
  %4574 = vmatmul.mubr.bf16.gmra.mrb[0].mxu0 %v763
  %v4575 = vpop.f32.mrb[0].mxu0
  %v4576 = vadd.f32 %v4523, %v4575
  %v4577 = vpop.f32.mrb[0].mxu0
  %v4578 = vadd.f32 %v4525, %v4577
  %v4579 = vpop.f32.mrb[0].mxu0
  %v4580 = vadd.f32 %v4527, %v4579
  %v4581 = vpop.f32.mrb[0].mxu0
  %v4582 = vadd.f32 %v4529, %v4581
  %4583 = vdwg.mxu0
  %4584 = vmatprep.subr.bf16.mxu0 %v3046
  %4585 = vmatpush1.bf16.msra.mxu0 %v3045
  %4586 = vmatprep.subr.bf16.mxu0 %v3050
  %4587 = vmatpush1.bf16.msra.mxu0 %v3049
  %4588 = vmatprep.subr.bf16.mxu0 %v3054
  %4589 = vmatpush1.bf16.msra.mxu0 %v3053
  %4590 = vmatprep.subr.bf16.mxu0 %v3058
  %4591 = vmatpush1.bf16.msra.mxu0 %v3057
  %4592 = vmatprep.subr.bf16.mxu0 %v3062
  %4593 = vmatpush1.bf16.msra.mxu0 %v3061
  %4594 = vmatprep.subr.bf16.mxu0 %v3066
  %4595 = vmatpush1.bf16.msra.mxu0 %v3065
  %4596 = vmatprep.subr.bf16.mxu0 %v3070
  %4597 = vmatpush1.bf16.msra.mxu0 %v3069
  %4598 = vmatprep.subr.bf16.mxu0 %v3074
  %4599 = vmatpush1.bf16.msra.mxu0 %v3073
  %4600 = vmatprep.subr.bf16.mxu0 %v3078
  %4601 = vmatpush1.bf16.msra.mxu0 %v3077
  %4602 = vmatprep.subr.bf16.mxu0 %v3082
  %4603 = vmatpush1.bf16.msra.mxu0 %v3081
  %4604 = vmatprep.subr.bf16.mxu0 %v3086
  %4605 = vmatpush1.bf16.msra.mxu0 %v3085
  %4606 = vmatprep.subr.bf16.mxu0 %v3090
  %4607 = vmatpush1.bf16.msra.mxu0 %v3089
  %4608 = vmatprep.subr.bf16.mxu0 %v3094
  %4609 = vmatpush1.bf16.msra.mxu0 %v3093
  %4610 = vmatprep.subr.bf16.mxu0 %v3098
  %4611 = vmatpush1.bf16.msra.mxu0 %v3097
  %4612 = vmatprep.subr.bf16.mxu0 %v3102
  %4613 = vmatpush1.bf16.msra.mxu0 %v3101
  %4614 = vmatprep.subr.bf16.mxu0 %v3106
  %4615 = vmatpush1.bf16.msra.mxu0 %v3105
  %4616 = vmatprep.mubr.bf16.mxu0 %v748
  %4617 = vmatmul.mubr.bf16.gmra.mrb[0].mxu0 %v747
  %v4618 = vpop.f32.mrb[0].mxu0
  %v4619 = vadd.f32 %v4566, %v4618
  %v4620 = vpop.f32.mrb[0].mxu0
  %v4621 = vadd.f32 %v4568, %v4620
  %v4622 = vpop.f32.mrb[0].mxu0
  %v4623 = vadd.f32 %v4570, %v4622
  %v4624 = vpop.f32.mrb[0].mxu0
  %v4625 = vadd.f32 %v4572, %v4624
  %4626 = vmatprep.mubr.bf16.mxu0 %v766
  %4627 = vmatmul.mubr.bf16.gmra.mrb[0].mxu0 %v765
  %v4628 = vpop.f32.mrb[0].mxu0
  %v4629 = vadd.f32 %v4576, %v4628
  %v4630 = vpop.f32.mrb[0].mxu0
  %v4631 = vadd.f32 %v4578, %v4630
  %v4632 = vpop.f32.mrb[0].mxu0
  %v4633 = vadd.f32 %v4580, %v4632
  %v4634 = vpop.f32.mrb[0].mxu0
  %v4635 = vadd.f32 %v4582, %v4634
  %4636 = vdwg.mxu0
  %v4637 = vadd.f32 %v4142, %v4146
  %v4638 = vadd.f32 %v4637, %v4152
  %v4639 = vadd.f32 %v4638, %v4156
  %v4640 = vrot.slane %v4639, 4
  %v4641 = vadd.f32 %v4639, %v4640
  %v4642 = vrot.slane %v4641, 2
  %v4643 = vadd.f32 %v4641, %v4642
  %v4644 = vrot.slane %v4643, 1
  %v4645 = vadd.f32 %v4643, %v4644
  %v4646 = vadd.f32 %v4144, %v4148
  %v4647 = vadd.f32 %v4646, %v4154
  %v4648 = vadd.f32 %v4647, %v4158
  %v4649 = vrot.slane %v4648, 4
  %v4650 = vadd.f32 %v4648, %v4649
  %v4651 = vrot.slane %v4650, 2
  %v4652 = vadd.f32 %v4650, %v4651
  %v4653 = vrot.slane %v4652, 1
  %v4654 = vadd.f32 %v4652, %v4653
  %v4655 = vadd.f32 %v4619, %v4623
  %v4656 = vadd.f32 %v4655, %v4629
  %v4657 = vadd.f32 %v4656, %v4633
  %v4658 = vrot.slane %v4657, 4
  %v4659 = vadd.f32 %v4657, %v4658
  %v4660 = vrot.slane %v4659, 2
  %v4661 = vadd.f32 %v4659, %v4660
  %v4662 = vrot.slane %v4661, 1
  %v4663 = vadd.f32 %v4661, %v4662
  %v4664 = vadd.f32 %v4621, %v4625
  %v4665 = vadd.f32 %v4664, %v4631
  %v4666 = vadd.f32 %v4665, %v4635
  %v4667 = vrot.slane %v4666, 4
  %v4668 = vadd.f32 %v4666, %v4667
  %v4669 = vrot.slane %v4668, 2
  %v4670 = vadd.f32 %v4668, %v4669
  %v4671 = vrot.slane %v4670, 1
  %v4672 = vadd.f32 %v4670, %v4671
  %v4673 = vmul.f32 %v4645, 0.055555556
  %v4674 = vmul.f32 %v4654, 0.055555556
  %v4675 = vmul.f32 %v4663, 0.055555556
  %v4676 = vmul.f32 %v4672, 0.055555556
  %v4677 = vlaneseq
  %v4678 = vshrl.u32 %v4677, 7
  %v4679 = vadd.s32 %v4678, 8
  %v4680 = vadd.s32 %v4678, 16
  %v4681 = vadd.s32 %v4678, 24
  %vm4682 = vcmp.lt.s32.totalorder %v4678, 18
  %vm4683 = vcmp.lt.s32.totalorder %v4679, 18
  %vm4684 = vcmp.lt.s32.totalorder %v4680, 18
  %vm4685 = vcmp.lt.s32.totalorder %v4681, 18
  %v4686 = vsub.f32 %v4142, %v4673
  %v4687 = vsub.f32 %v4144, %v4674
  %v4688 = vsub.f32 %v4619, %v4675
  %v4689 = vsub.f32 %v4621, %v4676
  %v4690 = vsub.f32 %v4146, %v4673
  %v4691 = vsub.f32 %v4148, %v4674
  %v4692 = vsub.f32 %v4623, %v4675
  %v4693 = vsub.f32 %v4625, %v4676
  %v4694 = vsub.f32 %v4152, %v4673
  %v4695 = vsub.f32 %v4154, %v4674
  %v4696 = vsub.f32 %v4629, %v4675
  %v4697 = vsub.f32 %v4631, %v4676
  %v4698 = vsub.f32 %v4156, %v4673
  %v4699 = vsub.f32 %v4158, %v4674
  %v4700 = vsub.f32 %v4633, %v4675
  %v4701 = vsub.f32 %v4635, %v4676
  %v4702 = vsel %vm4682, 1, 0
  %v4703 = vsel %vm4683, 1, 0
  %v4704 = vsel %vm4684, 1, 0
  %v4705 = vsel %vm4685, 1, 0
  %vm4706 = vcmp.eq.s32.totalorder %v4702, 1
  %vm4707 = vcmp.eq.s32.totalorder %v4703, 1
  %vm4708 = vcmp.eq.s32.totalorder %v4704, 1
  %vm4709 = vcmp.eq.s32.totalorder %v4705, 1
  %v4710 = vsel %vm4706, %v4686, 0.0
  %v4711 = vsel %vm4706, %v4687, 0.0
  %v4712 = vsel %vm4706, %v4688, 0.0
  %v4713 = vsel %vm4706, %v4689, 0.0
  %v4714 = vsel %vm4707, %v4690, 0.0
  %v4715 = vsel %vm4707, %v4691, 0.0
  %v4716 = vsel %vm4707, %v4692, 0.0
  %v4717 = vsel %vm4707, %v4693, 0.0
  %v4718 = vsel %vm4708, %v4694, 0.0
  %v4719 = vsel %vm4708, %v4695, 0.0
  %v4720 = vsel %vm4708, %v4696, 0.0
  %v4721 = vsel %vm4708, %v4697, 0.0
  %v4722 = vsel %vm4709, %v4698, 0.0
  %v4723 = vsel %vm4709, %v4699, 0.0
  %v4724 = vsel %vm4709, %v4700, 0.0
  %v4725 = vsel %vm4709, %v4701, 0.0
  %v4726 = vmul.f32 %v4710, %v4710
  %v4727 = vmul.f32 %v4711, %v4711
  %v4728 = vmul.f32 %v4712, %v4712
  %v4729 = vmul.f32 %v4713, %v4713
  %v4730 = vmul.f32 %v4714, %v4714
  %v4731 = vmul.f32 %v4715, %v4715
  %v4732 = vmul.f32 %v4716, %v4716
  %v4733 = vmul.f32 %v4717, %v4717
  %v4734 = vmul.f32 %v4718, %v4718
  %v4735 = vmul.f32 %v4719, %v4719
  %v4736 = vmul.f32 %v4720, %v4720
  %v4737 = vmul.f32 %v4721, %v4721
  %v4738 = vmul.f32 %v4722, %v4722
  %v4739 = vmul.f32 %v4723, %v4723
  %v4740 = vmul.f32 %v4724, %v4724
  %v4741 = vmul.f32 %v4725, %v4725
  %v4742 = vadd.f32 %v4726, %v4730
  %v4743 = vadd.f32 %v4742, %v4734
  %v4744 = vadd.f32 %v4743, %v4738
  %v4745 = vrot.slane %v4744, 4
  %v4746 = vadd.f32 %v4744, %v4745
  %v4747 = vrot.slane %v4746, 2
  %v4748 = vadd.f32 %v4746, %v4747
  %v4749 = vrot.slane %v4748, 1
  %v4750 = vadd.f32 %v4748, %v4749
  %v4751 = vadd.f32 %v4727, %v4731
  %v4752 = vadd.f32 %v4751, %v4735
  %v4753 = vadd.f32 %v4752, %v4739
  %v4754 = vrot.slane %v4753, 4
  %v4755 = vadd.f32 %v4753, %v4754
  %v4756 = vrot.slane %v4755, 2
  %v4757 = vadd.f32 %v4755, %v4756
  %v4758 = vrot.slane %v4757, 1
  %v4759 = vadd.f32 %v4757, %v4758
  %v4760 = vadd.f32 %v4728, %v4732
  %v4761 = vadd.f32 %v4760, %v4736
  %v4762 = vadd.f32 %v4761, %v4740
  %v4763 = vrot.slane %v4762, 4
  %v4764 = vadd.f32 %v4762, %v4763
  %v4765 = vrot.slane %v4764, 2
  %v4766 = vadd.f32 %v4764, %v4765
  %v4767 = vrot.slane %v4766, 1
  %v4768 = vadd.f32 %v4766, %v4767
  %v4769 = vadd.f32 %v4729, %v4733
  %v4770 = vadd.f32 %v4769, %v4737
  %v4771 = vadd.f32 %v4770, %v4741
  %v4772 = vrot.slane %v4771, 4
  %v4773 = vadd.f32 %v4771, %v4772
  %v4774 = vrot.slane %v4773, 2
  %v4775 = vadd.f32 %v4773, %v4774
  %v4776 = vrot.slane %v4775, 1
  %v4777 = vadd.f32 %v4775, %v4776
  %v4778 = vmul.f32 %v4750, 0.055555556
  %v4779 = vmul.f32 %v4759, 0.055555556
  %v4780 = vmul.f32 %v4768, 0.055555556
  %v4781 = vmul.f32 %v4777, 0.055555556
  %v4782 = vadd.f32 %v4778, 1e-05
  %v4783 = vadd.f32 %v4779, 1e-05
  %v4784 = vadd.f32 %v4780, 1e-05
  %v4785 = vadd.f32 %v4781, 1e-05
  %v4786 = vrsqrt.pop %v4782
  %v4787 = vrsqrt.pop %v4783
  %v4788 = vrsqrt.pop %v4784
  %v4789 = vrsqrt.pop %v4785
  %v4790 = vmul.f32 %v4710, %v4786
  %v4791 = vmul.f32 %v4711, %v4787
  %v4792 = vmul.f32 %v4712, %v4788
  %v4793 = vmul.f32 %v4713, %v4789
  %v4794 = vmul.f32 %v4714, %v4786
  %v4795 = vmul.f32 %v4715, %v4787
  %v4796 = vmul.f32 %v4716, %v4788
  %v4797 = vmul.f32 %v4717, %v4789
  %v4798 = vmul.f32 %v4718, %v4786
  %v4799 = vmul.f32 %v4719, %v4787
  %v4800 = vmul.f32 %v4720, %v4788
  %v4801 = vmul.f32 %v4721, %v4789
  %v4802 = vmul.f32 %v4722, %v4786
  %v4803 = vmul.f32 %v4723, %v4787
  %v4804 = vmul.f32 %v4724, %v4788
  %v4805 = vmul.f32 %v4725, %v4789
  %4806 = vst [vmem:[%s2] sm:$0xff] %v4790
  %4807 = vst [vmem:[%s2 + $0x8] sm:$0xff] %v4791
  %4808 = vst [vmem:[%s2 + $0x10] sm:$0xff] %v4792
  %4809 = vst [vmem:[%s2 + $0x18] sm:$0xff] %v4793
  %4810 = vst [vmem:[%s2 + $0x20] sm:$0xff] %v4794
  %4811 = vst [vmem:[%s2 + $0x28] sm:$0xff] %v4795
  %4812 = vst [vmem:[%s2 + $0x30] sm:$0xff] %v4796
  %4813 = vst [vmem:[%s2 + $0x38] sm:$0xff] %v4797
  %4814 = vst [vmem:[%s2 + $0x40] sm:$0xff] %v4798
  %4815 = vst [vmem:[%s2 + $0x48] sm:$0xff] %v4799
  %4816 = vst [vmem:[%s2 + $0x50] sm:$0xff] %v4800
  %4817 = vst [vmem:[%s2 + $0x58] sm:$0xff] %v4801
  %4818 = vst [vmem:[%s2 + $0x60] sm:$0xff] %v4802
  %4819 = vst [vmem:[%s2 + $0x68] sm:$0xff] %v4803
  %4820 = vst [vmem:[%s2 + $0x70] sm:$0xff] %v4804
  %4821 = vst [vmem:[%s2 + $0x78] sm:$0xff] %v4805
  // Predicated region
  $region10: #{resnet_forward.15} parent=0 // pred_check
    _
  $region11: #{resnet_forward.15} parent=0 // pred_check_branch
    %4823 = sbr.rel (0) target = $region13
  $region12: #{resnet_forward.15} parent=0 // pred_region
    _
  $region13: #{resnet_forward.15} parent=0 // pred_fallthru
    _
  // Predicated region
  $region14: #{resnet_forward.15} parent=0 // pred_check
    _
  $region15: #{resnet_forward.15} parent=0 // pred_check_branch
    %4825 = sbr.rel (0) target = $region17
  $region16: #{resnet_forward.15} parent=0 // pred_region
    _
  $region17: #{resnet_forward.15} parent=0 // pred_fallthru
    _

// kernel: resnet_forward.14
$region0: #{resnet_forward.14}
  #allocation0 [shape = 'u32[]', space=smem, size = 0x4, offset = 0x4, fixed_abs, tag = 'smem constant byte address 0x4 - core index']
  #allocation1 [shape = 'u32[144,128]{1,0:T(1,128)}', space=vmem, size = 0x12000, scoped, tag = 'internal scratch']
  %s0 = inlined_call_operand.vmem [shape: bf16[112,256], index: 0, kind: input, shape index: {}]
  %s1 = inlined_call_operand.vmem [shape: bf16[256,128], index: 1, kind: input, shape index: {}]
  %s2 = inlined_call_operand.vmem [shape: f32[112,128], index: 2, kind: output, shape index: {}]
  %s3 = sld [smem:[#allocation0]]
  $region18: #{resnet_forward.14} parent=0
    _
  %s5 = ssub.s32 1, %s3
  %s6 = scalar_select 0, %s5, %s3
  // Predicated region
  $region2: #{resnet_forward.14} parent=0 // pred_check
    _
  $region3: #{resnet_forward.14} parent=0 // pred_check_branch
    %8 = sbr.rel (0) target = $region5
  $region4: #{resnet_forward.14} parent=0 // pred_region
    _
  $region5: #{resnet_forward.14} parent=0 // pred_fallthru
    _
  // Predicated region
  $region6: #{resnet_forward.14} parent=0 // pred_check
    _
  $region7: #{resnet_forward.14} parent=0 // pred_check_branch
    %10 = sbr.rel (0) target = $region9
  $region8: #{resnet_forward.14} parent=0 // pred_region
    _
  $region9: #{resnet_forward.14} parent=0 // pred_fallthru
    _
  %v12 = vld [vmem:[%s0] sm:$0xff]
  %v13 = vld [vmem:[%s0 + $0x8] sm:$0xff]
  %v14 = vld [vmem:[%s0 + $0x10] sm:$0xff]
  %v15 = vld [vmem:[%s0 + $0x18] sm:$0xff]
  %v16 = vld [vmem:[%s0 + $0x20] sm:$0xff]
  %v17 = vld [vmem:[%s0 + $0x28] sm:$0xff]
  %v18 = vld [vmem:[%s0 + $0x30] sm:$0xff]
  %v19 = vld [vmem:[%s0 + $0x38] sm:$0xff]
  %v20 = vld [vmem:[%s0 + $0x40] sm:$0xff]
  %v21 = vld [vmem:[%s0 + $0x48] sm:$0xff]
  %v22 = vld [vmem:[%s0 + $0x50] sm:$0xff]
  %v23 = vld [vmem:[%s0 + $0x58] sm:$0xff]
  %v24 = vld [vmem:[%s0 + $0x60] sm:$0xff]
  %v25 = vld [vmem:[%s0 + $0x68] sm:$0xff]
  %v26 = vld [vmem:[%s1] sm:$0xf]
  %v27 = vld [vmem:[%s1 + $0x4] sm:$0xf]
  %v28 = vld [vmem:[%s1 + $0x8] sm:$0xf]
  %v29 = vld [vmem:[%s1 + $0xc] sm:$0xf]
  %v30 = vld [vmem:[%s1 + $0x10] sm:$0xf]
  %v31 = vld [vmem:[%s1 + $0x14] sm:$0xf]
  %v32 = vld [vmem:[%s1 + $0x18] sm:$0xf]
  %v33 = vld [vmem:[%s1 + $0x1c] sm:$0xf]
  %v34 = vld [vmem:[%s1 + $0x20] sm:$0xf]
  %v35 = vld [vmem:[%s1 + $0x24] sm:$0xf]
  %v36 = vld [vmem:[%s1 + $0x28] sm:$0xf]
  %v37 = vld [vmem:[%s1 + $0x2c] sm:$0xf]
  %v38 = vld [vmem:[%s1 + $0x30] sm:$0xf]
  %v39 = vld [vmem:[%s1 + $0x34] sm:$0xf]
  %v40 = vld [vmem:[%s1 + $0x38] sm:$0xf]
  %v41 = vld [vmem:[%s1 + $0x3c] sm:$0xf]
  %v42 = vld [vmem:[%s1 + $0x40] sm:$0xf]
  %v43 = vld [vmem:[%s1 + $0x44] sm:$0xf]
  %v44 = vld [vmem:[%s1 + $0x48] sm:$0xf]
  %v45 = vld [vmem:[%s1 + $0x4c] sm:$0xf]
  %v46 = vld [vmem:[%s1 + $0x50] sm:$0xf]
  %v47 = vld [vmem:[%s1 + $0x54] sm:$0xf]
  %v48 = vld [vmem:[%s1 + $0x58] sm:$0xf]
  %v49 = vld [vmem:[%s1 + $0x5c] sm:$0xf]
  %v50 = vld [vmem:[%s1 + $0x60] sm:$0xf]
  %v51 = vld [vmem:[%s1 + $0x64] sm:$0xf]
  %v52 = vld [vmem:[%s1 + $0x68] sm:$0xf]
  %v53 = vld [vmem:[%s1 + $0x6c] sm:$0xf]
  %v54 = vld [vmem:[%s1 + $0x70] sm:$0xf]
  %v55 = vld [vmem:[%s1 + $0x74] sm:$0xf]
  %v56 = vld [vmem:[%s1 + $0x78] sm:$0xf]
  %v57 = vld [vmem:[%s1 + $0x7c] sm:$0xf]
  %v72 = vunpack.c.l.b16 %v12
  %v73 = vunpack.c.h.b16 %v12
  %v74 = vunpack.c.l.b16 %v13
  %v75 = vunpack.c.h.b16 %v13
  %v76 = vunpack.c.l.b16 %v14
  %v77 = vunpack.c.h.b16 %v14
  %v78 = vunpack.c.l.b16 %v15
  %v79 = vunpack.c.h.b16 %v15
  %v80 = vunpack.c.l.b16 %v16
  %v81 = vunpack.c.h.b16 %v16
  %v82 = vunpack.c.l.b16 %v17
  %v83 = vunpack.c.h.b16 %v17
  %v84 = vunpack.c.l.b16 %v18
  %v85 = vunpack.c.h.b16 %v18
  %v86 = vunpack.c.l.b16 %v19
  %v87 = vunpack.c.h.b16 %v19
  %v88 = vunpack.c.l.b16 %v20
  %v89 = vunpack.c.h.b16 %v20
  %v90 = vunpack.c.l.b16 %v21
  %v91 = vunpack.c.h.b16 %v21
  %v92 = vunpack.c.l.b16 %v22
  %v93 = vunpack.c.h.b16 %v22
  %v94 = vunpack.c.l.b16 %v23
  %v95 = vunpack.c.h.b16 %v23
  %v96 = vunpack.c.l.b16 %v24
  %v97 = vunpack.c.h.b16 %v24
  %v98 = vunpack.c.l.b16 %v25
  %v99 = vunpack.c.h.b16 %v25
  %v100 = vpack.c.b16 %v74, %v72
  %v101 = vpack.c.b16 %v75, %v73
  %v102 = vpack.c.b16 %v78, %v76
  %v103 = vpack.c.b16 %v79, %v77
  %v104 = vpack.c.b16 %v82, %v80
  %v105 = vpack.c.b16 %v83, %v81
  %v106 = vpack.c.b16 %v86, %v84
  %v107 = vpack.c.b16 %v87, %v85
  %v108 = vpack.c.b16 %v90, %v88
  %v109 = vpack.c.b16 %v91, %v89
  %v110 = vpack.c.b16 %v94, %v92
  %v111 = vpack.c.b16 %v95, %v93
  %v112 = vpack.c.b16 %v98, %v96
  %v113 = vpack.c.b16 %v99, %v97
  %v160 = vunpack.c.l.b16 %v26
  %v161 = vunpack.c.l.b16 %v27
  %v162 = vunpack.c.l.b16 %v28
  %v163 = vunpack.c.l.b16 %v29
  %v164 = vunpack.c.l.b16 %v30
  %v165 = vunpack.c.l.b16 %v31
  %v166 = vunpack.c.l.b16 %v32
  %v167 = vunpack.c.l.b16 %v33
  %v168 = vunpack.c.l.b16 %v34
  %v169 = vunpack.c.l.b16 %v35
  %v170 = vunpack.c.l.b16 %v36
  %v171 = vunpack.c.l.b16 %v37
  %v172 = vunpack.c.l.b16 %v38
  %v173 = vunpack.c.l.b16 %v39
  %v174 = vunpack.c.l.b16 %v40
  %v175 = vunpack.c.l.b16 %v41
  %v176 = vunpack.c.l.b16 %v42
  %v177 = vunpack.c.l.b16 %v43
  %v178 = vunpack.c.l.b16 %v44
  %v179 = vunpack.c.l.b16 %v45
  %v180 = vunpack.c.l.b16 %v46
  %v181 = vunpack.c.l.b16 %v47
  %v182 = vunpack.c.l.b16 %v48
  %v183 = vunpack.c.l.b16 %v49
  %v184 = vunpack.c.l.b16 %v50
  %v185 = vunpack.c.l.b16 %v51
  %v186 = vunpack.c.l.b16 %v52
  %v187 = vunpack.c.l.b16 %v53
  %v188 = vunpack.c.l.b16 %v54
  %v189 = vunpack.c.l.b16 %v55
  %v190 = vunpack.c.l.b16 %v56
  %v191 = vunpack.c.l.b16 %v57
  %v192 = vpack.c.b16 %v161, %v160
  %v193 = vpack.c.b16 %v163, %v162
  %v194 = vpack.c.b16 %v165, %v164
  %v195 = vpack.c.b16 %v167, %v166
  %v196 = vpack.c.b16 %v169, %v168
  %v197 = vpack.c.b16 %v171, %v170
  %v198 = vpack.c.b16 %v173, %v172
  %v199 = vpack.c.b16 %v175, %v174
  %v200 = vpack.c.b16 %v177, %v176
  %v201 = vpack.c.b16 %v179, %v178
  %v202 = vpack.c.b16 %v181, %v180
  %v203 = vpack.c.b16 %v183, %v182
  %v204 = vpack.c.b16 %v185, %v184
  %v205 = vpack.c.b16 %v187, %v186
  %v206 = vpack.c.b16 %v189, %v188
  %v207 = vpack.c.b16 %v191, %v190
  %224 = vmatprep.subr.bf16.mxu0 0
  %225 = vmatpush1.bf16.msra.mxu0 %v192
  %226 = vmatprep.subr.bf16.mxu0 0
  %227 = vmatpush1.bf16.msra.mxu0 %v193
  %228 = vmatprep.subr.bf16.mxu0 0
  %229 = vmatpush1.bf16.msra.mxu0 %v194
  %230 = vmatprep.subr.bf16.mxu0 0
  %231 = vmatpush1.bf16.msra.mxu0 %v195
  %232 = vmatprep.subr.bf16.mxu0 0
  %233 = vmatpush1.bf16.msra.mxu0 %v196
  %234 = vmatprep.subr.bf16.mxu0 0
  %235 = vmatpush1.bf16.msra.mxu0 %v197
  %236 = vmatprep.subr.bf16.mxu0 0
  %237 = vmatpush1.bf16.msra.mxu0 %v198
  %238 = vmatprep.subr.bf16.mxu0 0
  %239 = vmatpush1.bf16.msra.mxu0 %v199
  %240 = vmatprep.subr.bf16.mxu0 0
  %241 = vmatpush1.bf16.msra.mxu0 %v200
  %242 = vmatprep.subr.bf16.mxu0 0
  %243 = vmatpush1.bf16.msra.mxu0 %v201
  %244 = vmatprep.subr.bf16.mxu0 0
  %245 = vmatpush1.bf16.msra.mxu0 %v202
  %246 = vmatprep.subr.bf16.mxu0 0
  %247 = vmatpush1.bf16.msra.mxu0 %v203
  %248 = vmatprep.subr.bf16.mxu0 0
  %249 = vmatpush1.bf16.msra.mxu0 %v204
  %250 = vmatprep.subr.bf16.mxu0 0
  %251 = vmatpush1.bf16.msra.mxu0 %v205
  %252 = vmatprep.subr.bf16.mxu0 0
  %253 = vmatpush1.bf16.msra.mxu0 %v206
  %254 = vmatprep.subr.bf16.mxu0 0
  %255 = vmatpush1.bf16.msra.mxu0 %v207
  %256 = vmatprep.mubr.bf16.mxu0 %v101
  %257 = vmatmul.mubr.bf16.gmra.mrb[0].mxu0 %v100
  %v258 = vpop.f32.mrb[0].mxu0
  %v259 = vadd.f32 0.0, %v258
  %v260 = vpop.f32.mrb[0].mxu0
  %v261 = vpop.f32.mrb[0].mxu0
  %v262 = vadd.f32 0.0, %v261
  %v263 = vpop.f32.mrb[0].mxu0
  %264 = vmatprep.mubr.bf16.mxu0 %v103
  %265 = vmatmul.mubr.bf16.gmra.mrb[0].mxu0 %v102
  %v266 = vpop.f32.mrb[0].mxu0
  %v267 = vadd.f32 0.0, %v266
  %v268 = vpop.f32.mrb[0].mxu0
  %v269 = vpop.f32.mrb[0].mxu0
  %v270 = vadd.f32 0.0, %v269
  %v271 = vpop.f32.mrb[0].mxu0
  %272 = vmatprep.mubr.bf16.mxu0 %v105
  %273 = vmatmul.mubr.bf16.gmra.mrb[0].mxu0 %v104
  %v274 = vpop.f32.mrb[0].mxu0
  %v275 = vadd.f32 0.0, %v274
  %v276 = vpop.f32.mrb[0].mxu0
  %v277 = vpop.f32.mrb[0].mxu0
  %v278 = vadd.f32 0.0, %v277
  %v279 = vpop.f32.mrb[0].mxu0
  %280 = vmatprep.mubr.bf16.mxu0 %v107
  %281 = vmatmul.mubr.bf16.gmra.mrb[0].mxu0 %v106
  %v282 = vpop.f32.mrb[0].mxu0
  %v283 = vadd.f32 0.0, %v282
  %v284 = vpop.f32.mrb[0].mxu0
  %v285 = vpop.f32.mrb[0].mxu0
  %v286 = vadd.f32 0.0, %v285
  %v287 = vpop.f32.mrb[0].mxu0
  %288 = vmatprep.mubr.bf16.mxu0 %v109
  %289 = vmatmul.mubr.bf16.gmra.mrb[0].mxu0 %v108
  %v290 = vpop.f32.mrb[0].mxu0
  %v291 = vadd.f32 0.0, %v290
  %v292 = vpop.f32.mrb[0].mxu0
  %v293 = vpop.f32.mrb[0].mxu0
  %v294 = vadd.f32 0.0, %v293
  %v295 = vpop.f32.mrb[0].mxu0
  %296 = vmatprep.mubr.bf16.mxu0 %v111
  %297 = vmatmul.mubr.bf16.gmra.mrb[0].mxu0 %v110
  %v298 = vpop.f32.mrb[0].mxu0
  %v299 = vadd.f32 0.0, %v298
  %v300 = vpop.f32.mrb[0].mxu0
  %v301 = vpop.f32.mrb[0].mxu0
  %v302 = vadd.f32 0.0, %v301
  %v303 = vpop.f32.mrb[0].mxu0
  %304 = vmatprep.mubr.bf16.mxu0 %v113
  %305 = vmatmul.mubr.bf16.gmra.mrb[0].mxu0 %v112
  %v306 = vpop.f32.mrb[0].mxu0
  %v307 = vadd.f32 0.0, %v306
  %v308 = vpop.f32.mrb[0].mxu0
  %v309 = vpop.f32.mrb[0].mxu0
  %v310 = vadd.f32 0.0, %v309
  %v311 = vpop.f32.mrb[0].mxu0
  %312 = vdwg.mxu0
  %v313 = vadd.f32 %v259, %v262
  %v314 = vadd.f32 %v313, %v267
  %v315 = vadd.f32 %v314, %v270
  %v316 = vadd.f32 %v315, %v275
  %v317 = vadd.f32 %v316, %v278
  %v318 = vadd.f32 %v317, %v283
  %v319 = vadd.f32 %v318, %v286
  %v320 = vadd.f32 %v319, %v291
  %v321 = vadd.f32 %v320, %v294
  %v322 = vadd.f32 %v321, %v299
  %v323 = vadd.f32 %v322, %v302
  %v324 = vadd.f32 %v323, %v307
  %v325 = vadd.f32 %v324, %v310
  %v326 = vrot.slane %v325, 4
  %v327 = vadd.f32 %v325, %v326
  %v328 = vrot.slane %v327, 2
  %v329 = vadd.f32 %v327, %v328
  %v330 = vrot.slane %v329, 1
  %v331 = vadd.f32 %v329, %v330
  %v332 = vmul.f32 %v331, 0.010204081
  %v333 = vlaneseq
  %v334 = vshrl.u32 %v333, 7
  %v335 = vadd.s32 %v334, 8
  %v336 = vadd.s32 %v334, 16
  %v337 = vadd.s32 %v334, 24
  %v338 = vadd.s32 %v334, 32
  %v339 = vadd.s32 %v334, 40
  %v340 = vadd.s32 %v334, 48
  %v341 = vadd.s32 %v334, 56
  %v342 = vadd.s32 %v334, 64
  %v343 = vadd.s32 %v334, 72
  %v344 = vadd.s32 %v334, 80
  %v345 = vadd.s32 %v334, 88
  %v346 = vadd.s32 %v334, 96
  %v347 = vadd.s32 %v334, 104
  %vm348 = vcmp.lt.s32.totalorder %v334, 98
  %vm349 = vcmp.lt.s32.totalorder %v335, 98
  %vm350 = vcmp.lt.s32.totalorder %v336, 98
  %vm351 = vcmp.lt.s32.totalorder %v337, 98
  %vm352 = vcmp.lt.s32.totalorder %v338, 98
  %vm353 = vcmp.lt.s32.totalorder %v339, 98
  %vm354 = vcmp.lt.s32.totalorder %v340, 98
  %vm355 = vcmp.lt.s32.totalorder %v341, 98
  %vm356 = vcmp.lt.s32.totalorder %v342, 98
  %vm357 = vcmp.lt.s32.totalorder %v343, 98
  %vm358 = vcmp.lt.s32.totalorder %v344, 98
  %vm359 = vcmp.lt.s32.totalorder %v345, 98
  %vm360 = vcmp.lt.s32.totalorder %v346, 98
  %vm361 = vcmp.lt.s32.totalorder %v347, 98
  %v362 = vsub.f32 %v259, %v332
  %v363 = vsub.f32 %v262, %v332
  %v364 = vsub.f32 %v267, %v332
  %v365 = vsub.f32 %v270, %v332
  %v366 = vsub.f32 %v275, %v332
  %v367 = vsub.f32 %v278, %v332
  %v368 = vsub.f32 %v283, %v332
  %v369 = vsub.f32 %v286, %v332
  %v370 = vsub.f32 %v291, %v332
  %v371 = vsub.f32 %v294, %v332
  %v372 = vsub.f32 %v299, %v332
  %v373 = vsub.f32 %v302, %v332
  %v374 = vsub.f32 %v307, %v332
  %v375 = vsub.f32 %v310, %v332
  %v376 = vsel %vm348, 1, 0
  %v377 = vsel %vm349, 1, 0
  %v378 = vsel %vm350, 1, 0
  %v379 = vsel %vm351, 1, 0
  %v380 = vsel %vm352, 1, 0
  %v381 = vsel %vm353, 1, 0
  %v382 = vsel %vm354, 1, 0
  %v383 = vsel %vm355, 1, 0
  %v384 = vsel %vm356, 1, 0
  %v385 = vsel %vm357, 1, 0
  %v386 = vsel %vm358, 1, 0
  %v387 = vsel %vm359, 1, 0
  %v388 = vsel %vm360, 1, 0
  %v389 = vsel %vm361, 1, 0
  %vm390 = vcmp.eq.s32.totalorder %v376, 1
  %vm391 = vcmp.eq.s32.totalorder %v377, 1
  %vm392 = vcmp.eq.s32.totalorder %v378, 1
  %vm393 = vcmp.eq.s32.totalorder %v379, 1
  %vm394 = vcmp.eq.s32.totalorder %v380, 1
  %vm395 = vcmp.eq.s32.totalorder %v381, 1
  %vm396 = vcmp.eq.s32.totalorder %v382, 1
  %vm397 = vcmp.eq.s32.totalorder %v383, 1
  %vm398 = vcmp.eq.s32.totalorder %v384, 1
  %vm399 = vcmp.eq.s32.totalorder %v385, 1
  %vm400 = vcmp.eq.s32.totalorder %v386, 1
  %vm401 = vcmp.eq.s32.totalorder %v387, 1
  %vm402 = vcmp.eq.s32.totalorder %v388, 1
  %vm403 = vcmp.eq.s32.totalorder %v389, 1
  %v404 = vsel %vm390, %v362, 0.0
  %v405 = vsel %vm391, %v363, 0.0
  %v406 = vsel %vm392, %v364, 0.0
  %v407 = vsel %vm393, %v365, 0.0
  %v408 = vsel %vm394, %v366, 0.0
  %v409 = vsel %vm395, %v367, 0.0
  %v410 = vsel %vm396, %v368, 0.0
  %v411 = vsel %vm397, %v369, 0.0
  %v412 = vsel %vm398, %v370, 0.0
  %v413 = vsel %vm399, %v371, 0.0
  %v414 = vsel %vm400, %v372, 0.0
  %v415 = vsel %vm401, %v373, 0.0
  %v416 = vsel %vm402, %v374, 0.0
  %v417 = vsel %vm403, %v375, 0.0
  %v418 = vmul.f32 %v404, %v404
  %v419 = vmul.f32 %v405, %v405
  %v420 = vmul.f32 %v406, %v406
  %v421 = vmul.f32 %v407, %v407
  %v422 = vmul.f32 %v408, %v408
  %v423 = vmul.f32 %v409, %v409
  %v424 = vmul.f32 %v410, %v410
  %v425 = vmul.f32 %v411, %v411
  %v426 = vmul.f32 %v412, %v412
  %v427 = vmul.f32 %v413, %v413
  %v428 = vmul.f32 %v414, %v414
  %v429 = vmul.f32 %v415, %v415
  %v430 = vmul.f32 %v416, %v416
  %v431 = vmul.f32 %v417, %v417
  %v432 = vadd.f32 %v418, %v419
  %v433 = vadd.f32 %v432, %v420
  %v434 = vadd.f32 %v433, %v421
  %v435 = vadd.f32 %v434, %v422
  %v436 = vadd.f32 %v435, %v423
  %v437 = vadd.f32 %v436, %v424
  %v438 = vadd.f32 %v437, %v425
  %v439 = vadd.f32 %v438, %v426
  %v440 = vadd.f32 %v439, %v427
  %v441 = vadd.f32 %v440, %v428
  %v442 = vadd.f32 %v441, %v429
  %v443 = vadd.f32 %v442, %v430
  %v444 = vadd.f32 %v443, %v431
  %v445 = vrot.slane %v444, 4
  %v446 = vadd.f32 %v444, %v445
  %v447 = vrot.slane %v446, 2
  %v448 = vadd.f32 %v446, %v447
  %v449 = vrot.slane %v448, 1
  %v450 = vadd.f32 %v448, %v449
  %v451 = vmul.f32 %v450, 0.010204081
  %v452 = vadd.f32 %v451, 1e-05
  %v453 = vrsqrt.pop %v452
  %v454 = vmul.f32 %v404, %v453
  %v455 = vmul.f32 %v405, %v453
  %v456 = vmul.f32 %v406, %v453
  %v457 = vmul.f32 %v407, %v453
  %v458 = vmul.f32 %v408, %v453
  %v459 = vmul.f32 %v409, %v453
  %v460 = vmul.f32 %v410, %v453
  %v461 = vmul.f32 %v411, %v453
  %v462 = vmul.f32 %v412, %v453
  %v463 = vmul.f32 %v413, %v453
  %v464 = vmul.f32 %v414, %v453
  %v465 = vmul.f32 %v415, %v453
  %v466 = vmul.f32 %v416, %v453
  %v467 = vmul.f32 %v417, %v453
  %v468 = vmax.f32 %v454, 0.0
  %v469 = vmax.f32 %v455, 0.0
  %v470 = vmax.f32 %v456, 0.0
  %v471 = vmax.f32 %v457, 0.0
  %v472 = vmax.f32 %v458, 0.0
  %v473 = vmax.f32 %v459, 0.0
  %v474 = vmax.f32 %v460, 0.0
  %v475 = vmax.f32 %v461, 0.0
  %v476 = vmax.f32 %v462, 0.0
  %v477 = vmax.f32 %v463, 0.0
  %v478 = vmax.f32 %v464, 0.0
  %v479 = vmax.f32 %v465, 0.0
  %v480 = vmax.f32 %v466, 0.0
  %v481 = vmax.f32 %v467, 0.0
  %482 = vst [vmem:[%s2] sm:$0xff] %v468
  %483 = vst [vmem:[%s2 + $0x8] sm:$0xff] %v469
  %484 = vst [vmem:[%s2 + $0x10] sm:$0xff] %v470
  %485 = vst [vmem:[%s2 + $0x18] sm:$0xff] %v471
  %486 = vst [vmem:[%s2 + $0x20] sm:$0xff] %v472
  %487 = vst [vmem:[%s2 + $0x28] sm:$0xff] %v473
  %488 = vst [vmem:[%s2 + $0x30] sm:$0xff] %v474
  %489 = vst [vmem:[%s2 + $0x38] sm:$0xff] %v475
  %490 = vst [vmem:[%s2 + $0x40] sm:$0xff] %v476
  %491 = vst [vmem:[%s2 + $0x48] sm:$0xff] %v477
  %492 = vst [vmem:[%s2 + $0x50] sm:$0xff] %v478
  %493 = vst [vmem:[%s2 + $0x58] sm:$0xff] %v479
  %494 = vst [vmem:[%s2 + $0x60] sm:$0xff] %v480
  %495 = vst [vmem:[%s2 + $0x68] sm:$0xff] %v481
  // Predicated region
  $region10: #{resnet_forward.14} parent=0 // pred_check
    _
  $region11: #{resnet_forward.14} parent=0 // pred_check_branch
    %497 = sbr.rel (0) target = $region13
  $region12: #{resnet_forward.14} parent=0 // pred_region
    _
  $region13: #{resnet_forward.14} parent=0 // pred_fallthru
    _
  // Predicated region
  $region14: #{resnet_forward.14} parent=0 // pred_check
    _
  $region15: #{resnet_forward.14} parent=0 // pred_check_branch
    %499 = sbr.rel (0) target = $region17
  $region16: #{resnet_forward.14} parent=0 // pred_region
    _
  $region17: #{resnet_forward.14} parent=0 // pred_fallthru
    _

// kernel: resnet_forward.16
$region0: #{resnet_forward.16}
  #allocation0 [shape = 'u32[]', space=smem, size = 0x4, offset = 0x4, fixed_abs, tag = 'smem constant byte address 0x4 - core index']
  #allocation1 [shape = 'u32[144,128]{1,0:T(1,128)}', space=vmem, size = 0x12000, scoped, tag = 'internal scratch']
  %s0 = inlined_call_operand.vmem [shape: bf16[32,1152], index: 0, kind: input, shape index: {}]
  %s1 = inlined_call_operand.vmem [shape: bf16[1152,128], index: 1, kind: input, shape index: {}]
  %s2 = inlined_call_operand.vmem [shape: f32[32,128], index: 2, kind: output, shape index: {}]
  %s3 = sld [smem:[#allocation0]]
  $region18: #{resnet_forward.16} parent=0
    _
  %s5 = ssub.s32 1, %s3
  %s6 = scalar_select 0, %s5, %s3
  // Predicated region
  $region2: #{resnet_forward.16} parent=0 // pred_check
    _
  $region3: #{resnet_forward.16} parent=0 // pred_check_branch
    %8 = sbr.rel (0) target = $region5
  $region4: #{resnet_forward.16} parent=0 // pred_region
    _
  $region5: #{resnet_forward.16} parent=0 // pred_fallthru
    _
  // Predicated region
  $region6: #{resnet_forward.16} parent=0 // pred_check
    _
  $region7: #{resnet_forward.16} parent=0 // pred_check_branch
    %10 = sbr.rel (0) target = $region9
  $region8: #{resnet_forward.16} parent=0 // pred_region
    _
  $region9: #{resnet_forward.16} parent=0 // pred_fallthru
    _
  %v12 = vld [vmem:[%s0] sm:$0xff]
  %v13 = vld [vmem:[%s0 + $0x8] sm:$0xff]
  %v14 = vld [vmem:[%s0 + $0x10] sm:$0xff]
  %v15 = vld [vmem:[%s0 + $0x18] sm:$0xff]
  %v16 = vld [vmem:[%s0 + $0x20] sm:$0xf]
  %v17 = vld [vmem:[%s0 + $0x24] sm:$0xff]
  %v18 = vld [vmem:[%s0 + $0x2c] sm:$0xff]
  %v19 = vld [vmem:[%s0 + $0x34] sm:$0xff]
  %v20 = vld [vmem:[%s0 + $0x3c] sm:$0xff]
  %v21 = vld [vmem:[%s0 + $0x44] sm:$0xf]
  %v22 = vld [vmem:[%s0 + $0x48] sm:$0xff]
  %v23 = vld [vmem:[%s0 + $0x50] sm:$0xff]
  %v24 = vld [vmem:[%s0 + $0x58] sm:$0xff]
  %v25 = vld [vmem:[%s0 + $0x60] sm:$0xff]
  %v26 = vld [vmem:[%s0 + $0x68] sm:$0xf]
  %v27 = vld [vmem:[%s0 + $0x6c] sm:$0xff]
  %v28 = vld [vmem:[%s0 + $0x74] sm:$0xff]
  %v29 = vld [vmem:[%s0 + $0x7c] sm:$0xff]
  %v30 = vld [vmem:[%s0 + $0x84] sm:$0xff]
  %v31 = vld [vmem:[%s0 + $0x8c] sm:$0xf]
  %v32 = vld [vmem:[%s1] sm:$0xf]
  %v33 = vld [vmem:[%s1 + $0x4] sm:$0xf]
  %v34 = vld [vmem:[%s1 + $0x8] sm:$0xf]
  %v35 = vld [vmem:[%s1 + $0xc] sm:$0xf]
  %v36 = vld [vmem:[%s1 + $0x10] sm:$0xf]
  %v37 = vld [vmem:[%s1 + $0x14] sm:$0xf]
  %v38 = vld [vmem:[%s1 + $0x18] sm:$0xf]
  %v39 = vld [vmem:[%s1 + $0x1c] sm:$0xf]
  %v40 = vld [vmem:[%s1 + $0x20] sm:$0xf]
  %v41 = vld [vmem:[%s1 + $0x24] sm:$0xf]
  %v42 = vld [vmem:[%s1 + $0x28] sm:$0xf]
  %v43 = vld [vmem:[%s1 + $0x2c] sm:$0xf]
  %v44 = vld [vmem:[%s1 + $0x30] sm:$0xf]
  %v45 = vld [vmem:[%s1 + $0x34] sm:$0xf]
  %v46 = vld [vmem:[%s1 + $0x38] sm:$0xf]
  %v47 = vld [vmem:[%s1 + $0x3c] sm:$0xf]
  %v48 = vld [vmem:[%s1 + $0x40] sm:$0xf]
  %v49 = vld [vmem:[%s1 + $0x44] sm:$0xf]
  %v50 = vld [vmem:[%s1 + $0x48] sm:$0xf]
  %v51 = vld [vmem:[%s1 + $0x4c] sm:$0xf]
  %v52 = vld [vmem:[%s1 + $0x50] sm:$0xf]
  %v53 = vld [vmem:[%s1 + $0x54] sm:$0xf]
  %v54 = vld [vmem:[%s1 + $0x58] sm:$0xf]
  %v55 = vld [vmem:[%s1 + $0x5c] sm:$0xf]
  %v56 = vld [vmem:[%s1 + $0x60] sm:$0xf]
  %v57 = vld [vmem:[%s1 + $0x64] sm:$0xf]
  %v58 = vld [vmem:[%s1 + $0x68] sm:$0xf]
  %v59 = vld [vmem:[%s1 + $0x6c] sm:$0xf]
  %v60 = vld [vmem:[%s1 + $0x70] sm:$0xf]
  %v61 = vld [vmem:[%s1 + $0x74] sm:$0xf]
  %v62 = vld [vmem:[%s1 + $0x78] sm:$0xf]
  %v63 = vld [vmem:[%s1 + $0x7c] sm:$0xf]
  %v64 = vld [vmem:[%s1 + $0x80] sm:$0xf]
  %v65 = vld [vmem:[%s1 + $0x84] sm:$0xf]
  %v66 = vld [vmem:[%s1 + $0x88] sm:$0xf]
  %v67 = vld [vmem:[%s1 + $0x8c] sm:$0xf]
  %v68 = vld [vmem:[%s1 + $0x90] sm:$0xf]
  %v69 = vld [vmem:[%s1 + $0x94] sm:$0xf]
  %v70 = vld [vmem:[%s1 + $0x98] sm:$0xf]
  %v71 = vld [vmem:[%s1 + $0x9c] sm:$0xf]
  %v72 = vld [vmem:[%s1 + $0xa0] sm:$0xf]
  %v73 = vld [vmem:[%s1 + $0xa4] sm:$0xf]
  %v74 = vld [vmem:[%s1 + $0xa8] sm:$0xf]
  %v75 = vld [vmem:[%s1 + $0xac] sm:$0xf]
  %v76 = vld [vmem:[%s1 + $0xb0] sm:$0xf]
  %v77 = vld [vmem:[%s1 + $0xb4] sm:$0xf]
  %v78 = vld [vmem:[%s1 + $0xb8] sm:$0xf]
  %v79 = vld [vmem:[%s1 + $0xbc] sm:$0xf]
  %v80 = vld [vmem:[%s1 + $0xc0] sm:$0xf]
  %v81 = vld [vmem:[%s1 + $0xc4] sm:$0xf]
  %v82 = vld [vmem:[%s1 + $0xc8] sm:$0xf]
  %v83 = vld [vmem:[%s1 + $0xcc] sm:$0xf]
  %v84 = vld [vmem:[%s1 + $0xd0] sm:$0xf]
  %v85 = vld [vmem:[%s1 + $0xd4] sm:$0xf]
  %v86 = vld [vmem:[%s1 + $0xd8] sm:$0xf]
  %v87 = vld [vmem:[%s1 + $0xdc] sm:$0xf]
  %v88 = vld [vmem:[%s1 + $0xe0] sm:$0xf]
  %v89 = vld [vmem:[%s1 + $0xe4] sm:$0xf]
  %v90 = vld [vmem:[%s1 + $0xe8] sm:$0xf]
  %v91 = vld [vmem:[%s1 + $0xec] sm:$0xf]
  %v92 = vld [vmem:[%s1 + $0xf0] sm:$0xf]
  %v93 = vld [vmem:[%s1 + $0xf4] sm:$0xf]
  %v94 = vld [vmem:[%s1 + $0xf8] sm:$0xf]
  %v95 = vld [vmem:[%s1 + $0xfc] sm:$0xf]
  %v96 = vld [vmem:[%s1 + $0x100] sm:$0xf]
  %v97 = vld [vmem:[%s1 + $0x104] sm:$0xf]
  %v98 = vld [vmem:[%s1 + $0x108] sm:$0xf]
  %v99 = vld [vmem:[%s1 + $0x10c] sm:$0xf]
  %v100 = vld [vmem:[%s1 + $0x110] sm:$0xf]
  %v101 = vld [vmem:[%s1 + $0x114] sm:$0xf]
  %v102 = vld [vmem:[%s1 + $0x118] sm:$0xf]
  %v103 = vld [vmem:[%s1 + $0x11c] sm:$0xf]
  %v104 = vld [vmem:[%s1 + $0x120] sm:$0xf]
  %v105 = vld [vmem:[%s1 + $0x124] sm:$0xf]
  %v106 = vld [vmem:[%s1 + $0x128] sm:$0xf]
  %v107 = vld [vmem:[%s1 + $0x12c] sm:$0xf]
  %v108 = vld [vmem:[%s1 + $0x130] sm:$0xf]
  %v109 = vld [vmem:[%s1 + $0x134] sm:$0xf]
  %v110 = vld [vmem:[%s1 + $0x138] sm:$0xf]
  %v111 = vld [vmem:[%s1 + $0x13c] sm:$0xf]
  %v112 = vld [vmem:[%s1 + $0x140] sm:$0xf]
  %v113 = vld [vmem:[%s1 + $0x144] sm:$0xf]
  %v114 = vld [vmem:[%s1 + $0x148] sm:$0xf]
  %v115 = vld [vmem:[%s1 + $0x14c] sm:$0xf]
  %v116 = vld [vmem:[%s1 + $0x150] sm:$0xf]
  %v117 = vld [vmem:[%s1 + $0x154] sm:$0xf]
  %v118 = vld [vmem:[%s1 + $0x158] sm:$0xf]
  %v119 = vld [vmem:[%s1 + $0x15c] sm:$0xf]
  %v120 = vld [vmem:[%s1 + $0x160] sm:$0xf]
  %v121 = vld [vmem:[%s1 + $0x164] sm:$0xf]
  %v122 = vld [vmem:[%s1 + $0x168] sm:$0xf]
  %v123 = vld [vmem:[%s1 + $0x16c] sm:$0xf]
  %v124 = vld [vmem:[%s1 + $0x170] sm:$0xf]
  %v125 = vld [vmem:[%s1 + $0x174] sm:$0xf]
  %v126 = vld [vmem:[%s1 + $0x178] sm:$0xf]
  %v127 = vld [vmem:[%s1 + $0x17c] sm:$0xf]
  %v128 = vld [vmem:[%s1 + $0x180] sm:$0xf]
  %v129 = vld [vmem:[%s1 + $0x184] sm:$0xf]
  %v130 = vld [vmem:[%s1 + $0x188] sm:$0xf]
  %v131 = vld [vmem:[%s1 + $0x18c] sm:$0xf]
  %v132 = vld [vmem:[%s1 + $0x190] sm:$0xf]
  %v133 = vld [vmem:[%s1 + $0x194] sm:$0xf]
  %v134 = vld [vmem:[%s1 + $0x198] sm:$0xf]
  %v135 = vld [vmem:[%s1 + $0x19c] sm:$0xf]
  %v136 = vld [vmem:[%s1 + $0x1a0] sm:$0xf]
  %v137 = vld [vmem:[%s1 + $0x1a4] sm:$0xf]
  %v138 = vld [vmem:[%s1 + $0x1a8] sm:$0xf]
  %v139 = vld [vmem:[%s1 + $0x1ac] sm:$0xf]
  %v140 = vld [vmem:[%s1 + $0x1b0] sm:$0xf]
  %v141 = vld [vmem:[%s1 + $0x1b4] sm:$0xf]
  %v142 = vld [vmem:[%s1 + $0x1b8] sm:$0xf]
  %v143 = vld [vmem:[%s1 + $0x1bc] sm:$0xf]
  %v144 = vld [vmem:[%s1 + $0x1c0] sm:$0xf]
  %v145 = vld [vmem:[%s1 + $0x1c4] sm:$0xf]
  %v146 = vld [vmem:[%s1 + $0x1c8] sm:$0xf]
  %v147 = vld [vmem:[%s1 + $0x1cc] sm:$0xf]
  %v148 = vld [vmem:[%s1 + $0x1d0] sm:$0xf]
  %v149 = vld [vmem:[%s1 + $0x1d4] sm:$0xf]
  %v150 = vld [vmem:[%s1 + $0x1d8] sm:$0xf]
  %v151 = vld [vmem:[%s1 + $0x1dc] sm:$0xf]
  %v152 = vld [vmem:[%s1 + $0x1e0] sm:$0xf]
  %v153 = vld [vmem:[%s1 + $0x1e4] sm:$0xf]
  %v154 = vld [vmem:[%s1 + $0x1e8] sm:$0xf]
  %v155 = vld [vmem:[%s1 + $0x1ec] sm:$0xf]
  %v156 = vld [vmem:[%s1 + $0x1f0] sm:$0xf]
  %v157 = vld [vmem:[%s1 + $0x1f4] sm:$0xf]
  %v158 = vld [vmem:[%s1 + $0x1f8] sm:$0xf]
  %v159 = vld [vmem:[%s1 + $0x1fc] sm:$0xf]
  %v160 = vld [vmem:[%s1 + $0x200] sm:$0xf]
  %v161 = vld [vmem:[%s1 + $0x204] sm:$0xf]
  %v162 = vld [vmem:[%s1 + $0x208] sm:$0xf]
  %v163 = vld [vmem:[%s1 + $0x20c] sm:$0xf]
  %v164 = vld [vmem:[%s1 + $0x210] sm:$0xf]
  %v165 = vld [vmem:[%s1 + $0x214] sm:$0xf]
  %v166 = vld [vmem:[%s1 + $0x218] sm:$0xf]
  %v167 = vld [vmem:[%s1 + $0x21c] sm:$0xf]
  %v168 = vld [vmem:[%s1 + $0x220] sm:$0xf]
  %v169 = vld [vmem:[%s1 + $0x224] sm:$0xf]
  %v170 = vld [vmem:[%s1 + $0x228] sm:$0xf]
  %v171 = vld [vmem:[%s1 + $0x22c] sm:$0xf]
  %v172 = vld [vmem:[%s1 + $0x230] sm:$0xf]
  %v173 = vld [vmem:[%s1 + $0x234] sm:$0xf]
  %v174 = vld [vmem:[%s1 + $0x238] sm:$0xf]
  %v175 = vld [vmem:[%s1 + $0x23c] sm:$0xf]
  %v196 = vunpack.c.l.b16 %v12
  %v197 = vunpack.c.h.b16 %v12
  %v198 = vunpack.c.l.b16 %v13
  %v199 = vunpack.c.h.b16 %v13
  %v200 = vunpack.c.l.b16 %v14
  %v201 = vunpack.c.h.b16 %v14
  %v202 = vunpack.c.l.b16 %v15
  %v203 = vunpack.c.h.b16 %v15
  %v204 = vunpack.c.l.b16 %v16
  %v205 = vunpack.c.l.b16 %v17
  %v206 = vunpack.c.h.b16 %v17
  %v207 = vunpack.c.l.b16 %v18
  %v208 = vunpack.c.h.b16 %v18
  %v209 = vunpack.c.l.b16 %v19
  %v210 = vunpack.c.h.b16 %v19
  %v211 = vunpack.c.l.b16 %v20
  %v212 = vunpack.c.h.b16 %v20
  %v213 = vunpack.c.l.b16 %v21
  %v214 = vunpack.c.l.b16 %v22
  %v215 = vunpack.c.h.b16 %v22
  %v216 = vunpack.c.l.b16 %v23
  %v217 = vunpack.c.h.b16 %v23
  %v218 = vunpack.c.l.b16 %v24
  %v219 = vunpack.c.h.b16 %v24
  %v220 = vunpack.c.l.b16 %v25
  %v221 = vunpack.c.h.b16 %v25
  %v222 = vunpack.c.l.b16 %v26
  %v223 = vunpack.c.l.b16 %v27
  %v224 = vunpack.c.h.b16 %v27
  %v225 = vunpack.c.l.b16 %v28
  %v226 = vunpack.c.h.b16 %v28
  %v227 = vunpack.c.l.b16 %v29
  %v228 = vunpack.c.h.b16 %v29
  %v229 = vunpack.c.l.b16 %v30
  %v230 = vunpack.c.h.b16 %v30
  %v231 = vunpack.c.l.b16 %v31
  %v232 = vpack.c.b16 %v205, %v196
  %v233 = vpack.c.b16 %v206, %v197
  %v234 = vpack.c.b16 %v207, %v198
  %v235 = vpack.c.b16 %v208, %v199
  %v236 = vpack.c.b16 %v209, %v200
  %v237 = vpack.c.b16 %v210, %v201
  %v238 = vpack.c.b16 %v211, %v202
  %v239 = vpack.c.b16 %v212, %v203
  %v240 = vpack.c.b16 %v213, %v204
  %v241 = vpack.c.b16 %v223, %v214
  %v242 = vpack.c.b16 %v224, %v215
  %v243 = vpack.c.b16 %v225, %v216
  %v244 = vpack.c.b16 %v226, %v217
  %v245 = vpack.c.b16 %v227, %v218
  %v246 = vpack.c.b16 %v228, %v219
  %v247 = vpack.c.b16 %v229, %v220
  %v248 = vpack.c.b16 %v230, %v221
  %v249 = vpack.c.b16 %v231, %v222
  %v412 = vunpack.c.l.b16 %v32
  %v413 = vunpack.c.l.b16 %v33
  %v414 = vunpack.c.l.b16 %v34
  %v415 = vunpack.c.l.b16 %v35
  %v416 = vunpack.c.l.b16 %v36
  %v417 = vunpack.c.l.b16 %v37
  %v418 = vunpack.c.l.b16 %v38
  %v419 = vunpack.c.l.b16 %v39
  %v420 = vunpack.c.l.b16 %v40
  %v421 = vunpack.c.l.b16 %v41
  %v422 = vunpack.c.l.b16 %v42
  %v423 = vunpack.c.l.b16 %v43
  %v424 = vunpack.c.l.b16 %v44
  %v425 = vunpack.c.l.b16 %v45
  %v426 = vunpack.c.l.b16 %v46
  %v427 = vunpack.c.l.b16 %v47
  %v428 = vunpack.c.l.b16 %v48
  %v429 = vunpack.c.l.b16 %v49
  %v430 = vunpack.c.l.b16 %v50
  %v431 = vunpack.c.l.b16 %v51
  %v432 = vunpack.c.l.b16 %v52
  %v433 = vunpack.c.l.b16 %v53
  %v434 = vunpack.c.l.b16 %v54
  %v435 = vunpack.c.l.b16 %v55
  %v436 = vunpack.c.l.b16 %v56
  %v437 = vunpack.c.l.b16 %v57
  %v438 = vunpack.c.l.b16 %v58
  %v439 = vunpack.c.l.b16 %v59
  %v440 = vunpack.c.l.b16 %v60
  %v441 = vunpack.c.l.b16 %v61
  %v442 = vunpack.c.l.b16 %v62
  %v443 = vunpack.c.l.b16 %v63
  %v444 = vunpack.c.l.b16 %v64
  %v445 = vunpack.c.l.b16 %v65
  %v446 = vunpack.c.l.b16 %v66
  %v447 = vunpack.c.l.b16 %v67
  %v448 = vunpack.c.l.b16 %v68
  %v449 = vunpack.c.l.b16 %v69
  %v450 = vunpack.c.l.b16 %v70
  %v451 = vunpack.c.l.b16 %v71
  %v452 = vunpack.c.l.b16 %v72
  %v453 = vunpack.c.l.b16 %v73
  %v454 = vunpack.c.l.b16 %v74
  %v455 = vunpack.c.l.b16 %v75
  %v456 = vunpack.c.l.b16 %v76
  %v457 = vunpack.c.l.b16 %v77
  %v458 = vunpack.c.l.b16 %v78
  %v459 = vunpack.c.l.b16 %v79
  %v460 = vunpack.c.l.b16 %v80
  %v461 = vunpack.c.l.b16 %v81
  %v462 = vunpack.c.l.b16 %v82
  %v463 = vunpack.c.l.b16 %v83
  %v464 = vunpack.c.l.b16 %v84
  %v465 = vunpack.c.l.b16 %v85
  %v466 = vunpack.c.l.b16 %v86
  %v467 = vunpack.c.l.b16 %v87
  %v468 = vunpack.c.l.b16 %v88
  %v469 = vunpack.c.l.b16 %v89
  %v470 = vunpack.c.l.b16 %v90
  %v471 = vunpack.c.l.b16 %v91
  %v472 = vunpack.c.l.b16 %v92
  %v473 = vunpack.c.l.b16 %v93
  %v474 = vunpack.c.l.b16 %v94
  %v475 = vunpack.c.l.b16 %v95
  %v476 = vunpack.c.l.b16 %v96
  %v477 = vunpack.c.l.b16 %v97
  %v478 = vunpack.c.l.b16 %v98
  %v479 = vunpack.c.l.b16 %v99
  %v480 = vunpack.c.l.b16 %v100
  %v481 = vunpack.c.l.b16 %v101
  %v482 = vunpack.c.l.b16 %v102
  %v483 = vunpack.c.l.b16 %v103
  %v484 = vunpack.c.l.b16 %v104
  %v485 = vunpack.c.l.b16 %v105
  %v486 = vunpack.c.l.b16 %v106
  %v487 = vunpack.c.l.b16 %v107
  %v488 = vunpack.c.l.b16 %v108
  %v489 = vunpack.c.l.b16 %v109
  %v490 = vunpack.c.l.b16 %v110
  %v491 = vunpack.c.l.b16 %v111
  %v492 = vunpack.c.l.b16 %v112
  %v493 = vunpack.c.l.b16 %v113
  %v494 = vunpack.c.l.b16 %v114
  %v495 = vunpack.c.l.b16 %v115
  %v496 = vunpack.c.l.b16 %v116
  %v497 = vunpack.c.l.b16 %v117
  %v498 = vunpack.c.l.b16 %v118
  %v499 = vunpack.c.l.b16 %v119
  %v500 = vunpack.c.l.b16 %v120
  %v501 = vunpack.c.l.b16 %v121
  %v502 = vunpack.c.l.b16 %v122
  %v503 = vunpack.c.l.b16 %v123
  %v504 = vunpack.c.l.b16 %v124
  %v505 = vunpack.c.l.b16 %v125
  %v506 = vunpack.c.l.b16 %v126
  %v507 = vunpack.c.l.b16 %v127
  %v508 = vunpack.c.l.b16 %v128
  %v509 = vunpack.c.l.b16 %v129
  %v510 = vunpack.c.l.b16 %v130
  %v511 = vunpack.c.l.b16 %v131
  %v512 = vunpack.c.l.b16 %v132
  %v513 = vunpack.c.l.b16 %v133
  %v514 = vunpack.c.l.b16 %v134
  %v515 = vunpack.c.l.b16 %v135
  %v516 = vunpack.c.l.b16 %v136
  %v517 = vunpack.c.l.b16 %v137
  %v518 = vunpack.c.l.b16 %v138
  %v519 = vunpack.c.l.b16 %v139
  %v520 = vunpack.c.l.b16 %v140
  %v521 = vunpack.c.l.b16 %v141
  %v522 = vunpack.c.l.b16 %v142
  %v523 = vunpack.c.l.b16 %v143
  %v524 = vunpack.c.l.b16 %v144
  %v525 = vunpack.c.l.b16 %v145
  %v526 = vunpack.c.l.b16 %v146
  %v527 = vunpack.c.l.b16 %v147
  %v528 = vunpack.c.l.b16 %v148
  %v529 = vunpack.c.l.b16 %v149
  %v530 = vunpack.c.l.b16 %v150
  %v531 = vunpack.c.l.b16 %v151
  %v532 = vunpack.c.l.b16 %v152
  %v533 = vunpack.c.l.b16 %v153
  %v534 = vunpack.c.l.b16 %v154
  %v535 = vunpack.c.l.b16 %v155
  %v536 = vunpack.c.l.b16 %v156
  %v537 = vunpack.c.l.b16 %v157
  %v538 = vunpack.c.l.b16 %v158
  %v539 = vunpack.c.l.b16 %v159
  %v540 = vunpack.c.l.b16 %v160
  %v541 = vunpack.c.l.b16 %v161
  %v542 = vunpack.c.l.b16 %v162
  %v543 = vunpack.c.l.b16 %v163
  %v544 = vunpack.c.l.b16 %v164
  %v545 = vunpack.c.l.b16 %v165
  %v546 = vunpack.c.l.b16 %v166
  %v547 = vunpack.c.l.b16 %v167
  %v548 = vunpack.c.l.b16 %v168
  %v549 = vunpack.c.l.b16 %v169
  %v550 = vunpack.c.l.b16 %v170
  %v551 = vunpack.c.l.b16 %v171
  %v552 = vunpack.c.l.b16 %v172
  %v553 = vunpack.c.l.b16 %v173
  %v554 = vunpack.c.l.b16 %v174
  %v555 = vunpack.c.l.b16 %v175
  %v556 = vpack.c.b16 %v413, %v412
  %v557 = vpack.c.b16 %v415, %v414
  %v558 = vpack.c.b16 %v417, %v416
  %v559 = vpack.c.b16 %v419, %v418
  %v560 = vpack.c.b16 %v421, %v420
  %v561 = vpack.c.b16 %v423, %v422
  %v562 = vpack.c.b16 %v425, %v424
  %v563 = vpack.c.b16 %v427, %v426
  %v564 = vpack.c.b16 %v429, %v428
  %v565 = vpack.c.b16 %v431, %v430
  %v566 = vpack.c.b16 %v433, %v432
  %v567 = vpack.c.b16 %v435, %v434
  %v568 = vpack.c.b16 %v437, %v436
  %v569 = vpack.c.b16 %v439, %v438
  %v570 = vpack.c.b16 %v441, %v440
  %v571 = vpack.c.b16 %v443, %v442
  %v572 = vpack.c.b16 %v445, %v444
  %v573 = vpack.c.b16 %v447, %v446
  %v574 = vpack.c.b16 %v449, %v448
  %v575 = vpack.c.b16 %v451, %v450
  %v576 = vpack.c.b16 %v453, %v452
  %v577 = vpack.c.b16 %v455, %v454
  %v578 = vpack.c.b16 %v457, %v456
  %v579 = vpack.c.b16 %v459, %v458
  %v580 = vpack.c.b16 %v461, %v460
  %v581 = vpack.c.b16 %v463, %v462
  %v582 = vpack.c.b16 %v465, %v464
  %v583 = vpack.c.b16 %v467, %v466
  %v584 = vpack.c.b16 %v469, %v468
  %v585 = vpack.c.b16 %v471, %v470
  %v586 = vpack.c.b16 %v473, %v472
  %v587 = vpack.c.b16 %v475, %v474
  %v588 = vpack.c.b16 %v477, %v476
  %v589 = vpack.c.b16 %v479, %v478
  %v590 = vpack.c.b16 %v481, %v480
  %v591 = vpack.c.b16 %v483, %v482
  %v592 = vpack.c.b16 %v485, %v484
  %v593 = vpack.c.b16 %v487, %v486
  %v594 = vpack.c.b16 %v489, %v488
  %v595 = vpack.c.b16 %v491, %v490
  %v596 = vpack.c.b16 %v493, %v492
  %v597 = vpack.c.b16 %v495, %v494
  %v598 = vpack.c.b16 %v497, %v496
  %v599 = vpack.c.b16 %v499, %v498
  %v600 = vpack.c.b16 %v501, %v500
  %v601 = vpack.c.b16 %v503, %v502
  %v602 = vpack.c.b16 %v505, %v504
  %v603 = vpack.c.b16 %v507, %v506
  %v604 = vpack.c.b16 %v509, %v508
  %v605 = vpack.c.b16 %v511, %v510
  %v606 = vpack.c.b16 %v513, %v512
  %v607 = vpack.c.b16 %v515, %v514
  %v608 = vpack.c.b16 %v517, %v516
  %v609 = vpack.c.b16 %v519, %v518
  %v610 = vpack.c.b16 %v521, %v520
  %v611 = vpack.c.b16 %v523, %v522
  %v612 = vpack.c.b16 %v525, %v524
  %v613 = vpack.c.b16 %v527, %v526
  %v614 = vpack.c.b16 %v529, %v528
  %v615 = vpack.c.b16 %v531, %v530
  %v616 = vpack.c.b16 %v533, %v532
  %v617 = vpack.c.b16 %v535, %v534
  %v618 = vpack.c.b16 %v537, %v536
  %v619 = vpack.c.b16 %v539, %v538
  %v620 = vpack.c.b16 %v541, %v540
  %v621 = vpack.c.b16 %v543, %v542
  %v622 = vpack.c.b16 %v545, %v544
  %v623 = vpack.c.b16 %v547, %v546
  %v624 = vpack.c.b16 %v549, %v548
  %v625 = vpack.c.b16 %v551, %v550
  %v626 = vpack.c.b16 %v553, %v552
  %v627 = vpack.c.b16 %v555, %v554
  %700 = vmatprep.subr.bf16.mxu0 0
  %701 = vmatpush1.bf16.msra.mxu0 %v556
  %702 = vmatprep.subr.bf16.mxu0 0
  %703 = vmatpush1.bf16.msra.mxu0 %v557
  %704 = vmatprep.subr.bf16.mxu0 0
  %705 = vmatpush1.bf16.msra.mxu0 %v558
  %706 = vmatprep.subr.bf16.mxu0 0
  %707 = vmatpush1.bf16.msra.mxu0 %v559
  %708 = vmatprep.subr.bf16.mxu0 0
  %709 = vmatpush1.bf16.msra.mxu0 %v560
  %710 = vmatprep.subr.bf16.mxu0 0
  %711 = vmatpush1.bf16.msra.mxu0 %v561
  %712 = vmatprep.subr.bf16.mxu0 0
  %713 = vmatpush1.bf16.msra.mxu0 %v562
  %714 = vmatprep.subr.bf16.mxu0 0
  %715 = vmatpush1.bf16.msra.mxu0 %v563
  %716 = vmatprep.subr.bf16.mxu0 0
  %717 = vmatpush1.bf16.msra.mxu0 %v564
  %718 = vmatprep.subr.bf16.mxu0 0
  %719 = vmatpush1.bf16.msra.mxu0 %v565
  %720 = vmatprep.subr.bf16.mxu0 0
  %721 = vmatpush1.bf16.msra.mxu0 %v566
  %722 = vmatprep.subr.bf16.mxu0 0
  %723 = vmatpush1.bf16.msra.mxu0 %v567
  %724 = vmatprep.subr.bf16.mxu0 0
  %725 = vmatpush1.bf16.msra.mxu0 %v568
  %726 = vmatprep.subr.bf16.mxu0 0
  %727 = vmatpush1.bf16.msra.mxu0 %v569
  %728 = vmatprep.subr.bf16.mxu0 0
  %729 = vmatpush1.bf16.msra.mxu0 %v570
  %730 = vmatprep.subr.bf16.mxu0 0
  %731 = vmatpush1.bf16.msra.mxu0 %v571
  %732 = vmatprep.mubr.bf16.mxu0 %v233
  %733 = vmatmul.mubr.bf16.gmra.mrb[0].mxu0 %v232
  %v734 = vpop.f32.mrb[0].mxu0
  %v735 = vadd.f32 0.0, %v734
  %v736 = vpop.f32.mrb[0].mxu0
  %v737 = vpop.f32.mrb[0].mxu0
  %v738 = vadd.f32 0.0, %v737
  %v739 = vpop.f32.mrb[0].mxu0
  %740 = vmatprep.mubr.bf16.mxu0 %v242
  %741 = vmatmul.mubr.bf16.gmra.mrb[0].mxu0 %v241
  %v742 = vpop.f32.mrb[0].mxu0
  %v743 = vadd.f32 0.0, %v742
  %v744 = vpop.f32.mrb[0].mxu0
  %v745 = vpop.f32.mrb[0].mxu0
  %v746 = vadd.f32 0.0, %v745
  %v747 = vpop.f32.mrb[0].mxu0
  %748 = vdwg.mxu0
  %749 = vmatprep.subr.bf16.mxu0 0
  %750 = vmatpush1.bf16.msra.mxu0 %v572
  %751 = vmatprep.subr.bf16.mxu0 0
  %752 = vmatpush1.bf16.msra.mxu0 %v573
  %753 = vmatprep.subr.bf16.mxu0 0
  %754 = vmatpush1.bf16.msra.mxu0 %v574
  %755 = vmatprep.subr.bf16.mxu0 0
  %756 = vmatpush1.bf16.msra.mxu0 %v575
  %757 = vmatprep.subr.bf16.mxu0 0
  %758 = vmatpush1.bf16.msra.mxu0 %v576
  %759 = vmatprep.subr.bf16.mxu0 0
  %760 = vmatpush1.bf16.msra.mxu0 %v577
  %761 = vmatprep.subr.bf16.mxu0 0
  %762 = vmatpush1.bf16.msra.mxu0 %v578
  %763 = vmatprep.subr.bf16.mxu0 0
  %764 = vmatpush1.bf16.msra.mxu0 %v579
  %765 = vmatprep.subr.bf16.mxu0 0
  %766 = vmatpush1.bf16.msra.mxu0 %v580
  %767 = vmatprep.subr.bf16.mxu0 0
  %768 = vmatpush1.bf16.msra.mxu0 %v581
  %769 = vmatprep.subr.bf16.mxu0 0
  %770 = vmatpush1.bf16.msra.mxu0 %v582
  %771 = vmatprep.subr.bf16.mxu0 0
  %772 = vmatpush1.bf16.msra.mxu0 %v583
  %773 = vmatprep.subr.bf16.mxu0 0
  %774 = vmatpush1.bf16.msra.mxu0 %v584
  %775 = vmatprep.subr.bf16.mxu0 0
  %776 = vmatpush1.bf16.msra.mxu0 %v585
  %777 = vmatprep.subr.bf16.mxu0 0
  %778 = vmatpush1.bf16.msra.mxu0 %v586
  %779 = vmatprep.subr.bf16.mxu0 0
  %780 = vmatpush1.bf16.msra.mxu0 %v587
  %781 = vmatprep.mubr.bf16.mxu0 %v235
  %782 = vmatmul.mubr.bf16.gmra.mrb[0].mxu0 %v234
  %v783 = vpop.f32.mrb[0].mxu0
  %v784 = vadd.f32 %v735, %v783
  %v785 = vpop.f32.mrb[0].mxu0
  %v786 = vpop.f32.mrb[0].mxu0
  %v787 = vadd.f32 %v738, %v786
  %v788 = vpop.f32.mrb[0].mxu0
  %789 = vmatprep.mubr.bf16.mxu0 %v244
  %790 = vmatmul.mubr.bf16.gmra.mrb[0].mxu0 %v243
  %v791 = vpop.f32.mrb[0].mxu0
  %v792 = vadd.f32 %v743, %v791
  %v793 = vpop.f32.mrb[0].mxu0
  %v794 = vpop.f32.mrb[0].mxu0
  %v795 = vadd.f32 %v746, %v794
  %v796 = vpop.f32.mrb[0].mxu0
  %797 = vdwg.mxu0
  %798 = vmatprep.subr.bf16.mxu0 0
  %799 = vmatpush1.bf16.msra.mxu0 %v588
  %800 = vmatprep.subr.bf16.mxu0 0
  %801 = vmatpush1.bf16.msra.mxu0 %v589
  %802 = vmatprep.subr.bf16.mxu0 0
  %803 = vmatpush1.bf16.msra.mxu0 %v590
  %804 = vmatprep.subr.bf16.mxu0 0
  %805 = vmatpush1.bf16.msra.mxu0 %v591
  %806 = vmatprep.subr.bf16.mxu0 0
  %807 = vmatpush1.bf16.msra.mxu0 %v592
  %808 = vmatprep.subr.bf16.mxu0 0
  %809 = vmatpush1.bf16.msra.mxu0 %v593
  %810 = vmatprep.subr.bf16.mxu0 0
  %811 = vmatpush1.bf16.msra.mxu0 %v594
  %812 = vmatprep.subr.bf16.mxu0 0
  %813 = vmatpush1.bf16.msra.mxu0 %v595
  %814 = vmatprep.subr.bf16.mxu0 0
  %815 = vmatpush1.bf16.msra.mxu0 %v596
  %816 = vmatprep.subr.bf16.mxu0 0
  %817 = vmatpush1.bf16.msra.mxu0 %v597
  %818 = vmatprep.subr.bf16.mxu0 0
  %819 = vmatpush1.bf16.msra.mxu0 %v598
  %820 = vmatprep.subr.bf16.mxu0 0
  %821 = vmatpush1.bf16.msra.mxu0 %v599
  %822 = vmatprep.subr.bf16.mxu0 0
  %823 = vmatpush1.bf16.msra.mxu0 %v600
  %824 = vmatprep.subr.bf16.mxu0 0
  %825 = vmatpush1.bf16.msra.mxu0 %v601
  %826 = vmatprep.subr.bf16.mxu0 0
  %827 = vmatpush1.bf16.msra.mxu0 %v602
  %828 = vmatprep.subr.bf16.mxu0 0
  %829 = vmatpush1.bf16.msra.mxu0 %v603
  %830 = vmatprep.mubr.bf16.mxu0 %v237
  %831 = vmatmul.mubr.bf16.gmra.mrb[0].mxu0 %v236
  %v832 = vpop.f32.mrb[0].mxu0
  %v833 = vadd.f32 %v784, %v832
  %v834 = vpop.f32.mrb[0].mxu0
  %v835 = vpop.f32.mrb[0].mxu0
  %v836 = vadd.f32 %v787, %v835
  %v837 = vpop.f32.mrb[0].mxu0
  %838 = vmatprep.mubr.bf16.mxu0 %v246
  %839 = vmatmul.mubr.bf16.gmra.mrb[0].mxu0 %v245
  %v840 = vpop.f32.mrb[0].mxu0
  %v841 = vadd.f32 %v792, %v840
  %v842 = vpop.f32.mrb[0].mxu0
  %v843 = vpop.f32.mrb[0].mxu0
  %v844 = vadd.f32 %v795, %v843
  %v845 = vpop.f32.mrb[0].mxu0
  %846 = vdwg.mxu0
  %847 = vmatprep.subr.bf16.mxu0 0
  %848 = vmatpush1.bf16.msra.mxu0 %v604
  %849 = vmatprep.subr.bf16.mxu0 0
  %850 = vmatpush1.bf16.msra.mxu0 %v605
  %851 = vmatprep.subr.bf16.mxu0 0
  %852 = vmatpush1.bf16.msra.mxu0 %v606
  %853 = vmatprep.subr.bf16.mxu0 0
  %854 = vmatpush1.bf16.msra.mxu0 %v607
  %855 = vmatprep.subr.bf16.mxu0 0
  %856 = vmatpush1.bf16.msra.mxu0 %v608
  %857 = vmatprep.subr.bf16.mxu0 0
  %858 = vmatpush1.bf16.msra.mxu0 %v609
  %859 = vmatprep.subr.bf16.mxu0 0
  %860 = vmatpush1.bf16.msra.mxu0 %v610
  %861 = vmatprep.subr.bf16.mxu0 0
  %862 = vmatpush1.bf16.msra.mxu0 %v611
  %863 = vmatprep.subr.bf16.mxu0 0
  %864 = vmatpush1.bf16.msra.mxu0 %v612
  %865 = vmatprep.subr.bf16.mxu0 0
  %866 = vmatpush1.bf16.msra.mxu0 %v613
  %867 = vmatprep.subr.bf16.mxu0 0
  %868 = vmatpush1.bf16.msra.mxu0 %v614
  %869 = vmatprep.subr.bf16.mxu0 0
  %870 = vmatpush1.bf16.msra.mxu0 %v615
  %871 = vmatprep.subr.bf16.mxu0 0
  %872 = vmatpush1.bf16.msra.mxu0 %v616
  %873 = vmatprep.subr.bf16.mxu0 0
  %874 = vmatpush1.bf16.msra.mxu0 %v617
  %875 = vmatprep.subr.bf16.mxu0 0
  %876 = vmatpush1.bf16.msra.mxu0 %v618
  %877 = vmatprep.subr.bf16.mxu0 0
  %878 = vmatpush1.bf16.msra.mxu0 %v619
  %879 = vmatprep.mubr.bf16.mxu0 %v239
  %880 = vmatmul.mubr.bf16.gmra.mrb[0].mxu0 %v238
  %v881 = vpop.f32.mrb[0].mxu0
  %v882 = vadd.f32 %v833, %v881
  %v883 = vpop.f32.mrb[0].mxu0
  %v884 = vpop.f32.mrb[0].mxu0
  %v885 = vadd.f32 %v836, %v884
  %v886 = vpop.f32.mrb[0].mxu0
  %887 = vmatprep.mubr.bf16.mxu0 %v248
  %888 = vmatmul.mubr.bf16.gmra.mrb[0].mxu0 %v247
  %v889 = vpop.f32.mrb[0].mxu0
  %v890 = vadd.f32 %v841, %v889
  %v891 = vpop.f32.mrb[0].mxu0
  %v892 = vpop.f32.mrb[0].mxu0
  %v893 = vadd.f32 %v844, %v892
  %v894 = vpop.f32.mrb[0].mxu0
  %895 = vdwg.mxu0
  %896 = vmatprep.subr.bf16.mxu0 0
  %897 = vmatpush1.bf16.msra.mxu0 %v620
  %898 = vmatprep.subr.bf16.mxu0 0
  %899 = vmatpush1.bf16.msra.mxu0 %v621
  %900 = vmatprep.subr.bf16.mxu0 0
  %901 = vmatpush1.bf16.msra.mxu0 %v622
  %902 = vmatprep.subr.bf16.mxu0 0
  %903 = vmatpush1.bf16.msra.mxu0 %v623
  %904 = vmatprep.subr.bf16.mxu0 0
  %905 = vmatpush1.bf16.msra.mxu0 %v624
  %906 = vmatprep.subr.bf16.mxu0 0
  %907 = vmatpush1.bf16.msra.mxu0 %v625
  %908 = vmatprep.subr.bf16.mxu0 0
  %909 = vmatpush1.bf16.msra.mxu0 %v626
  %910 = vmatprep.subr.bf16.mxu0 0
  %911 = vmatpush1.bf16.msra.mxu0 %v627
  %912 = vmatprep.subr.bf16.mxu0 0
  %913 = vmatpush1.bf16.msra.mxu0 0
  %914 = vmatprep.subr.bf16.mxu0 0
  %915 = vmatpush1.bf16.msra.mxu0 0
  %916 = vmatprep.subr.bf16.mxu0 0
  %917 = vmatpush1.bf16.msra.mxu0 0
  %918 = vmatprep.subr.bf16.mxu0 0
  %919 = vmatpush1.bf16.msra.mxu0 0
  %920 = vmatprep.subr.bf16.mxu0 0
  %921 = vmatpush1.bf16.msra.mxu0 0
  %922 = vmatprep.subr.bf16.mxu0 0
  %923 = vmatpush1.bf16.msra.mxu0 0
  %924 = vmatprep.subr.bf16.mxu0 0
  %925 = vmatpush1.bf16.msra.mxu0 0
  %926 = vmatprep.subr.bf16.mxu0 0
  %927 = vmatpush1.bf16.msra.mxu0 0
  %928 = vmatprep.mubr.bf16.mxu0 0
  %929 = vmatmul.mubr.bf16.gmra.mrb[0].mxu0 %v240
  %v930 = vpop.f32.mrb[0].mxu0
  %v931 = vadd.f32 %v882, %v930
  %v932 = vpop.f32.mrb[0].mxu0
  %v933 = vpop.f32.mrb[0].mxu0
  %v934 = vadd.f32 %v885, %v933
  %v935 = vpop.f32.mrb[0].mxu0
  %936 = vmatprep.mubr.bf16.mxu0 0
  %937 = vmatmul.mubr.bf16.gmra.mrb[0].mxu0 %v249
  %v938 = vpop.f32.mrb[0].mxu0
  %v939 = vadd.f32 %v890, %v938
  %v940 = vpop.f32.mrb[0].mxu0
  %v941 = vpop.f32.mrb[0].mxu0
  %v942 = vadd.f32 %v893, %v941
  %v943 = vpop.f32.mrb[0].mxu0
  %944 = vdwg.mxu0
  %v945 = vadd.f32 %v931, %v934
  %v946 = vadd.f32 %v945, %v939
  %v947 = vadd.f32 %v946, %v942
  %v948 = vrot.slane %v947, 4
  %v949 = vadd.f32 %v947, %v948
  %v950 = vrot.slane %v949, 2
  %v951 = vadd.f32 %v949, %v950
  %v952 = vrot.slane %v951, 1
  %v953 = vadd.f32 %v951, %v952
  %v954 = vmul.f32 %v953, 0.055555556
  %v955 = vlaneseq
  %v956 = vshrl.u32 %v955, 7
  %v957 = vadd.s32 %v956, 8
  %v958 = vadd.s32 %v956, 16
  %v959 = vadd.s32 %v956, 24
  %vm960 = vcmp.lt.s32.totalorder %v956, 18
  %vm961 = vcmp.lt.s32.totalorder %v957, 18
  %vm962 = vcmp.lt.s32.totalorder %v958, 18
  %vm963 = vcmp.lt.s32.totalorder %v959, 18
  %v964 = vsub.f32 %v931, %v954
  %v965 = vsub.f32 %v934, %v954
  %v966 = vsub.f32 %v939, %v954
  %v967 = vsub.f32 %v942, %v954
  %v968 = vsel %vm960, 1, 0
  %v969 = vsel %vm961, 1, 0
  %v970 = vsel %vm962, 1, 0
  %v971 = vsel %vm963, 1, 0
  %vm972 = vcmp.eq.s32.totalorder %v968, 1
  %vm973 = vcmp.eq.s32.totalorder %v969, 1
  %vm974 = vcmp.eq.s32.totalorder %v970, 1
  %vm975 = vcmp.eq.s32.totalorder %v971, 1
  %v976 = vsel %vm972, %v964, 0.0
  %v977 = vsel %vm973, %v965, 0.0
  %v978 = vsel %vm974, %v966, 0.0
  %v979 = vsel %vm975, %v967, 0.0
  %v980 = vmul.f32 %v976, %v976
  %v981 = vmul.f32 %v977, %v977
  %v982 = vmul.f32 %v978, %v978
  %v983 = vmul.f32 %v979, %v979
  %v984 = vadd.f32 %v980, %v981
  %v985 = vadd.f32 %v984, %v982
  %v986 = vadd.f32 %v985, %v983
  %v987 = vrot.slane %v986, 4
  %v988 = vadd.f32 %v986, %v987
  %v989 = vrot.slane %v988, 2
  %v990 = vadd.f32 %v988, %v989
  %v991 = vrot.slane %v990, 1
  %v992 = vadd.f32 %v990, %v991
  %v993 = vmul.f32 %v992, 0.055555556
  %v994 = vadd.f32 %v993, 1e-05
  %v995 = vrsqrt.pop %v994
  %v996 = vmul.f32 %v976, %v995
  %v997 = vmul.f32 %v977, %v995
  %v998 = vmul.f32 %v978, %v995
  %v999 = vmul.f32 %v979, %v995
  %v1000 = vmax.f32 %v996, 0.0
  %v1001 = vmax.f32 %v997, 0.0
  %v1002 = vmax.f32 %v998, 0.0
  %v1003 = vmax.f32 %v999, 0.0
  %1004 = vst [vmem:[%s2] sm:$0xff] %v1000
  %1005 = vst [vmem:[%s2 + $0x8] sm:$0xff] %v1001
  %1006 = vst [vmem:[%s2 + $0x10] sm:$0xff] %v1002
  %1007 = vst [vmem:[%s2 + $0x18] sm:$0xff] %v1003
  // Predicated region
  $region10: #{resnet_forward.16} parent=0 // pred_check
    _
  $region11: #{resnet_forward.16} parent=0 // pred_check_branch
    %1009 = sbr.rel (0) target = $region13
  $region12: #{resnet_forward.16} parent=0 // pred_region
    _
  $region13: #{resnet_forward.16} parent=0 // pred_fallthru
    _
  // Predicated region
  $region14: #{resnet_forward.16} parent=0 // pred_check
    _
  $region15: #{resnet_forward.16} parent=0 // pred_check_branch
    %1011 = sbr.rel (0) target = $region17
  $region16: #{resnet_forward.16} parent=0 // pred_region
    _
  $region17: #{resnet_forward.16} parent=0 // pred_fallthru
    _

// kernel: resnet_forward.17
$region0: #{resnet_forward.17}
  #allocation0 [shape = 'u32[]', space=smem, size = 0x4, offset = 0x4, fixed_abs, tag = 'smem constant byte address 0x4 - core index']
  #allocation1 [shape = 'u32[144,128]{1,0:T(1,128)}', space=vmem, size = 0x12000, scoped, tag = 'internal scratch']
  %s0 = inlined_call_operand.vmem [shape: bf16[32,128], index: 0, kind: input, shape index: {}]
  %s1 = inlined_call_operand.vmem [shape: bf16[128,512], index: 1, kind: input, shape index: {}]
  %s2 = inlined_call_operand.vmem [shape: f32[32,512], index: 2, kind: input, shape index: {}]
  %s3 = inlined_call_operand.vmem [shape: f32[32,512], index: 3, kind: output, shape index: {}]
  %s4 = sld [smem:[#allocation0]]
  $region22: #{resnet_forward.17} parent=0
    _
  %s6 = ssub.s32 1, %s4
  %s7 = scalar_select 0, %s6, %s4
  // Predicated region
  $region2: #{resnet_forward.17} parent=0 // pred_check
    _
  $region3: #{resnet_forward.17} parent=0 // pred_check_branch
    %9 = sbr.rel (0) target = $region5
  $region4: #{resnet_forward.17} parent=0 // pred_region
    _
  $region5: #{resnet_forward.17} parent=0 // pred_fallthru
    _
  // Predicated region
  $region6: #{resnet_forward.17} parent=0 // pred_check
    _
  $region7: #{resnet_forward.17} parent=0 // pred_check_branch
    %11 = sbr.rel (0) target = $region9
  $region8: #{resnet_forward.17} parent=0 // pred_region
    _
  $region9: #{resnet_forward.17} parent=0 // pred_fallthru
    _
  // Predicated region
  $region10: #{resnet_forward.17} parent=0 // pred_check
    _
  $region11: #{resnet_forward.17} parent=0 // pred_check_branch
    %13 = sbr.rel (0) target = $region13
  $region12: #{resnet_forward.17} parent=0 // pred_region
    _
  $region13: #{resnet_forward.17} parent=0 // pred_fallthru
    _
  %v15 = vld [vmem:[%s0] sm:$0xf]
  %v16 = vld [vmem:[%s0 + $0x4] sm:$0xf]
  %v17 = vld [vmem:[%s0 + $0x8] sm:$0xf]
  %v18 = vld [vmem:[%s0 + $0xc] sm:$0xf]
  %v19 = vld [vmem:[%s1] sm:$0xff]
  %v20 = vld [vmem:[%s1 + $0x8] sm:$0xff]
  %v21 = vld [vmem:[%s1 + $0x10] sm:$0xff]
  %v22 = vld [vmem:[%s1 + $0x18] sm:$0xff]
  %v23 = vld [vmem:[%s1 + $0x20] sm:$0xff]
  %v24 = vld [vmem:[%s1 + $0x28] sm:$0xff]
  %v25 = vld [vmem:[%s1 + $0x30] sm:$0xff]
  %v26 = vld [vmem:[%s1 + $0x38] sm:$0xff]
  %v27 = vld [vmem:[%s1 + $0x40] sm:$0xff]
  %v28 = vld [vmem:[%s1 + $0x48] sm:$0xff]
  %v29 = vld [vmem:[%s1 + $0x50] sm:$0xff]
  %v30 = vld [vmem:[%s1 + $0x58] sm:$0xff]
  %v31 = vld [vmem:[%s1 + $0x60] sm:$0xff]
  %v32 = vld [vmem:[%s1 + $0x68] sm:$0xff]
  %v33 = vld [vmem:[%s1 + $0x70] sm:$0xff]
  %v34 = vld [vmem:[%s1 + $0x78] sm:$0xff]
  %v35 = vld [vmem:[%s1 + $0x80] sm:$0xff]
  %v36 = vld [vmem:[%s1 + $0x88] sm:$0xff]
  %v37 = vld [vmem:[%s1 + $0x90] sm:$0xff]
  %v38 = vld [vmem:[%s1 + $0x98] sm:$0xff]
  %v39 = vld [vmem:[%s1 + $0xa0] sm:$0xff]
  %v40 = vld [vmem:[%s1 + $0xa8] sm:$0xff]
  %v41 = vld [vmem:[%s1 + $0xb0] sm:$0xff]
  %v42 = vld [vmem:[%s1 + $0xb8] sm:$0xff]
  %v43 = vld [vmem:[%s1 + $0xc0] sm:$0xff]
  %v44 = vld [vmem:[%s1 + $0xc8] sm:$0xff]
  %v45 = vld [vmem:[%s1 + $0xd0] sm:$0xff]
  %v46 = vld [vmem:[%s1 + $0xd8] sm:$0xff]
  %v47 = vld [vmem:[%s1 + $0xe0] sm:$0xff]
  %v48 = vld [vmem:[%s1 + $0xe8] sm:$0xff]
  %v49 = vld [vmem:[%s1 + $0xf0] sm:$0xff]
  %v50 = vld [vmem:[%s1 + $0xf8] sm:$0xff]
  %v55 = vunpack.c.l.b16 %v15
  %v56 = vunpack.c.l.b16 %v16
  %v57 = vunpack.c.l.b16 %v17
  %v58 = vunpack.c.l.b16 %v18
  %v59 = vpack.c.b16 %v56, %v55
  %v60 = vpack.c.b16 %v58, %v57
  %v95 = vunpack.c.l.b16 %v19
  %v96 = vunpack.c.h.b16 %v19
  %v97 = vunpack.c.l.b16 %v20
  %v98 = vunpack.c.h.b16 %v20
  %v99 = vunpack.c.l.b16 %v21
  %v100 = vunpack.c.h.b16 %v21
  %v101 = vunpack.c.l.b16 %v22
  %v102 = vunpack.c.h.b16 %v22
  %v103 = vunpack.c.l.b16 %v23
  %v104 = vunpack.c.h.b16 %v23
  %v105 = vunpack.c.l.b16 %v24
  %v106 = vunpack.c.h.b16 %v24
  %v107 = vunpack.c.l.b16 %v25
  %v108 = vunpack.c.h.b16 %v25
  %v109 = vunpack.c.l.b16 %v26
  %v110 = vunpack.c.h.b16 %v26
  %v111 = vunpack.c.l.b16 %v27
  %v112 = vunpack.c.h.b16 %v27
  %v113 = vunpack.c.l.b16 %v28
  %v114 = vunpack.c.h.b16 %v28
  %v115 = vunpack.c.l.b16 %v29
  %v116 = vunpack.c.h.b16 %v29
  %v117 = vunpack.c.l.b16 %v30
  %v118 = vunpack.c.h.b16 %v30
  %v119 = vunpack.c.l.b16 %v31
  %v120 = vunpack.c.h.b16 %v31
  %v121 = vunpack.c.l.b16 %v32
  %v122 = vunpack.c.h.b16 %v32
  %v123 = vunpack.c.l.b16 %v33
  %v124 = vunpack.c.h.b16 %v33
  %v125 = vunpack.c.l.b16 %v34
  %v126 = vunpack.c.h.b16 %v34
  %v127 = vunpack.c.l.b16 %v35
  %v128 = vunpack.c.h.b16 %v35
  %v129 = vunpack.c.l.b16 %v36
  %v130 = vunpack.c.h.b16 %v36
  %v131 = vunpack.c.l.b16 %v37
  %v132 = vunpack.c.h.b16 %v37
  %v133 = vunpack.c.l.b16 %v38
  %v134 = vunpack.c.h.b16 %v38
  %v135 = vunpack.c.l.b16 %v39
  %v136 = vunpack.c.h.b16 %v39
  %v137 = vunpack.c.l.b16 %v40
  %v138 = vunpack.c.h.b16 %v40
  %v139 = vunpack.c.l.b16 %v41
  %v140 = vunpack.c.h.b16 %v41
  %v141 = vunpack.c.l.b16 %v42
  %v142 = vunpack.c.h.b16 %v42
  %v143 = vunpack.c.l.b16 %v43
  %v144 = vunpack.c.h.b16 %v43
  %v145 = vunpack.c.l.b16 %v44
  %v146 = vunpack.c.h.b16 %v44
  %v147 = vunpack.c.l.b16 %v45
  %v148 = vunpack.c.h.b16 %v45
  %v149 = vunpack.c.l.b16 %v46
  %v150 = vunpack.c.h.b16 %v46
  %v151 = vunpack.c.l.b16 %v47
  %v152 = vunpack.c.h.b16 %v47
  %v153 = vunpack.c.l.b16 %v48
  %v154 = vunpack.c.h.b16 %v48
  %v155 = vunpack.c.l.b16 %v49
  %v156 = vunpack.c.h.b16 %v49
  %v157 = vunpack.c.l.b16 %v50
  %v158 = vunpack.c.h.b16 %v50
  %v159 = vpack.c.b16 %v99, %v95
  %v160 = vpack.c.b16 %v100, %v96
  %v161 = vpack.c.b16 %v101, %v97
  %v162 = vpack.c.b16 %v102, %v98
  %v163 = vpack.c.b16 %v107, %v103
  %v164 = vpack.c.b16 %v108, %v104
  %v165 = vpack.c.b16 %v109, %v105
  %v166 = vpack.c.b16 %v110, %v106
  %v167 = vpack.c.b16 %v115, %v111
  %v168 = vpack.c.b16 %v116, %v112
  %v169 = vpack.c.b16 %v117, %v113
  %v170 = vpack.c.b16 %v118, %v114
  %v171 = vpack.c.b16 %v123, %v119
  %v172 = vpack.c.b16 %v124, %v120
  %v173 = vpack.c.b16 %v125, %v121
  %v174 = vpack.c.b16 %v126, %v122
  %v175 = vpack.c.b16 %v131, %v127
  %v176 = vpack.c.b16 %v132, %v128
  %v177 = vpack.c.b16 %v133, %v129
  %v178 = vpack.c.b16 %v134, %v130
  %v179 = vpack.c.b16 %v139, %v135
  %v180 = vpack.c.b16 %v140, %v136
  %v181 = vpack.c.b16 %v141, %v137
  %v182 = vpack.c.b16 %v142, %v138
  %v183 = vpack.c.b16 %v147, %v143
  %v184 = vpack.c.b16 %v148, %v144
  %v185 = vpack.c.b16 %v149, %v145
  %v186 = vpack.c.b16 %v150, %v146
  %v187 = vpack.c.b16 %v155, %v151
  %v188 = vpack.c.b16 %v156, %v152
  %v189 = vpack.c.b16 %v157, %v153
  %v190 = vpack.c.b16 %v158, %v154
  %223 = vmatprep.subr.bf16.mxu0 %v160
  %224 = vmatpush1.bf16.msra.mxu0 %v159
  %225 = vmatprep.subr.bf16.mxu0 %v164
  %226 = vmatpush1.bf16.msra.mxu0 %v163
  %227 = vmatprep.subr.bf16.mxu0 %v168
  %228 = vmatpush1.bf16.msra.mxu0 %v167
  %229 = vmatprep.subr.bf16.mxu0 %v172
  %230 = vmatpush1.bf16.msra.mxu0 %v171
  %231 = vmatprep.subr.bf16.mxu0 %v176
  %232 = vmatpush1.bf16.msra.mxu0 %v175
  %233 = vmatprep.subr.bf16.mxu0 %v180
  %234 = vmatpush1.bf16.msra.mxu0 %v179
  %235 = vmatprep.subr.bf16.mxu0 %v184
  %236 = vmatpush1.bf16.msra.mxu0 %v183
  %237 = vmatprep.subr.bf16.mxu0 %v188
  %238 = vmatpush1.bf16.msra.mxu0 %v187
  %239 = vmatprep.subr.bf16.mxu0 0
  %240 = vmatpush1.bf16.msra.mxu0 0
  %241 = vmatprep.subr.bf16.mxu0 0
  %242 = vmatpush1.bf16.msra.mxu0 0
  %243 = vmatprep.subr.bf16.mxu0 0
  %244 = vmatpush1.bf16.msra.mxu0 0
  %245 = vmatprep.subr.bf16.mxu0 0
  %246 = vmatpush1.bf16.msra.mxu0 0
  %247 = vmatprep.subr.bf16.mxu0 0
  %248 = vmatpush1.bf16.msra.mxu0 0
  %249 = vmatprep.subr.bf16.mxu0 0
  %250 = vmatpush1.bf16.msra.mxu0 0
  %251 = vmatprep.subr.bf16.mxu0 0
  %252 = vmatpush1.bf16.msra.mxu0 0
  %253 = vmatprep.subr.bf16.mxu0 0
  %254 = vmatpush1.bf16.msra.mxu0 0
  %255 = vmatprep.mubr.bf16.mxu0 0
  %256 = vmatmul.mubr.bf16.gmra.mrb[0].mxu0 %v59
  %v257 = vpop.f32.mrb[0].mxu0
  %v258 = vadd.f32 0.0, %v257
  %v259 = vpop.f32.mrb[0].mxu0
  %v260 = vadd.f32 0.0, %v259
  %v261 = vpop.f32.mrb[0].mxu0
  %v262 = vadd.f32 0.0, %v261
  %v263 = vpop.f32.mrb[0].mxu0
  %v264 = vadd.f32 0.0, %v263
  %265 = vmatprep.mubr.bf16.mxu0 0
  %266 = vmatmul.mubr.bf16.gmra.mrb[0].mxu0 %v60
  %v267 = vpop.f32.mrb[0].mxu0
  %v268 = vadd.f32 0.0, %v267
  %v269 = vpop.f32.mrb[0].mxu0
  %v270 = vadd.f32 0.0, %v269
  %v271 = vpop.f32.mrb[0].mxu0
  %v272 = vadd.f32 0.0, %v271
  %v273 = vpop.f32.mrb[0].mxu0
  %v274 = vadd.f32 0.0, %v273
  %275 = vdwg.mxu0
  %276 = vmatprep.subr.bf16.mxu0 %v162
  %277 = vmatpush1.bf16.msra.mxu0 %v161
  %278 = vmatprep.subr.bf16.mxu0 %v166
  %279 = vmatpush1.bf16.msra.mxu0 %v165
  %280 = vmatprep.subr.bf16.mxu0 %v170
  %281 = vmatpush1.bf16.msra.mxu0 %v169
  %282 = vmatprep.subr.bf16.mxu0 %v174
  %283 = vmatpush1.bf16.msra.mxu0 %v173
  %284 = vmatprep.subr.bf16.mxu0 %v178
  %285 = vmatpush1.bf16.msra.mxu0 %v177
  %286 = vmatprep.subr.bf16.mxu0 %v182
  %287 = vmatpush1.bf16.msra.mxu0 %v181
  %288 = vmatprep.subr.bf16.mxu0 %v186
  %289 = vmatpush1.bf16.msra.mxu0 %v185
  %290 = vmatprep.subr.bf16.mxu0 %v190
  %291 = vmatpush1.bf16.msra.mxu0 %v189
  %292 = vmatprep.subr.bf16.mxu0 0
  %293 = vmatpush1.bf16.msra.mxu0 0
  %294 = vmatprep.subr.bf16.mxu0 0
  %295 = vmatpush1.bf16.msra.mxu0 0
  %296 = vmatprep.subr.bf16.mxu0 0
  %297 = vmatpush1.bf16.msra.mxu0 0
  %298 = vmatprep.subr.bf16.mxu0 0
  %299 = vmatpush1.bf16.msra.mxu0 0
  %300 = vmatprep.subr.bf16.mxu0 0
  %301 = vmatpush1.bf16.msra.mxu0 0
  %302 = vmatprep.subr.bf16.mxu0 0
  %303 = vmatpush1.bf16.msra.mxu0 0
  %304 = vmatprep.subr.bf16.mxu0 0
  %305 = vmatpush1.bf16.msra.mxu0 0
  %306 = vmatprep.subr.bf16.mxu0 0
  %307 = vmatpush1.bf16.msra.mxu0 0
  %308 = vmatprep.mubr.bf16.mxu0 0
  %309 = vmatmul.mubr.bf16.gmra.mrb[0].mxu0 %v59
  %v310 = vpop.f32.mrb[0].mxu0
  %v311 = vadd.f32 0.0, %v310
  %v312 = vpop.f32.mrb[0].mxu0
  %v313 = vadd.f32 0.0, %v312
  %v314 = vpop.f32.mrb[0].mxu0
  %v315 = vadd.f32 0.0, %v314
  %v316 = vpop.f32.mrb[0].mxu0
  %v317 = vadd.f32 0.0, %v316
  %318 = vmatprep.mubr.bf16.mxu0 0
  %319 = vmatmul.mubr.bf16.gmra.mrb[0].mxu0 %v60
  %v320 = vpop.f32.mrb[0].mxu0
  %v321 = vadd.f32 0.0, %v320
  %v322 = vpop.f32.mrb[0].mxu0
  %v323 = vadd.f32 0.0, %v322
  %v324 = vpop.f32.mrb[0].mxu0
  %v325 = vadd.f32 0.0, %v324
  %v326 = vpop.f32.mrb[0].mxu0
  %v327 = vadd.f32 0.0, %v326
  %328 = vdwg.mxu0
  %v329 = vadd.f32 %v258, %v262
  %v330 = vadd.f32 %v329, %v268
  %v331 = vadd.f32 %v330, %v272
  %v332 = vrot.slane %v331, 4
  %v333 = vadd.f32 %v331, %v332
  %v334 = vrot.slane %v333, 2
  %v335 = vadd.f32 %v333, %v334
  %v336 = vrot.slane %v335, 1
  %v337 = vadd.f32 %v335, %v336
  %v338 = vadd.f32 %v260, %v264
  %v339 = vadd.f32 %v338, %v270
  %v340 = vadd.f32 %v339, %v274
  %v341 = vrot.slane %v340, 4
  %v342 = vadd.f32 %v340, %v341
  %v343 = vrot.slane %v342, 2
  %v344 = vadd.f32 %v342, %v343
  %v345 = vrot.slane %v344, 1
  %v346 = vadd.f32 %v344, %v345
  %v347 = vadd.f32 %v311, %v315
  %v348 = vadd.f32 %v347, %v321
  %v349 = vadd.f32 %v348, %v325
  %v350 = vrot.slane %v349, 4
  %v351 = vadd.f32 %v349, %v350
  %v352 = vrot.slane %v351, 2
  %v353 = vadd.f32 %v351, %v352
  %v354 = vrot.slane %v353, 1
  %v355 = vadd.f32 %v353, %v354
  %v356 = vadd.f32 %v313, %v317
  %v357 = vadd.f32 %v356, %v323
  %v358 = vadd.f32 %v357, %v327
  %v359 = vrot.slane %v358, 4
  %v360 = vadd.f32 %v358, %v359
  %v361 = vrot.slane %v360, 2
  %v362 = vadd.f32 %v360, %v361
  %v363 = vrot.slane %v362, 1
  %v364 = vadd.f32 %v362, %v363
  %v365 = vmul.f32 %v337, 0.055555556
  %v366 = vmul.f32 %v346, 0.055555556
  %v367 = vmul.f32 %v355, 0.055555556
  %v368 = vmul.f32 %v364, 0.055555556
  %v369 = vlaneseq
  %v370 = vshrl.u32 %v369, 7
  %v371 = vadd.s32 %v370, 8
  %v372 = vadd.s32 %v370, 16
  %v373 = vadd.s32 %v370, 24
  %vm374 = vcmp.lt.s32.totalorder %v370, 18
  %vm375 = vcmp.lt.s32.totalorder %v371, 18
  %vm376 = vcmp.lt.s32.totalorder %v372, 18
  %vm377 = vcmp.lt.s32.totalorder %v373, 18
  %v378 = vsub.f32 %v258, %v365
  %v379 = vsub.f32 %v260, %v366
  %v380 = vsub.f32 %v311, %v367
  %v381 = vsub.f32 %v313, %v368
  %v382 = vsub.f32 %v262, %v365
  %v383 = vsub.f32 %v264, %v366
  %v384 = vsub.f32 %v315, %v367
  %v385 = vsub.f32 %v317, %v368
  %v386 = vsub.f32 %v268, %v365
  %v387 = vsub.f32 %v270, %v366
  %v388 = vsub.f32 %v321, %v367
  %v389 = vsub.f32 %v323, %v368
  %v390 = vsub.f32 %v272, %v365
  %v391 = vsub.f32 %v274, %v366
  %v392 = vsub.f32 %v325, %v367
  %v393 = vsub.f32 %v327, %v368
  %v394 = vsel %vm374, 1, 0
  %v395 = vsel %vm375, 1, 0
  %v396 = vsel %vm376, 1, 0
  %v397 = vsel %vm377, 1, 0
  %vm398 = vcmp.eq.s32.totalorder %v394, 1
  %vm399 = vcmp.eq.s32.totalorder %v395, 1
  %vm400 = vcmp.eq.s32.totalorder %v396, 1
  %vm401 = vcmp.eq.s32.totalorder %v397, 1
  %v402 = vsel %vm398, %v378, 0.0
  %v403 = vsel %vm398, %v379, 0.0
  %v404 = vsel %vm398, %v380, 0.0
  %v405 = vsel %vm398, %v381, 0.0
  %v406 = vsel %vm399, %v382, 0.0
  %v407 = vsel %vm399, %v383, 0.0
  %v408 = vsel %vm399, %v384, 0.0
  %v409 = vsel %vm399, %v385, 0.0
  %v410 = vsel %vm400, %v386, 0.0
  %v411 = vsel %vm400, %v387, 0.0
  %v412 = vsel %vm400, %v388, 0.0
  %v413 = vsel %vm400, %v389, 0.0
  %v414 = vsel %vm401, %v390, 0.0
  %v415 = vsel %vm401, %v391, 0.0
  %v416 = vsel %vm401, %v392, 0.0
  %v417 = vsel %vm401, %v393, 0.0
  %v418 = vmul.f32 %v402, %v402
  %v419 = vmul.f32 %v403, %v403
  %v420 = vmul.f32 %v404, %v404
  %v421 = vmul.f32 %v405, %v405
  %v422 = vmul.f32 %v406, %v406
  %v423 = vmul.f32 %v407, %v407
  %v424 = vmul.f32 %v408, %v408
  %v425 = vmul.f32 %v409, %v409
  %v426 = vmul.f32 %v410, %v410
  %v427 = vmul.f32 %v411, %v411
  %v428 = vmul.f32 %v412, %v412
  %v429 = vmul.f32 %v413, %v413
  %v430 = vmul.f32 %v414, %v414
  %v431 = vmul.f32 %v415, %v415
  %v432 = vmul.f32 %v416, %v416
  %v433 = vmul.f32 %v417, %v417
  %v434 = vadd.f32 %v418, %v422
  %v435 = vadd.f32 %v434, %v426
  %v436 = vadd.f32 %v435, %v430
  %v437 = vrot.slane %v436, 4
  %v438 = vadd.f32 %v436, %v437
  %v439 = vrot.slane %v438, 2
  %v440 = vadd.f32 %v438, %v439
  %v441 = vrot.slane %v440, 1
  %v442 = vadd.f32 %v440, %v441
  %v443 = vadd.f32 %v419, %v423
  %v444 = vadd.f32 %v443, %v427
  %v445 = vadd.f32 %v444, %v431
  %v446 = vrot.slane %v445, 4
  %v447 = vadd.f32 %v445, %v446
  %v448 = vrot.slane %v447, 2
  %v449 = vadd.f32 %v447, %v448
  %v450 = vrot.slane %v449, 1
  %v451 = vadd.f32 %v449, %v450
  %v452 = vadd.f32 %v420, %v424
  %v453 = vadd.f32 %v452, %v428
  %v454 = vadd.f32 %v453, %v432
  %v455 = vrot.slane %v454, 4
  %v456 = vadd.f32 %v454, %v455
  %v457 = vrot.slane %v456, 2
  %v458 = vadd.f32 %v456, %v457
  %v459 = vrot.slane %v458, 1
  %v460 = vadd.f32 %v458, %v459
  %v461 = vadd.f32 %v421, %v425
  %v462 = vadd.f32 %v461, %v429
  %v463 = vadd.f32 %v462, %v433
  %v464 = vrot.slane %v463, 4
  %v465 = vadd.f32 %v463, %v464
  %v466 = vrot.slane %v465, 2
  %v467 = vadd.f32 %v465, %v466
  %v468 = vrot.slane %v467, 1
  %v469 = vadd.f32 %v467, %v468
  %v470 = vmul.f32 %v442, 0.055555556
  %v471 = vmul.f32 %v451, 0.055555556
  %v472 = vmul.f32 %v460, 0.055555556
  %v473 = vmul.f32 %v469, 0.055555556
  %v474 = vadd.f32 %v470, 1e-05
  %v475 = vadd.f32 %v471, 1e-05
  %v476 = vadd.f32 %v472, 1e-05
  %v477 = vadd.f32 %v473, 1e-05
  %v478 = vrsqrt.pop %v474
  %v479 = vrsqrt.pop %v475
  %v480 = vrsqrt.pop %v476
  %v481 = vrsqrt.pop %v477
  %v482 = vmul.f32 %v402, %v478
  %v483 = vmul.f32 %v403, %v479
  %v484 = vmul.f32 %v404, %v480
  %v485 = vmul.f32 %v405, %v481
  %v486 = vmul.f32 %v406, %v478
  %v487 = vmul.f32 %v407, %v479
  %v488 = vmul.f32 %v408, %v480
  %v489 = vmul.f32 %v409, %v481
  %v490 = vmul.f32 %v410, %v478
  %v491 = vmul.f32 %v411, %v479
  %v492 = vmul.f32 %v412, %v480
  %v493 = vmul.f32 %v413, %v481
  %v494 = vmul.f32 %v414, %v478
  %v495 = vmul.f32 %v415, %v479
  %v496 = vmul.f32 %v416, %v480
  %v497 = vmul.f32 %v417, %v481
  %v498 = vld [vmem:[%s2] sm:$0xff]
  %v499 = vld [vmem:[%s2 + $0x8] sm:$0xff]
  %v500 = vld [vmem:[%s2 + $0x10] sm:$0xff]
  %v501 = vld [vmem:[%s2 + $0x18] sm:$0xff]
  %v502 = vld [vmem:[%s2 + $0x20] sm:$0xff]
  %v503 = vld [vmem:[%s2 + $0x28] sm:$0xff]
  %v504 = vld [vmem:[%s2 + $0x30] sm:$0xff]
  %v505 = vld [vmem:[%s2 + $0x38] sm:$0xff]
  %v506 = vld [vmem:[%s2 + $0x40] sm:$0xff]
  %v507 = vld [vmem:[%s2 + $0x48] sm:$0xff]
  %v508 = vld [vmem:[%s2 + $0x50] sm:$0xff]
  %v509 = vld [vmem:[%s2 + $0x58] sm:$0xff]
  %v510 = vld [vmem:[%s2 + $0x60] sm:$0xff]
  %v511 = vld [vmem:[%s2 + $0x68] sm:$0xff]
  %v512 = vld [vmem:[%s2 + $0x70] sm:$0xff]
  %v513 = vld [vmem:[%s2 + $0x78] sm:$0xff]
  %v514 = vadd.f32 %v482, %v498
  %v515 = vadd.f32 %v483, %v499
  %v516 = vadd.f32 %v484, %v500
  %v517 = vadd.f32 %v485, %v501
  %v518 = vadd.f32 %v486, %v502
  %v519 = vadd.f32 %v487, %v503
  %v520 = vadd.f32 %v488, %v504
  %v521 = vadd.f32 %v489, %v505
  %v522 = vadd.f32 %v490, %v506
  %v523 = vadd.f32 %v491, %v507
  %v524 = vadd.f32 %v492, %v508
  %v525 = vadd.f32 %v493, %v509
  %v526 = vadd.f32 %v494, %v510
  %v527 = vadd.f32 %v495, %v511
  %v528 = vadd.f32 %v496, %v512
  %v529 = vadd.f32 %v497, %v513
  %v530 = vmax.f32 %v514, 0.0
  %v531 = vmax.f32 %v515, 0.0
  %v532 = vmax.f32 %v516, 0.0
  %v533 = vmax.f32 %v517, 0.0
  %v534 = vmax.f32 %v518, 0.0
  %v535 = vmax.f32 %v519, 0.0
  %v536 = vmax.f32 %v520, 0.0
  %v537 = vmax.f32 %v521, 0.0
  %v538 = vmax.f32 %v522, 0.0
  %v539 = vmax.f32 %v523, 0.0
  %v540 = vmax.f32 %v524, 0.0
  %v541 = vmax.f32 %v525, 0.0
  %v542 = vmax.f32 %v526, 0.0
  %v543 = vmax.f32 %v527, 0.0
  %v544 = vmax.f32 %v528, 0.0
  %v545 = vmax.f32 %v529, 0.0
  %546 = vst [vmem:[%s3] sm:$0xff] %v530
  %547 = vst [vmem:[%s3 + $0x8] sm:$0xff] %v531
  %548 = vst [vmem:[%s3 + $0x10] sm:$0xff] %v532
  %549 = vst [vmem:[%s3 + $0x18] sm:$0xff] %v533
  %550 = vst [vmem:[%s3 + $0x20] sm:$0xff] %v534
  %551 = vst [vmem:[%s3 + $0x28] sm:$0xff] %v535
  %552 = vst [vmem:[%s3 + $0x30] sm:$0xff] %v536
  %553 = vst [vmem:[%s3 + $0x38] sm:$0xff] %v537
  %554 = vst [vmem:[%s3 + $0x40] sm:$0xff] %v538
  %555 = vst [vmem:[%s3 + $0x48] sm:$0xff] %v539
  %556 = vst [vmem:[%s3 + $0x50] sm:$0xff] %v540
  %557 = vst [vmem:[%s3 + $0x58] sm:$0xff] %v541
  %558 = vst [vmem:[%s3 + $0x60] sm:$0xff] %v542
  %559 = vst [vmem:[%s3 + $0x68] sm:$0xff] %v543
  %560 = vst [vmem:[%s3 + $0x70] sm:$0xff] %v544
  %561 = vst [vmem:[%s3 + $0x78] sm:$0xff] %v545
  // Predicated region
  $region14: #{resnet_forward.17} parent=0 // pred_check
    _
  $region15: #{resnet_forward.17} parent=0 // pred_check_branch
    %563 = sbr.rel (0) target = $region17
  $region16: #{resnet_forward.17} parent=0 // pred_region
    _
  $region17: #{resnet_forward.17} parent=0 // pred_fallthru
    _
  // Predicated region
  $region18: #{resnet_forward.17} parent=0 // pred_check
    _
  $region19: #{resnet_forward.17} parent=0 // pred_check_branch
    %565 = sbr.rel (0) target = $region21
  $region20: #{resnet_forward.17} parent=0 // pred_region
    _
  $region21: #{resnet_forward.17} parent=0 // pred_fallthru
    _

</llo_original>
